<compile_context>
chip_gen: v5e
topology: v5e:2x2
jax: 0.10.0
libtpu: 0.0.40
codegen_flags: <defaults>
</compile_context>

<pallas_src>
import numpy as np
import jax
import jax.numpy as jnp
from jax.experimental import pallas as pl
from jax.experimental.pallas import tpu as pltpu


def _round_up(x, m):
    return ((x + m - 1) // m) * m


def _physical_vmem_bytes():
    """Per-core VMEM capacity; conservative 64 MiB (v7x size) if query unavailable."""
    try:
        info = pltpu.get_tpu_info()
        cap = int(getattr(info, "vmem_capacity_bytes", 0) or 0)
        if cap > 0:
            return cap
    except Exception:
        pass
    return 64 * 1024 * 1024


def _const_spec(shape, single_buffer):
    """BlockSpec for a grid-invariant constant operand.

    single_buffer=True requests 1-deep pipelining (the block index never changes,
    so double-buffering would only double the ~25 MB of resident DFT operators at
    production featureDim=3000).  Falls back to the default (double-buffered)
    spec if this jax version does not support pipeline_mode / pl.Buffered.
    """
    idx = lambda i: (0,) * len(shape)
    if single_buffer:
        try:
            return pl.BlockSpec(shape, idx, pipeline_mode=pl.Buffered(1))
        except (AttributeError, TypeError):
            pass
    return pl.BlockSpec(shape, idx)


def make_ftconv_kernel(*, Bt, c_in, tot2F, band_meta):
    """band_meta: static list of (nb, Fb, lane_off, chan_off) per band."""
    n_bands = len(band_meta)

    def kernel(*refs):
        sig_ref = refs[0]                    # (c_in, Bt, L)    bf16, channel-major
        basis_ref = refs[1]                  # (L, tot2F)       bf16, fused band DFT
        out_ref = refs[2 + 2 * n_bands]      # (c_out, Bt, Lp)  f32, channel-major

        L = sig_ref.shape[-1]

        # Fused forward DFT of ALL bands: one MXU matmul per grid step.
        s2 = sig_ref[...].reshape(c_in * Bt, L)
        sf = jnp.dot(s2, basis_ref[...], preferred_element_type=jnp.float32)
        sf3 = sf.reshape(c_in, Bt, tot2F)    # (c_in, Bt, tot2F) f32, per-band lane slabs

        for b, (nb, Fb, off, clo) in enumerate(band_meta):
            k_ref = refs[2 + 2 * b]          # (2, c_in, nb, 2Fb) f32  ([kre|kre], [-kim|kim])
            inv_ref = refs[3 + 2 * b]        # (2Fb, Lp)          bf16 (irfft rows, cropped)
            kab = k_ref[...]

            # Channel contraction on the VPU (f32), unrolled FMA chain over c_in.
            # acc[o, bt, :] = [ore | oim] packed along lanes:
            #   [ore|oim] = sum_c [sre|sim].k_a[o,c] + [sim|sre].k_b[o,c]
            acc = None
            for c in range(c_in):
                s_a = sf3[c, :, off:off + 2 * Fb]          # (Bt, 2Fb) = [sre | sim]
                s_b = pltpu.roll(s_a, shift=Fb, axis=1)    # (Bt, 2Fb) = [sim | sre] (XLU)
                t = (s_a[None, :, :] * kab[0, c][:, None, :]
                     + s_b[None, :, :] * kab[1, c][:, None, :])
                acc = t if acc is None else acc + t        # (nb, Bt, 2Fb) f32

            # Band-truncated inverse DFT: one MXU matmul per band (M = nb*Bt).
            lhs = acc.reshape(nb * Bt, 2 * Fb).astype(jnp.bfloat16)
            y = jnp.dot(lhs, inv_ref[...], preferred_element_type=jnp.float32)
            # Direct per-band store into the channel-major output block
            # (full (Bt, Lp) sublane/lane-aligned tiles, no masked stores).
            out_ref[clo:clo + nb, :, :] = y.reshape(nb, Bt, y.shape[-1])

    return kernel


def ft_conv(signal, weight, bias, *, padding, band_edges,
            stride=1, dilation=1, groups=1):
    # TODO(synk): stride>1 / dilation>1 / groups>1 branches of fft_conv are not
    # implemented; the module's defaults (1, 1, 1) are used here.
    assert stride == 1 and dilation == 1 and groups == 1
    B, c_in, L_in = signal.shape
    c_out, c_in_w, K = weight.shape
    assert c_in_w == c_in

    L_sig = L_in + 2 * padding              # length after conv padding
    L = L_sig + (L_sig % 2)                 # evened length == featureDim
    F = L // 2 + 1
    L_out = L_sig - K + 1
    Lp = _round_up(L_out, 128)              # lane-dense output width

    # output-channel groups per frequency band (same slicing as the reference)
    o5 = c_out // 5
    chan = [(0, o5), (o5, 2 * o5), (2 * o5, 3 * o5), (3 * o5, 4 * o5), (4 * o5, c_out)]

    # full-precision DFT / inverse-DFT operators (host, numpy)
    fbas = np.fft.rfft(np.eye(L))                    # (L, F) complex
    eyeF = np.eye(F)
    ire = np.fft.irfft(eyeF, n=L, axis=-1)           # (F, L)
    iim = np.fft.irfft(1j * eyeF, n=L, axis=-1)      # (F, L)

    # conj(rfft(zero-padded kernel))   (the reference's `kernel_fr.imag *= -1`)
    w = np.asarray(weight, dtype=np.float64)
    kfr_full = np.conj(np.fft.rfft(np.pad(w, ((0, 0), (0, 0), (0, L - K))), axis=-1))

    band_meta, band_inputs, basis_cols = [], [], []
    off = 0
    for (clo, chi), (flo, fhi) in zip(chan, band_edges):
        nb = chi - clo
        if nb <= 0:
            continue
        fhi = min(fhi, F - 1)
        nF = fhi - flo + 1                           # inclusive band, like initMAT
        Fb = _round_up(nF, 128)                      # truncated, 128-aligned band width

        # fused forward-DFT columns for this band: [re | im], each width Fb
        bcols = np.zeros((L, 2 * Fb), np.float32)
        bcols[:, :nF] = fbas.real[:, flo:fhi + 1]
        bcols[:, Fb:Fb + nF] = fbas.imag[:, flo:fhi + 1]
        basis_cols.append(bcols)

        # packed conj-kernel spectra: kab[0] = [kre|kre], kab[1] = [-kim|kim]
        kre = kfr_full.real[clo:chi, :, flo:fhi + 1].transpose(1, 0, 2)   # (c_in, nb, nF)
        kim = kfr_full.imag[clo:chi, :, flo:fhi + 1].transpose(1, 0, 2)
        kab = np.zeros((2, c_in, nb, 2 * Fb), np.float32)
        kab[0, :, :, :nF] = kre
        kab[0, :, :, Fb:Fb + nF] = kre
        kab[1, :, :, :nF] = -kim
        kab[1, :, :, Fb:Fb + nF] = kim

        # band-truncated inverse DFT rows, cropped to L_out columns
        inv = np.zeros((2 * Fb, Lp), np.float32)
        inv[:nF, :L_out] = ire[flo:fhi + 1, :L_out]
        inv[Fb:Fb + nF, :L_out] = iim[flo:fhi + 1, :L_out]

        band_meta.append((nb, Fb, off, clo))
        off += 2 * Fb
        band_inputs += [jnp.asarray(kab, jnp.float32), jnp.asarray(inv, jnp.bfloat16)]

    tot2F = off
    basis_all = jnp.asarray(np.concatenate(basis_cols, axis=1), jnp.bfloat16)  # (L, tot2F)
    const_inputs = [basis_all] + band_inputs

    # ---- VMEM budget (generation-aware) and batch-tile selection --------------
    vmem_phys = _physical_vmem_bytes()
    vmem_limit = int(max(32 * 1024 * 1024,
                         min(vmem_phys - 12 * 1024 * 1024, 110 * 1024 * 1024)))
    const_bytes = sum(int(a.size) * a.dtype.itemsize for a in const_inputs)
    budget = vmem_limit - const_bytes - 4 * 1024 * 1024     # compiler-scratch headroom

    max_nb = max(m[0] for m in band_meta)
    max_Fb = max(m[1] for m in band_meta)

    def _tile_bytes(bt):
        sig_t = 2 * c_in * bt * L * 2                        # double-buffered bf16 signal
        out_t = 2 * c_out * bt * Lp * 4                      # double-buffered f32 output
        interm = bt * (c_in * tot2F * 4                      # forward-DFT result
                       + 4 * max_nb * 2 * max_Fb * 4         # contraction temporaries
                       + max_nb * Lp * 4)                    # inverse-DFT result
        return sig_t + out_t + interm

    rows_target = 256                   # MXU M target (v6e/v7x 256-wide; 128 of v5e divides it)
    Bt = max(1, min(B, rows_target // max(1, c_in)))
    if Bt < B:
        Bt = max(8, (Bt // 8) * 8)      # multiple-of-8 sublane tiles when multi-step
        while Bt > 8 and _tile_bytes(Bt) > budget:
            Bt = max(8, (Bt // 2 // 8) * 8)
    if Bt >= B:
        Bt, B_pad, n_steps = B, B, 1    # tiny batch: one full-array block
    else:
        n_steps = -(-B // Bt)           # minimize padded rows; >=2 steps feeds both v7x TCs
        Bt = _round_up(-(-B // n_steps), 8)
        B_pad = Bt * n_steps

    # conv padding + even-length padding + batch padding, channel-major, bf16
    sig = jnp.pad(jnp.asarray(signal, jnp.float32),
                  ((0, B_pad - B), (0, 0), (padding, padding + (L - L_sig))))
    sig_cm = jnp.transpose(sig, (1, 0, 2)).astype(jnp.bfloat16)     # (c_in, B_pad, L)

    kernel = make_ftconv_kernel(Bt=Bt, c_in=c_in, tot2F=tot2F, band_meta=band_meta)

    flops = int(n_steps * (2 * (c_in * Bt) * L * tot2F
                           + sum(2 * nb * Bt * (2 * Fb) * Lp + 8 * nb * c_in * Bt * Fb
                                 for nb, Fb, _, _ in band_meta)))
    bytes_accessed = int(sig_cm.size * sig_cm.dtype.itemsize
                         + const_bytes + B_pad * c_out * Lp * 4)

    def _run(single_buffer_consts):
        const_specs = [_const_spec(tuple(a.shape), single_buffer_consts)
                       for a in const_inputs]
        fn = pl.pallas_call(
            kernel,
            out_shape=jax.ShapeDtypeStruct((c_out, B_pad, Lp), jnp.float32),
            grid=(n_steps,),
            in_specs=[pl.BlockSpec((c_in, Bt, L), lambda i: (0, i, 0))] + const_specs,
            out_specs=pl.BlockSpec((c_out, Bt, Lp), lambda i: (0, i, 0)),
            compiler_params=pltpu.CompilerParams(
                dimension_semantics=("parallel",),
                vmem_limit_bytes=vmem_limit),
            cost_estimate=pl.CostEstimate(flops=flops, transcendentals=0,
                                          bytes_accessed=bytes_accessed),
        )
        return fn(sig_cm, *const_inputs)

    try:
        out = _run(True)
    except Exception:
        # pl.Buffered(1) not supported by this jax/libtpu -> default double-buffering
        out = _run(False)

    # crop + transpose + bias in the XLA wrapper (keeps the kernel store lane-dense)
    out = jnp.transpose(out[:, :B, :L_out], (1, 0, 2))
    return out + jnp.asarray(bias, jnp.float32)[None, :, None]


def ft_conv_reference(signal, weight, bias, *, padding, band_edges):
    """Pure numpy/FFT reference with the exact reference-module semantics."""
    B, c_in, L_in = signal.shape
    c_out, _, K = weight.shape
    L_sig = L_in + 2 * padding
    L = L_sig + (L_sig % 2)
    F = L // 2 + 1
    L_out = L_sig - K + 1
    sig = np.pad(np.asarray(signal, np.float64),
                 ((0, 0), (0, 0), (padding, padding + (L - L_sig))))
    sfr = np.fft.rfft(sig, axis=-1)
    kfr = np.conj(np.fft.rfft(
        np.pad(np.asarray(weight, np.float64), ((0, 0), (0, 0), (0, L - K))), axis=-1))
    o5 = c_out // 5
    chans = [(0, o5), (o5, 2 * o5), (2 * o5, 3 * o5), (3 * o5, 4 * o5), (4 * o5, c_out)]
    out_fr = np.zeros((B, c_out, F), dtype=np.complex128)
    for (lo, hi), (s, e) in zip(chans, band_edges):
        mask = np.zeros(F)
        mask[s:e + 1] = 1.0
        sband = sfr * mask[None, None, :]
        out_fr[:, lo:hi, :] = np.einsum('bcf,ocf->bof', sband, kfr[lo:hi])
    y = np.fft.irfft(out_fr, n=L, axis=-1)
    return y[:, :, :L_out] + np.asarray(bias, np.float64)[None, :, None]


if __name__ == "__main__":
    key = jax.random.PRNGKey(0)
    k1, k2, k3 = jax.random.split(key, 3)

    B, C_IN, C_OUT = 2, 4, 10
    K, PAD, L_IN = 9, 4, 56          # -> L = featureDim = 64, F = 33, L_out = 56

    x = jax.random.normal(k1, (B, C_IN, L_IN), jnp.float32)
    weight = jax.random.normal(k2, (C_OUT, C_IN, K), jnp.float32)
    bias = jax.random.normal(k3, (C_OUT,), jnp.float32)

    # scale the module's hard-coded featureDim=3000 band edges down to F bins
    L = L_IN + 2 * PAD
    F = L // 2 + 1
    edges3000 = [0, 122, 244, 366, 488, 972]
    sc = (F - 1) / 1500.0
    e = [int(round(v * sc)) for v in edges3000]
    band_edges = [(e[i], e[i + 1]) for i in range(5)]

    out = ft_conv(x, weight, bias, padding=PAD, band_edges=band_edges)
    out = jax.block_until_ready(out)
    out_np = np.asarray(out)

    ref = ft_conv_reference(np.asarray(x), np.asarray(weight), np.asarray(bias),
                            padding=PAD, band_edges=band_edges)

    # bf16-MXU kernel: compare with a tolerance scaled to the output magnitude
    atol = max(2e-2, 2e-2 * float(np.abs(ref).max()))
    np.testing.assert_allclose(out_np, ref, rtol=2e-2, atol=atol)
    print("KERNEL_OK")
</pallas_src>

<mosaic_0001>
module attributes {stable_mosaic.version = 11 : i64} {
  func.func @kernel(%arg0: i32, %arg1: memref<4x2x64xbf16, #tpu.memory_space<vmem>>, %arg2: memref<64x1280xbf16, #tpu.memory_space<vmem>>, %arg3: memref<2x4x2x256xf32, #tpu.memory_space<vmem>>, %arg4: memref<256x128xbf16, #tpu.memory_space<vmem>>, %arg5: memref<2x4x2x256xf32, #tpu.memory_space<vmem>>, %arg6: memref<256x128xbf16, #tpu.memory_space<vmem>>, %arg7: memref<2x4x2x256xf32, #tpu.memory_space<vmem>>, %arg8: memref<256x128xbf16, #tpu.memory_space<vmem>>, %arg9: memref<2x4x2x256xf32, #tpu.memory_space<vmem>>, %arg10: memref<256x128xbf16, #tpu.memory_space<vmem>>, %arg11: memref<2x4x2x256xf32, #tpu.memory_space<vmem>>, %arg12: memref<256x128xbf16, #tpu.memory_space<vmem>>, %arg13: memref<10x2x128xf32, #tpu.memory_space<vmem>>) attributes {dimension_semantics = [#tpu.dimension_semantics<parallel>], iteration_bounds = array<i64: 1>, scalar_prefetch = 0 : i64, scratch_operands = 0 : i64, tpu.core_type = #tpu.core_type<tc>, window_params = [{transform_indices = @transform_0, window_bounds = array<i64: 4, 2, 64>}, {pipeline_mode = #tpu.pipeline_mode<synchronous>, transform_indices = @transform_1, window_bounds = array<i64: 64, 1280>}, {pipeline_mode = #tpu.pipeline_mode<synchronous>, transform_indices = @transform_2, window_bounds = array<i64: 2, 4, 2, 256>}, {pipeline_mode = #tpu.pipeline_mode<synchronous>, transform_indices = @transform_3, window_bounds = array<i64: 256, 128>}, {pipeline_mode = #tpu.pipeline_mode<synchronous>, transform_indices = @transform_4, window_bounds = array<i64: 2, 4, 2, 256>}, {pipeline_mode = #tpu.pipeline_mode<synchronous>, transform_indices = @transform_5, window_bounds = array<i64: 256, 128>}, {pipeline_mode = #tpu.pipeline_mode<synchronous>, transform_indices = @transform_6, window_bounds = array<i64: 2, 4, 2, 256>}, {pipeline_mode = #tpu.pipeline_mode<synchronous>, transform_indices = @transform_7, window_bounds = array<i64: 256, 128>}, {pipeline_mode = #tpu.pipeline_mode<synchronous>, transform_indices = @transform_8, window_bounds = array<i64: 2, 4, 2, 256>}, {pipeline_mode = #tpu.pipeline_mode<synchronous>, transform_indices = @transform_9, window_bounds = array<i64: 256, 128>}, {pipeline_mode = #tpu.pipeline_mode<synchronous>, transform_indices = @transform_10, window_bounds = array<i64: 2, 4, 2, 256>}, {pipeline_mode = #tpu.pipeline_mode<synchronous>, transform_indices = @transform_11, window_bounds = array<i64: 256, 128>}, {transform_indices = @transform_12, window_bounds = array<i64: 10, 2, 128>}]} {
    %c0 = arith.constant 0 : index
    %c0_0 = arith.constant 0 : index
    %c0_1 = arith.constant 0 : index
    %0 = vector.load %arg1[%c0, %c0_0, %c0_1] : memref<4x2x64xbf16, #tpu.memory_space<vmem>>, vector<4x2x64xbf16>
    %1 = vector.shape_cast %0 : vector<4x2x64xbf16> to vector<8x64xbf16>
    %c0_2 = arith.constant 0 : index
    %c0_3 = arith.constant 0 : index
    %2 = vector.load %arg2[%c0_2, %c0_3] : memref<64x1280xbf16, #tpu.memory_space<vmem>>, vector<64x1280xbf16>
    %cst = arith.constant dense<0.000000e+00> : vector<8x1280xf32>
    %3 = tpu.matmul %1, %2, %cst {dimension_numbers = #tpu.dot_dimension_numbers<[1], [0], [0], [1], [0, 0, 1, 1], [], []>} : vector<8x64xbf16>, vector<64x1280xbf16>, vector<8x1280xf32> -> vector<8x1280xf32>
    %4 = vector.shape_cast %3 : vector<8x1280xf32> to vector<4x2x1280xf32>
    %c0_4 = arith.constant 0 : index
    %c0_5 = arith.constant 0 : index
    %c0_6 = arith.constant 0 : index
    %c0_7 = arith.constant 0 : index
    %5 = vector.load %arg3[%c0_4, %c0_5, %c0_6, %c0_7] : memref<2x4x2x256xf32, #tpu.memory_space<vmem>>, vector<2x4x2x256xf32>
    %6 = vector.extract_strided_slice %4 {offsets = [0, 0, 0], sizes = [1, 2, 256], strides = [1, 1, 1]} : vector<4x2x1280xf32> to vector<1x2x256xf32>
    %7 = vector.shape_cast %6 : vector<1x2x256xf32> to vector<2x256xf32>
    %c128_i32 = arith.constant 128 : i32
    %8 = tpu.dynamic_rotate %7 by %c128_i32 dim 1 : vector<2x256xf32>, i32 -> vector<2x256xf32>
    %9 = vector.shape_cast %7 : vector<2x256xf32> to vector<1x2x256xf32>
    %10 = vector.extract_strided_slice %5 {offsets = [0, 0, 0, 0], sizes = [1, 1, 2, 256], strides = [1, 1, 1, 1]} : vector<2x4x2x256xf32> to vector<1x1x2x256xf32>
    %11 = vector.shape_cast %10 : vector<1x1x2x256xf32> to vector<2x256xf32>
    %12 = vector.shape_cast %11 : vector<2x256xf32> to vector<2x1x256xf32>
    %13 = vector.broadcast %9 : vector<1x2x256xf32> to vector<2x2x256xf32>
    %14 = vector.broadcast %12 : vector<2x1x256xf32> to vector<2x2x256xf32>
    %15 = arith.mulf %13, %14 : vector<2x2x256xf32>
    %16 = vector.shape_cast %8 : vector<2x256xf32> to vector<1x2x256xf32>
    %17 = vector.extract_strided_slice %5 {offsets = [1, 0, 0, 0], sizes = [1, 1, 2, 256], strides = [1, 1, 1, 1]} : vector<2x4x2x256xf32> to vector<1x1x2x256xf32>
    %18 = vector.shape_cast %17 : vector<1x1x2x256xf32> to vector<2x256xf32>
    %19 = vector.shape_cast %18 : vector<2x256xf32> to vector<2x1x256xf32>
    %20 = vector.broadcast %16 : vector<1x2x256xf32> to vector<2x2x256xf32>
    %21 = vector.broadcast %19 : vector<2x1x256xf32> to vector<2x2x256xf32>
    %22 = arith.mulf %20, %21 : vector<2x2x256xf32>
    %23 = arith.addf %15, %22 : vector<2x2x256xf32>
    %24 = vector.extract_strided_slice %4 {offsets = [1, 0, 0], sizes = [1, 2, 256], strides = [1, 1, 1]} : vector<4x2x1280xf32> to vector<1x2x256xf32>
    %25 = vector.shape_cast %24 : vector<1x2x256xf32> to vector<2x256xf32>
    %c128_i32_8 = arith.constant 128 : i32
    %26 = tpu.dynamic_rotate %25 by %c128_i32_8 dim 1 : vector<2x256xf32>, i32 -> vector<2x256xf32>
    %27 = vector.shape_cast %25 : vector<2x256xf32> to vector<1x2x256xf32>
    %28 = vector.extract_strided_slice %5 {offsets = [0, 1, 0, 0], sizes = [1, 1, 2, 256], strides = [1, 1, 1, 1]} : vector<2x4x2x256xf32> to vector<1x1x2x256xf32>
    %29 = vector.shape_cast %28 : vector<1x1x2x256xf32> to vector<2x256xf32>
    %30 = vector.shape_cast %29 : vector<2x256xf32> to vector<2x1x256xf32>
    %31 = vector.broadcast %27 : vector<1x2x256xf32> to vector<2x2x256xf32>
    %32 = vector.broadcast %30 : vector<2x1x256xf32> to vector<2x2x256xf32>
    %33 = arith.mulf %31, %32 : vector<2x2x256xf32>
    %34 = vector.shape_cast %26 : vector<2x256xf32> to vector<1x2x256xf32>
    %35 = vector.extract_strided_slice %5 {offsets = [1, 1, 0, 0], sizes = [1, 1, 2, 256], strides = [1, 1, 1, 1]} : vector<2x4x2x256xf32> to vector<1x1x2x256xf32>
    %36 = vector.shape_cast %35 : vector<1x1x2x256xf32> to vector<2x256xf32>
    %37 = vector.shape_cast %36 : vector<2x256xf32> to vector<2x1x256xf32>
    %38 = vector.broadcast %34 : vector<1x2x256xf32> to vector<2x2x256xf32>
    %39 = vector.broadcast %37 : vector<2x1x256xf32> to vector<2x2x256xf32>
    %40 = arith.mulf %38, %39 : vector<2x2x256xf32>
    %41 = arith.addf %33, %40 : vector<2x2x256xf32>
    %42 = arith.addf %23, %41 : vector<2x2x256xf32>
    %43 = vector.extract_strided_slice %4 {offsets = [2, 0, 0], sizes = [1, 2, 256], strides = [1, 1, 1]} : vector<4x2x1280xf32> to vector<1x2x256xf32>
    %44 = vector.shape_cast %43 : vector<1x2x256xf32> to vector<2x256xf32>
    %c128_i32_9 = arith.constant 128 : i32
    %45 = tpu.dynamic_rotate %44 by %c128_i32_9 dim 1 : vector<2x256xf32>, i32 -> vector<2x256xf32>
    %46 = vector.shape_cast %44 : vector<2x256xf32> to vector<1x2x256xf32>
    %47 = vector.extract_strided_slice %5 {offsets = [0, 2, 0, 0], sizes = [1, 1, 2, 256], strides = [1, 1, 1, 1]} : vector<2x4x2x256xf32> to vector<1x1x2x256xf32>
    %48 = vector.shape_cast %47 : vector<1x1x2x256xf32> to vector<2x256xf32>
    %49 = vector.shape_cast %48 : vector<2x256xf32> to vector<2x1x256xf32>
    %50 = vector.broadcast %46 : vector<1x2x256xf32> to vector<2x2x256xf32>
    %51 = vector.broadcast %49 : vector<2x1x256xf32> to vector<2x2x256xf32>
    %52 = arith.mulf %50, %51 : vector<2x2x256xf32>
    %53 = vector.shape_cast %45 : vector<2x256xf32> to vector<1x2x256xf32>
    %54 = vector.extract_strided_slice %5 {offsets = [1, 2, 0, 0], sizes = [1, 1, 2, 256], strides = [1, 1, 1, 1]} : vector<2x4x2x256xf32> to vector<1x1x2x256xf32>
    %55 = vector.shape_cast %54 : vector<1x1x2x256xf32> to vector<2x256xf32>
    %56 = vector.shape_cast %55 : vector<2x256xf32> to vector<2x1x256xf32>
    %57 = vector.broadcast %53 : vector<1x2x256xf32> to vector<2x2x256xf32>
    %58 = vector.broadcast %56 : vector<2x1x256xf32> to vector<2x2x256xf32>
    %59 = arith.mulf %57, %58 : vector<2x2x256xf32>
    %60 = arith.addf %52, %59 : vector<2x2x256xf32>
    %61 = arith.addf %42, %60 : vector<2x2x256xf32>
    %62 = vector.extract_strided_slice %4 {offsets = [3, 0, 0], sizes = [1, 2, 256], strides = [1, 1, 1]} : vector<4x2x1280xf32> to vector<1x2x256xf32>
    %63 = vector.shape_cast %62 : vector<1x2x256xf32> to vector<2x256xf32>
    %c128_i32_10 = arith.constant 128 : i32
    %64 = tpu.dynamic_rotate %63 by %c128_i32_10 dim 1 : vector<2x256xf32>, i32 -> vector<2x256xf32>
    %65 = vector.shape_cast %63 : vector<2x256xf32> to vector<1x2x256xf32>
    %66 = vector.extract_strided_slice %5 {offsets = [0, 3, 0, 0], sizes = [1, 1, 2, 256], strides = [1, 1, 1, 1]} : vector<2x4x2x256xf32> to vector<1x1x2x256xf32>
    %67 = vector.shape_cast %66 : vector<1x1x2x256xf32> to vector<2x256xf32>
    %68 = vector.shape_cast %67 : vector<2x256xf32> to vector<2x1x256xf32>
    %69 = vector.broadcast %65 : vector<1x2x256xf32> to vector<2x2x256xf32>
    %70 = vector.broadcast %68 : vector<2x1x256xf32> to vector<2x2x256xf32>
    %71 = arith.mulf %69, %70 : vector<2x2x256xf32>
    %72 = vector.shape_cast %64 : vector<2x256xf32> to vector<1x2x256xf32>
    %73 = vector.extract_strided_slice %5 {offsets = [1, 3, 0, 0], sizes = [1, 1, 2, 256], strides = [1, 1, 1, 1]} : vector<2x4x2x256xf32> to vector<1x1x2x256xf32>
    %74 = vector.shape_cast %73 : vector<1x1x2x256xf32> to vector<2x256xf32>
    %75 = vector.shape_cast %74 : vector<2x256xf32> to vector<2x1x256xf32>
    %76 = vector.broadcast %72 : vector<1x2x256xf32> to vector<2x2x256xf32>
    %77 = vector.broadcast %75 : vector<2x1x256xf32> to vector<2x2x256xf32>
    %78 = arith.mulf %76, %77 : vector<2x2x256xf32>
    %79 = arith.addf %71, %78 : vector<2x2x256xf32>
    %80 = arith.addf %61, %79 : vector<2x2x256xf32>
    %81 = vector.shape_cast %80 : vector<2x2x256xf32> to vector<4x256xf32>
    %82 = arith.truncf %81 : vector<4x256xf32> to vector<4x256xbf16>
    %c0_11 = arith.constant 0 : index
    %c0_12 = arith.constant 0 : index
    %83 = vector.load %arg4[%c0_11, %c0_12] : memref<256x128xbf16, #tpu.memory_space<vmem>>, vector<256x128xbf16>
    %cst_13 = arith.constant dense<0.000000e+00> : vector<4x128xf32>
    %84 = tpu.matmul %82, %83, %cst_13 {dimension_numbers = #tpu.dot_dimension_numbers<[1], [0], [0], [1], [0, 0, 1, 1], [], []>} : vector<4x256xbf16>, vector<256x128xbf16>, vector<4x128xf32> -> vector<4x128xf32>
    %85 = vector.shape_cast %84 : vector<4x128xf32> to vector<2x2x128xf32>
    %c0_14 = arith.constant 0 : index
    %c0_15 = arith.constant 0 : index
    %c0_16 = arith.constant 0 : index
    %86 = vector.load %arg13[%c0_14, %c0_15, %c0_16] : memref<10x2x128xf32, #tpu.memory_space<vmem>>, vector<2x2x128xf32>
    tpu.vector_store %arg13[%c0_14, %c0_15, %c0_16], %85 {strides = array<i32>} : memref<10x2x128xf32, #tpu.memory_space<vmem>>, vector<2x2x128xf32>,
    %c0_17 = arith.constant 0 : index
    %c0_18 = arith.constant 0 : index
    %c0_19 = arith.constant 0 : index
    %c0_20 = arith.constant 0 : index
    %87 = vector.load %arg5[%c0_17, %c0_18, %c0_19, %c0_20] : memref<2x4x2x256xf32, #tpu.memory_space<vmem>>, vector<2x4x2x256xf32>
    %88 = vector.extract_strided_slice %4 {offsets = [0, 0, 256], sizes = [1, 2, 256], strides = [1, 1, 1]} : vector<4x2x1280xf32> to vector<1x2x256xf32>
    %89 = vector.shape_cast %88 : vector<1x2x256xf32> to vector<2x256xf32>
    %c128_i32_21 = arith.constant 128 : i32
    %90 = tpu.dynamic_rotate %89 by %c128_i32_21 dim 1 : vector<2x256xf32>, i32 -> vector<2x256xf32>
    %91 = vector.shape_cast %89 : vector<2x256xf32> to vector<1x2x256xf32>
    %92 = vector.extract_strided_slice %87 {offsets = [0, 0, 0, 0], sizes = [1, 1, 2, 256], strides = [1, 1, 1, 1]} : vector<2x4x2x256xf32> to vector<1x1x2x256xf32>
    %93 = vector.shape_cast %92 : vector<1x1x2x256xf32> to vector<2x256xf32>
    %94 = vector.shape_cast %93 : vector<2x256xf32> to vector<2x1x256xf32>
    %95 = vector.broadcast %91 : vector<1x2x256xf32> to vector<2x2x256xf32>
    %96 = vector.broadcast %94 : vector<2x1x256xf32> to vector<2x2x256xf32>
    %97 = arith.mulf %95, %96 : vector<2x2x256xf32>
    %98 = vector.shape_cast %90 : vector<2x256xf32> to vector<1x2x256xf32>
    %99 = vector.extract_strided_slice %87 {offsets = [1, 0, 0, 0], sizes = [1, 1, 2, 256], strides = [1, 1, 1, 1]} : vector<2x4x2x256xf32> to vector<1x1x2x256xf32>
    %100 = vector.shape_cast %99 : vector<1x1x2x256xf32> to vector<2x256xf32>
    %101 = vector.shape_cast %100 : vector<2x256xf32> to vector<2x1x256xf32>
    %102 = vector.broadcast %98 : vector<1x2x256xf32> to vector<2x2x256xf32>
    %103 = vector.broadcast %101 : vector<2x1x256xf32> to vector<2x2x256xf32>
    %104 = arith.mulf %102, %103 : vector<2x2x256xf32>
    %105 = arith.addf %97, %104 : vector<2x2x256xf32>
    %106 = vector.extract_strided_slice %4 {offsets = [1, 0, 256], sizes = [1, 2, 256], strides = [1, 1, 1]} : vector<4x2x1280xf32> to vector<1x2x256xf32>
    %107 = vector.shape_cast %106 : vector<1x2x256xf32> to vector<2x256xf32>
    %c128_i32_22 = arith.constant 128 : i32
    %108 = tpu.dynamic_rotate %107 by %c128_i32_22 dim 1 : vector<2x256xf32>, i32 -> vector<2x256xf32>
    %109 = vector.shape_cast %107 : vector<2x256xf32> to vector<1x2x256xf32>
    %110 = vector.extract_strided_slice %87 {offsets = [0, 1, 0, 0], sizes = [1, 1, 2, 256], strides = [1, 1, 1, 1]} : vector<2x4x2x256xf32> to vector<1x1x2x256xf32>
    %111 = vector.shape_cast %110 : vector<1x1x2x256xf32> to vector<2x256xf32>
    %112 = vector.shape_cast %111 : vector<2x256xf32> to vector<2x1x256xf32>
    %113 = vector.broadcast %109 : vector<1x2x256xf32> to vector<2x2x256xf32>
    %114 = vector.broadcast %112 : vector<2x1x256xf32> to vector<2x2x256xf32>
    %115 = arith.mulf %113, %114 : vector<2x2x256xf32>
    %116 = vector.shape_cast %108 : vector<2x256xf32> to vector<1x2x256xf32>
    %117 = vector.extract_strided_slice %87 {offsets = [1, 1, 0, 0], sizes = [1, 1, 2, 256], strides = [1, 1, 1, 1]} : vector<2x4x2x256xf32> to vector<1x1x2x256xf32>
    %118 = vector.shape_cast %117 : vector<1x1x2x256xf32> to vector<2x256xf32>
    %119 = vector.shape_cast %118 : vector<2x256xf32> to vector<2x1x256xf32>
    %120 = vector.broadcast %116 : vector<1x2x256xf32> to vector<2x2x256xf32>
    %121 = vector.broadcast %119 : vector<2x1x256xf32> to vector<2x2x256xf32>
    %122 = arith.mulf %120, %121 : vector<2x2x256xf32>
    %123 = arith.addf %115, %122 : vector<2x2x256xf32>
    %124 = arith.addf %105, %123 : vector<2x2x256xf32>
    %125 = vector.extract_strided_slice %4 {offsets = [2, 0, 256], sizes = [1, 2, 256], strides = [1, 1, 1]} : vector<4x2x1280xf32> to vector<1x2x256xf32>
    %126 = vector.shape_cast %125 : vector<1x2x256xf32> to vector<2x256xf32>
    %c128_i32_23 = arith.constant 128 : i32
    %127 = tpu.dynamic_rotate %126 by %c128_i32_23 dim 1 : vector<2x256xf32>, i32 -> vector<2x256xf32>
    %128 = vector.shape_cast %126 : vector<2x256xf32> to vector<1x2x256xf32>
    %129 = vector.extract_strided_slice %87 {offsets = [0, 2, 0, 0], sizes = [1, 1, 2, 256], strides = [1, 1, 1, 1]} : vector<2x4x2x256xf32> to vector<1x1x2x256xf32>
    %130 = vector.shape_cast %129 : vector<1x1x2x256xf32> to vector<2x256xf32>
    %131 = vector.shape_cast %130 : vector<2x256xf32> to vector<2x1x256xf32>
    %132 = vector.broadcast %128 : vector<1x2x256xf32> to vector<2x2x256xf32>
    %133 = vector.broadcast %131 : vector<2x1x256xf32> to vector<2x2x256xf32>
    %134 = arith.mulf %132, %133 : vector<2x2x256xf32>
    %135 = vector.shape_cast %127 : vector<2x256xf32> to vector<1x2x256xf32>
    %136 = vector.extract_strided_slice %87 {offsets = [1, 2, 0, 0], sizes = [1, 1, 2, 256], strides = [1, 1, 1, 1]} : vector<2x4x2x256xf32> to vector<1x1x2x256xf32>
    %137 = vector.shape_cast %136 : vector<1x1x2x256xf32> to vector<2x256xf32>
    %138 = vector.shape_cast %137 : vector<2x256xf32> to vector<2x1x256xf32>
    %139 = vector.broadcast %135 : vector<1x2x256xf32> to vector<2x2x256xf32>
    %140 = vector.broadcast %138 : vector<2x1x256xf32> to vector<2x2x256xf32>
    %141 = arith.mulf %139, %140 : vector<2x2x256xf32>
    %142 = arith.addf %134, %141 : vector<2x2x256xf32>
    %143 = arith.addf %124, %142 : vector<2x2x256xf32>
    %144 = vector.extract_strided_slice %4 {offsets = [3, 0, 256], sizes = [1, 2, 256], strides = [1, 1, 1]} : vector<4x2x1280xf32> to vector<1x2x256xf32>
    %145 = vector.shape_cast %144 : vector<1x2x256xf32> to vector<2x256xf32>
    %c128_i32_24 = arith.constant 128 : i32
    %146 = tpu.dynamic_rotate %145 by %c128_i32_24 dim 1 : vector<2x256xf32>, i32 -> vector<2x256xf32>
    %147 = vector.shape_cast %145 : vector<2x256xf32> to vector<1x2x256xf32>
    %148 = vector.extract_strided_slice %87 {offsets = [0, 3, 0, 0], sizes = [1, 1, 2, 256], strides = [1, 1, 1, 1]} : vector<2x4x2x256xf32> to vector<1x1x2x256xf32>
    %149 = vector.shape_cast %148 : vector<1x1x2x256xf32> to vector<2x256xf32>
    %150 = vector.shape_cast %149 : vector<2x256xf32> to vector<2x1x256xf32>
    %151 = vector.broadcast %147 : vector<1x2x256xf32> to vector<2x2x256xf32>
    %152 = vector.broadcast %150 : vector<2x1x256xf32> to vector<2x2x256xf32>
    %153 = arith.mulf %151, %152 : vector<2x2x256xf32>
    %154 = vector.shape_cast %146 : vector<2x256xf32> to vector<1x2x256xf32>
    %155 = vector.extract_strided_slice %87 {offsets = [1, 3, 0, 0], sizes = [1, 1, 2, 256], strides = [1, 1, 1, 1]} : vector<2x4x2x256xf32> to vector<1x1x2x256xf32>
    %156 = vector.shape_cast %155 : vector<1x1x2x256xf32> to vector<2x256xf32>
    %157 = vector.shape_cast %156 : vector<2x256xf32> to vector<2x1x256xf32>
    %158 = vector.broadcast %154 : vector<1x2x256xf32> to vector<2x2x256xf32>
    %159 = vector.broadcast %157 : vector<2x1x256xf32> to vector<2x2x256xf32>
    %160 = arith.mulf %158, %159 : vector<2x2x256xf32>
    %161 = arith.addf %153, %160 : vector<2x2x256xf32>
    %162 = arith.addf %143, %161 : vector<2x2x256xf32>
    %163 = vector.shape_cast %162 : vector<2x2x256xf32> to vector<4x256xf32>
    %164 = arith.truncf %163 : vector<4x256xf32> to vector<4x256xbf16>
    %c0_25 = arith.constant 0 : index
    %c0_26 = arith.constant 0 : index
    %165 = vector.load %arg6[%c0_25, %c0_26] : memref<256x128xbf16, #tpu.memory_space<vmem>>, vector<256x128xbf16>
    %cst_27 = arith.constant dense<0.000000e+00> : vector<4x128xf32>
    %166 = tpu.matmul %164, %165, %cst_27 {dimension_numbers = #tpu.dot_dimension_numbers<[1], [0], [0], [1], [0, 0, 1, 1], [], []>} : vector<4x256xbf16>, vector<256x128xbf16>, vector<4x128xf32> -> vector<4x128xf32>
    %167 = vector.shape_cast %166 : vector<4x128xf32> to vector<2x2x128xf32>
    %c2 = arith.constant 2 : index
    %c0_28 = arith.constant 0 : index
    %c0_29 = arith.constant 0 : index
    %168 = vector.load %arg13[%c2, %c0_28, %c0_29] : memref<10x2x128xf32, #tpu.memory_space<vmem>>, vector<2x2x128xf32>
    tpu.vector_store %arg13[%c2, %c0_28, %c0_29], %167 {strides = array<i32>} : memref<10x2x128xf32, #tpu.memory_space<vmem>>, vector<2x2x128xf32>,
    %c0_30 = arith.constant 0 : index
    %c0_31 = arith.constant 0 : index
    %c0_32 = arith.constant 0 : index
    %c0_33 = arith.constant 0 : index
    %169 = vector.load %arg7[%c0_30, %c0_31, %c0_32, %c0_33] : memref<2x4x2x256xf32, #tpu.memory_space<vmem>>, vector<2x4x2x256xf32>
    %170 = vector.extract_strided_slice %4 {offsets = [0, 0, 512], sizes = [1, 2, 256], strides = [1, 1, 1]} : vector<4x2x1280xf32> to vector<1x2x256xf32>
    %171 = vector.shape_cast %170 : vector<1x2x256xf32> to vector<2x256xf32>
    %c128_i32_34 = arith.constant 128 : i32
    %172 = tpu.dynamic_rotate %171 by %c128_i32_34 dim 1 : vector<2x256xf32>, i32 -> vector<2x256xf32>
    %173 = vector.shape_cast %171 : vector<2x256xf32> to vector<1x2x256xf32>
    %174 = vector.extract_strided_slice %169 {offsets = [0, 0, 0, 0], sizes = [1, 1, 2, 256], strides = [1, 1, 1, 1]} : vector<2x4x2x256xf32> to vector<1x1x2x256xf32>
    %175 = vector.shape_cast %174 : vector<1x1x2x256xf32> to vector<2x256xf32>
    %176 = vector.shape_cast %175 : vector<2x256xf32> to vector<2x1x256xf32>
    %177 = vector.broadcast %173 : vector<1x2x256xf32> to vector<2x2x256xf32>
    %178 = vector.broadcast %176 : vector<2x1x256xf32> to vector<2x2x256xf32>
    %179 = arith.mulf %177, %178 : vector<2x2x256xf32>
    %180 = vector.shape_cast %172 : vector<2x256xf32> to vector<1x2x256xf32>
    %181 = vector.extract_strided_slice %169 {offsets = [1, 0, 0, 0], sizes = [1, 1, 2, 256], strides = [1, 1, 1, 1]} : vector<2x4x2x256xf32> to vector<1x1x2x256xf32>
    %182 = vector.shape_cast %181 : vector<1x1x2x256xf32> to vector<2x256xf32>
    %183 = vector.shape_cast %182 : vector<2x256xf32> to vector<2x1x256xf32>
    %184 = vector.broadcast %180 : vector<1x2x256xf32> to vector<2x2x256xf32>
    %185 = vector.broadcast %183 : vector<2x1x256xf32> to vector<2x2x256xf32>
    %186 = arith.mulf %184, %185 : vector<2x2x256xf32>
    %187 = arith.addf %179, %186 : vector<2x2x256xf32>
    %188 = vector.extract_strided_slice %4 {offsets = [1, 0, 512], sizes = [1, 2, 256], strides = [1, 1, 1]} : vector<4x2x1280xf32> to vector<1x2x256xf32>
    %189 = vector.shape_cast %188 : vector<1x2x256xf32> to vector<2x256xf32>
    %c128_i32_35 = arith.constant 128 : i32
    %190 = tpu.dynamic_rotate %189 by %c128_i32_35 dim 1 : vector<2x256xf32>, i32 -> vector<2x256xf32>
    %191 = vector.shape_cast %189 : vector<2x256xf32> to vector<1x2x256xf32>
    %192 = vector.extract_strided_slice %169 {offsets = [0, 1, 0, 0], sizes = [1, 1, 2, 256], strides = [1, 1, 1, 1]} : vector<2x4x2x256xf32> to vector<1x1x2x256xf32>
    %193 = vector.shape_cast %192 : vector<1x1x2x256xf32> to vector<2x256xf32>
    %194 = vector.shape_cast %193 : vector<2x256xf32> to vector<2x1x256xf32>
    %195 = vector.broadcast %191 : vector<1x2x256xf32> to vector<2x2x256xf32>
    %196 = vector.broadcast %194 : vector<2x1x256xf32> to vector<2x2x256xf32>
    %197 = arith.mulf %195, %196 : vector<2x2x256xf32>
    %198 = vector.shape_cast %190 : vector<2x256xf32> to vector<1x2x256xf32>
    %199 = vector.extract_strided_slice %169 {offsets = [1, 1, 0, 0], sizes = [1, 1, 2, 256], strides = [1, 1, 1, 1]} : vector<2x4x2x256xf32> to vector<1x1x2x256xf32>
    %200 = vector.shape_cast %199 : vector<1x1x2x256xf32> to vector<2x256xf32>
    %201 = vector.shape_cast %200 : vector<2x256xf32> to vector<2x1x256xf32>
    %202 = vector.broadcast %198 : vector<1x2x256xf32> to vector<2x2x256xf32>
    %203 = vector.broadcast %201 : vector<2x1x256xf32> to vector<2x2x256xf32>
    %204 = arith.mulf %202, %203 : vector<2x2x256xf32>
    %205 = arith.addf %197, %204 : vector<2x2x256xf32>
    %206 = arith.addf %187, %205 : vector<2x2x256xf32>
    %207 = vector.extract_strided_slice %4 {offsets = [2, 0, 512], sizes = [1, 2, 256], strides = [1, 1, 1]} : vector<4x2x1280xf32> to vector<1x2x256xf32>
    %208 = vector.shape_cast %207 : vector<1x2x256xf32> to vector<2x256xf32>
    %c128_i32_36 = arith.constant 128 : i32
    %209 = tpu.dynamic_rotate %208 by %c128_i32_36 dim 1 : vector<2x256xf32>, i32 -> vector<2x256xf32>
    %210 = vector.shape_cast %208 : vector<2x256xf32> to vector<1x2x256xf32>
    %211 = vector.extract_strided_slice %169 {offsets = [0, 2, 0, 0], sizes = [1, 1, 2, 256], strides = [1, 1, 1, 1]} : vector<2x4x2x256xf32> to vector<1x1x2x256xf32>
    %212 = vector.shape_cast %211 : vector<1x1x2x256xf32> to vector<2x256xf32>
    %213 = vector.shape_cast %212 : vector<2x256xf32> to vector<2x1x256xf32>
    %214 = vector.broadcast %210 : vector<1x2x256xf32> to vector<2x2x256xf32>
    %215 = vector.broadcast %213 : vector<2x1x256xf32> to vector<2x2x256xf32>
    %216 = arith.mulf %214, %215 : vector<2x2x256xf32>
    %217 = vector.shape_cast %209 : vector<2x256xf32> to vector<1x2x256xf32>
    %218 = vector.extract_strided_slice %169 {offsets = [1, 2, 0, 0], sizes = [1, 1, 2, 256], strides = [1, 1, 1, 1]} : vector<2x4x2x256xf32> to vector<1x1x2x256xf32>
    %219 = vector.shape_cast %218 : vector<1x1x2x256xf32> to vector<2x256xf32>
    %220 = vector.shape_cast %219 : vector<2x256xf32> to vector<2x1x256xf32>
    %221 = vector.broadcast %217 : vector<1x2x256xf32> to vector<2x2x256xf32>
    %222 = vector.broadcast %220 : vector<2x1x256xf32> to vector<2x2x256xf32>
    %223 = arith.mulf %221, %222 : vector<2x2x256xf32>
    %224 = arith.addf %216, %223 : vector<2x2x256xf32>
    %225 = arith.addf %206, %224 : vector<2x2x256xf32>
    %226 = vector.extract_strided_slice %4 {offsets = [3, 0, 512], sizes = [1, 2, 256], strides = [1, 1, 1]} : vector<4x2x1280xf32> to vector<1x2x256xf32>
    %227 = vector.shape_cast %226 : vector<1x2x256xf32> to vector<2x256xf32>
    %c128_i32_37 = arith.constant 128 : i32
    %228 = tpu.dynamic_rotate %227 by %c128_i32_37 dim 1 : vector<2x256xf32>, i32 -> vector<2x256xf32>
    %229 = vector.shape_cast %227 : vector<2x256xf32> to vector<1x2x256xf32>
    %230 = vector.extract_strided_slice %169 {offsets = [0, 3, 0, 0], sizes = [1, 1, 2, 256], strides = [1, 1, 1, 1]} : vector<2x4x2x256xf32> to vector<1x1x2x256xf32>
    %231 = vector.shape_cast %230 : vector<1x1x2x256xf32> to vector<2x256xf32>
    %232 = vector.shape_cast %231 : vector<2x256xf32> to vector<2x1x256xf32>
    %233 = vector.broadcast %229 : vector<1x2x256xf32> to vector<2x2x256xf32>
    %234 = vector.broadcast %232 : vector<2x1x256xf32> to vector<2x2x256xf32>
    %235 = arith.mulf %233, %234 : vector<2x2x256xf32>
    %236 = vector.shape_cast %228 : vector<2x256xf32> to vector<1x2x256xf32>
    %237 = vector.extract_strided_slice %169 {offsets = [1, 3, 0, 0], sizes = [1, 1, 2, 256], strides = [1, 1, 1, 1]} : vector<2x4x2x256xf32> to vector<1x1x2x256xf32>
    %238 = vector.shape_cast %237 : vector<1x1x2x256xf32> to vector<2x256xf32>
    %239 = vector.shape_cast %238 : vector<2x256xf32> to vector<2x1x256xf32>
    %240 = vector.broadcast %236 : vector<1x2x256xf32> to vector<2x2x256xf32>
    %241 = vector.broadcast %239 : vector<2x1x256xf32> to vector<2x2x256xf32>
    %242 = arith.mulf %240, %241 : vector<2x2x256xf32>
    %243 = arith.addf %235, %242 : vector<2x2x256xf32>
    %244 = arith.addf %225, %243 : vector<2x2x256xf32>
    %245 = vector.shape_cast %244 : vector<2x2x256xf32> to vector<4x256xf32>
    %246 = arith.truncf %245 : vector<4x256xf32> to vector<4x256xbf16>
    %c0_38 = arith.constant 0 : index
    %c0_39 = arith.constant 0 : index
    %247 = vector.load %arg8[%c0_38, %c0_39] : memref<256x128xbf16, #tpu.memory_space<vmem>>, vector<256x128xbf16>
    %cst_40 = arith.constant dense<0.000000e+00> : vector<4x128xf32>
    %248 = tpu.matmul %246, %247, %cst_40 {dimension_numbers = #tpu.dot_dimension_numbers<[1], [0], [0], [1], [0, 0, 1, 1], [], []>} : vector<4x256xbf16>, vector<256x128xbf16>, vector<4x128xf32> -> vector<4x128xf32>
    %249 = vector.shape_cast %248 : vector<4x128xf32> to vector<2x2x128xf32>
    %c4 = arith.constant 4 : index
    %c0_41 = arith.constant 0 : index
    %c0_42 = arith.constant 0 : index
    %250 = vector.load %arg13[%c4, %c0_41, %c0_42] : memref<10x2x128xf32, #tpu.memory_space<vmem>>, vector<2x2x128xf32>
    tpu.vector_store %arg13[%c4, %c0_41, %c0_42], %249 {strides = array<i32>} : memref<10x2x128xf32, #tpu.memory_space<vmem>>, vector<2x2x128xf32>,
    %c0_43 = arith.constant 0 : index
    %c0_44 = arith.constant 0 : index
    %c0_45 = arith.constant 0 : index
    %c0_46 = arith.constant 0 : index
    %251 = vector.load %arg9[%c0_43, %c0_44, %c0_45, %c0_46] : memref<2x4x2x256xf32, #tpu.memory_space<vmem>>, vector<2x4x2x256xf32>
    %252 = vector.extract_strided_slice %4 {offsets = [0, 0, 768], sizes = [1, 2, 256], strides = [1, 1, 1]} : vector<4x2x1280xf32> to vector<1x2x256xf32>
    %253 = vector.shape_cast %252 : vector<1x2x256xf32> to vector<2x256xf32>
    %c128_i32_47 = arith.constant 128 : i32
    %254 = tpu.dynamic_rotate %253 by %c128_i32_47 dim 1 : vector<2x256xf32>, i32 -> vector<2x256xf32>
    %255 = vector.shape_cast %253 : vector<2x256xf32> to vector<1x2x256xf32>
    %256 = vector.extract_strided_slice %251 {offsets = [0, 0, 0, 0], sizes = [1, 1, 2, 256], strides = [1, 1, 1, 1]} : vector<2x4x2x256xf32> to vector<1x1x2x256xf32>
    %257 = vector.shape_cast %256 : vector<1x1x2x256xf32> to vector<2x256xf32>
    %258 = vector.shape_cast %257 : vector<2x256xf32> to vector<2x1x256xf32>
    %259 = vector.broadcast %255 : vector<1x2x256xf32> to vector<2x2x256xf32>
    %260 = vector.broadcast %258 : vector<2x1x256xf32> to vector<2x2x256xf32>
    %261 = arith.mulf %259, %260 : vector<2x2x256xf32>
    %262 = vector.shape_cast %254 : vector<2x256xf32> to vector<1x2x256xf32>
    %263 = vector.extract_strided_slice %251 {offsets = [1, 0, 0, 0], sizes = [1, 1, 2, 256], strides = [1, 1, 1, 1]} : vector<2x4x2x256xf32> to vector<1x1x2x256xf32>
    %264 = vector.shape_cast %263 : vector<1x1x2x256xf32> to vector<2x256xf32>
    %265 = vector.shape_cast %264 : vector<2x256xf32> to vector<2x1x256xf32>
    %266 = vector.broadcast %262 : vector<1x2x256xf32> to vector<2x2x256xf32>
    %267 = vector.broadcast %265 : vector<2x1x256xf32> to vector<2x2x256xf32>
    %268 = arith.mulf %266, %267 : vector<2x2x256xf32>
    %269 = arith.addf %261, %268 : vector<2x2x256xf32>
    %270 = vector.extract_strided_slice %4 {offsets = [1, 0, 768], sizes = [1, 2, 256], strides = [1, 1, 1]} : vector<4x2x1280xf32> to vector<1x2x256xf32>
    %271 = vector.shape_cast %270 : vector<1x2x256xf32> to vector<2x256xf32>
    %c128_i32_48 = arith.constant 128 : i32
    %272 = tpu.dynamic_rotate %271 by %c128_i32_48 dim 1 : vector<2x256xf32>, i32 -> vector<2x256xf32>
    %273 = vector.shape_cast %271 : vector<2x256xf32> to vector<1x2x256xf32>
    %274 = vector.extract_strided_slice %251 {offsets = [0, 1, 0, 0], sizes = [1, 1, 2, 256], strides = [1, 1, 1, 1]} : vector<2x4x2x256xf32> to vector<1x1x2x256xf32>
    %275 = vector.shape_cast %274 : vector<1x1x2x256xf32> to vector<2x256xf32>
    %276 = vector.shape_cast %275 : vector<2x256xf32> to vector<2x1x256xf32>
    %277 = vector.broadcast %273 : vector<1x2x256xf32> to vector<2x2x256xf32>
    %278 = vector.broadcast %276 : vector<2x1x256xf32> to vector<2x2x256xf32>
    %279 = arith.mulf %277, %278 : vector<2x2x256xf32>
    %280 = vector.shape_cast %272 : vector<2x256xf32> to vector<1x2x256xf32>
    %281 = vector.extract_strided_slice %251 {offsets = [1, 1, 0, 0], sizes = [1, 1, 2, 256], strides = [1, 1, 1, 1]} : vector<2x4x2x256xf32> to vector<1x1x2x256xf32>
    %282 = vector.shape_cast %281 : vector<1x1x2x256xf32> to vector<2x256xf32>
    %283 = vector.shape_cast %282 : vector<2x256xf32> to vector<2x1x256xf32>
    %284 = vector.broadcast %280 : vector<1x2x256xf32> to vector<2x2x256xf32>
    %285 = vector.broadcast %283 : vector<2x1x256xf32> to vector<2x2x256xf32>
    %286 = arith.mulf %284, %285 : vector<2x2x256xf32>
    %287 = arith.addf %279, %286 : vector<2x2x256xf32>
    %288 = arith.addf %269, %287 : vector<2x2x256xf32>
    %289 = vector.extract_strided_slice %4 {offsets = [2, 0, 768], sizes = [1, 2, 256], strides = [1, 1, 1]} : vector<4x2x1280xf32> to vector<1x2x256xf32>
    %290 = vector.shape_cast %289 : vector<1x2x256xf32> to vector<2x256xf32>
    %c128_i32_49 = arith.constant 128 : i32
    %291 = tpu.dynamic_rotate %290 by %c128_i32_49 dim 1 : vector<2x256xf32>, i32 -> vector<2x256xf32>
    %292 = vector.shape_cast %290 : vector<2x256xf32> to vector<1x2x256xf32>
    %293 = vector.extract_strided_slice %251 {offsets = [0, 2, 0, 0], sizes = [1, 1, 2, 256], strides = [1, 1, 1, 1]} : vector<2x4x2x256xf32> to vector<1x1x2x256xf32>
    %294 = vector.shape_cast %293 : vector<1x1x2x256xf32> to vector<2x256xf32>
    %295 = vector.shape_cast %294 : vector<2x256xf32> to vector<2x1x256xf32>
    %296 = vector.broadcast %292 : vector<1x2x256xf32> to vector<2x2x256xf32>
    %297 = vector.broadcast %295 : vector<2x1x256xf32> to vector<2x2x256xf32>
    %298 = arith.mulf %296, %297 : vector<2x2x256xf32>
    %299 = vector.shape_cast %291 : vector<2x256xf32> to vector<1x2x256xf32>
    %300 = vector.extract_strided_slice %251 {offsets = [1, 2, 0, 0], sizes = [1, 1, 2, 256], strides = [1, 1, 1, 1]} : vector<2x4x2x256xf32> to vector<1x1x2x256xf32>
    %301 = vector.shape_cast %300 : vector<1x1x2x256xf32> to vector<2x256xf32>
    %302 = vector.shape_cast %301 : vector<2x256xf32> to vector<2x1x256xf32>
    %303 = vector.broadcast %299 : vector<1x2x256xf32> to vector<2x2x256xf32>
    %304 = vector.broadcast %302 : vector<2x1x256xf32> to vector<2x2x256xf32>
    %305 = arith.mulf %303, %304 : vector<2x2x256xf32>
    %306 = arith.addf %298, %305 : vector<2x2x256xf32>
    %307 = arith.addf %288, %306 : vector<2x2x256xf32>
    %308 = vector.extract_strided_slice %4 {offsets = [3, 0, 768], sizes = [1, 2, 256], strides = [1, 1, 1]} : vector<4x2x1280xf32> to vector<1x2x256xf32>
    %309 = vector.shape_cast %308 : vector<1x2x256xf32> to vector<2x256xf32>
    %c128_i32_50 = arith.constant 128 : i32
    %310 = tpu.dynamic_rotate %309 by %c128_i32_50 dim 1 : vector<2x256xf32>, i32 -> vector<2x256xf32>
    %311 = vector.shape_cast %309 : vector<2x256xf32> to vector<1x2x256xf32>
    %312 = vector.extract_strided_slice %251 {offsets = [0, 3, 0, 0], sizes = [1, 1, 2, 256], strides = [1, 1, 1, 1]} : vector<2x4x2x256xf32> to vector<1x1x2x256xf32>
    %313 = vector.shape_cast %312 : vector<1x1x2x256xf32> to vector<2x256xf32>
    %314 = vector.shape_cast %313 : vector<2x256xf32> to vector<2x1x256xf32>
    %315 = vector.broadcast %311 : vector<1x2x256xf32> to vector<2x2x256xf32>
    %316 = vector.broadcast %314 : vector<2x1x256xf32> to vector<2x2x256xf32>
    %317 = arith.mulf %315, %316 : vector<2x2x256xf32>
    %318 = vector.shape_cast %310 : vector<2x256xf32> to vector<1x2x256xf32>
    %319 = vector.extract_strided_slice %251 {offsets = [1, 3, 0, 0], sizes = [1, 1, 2, 256], strides = [1, 1, 1, 1]} : vector<2x4x2x256xf32> to vector<1x1x2x256xf32>
    %320 = vector.shape_cast %319 : vector<1x1x2x256xf32> to vector<2x256xf32>
    %321 = vector.shape_cast %320 : vector<2x256xf32> to vector<2x1x256xf32>
    %322 = vector.broadcast %318 : vector<1x2x256xf32> to vector<2x2x256xf32>
    %323 = vector.broadcast %321 : vector<2x1x256xf32> to vector<2x2x256xf32>
    %324 = arith.mulf %322, %323 : vector<2x2x256xf32>
    %325 = arith.addf %317, %324 : vector<2x2x256xf32>
    %326 = arith.addf %307, %325 : vector<2x2x256xf32>
    %327 = vector.shape_cast %326 : vector<2x2x256xf32> to vector<4x256xf32>
    %328 = arith.truncf %327 : vector<4x256xf32> to vector<4x256xbf16>
    %c0_51 = arith.constant 0 : index
    %c0_52 = arith.constant 0 : index
    %329 = vector.load %arg10[%c0_51, %c0_52] : memref<256x128xbf16, #tpu.memory_space<vmem>>, vector<256x128xbf16>
    %cst_53 = arith.constant dense<0.000000e+00> : vector<4x128xf32>
    %330 = tpu.matmul %328, %329, %cst_53 {dimension_numbers = #tpu.dot_dimension_numbers<[1], [0], [0], [1], [0, 0, 1, 1], [], []>} : vector<4x256xbf16>, vector<256x128xbf16>, vector<4x128xf32> -> vector<4x128xf32>
    %331 = vector.shape_cast %330 : vector<4x128xf32> to vector<2x2x128xf32>
    %c6 = arith.constant 6 : index
    %c0_54 = arith.constant 0 : index
    %c0_55 = arith.constant 0 : index
    %332 = vector.load %arg13[%c6, %c0_54, %c0_55] : memref<10x2x128xf32, #tpu.memory_space<vmem>>, vector<2x2x128xf32>
    tpu.vector_store %arg13[%c6, %c0_54, %c0_55], %331 {strides = array<i32>} : memref<10x2x128xf32, #tpu.memory_space<vmem>>, vector<2x2x128xf32>,
    %c0_56 = arith.constant 0 : index
    %c0_57 = arith.constant 0 : index
    %c0_58 = arith.constant 0 : index
    %c0_59 = arith.constant 0 : index
    %333 = vector.load %arg11[%c0_56, %c0_57, %c0_58, %c0_59] : memref<2x4x2x256xf32, #tpu.memory_space<vmem>>, vector<2x4x2x256xf32>
    %334 = vector.extract_strided_slice %4 {offsets = [0, 0, 1024], sizes = [1, 2, 256], strides = [1, 1, 1]} : vector<4x2x1280xf32> to vector<1x2x256xf32>
    %335 = vector.shape_cast %334 : vector<1x2x256xf32> to vector<2x256xf32>
    %c128_i32_60 = arith.constant 128 : i32
    %336 = tpu.dynamic_rotate %335 by %c128_i32_60 dim 1 : vector<2x256xf32>, i32 -> vector<2x256xf32>
    %337 = vector.shape_cast %335 : vector<2x256xf32> to vector<1x2x256xf32>
    %338 = vector.extract_strided_slice %333 {offsets = [0, 0, 0, 0], sizes = [1, 1, 2, 256], strides = [1, 1, 1, 1]} : vector<2x4x2x256xf32> to vector<1x1x2x256xf32>
    %339 = vector.shape_cast %338 : vector<1x1x2x256xf32> to vector<2x256xf32>
    %340 = vector.shape_cast %339 : vector<2x256xf32> to vector<2x1x256xf32>
    %341 = vector.broadcast %337 : vector<1x2x256xf32> to vector<2x2x256xf32>
    %342 = vector.broadcast %340 : vector<2x1x256xf32> to vector<2x2x256xf32>
    %343 = arith.mulf %341, %342 : vector<2x2x256xf32>
    %344 = vector.shape_cast %336 : vector<2x256xf32> to vector<1x2x256xf32>
    %345 = vector.extract_strided_slice %333 {offsets = [1, 0, 0, 0], sizes = [1, 1, 2, 256], strides = [1, 1, 1, 1]} : vector<2x4x2x256xf32> to vector<1x1x2x256xf32>
    %346 = vector.shape_cast %345 : vector<1x1x2x256xf32> to vector<2x256xf32>
    %347 = vector.shape_cast %346 : vector<2x256xf32> to vector<2x1x256xf32>
    %348 = vector.broadcast %344 : vector<1x2x256xf32> to vector<2x2x256xf32>
    %349 = vector.broadcast %347 : vector<2x1x256xf32> to vector<2x2x256xf32>
    %350 = arith.mulf %348, %349 : vector<2x2x256xf32>
    %351 = arith.addf %343, %350 : vector<2x2x256xf32>
    %352 = vector.extract_strided_slice %4 {offsets = [1, 0, 1024], sizes = [1, 2, 256], strides = [1, 1, 1]} : vector<4x2x1280xf32> to vector<1x2x256xf32>
    %353 = vector.shape_cast %352 : vector<1x2x256xf32> to vector<2x256xf32>
    %c128_i32_61 = arith.constant 128 : i32
    %354 = tpu.dynamic_rotate %353 by %c128_i32_61 dim 1 : vector<2x256xf32>, i32 -> vector<2x256xf32>
    %355 = vector.shape_cast %353 : vector<2x256xf32> to vector<1x2x256xf32>
    %356 = vector.extract_strided_slice %333 {offsets = [0, 1, 0, 0], sizes = [1, 1, 2, 256], strides = [1, 1, 1, 1]} : vector<2x4x2x256xf32> to vector<1x1x2x256xf32>
    %357 = vector.shape_cast %356 : vector<1x1x2x256xf32> to vector<2x256xf32>
    %358 = vector.shape_cast %357 : vector<2x256xf32> to vector<2x1x256xf32>
    %359 = vector.broadcast %355 : vector<1x2x256xf32> to vector<2x2x256xf32>
    %360 = vector.broadcast %358 : vector<2x1x256xf32> to vector<2x2x256xf32>
    %361 = arith.mulf %359, %360 : vector<2x2x256xf32>
    %362 = vector.shape_cast %354 : vector<2x256xf32> to vector<1x2x256xf32>
    %363 = vector.extract_strided_slice %333 {offsets = [1, 1, 0, 0], sizes = [1, 1, 2, 256], strides = [1, 1, 1, 1]} : vector<2x4x2x256xf32> to vector<1x1x2x256xf32>
    %364 = vector.shape_cast %363 : vector<1x1x2x256xf32> to vector<2x256xf32>
    %365 = vector.shape_cast %364 : vector<2x256xf32> to vector<2x1x256xf32>
    %366 = vector.broadcast %362 : vector<1x2x256xf32> to vector<2x2x256xf32>
    %367 = vector.broadcast %365 : vector<2x1x256xf32> to vector<2x2x256xf32>
    %368 = arith.mulf %366, %367 : vector<2x2x256xf32>
    %369 = arith.addf %361, %368 : vector<2x2x256xf32>
    %370 = arith.addf %351, %369 : vector<2x2x256xf32>
    %371 = vector.extract_strided_slice %4 {offsets = [2, 0, 1024], sizes = [1, 2, 256], strides = [1, 1, 1]} : vector<4x2x1280xf32> to vector<1x2x256xf32>
    %372 = vector.shape_cast %371 : vector<1x2x256xf32> to vector<2x256xf32>
    %c128_i32_62 = arith.constant 128 : i32
    %373 = tpu.dynamic_rotate %372 by %c128_i32_62 dim 1 : vector<2x256xf32>, i32 -> vector<2x256xf32>
    %374 = vector.shape_cast %372 : vector<2x256xf32> to vector<1x2x256xf32>
    %375 = vector.extract_strided_slice %333 {offsets = [0, 2, 0, 0], sizes = [1, 1, 2, 256], strides = [1, 1, 1, 1]} : vector<2x4x2x256xf32> to vector<1x1x2x256xf32>
    %376 = vector.shape_cast %375 : vector<1x1x2x256xf32> to vector<2x256xf32>
    %377 = vector.shape_cast %376 : vector<2x256xf32> to vector<2x1x256xf32>
    %378 = vector.broadcast %374 : vector<1x2x256xf32> to vector<2x2x256xf32>
    %379 = vector.broadcast %377 : vector<2x1x256xf32> to vector<2x2x256xf32>
    %380 = arith.mulf %378, %379 : vector<2x2x256xf32>
    %381 = vector.shape_cast %373 : vector<2x256xf32> to vector<1x2x256xf32>
    %382 = vector.extract_strided_slice %333 {offsets = [1, 2, 0, 0], sizes = [1, 1, 2, 256], strides = [1, 1, 1, 1]} : vector<2x4x2x256xf32> to vector<1x1x2x256xf32>
    %383 = vector.shape_cast %382 : vector<1x1x2x256xf32> to vector<2x256xf32>
    %384 = vector.shape_cast %383 : vector<2x256xf32> to vector<2x1x256xf32>
    %385 = vector.broadcast %381 : vector<1x2x256xf32> to vector<2x2x256xf32>
    %386 = vector.broadcast %384 : vector<2x1x256xf32> to vector<2x2x256xf32>
    %387 = arith.mulf %385, %386 : vector<2x2x256xf32>
    %388 = arith.addf %380, %387 : vector<2x2x256xf32>
    %389 = arith.addf %370, %388 : vector<2x2x256xf32>
    %390 = vector.extract_strided_slice %4 {offsets = [3, 0, 1024], sizes = [1, 2, 256], strides = [1, 1, 1]} : vector<4x2x1280xf32> to vector<1x2x256xf32>
    %391 = vector.shape_cast %390 : vector<1x2x256xf32> to vector<2x256xf32>
    %c128_i32_63 = arith.constant 128 : i32
    %392 = tpu.dynamic_rotate %391 by %c128_i32_63 dim 1 : vector<2x256xf32>, i32 -> vector<2x256xf32>
    %393 = vector.shape_cast %391 : vector<2x256xf32> to vector<1x2x256xf32>
    %394 = vector.extract_strided_slice %333 {offsets = [0, 3, 0, 0], sizes = [1, 1, 2, 256], strides = [1, 1, 1, 1]} : vector<2x4x2x256xf32> to vector<1x1x2x256xf32>
    %395 = vector.shape_cast %394 : vector<1x1x2x256xf32> to vector<2x256xf32>
    %396 = vector.shape_cast %395 : vector<2x256xf32> to vector<2x1x256xf32>
    %397 = vector.broadcast %393 : vector<1x2x256xf32> to vector<2x2x256xf32>
    %398 = vector.broadcast %396 : vector<2x1x256xf32> to vector<2x2x256xf32>
    %399 = arith.mulf %397, %398 : vector<2x2x256xf32>
    %400 = vector.shape_cast %392 : vector<2x256xf32> to vector<1x2x256xf32>
    %401 = vector.extract_strided_slice %333 {offsets = [1, 3, 0, 0], sizes = [1, 1, 2, 256], strides = [1, 1, 1, 1]} : vector<2x4x2x256xf32> to vector<1x1x2x256xf32>
    %402 = vector.shape_cast %401 : vector<1x1x2x256xf32> to vector<2x256xf32>
    %403 = vector.shape_cast %402 : vector<2x256xf32> to vector<2x1x256xf32>
    %404 = vector.broadcast %400 : vector<1x2x256xf32> to vector<2x2x256xf32>
    %405 = vector.broadcast %403 : vector<2x1x256xf32> to vector<2x2x256xf32>
    %406 = arith.mulf %404, %405 : vector<2x2x256xf32>
    %407 = arith.addf %399, %406 : vector<2x2x256xf32>
    %408 = arith.addf %389, %407 : vector<2x2x256xf32>
    %409 = vector.shape_cast %408 : vector<2x2x256xf32> to vector<4x256xf32>
    %410 = arith.truncf %409 : vector<4x256xf32> to vector<4x256xbf16>
    %c0_64 = arith.constant 0 : index
    %c0_65 = arith.constant 0 : index
    %411 = vector.load %arg12[%c0_64, %c0_65] : memref<256x128xbf16, #tpu.memory_space<vmem>>, vector<256x128xbf16>
    %cst_66 = arith.constant dense<0.000000e+00> : vector<4x128xf32>
    %412 = tpu.matmul %410, %411, %cst_66 {dimension_numbers = #tpu.dot_dimension_numbers<[1], [0], [0], [1], [0, 0, 1, 1], [], []>} : vector<4x256xbf16>, vector<256x128xbf16>, vector<4x128xf32> -> vector<4x128xf32>
    %413 = vector.shape_cast %412 : vector<4x128xf32> to vector<2x2x128xf32>
    %c8 = arith.constant 8 : index
    %c0_67 = arith.constant 0 : index
    %c0_68 = arith.constant 0 : index
    %414 = vector.load %arg13[%c8, %c0_67, %c0_68] : memref<10x2x128xf32, #tpu.memory_space<vmem>>, vector<2x2x128xf32>
    tpu.vector_store %arg13[%c8, %c0_67, %c0_68], %413 {strides = array<i32>} : memref<10x2x128xf32, #tpu.memory_space<vmem>>, vector<2x2x128xf32>,
    return
  }
  func.func @transform_0(%arg0: i32) -> (i32, i32, i32) {
    %c0_i32 = arith.constant 0 : i32
    %c0_i32_0 = arith.constant 0 : i32
    %c0_i32_1 = arith.constant 0 : i32
    return %c0_i32, %arg0, %c0_i32_0 : i32, i32, i32
  }
  func.func @transform_1(%arg0: i32) -> (i32, i32) {
    %c0_i32 = arith.constant 0 : i32
    %c0_i32_0 = arith.constant 0 : i32
    %c0_i32_1 = arith.constant 0 : i32
    return %c0_i32, %c0_i32_0 : i32, i32
  }
  func.func @transform_2(%arg0: i32) -> (i32, i32, i32, i32) {
    %c0_i32 = arith.constant 0 : i32
    %c0_i32_0 = arith.constant 0 : i32
    %c0_i32_1 = arith.constant 0 : i32
    %c0_i32_2 = arith.constant 0 : i32
    %c0_i32_3 = arith.constant 0 : i32
    return %c0_i32, %c0_i32_0, %c0_i32_1, %c0_i32_2 : i32, i32, i32, i32
  }
  func.func @transform_3(%arg0: i32) -> (i32, i32) {
    %c0_i32 = arith.constant 0 : i32
    %c0_i32_0 = arith.constant 0 : i32
    %c0_i32_1 = arith.constant 0 : i32
    return %c0_i32, %c0_i32_0 : i32, i32
  }
  func.func @transform_4(%arg0: i32) -> (i32, i32, i32, i32) {
    %c0_i32 = arith.constant 0 : i32
    %c0_i32_0 = arith.constant 0 : i32
    %c0_i32_1 = arith.constant 0 : i32
    %c0_i32_2 = arith.constant 0 : i32
    %c0_i32_3 = arith.constant 0 : i32
    return %c0_i32, %c0_i32_0, %c0_i32_1, %c0_i32_2 : i32, i32, i32, i32
  }
  func.func @transform_5(%arg0: i32) -> (i32, i32) {
    %c0_i32 = arith.constant 0 : i32
    %c0_i32_0 = arith.constant 0 : i32
    %c0_i32_1 = arith.constant 0 : i32
    return %c0_i32, %c0_i32_0 : i32, i32
  }
  func.func @transform_6(%arg0: i32) -> (i32, i32, i32, i32) {
    %c0_i32 = arith.constant 0 : i32
    %c0_i32_0 = arith.constant 0 : i32
    %c0_i32_1 = arith.constant 0 : i32
    %c0_i32_2 = arith.constant 0 : i32
    %c0_i32_3 = arith.constant 0 : i32
    return %c0_i32, %c0_i32_0, %c0_i32_1, %c0_i32_2 : i32, i32, i32, i32
  }
  func.func @transform_7(%arg0: i32) -> (i32, i32) {
    %c0_i32 = arith.constant 0 : i32
    %c0_i32_0 = arith.constant 0 : i32
    %c0_i32_1 = arith.constant 0 : i32
    return %c0_i32, %c0_i32_0 : i32, i32
  }
  func.func @transform_8(%arg0: i32) -> (i32, i32, i32, i32) {
    %c0_i32 = arith.constant 0 : i32
    %c0_i32_0 = arith.constant 0 : i32
    %c0_i32_1 = arith.constant 0 : i32
    %c0_i32_2 = arith.constant 0 : i32
    %c0_i32_3 = arith.constant 0 : i32
    return %c0_i32, %c0_i32_0, %c0_i32_1, %c0_i32_2 : i32, i32, i32, i32
  }
  func.func @transform_9(%arg0: i32) -> (i32, i32) {
    %c0_i32 = arith.constant 0 : i32
    %c0_i32_0 = arith.constant 0 : i32
    %c0_i32_1 = arith.constant 0 : i32
    return %c0_i32, %c0_i32_0 : i32, i32
  }
  func.func @transform_10(%arg0: i32) -> (i32, i32, i32, i32) {
    %c0_i32 = arith.constant 0 : i32
    %c0_i32_0 = arith.constant 0 : i32
    %c0_i32_1 = arith.constant 0 : i32
    %c0_i32_2 = arith.constant 0 : i32
    %c0_i32_3 = arith.constant 0 : i32
    return %c0_i32, %c0_i32_0, %c0_i32_1, %c0_i32_2 : i32, i32, i32, i32
  }
  func.func @transform_11(%arg0: i32) -> (i32, i32) {
    %c0_i32 = arith.constant 0 : i32
    %c0_i32_0 = arith.constant 0 : i32
    %c0_i32_1 = arith.constant 0 : i32
    return %c0_i32, %c0_i32_0 : i32, i32
  }
  func.func @transform_12(%arg0: i32) -> (i32, i32, i32) {
    %c0_i32 = arith.constant 0 : i32
    %c0_i32_0 = arith.constant 0 : i32
    %c0_i32_1 = arith.constant 0 : i32
    return %c0_i32, %arg0, %c0_i32_0 : i32, i32, i32
  }
}

module attributes {stable_mosaic.version = 11 : i64} {
  func.func @kernel(%arg0: i32, %arg1: memref<4x2x64xbf16, #tpu.memory_space<vmem>>, %arg2: memref<64x1280xbf16, #tpu.memory_space<vmem>>, %arg3: memref<2x4x2x256xf32, #tpu.memory_space<vmem>>, %arg4: memref<256x128xbf16, #tpu.memory_space<vmem>>, %arg5: memref<2x4x2x256xf32, #tpu.memory_space<vmem>>, %arg6: memref<256x128xbf16, #tpu.memory_space<vmem>>, %arg7: memref<2x4x2x256xf32, #tpu.memory_space<vmem>>, %arg8: memref<256x128xbf16, #tpu.memory_space<vmem>>, %arg9: memref<2x4x2x256xf32, #tpu.memory_space<vmem>>, %arg10: memref<256x128xbf16, #tpu.memory_space<vmem>>, %arg11: memref<2x4x2x256xf32, #tpu.memory_space<vmem>>, %arg12: memref<256x128xbf16, #tpu.memory_space<vmem>>, %arg13: memref<10x2x128xf32, #tpu.memory_space<vmem>>) attributes {dimension_semantics = [#tpu.dimension_semantics<parallel>], iteration_bounds = array<i64: 1>, scalar_prefetch = 0 : i64, scratch_operands = 0 : i64, tpu.core_type = #tpu.core_type<tc>, window_params = [{transform_indices = @transform_0, window_bounds = array<i64: 4, 2, 64>}, {pipeline_mode = #tpu.pipeline_mode<synchronous>, transform_indices = @transform_1, window_bounds = array<i64: 64, 1280>}, {pipeline_mode = #tpu.pipeline_mode<synchronous>, transform_indices = @transform_2, window_bounds = array<i64: 2, 4, 2, 256>}, {pipeline_mode = #tpu.pipeline_mode<synchronous>, transform_indices = @transform_3, window_bounds = array<i64: 256, 128>}, {pipeline_mode = #tpu.pipeline_mode<synchronous>, transform_indices = @transform_4, window_bounds = array<i64: 2, 4, 2, 256>}, {pipeline_mode = #tpu.pipeline_mode<synchronous>, transform_indices = @transform_5, window_bounds = array<i64: 256, 128>}, {pipeline_mode = #tpu.pipeline_mode<synchronous>, transform_indices = @transform_6, window_bounds = array<i64: 2, 4, 2, 256>}, {pipeline_mode = #tpu.pipeline_mode<synchronous>, transform_indices = @transform_7, window_bounds = array<i64: 256, 128>}, {pipeline_mode = #tpu.pipeline_mode<synchronous>, transform_indices = @transform_8, window_bounds = array<i64: 2, 4, 2, 256>}, {pipeline_mode = #tpu.pipeline_mode<synchronous>, transform_indices = @transform_9, window_bounds = array<i64: 256, 128>}, {pipeline_mode = #tpu.pipeline_mode<synchronous>, transform_indices = @transform_10, window_bounds = array<i64: 2, 4, 2, 256>}, {pipeline_mode = #tpu.pipeline_mode<synchronous>, transform_indices = @transform_11, window_bounds = array<i64: 256, 128>}, {transform_indices = @transform_12, window_bounds = array<i64: 10, 2, 128>}]} {
    %c0 = arith.constant 0 : index
    %c0_0 = arith.constant 0 : index
    %c0_1 = arith.constant 0 : index
    %0 = vector.load %arg1[%c0, %c0_0, %c0_1] : memref<4x2x64xbf16, #tpu.memory_space<vmem>>, vector<4x2x64xbf16>
    %1 = vector.shape_cast %0 : vector<4x2x64xbf16> to vector<8x64xbf16>
    %c0_2 = arith.constant 0 : index
    %c0_3 = arith.constant 0 : index
    %2 = vector.load %arg2[%c0_2, %c0_3] : memref<64x1280xbf16, #tpu.memory_space<vmem>>, vector<64x1280xbf16>
    %cst = arith.constant dense<0.000000e+00> : vector<8x1280xf32>
    %3 = tpu.matmul %1, %2, %cst {dimension_numbers = #tpu.dot_dimension_numbers<[1], [0], [0], [1], [0, 0, 1, 1], [], []>} : vector<8x64xbf16>, vector<64x1280xbf16>, vector<8x1280xf32> -> vector<8x1280xf32>
    %4 = vector.shape_cast %3 : vector<8x1280xf32> to vector<4x2x1280xf32>
    %c0_4 = arith.constant 0 : index
    %c0_5 = arith.constant 0 : index
    %c0_6 = arith.constant 0 : index
    %c0_7 = arith.constant 0 : index
    %5 = vector.load %arg3[%c0_4, %c0_5, %c0_6, %c0_7] : memref<2x4x2x256xf32, #tpu.memory_space<vmem>>, vector<2x4x2x256xf32>
    %6 = vector.extract_strided_slice %4 {offsets = [0, 0, 0], sizes = [1, 2, 256], strides = [1, 1, 1]} : vector<4x2x1280xf32> to vector<1x2x256xf32>
    %7 = vector.shape_cast %6 : vector<1x2x256xf32> to vector<2x256xf32>
    %c128_i32 = arith.constant 128 : i32
    %8 = tpu.dynamic_rotate %7 by %c128_i32 dim 1 : vector<2x256xf32>, i32 -> vector<2x256xf32>
    %9 = vector.shape_cast %7 : vector<2x256xf32> to vector<1x2x256xf32>
    %10 = vector.extract_strided_slice %5 {offsets = [0, 0, 0, 0], sizes = [1, 1, 2, 256], strides = [1, 1, 1, 1]} : vector<2x4x2x256xf32> to vector<1x1x2x256xf32>
    %11 = vector.shape_cast %10 : vector<1x1x2x256xf32> to vector<2x256xf32>
    %12 = vector.shape_cast %11 : vector<2x256xf32> to vector<2x1x256xf32>
    %13 = vector.broadcast %9 : vector<1x2x256xf32> to vector<2x2x256xf32>
    %14 = vector.broadcast %12 : vector<2x1x256xf32> to vector<2x2x256xf32>
    %15 = arith.mulf %13, %14 : vector<2x2x256xf32>
    %16 = vector.shape_cast %8 : vector<2x256xf32> to vector<1x2x256xf32>
    %17 = vector.extract_strided_slice %5 {offsets = [1, 0, 0, 0], sizes = [1, 1, 2, 256], strides = [1, 1, 1, 1]} : vector<2x4x2x256xf32> to vector<1x1x2x256xf32>
    %18 = vector.shape_cast %17 : vector<1x1x2x256xf32> to vector<2x256xf32>
    %19 = vector.shape_cast %18 : vector<2x256xf32> to vector<2x1x256xf32>
    %20 = vector.broadcast %16 : vector<1x2x256xf32> to vector<2x2x256xf32>
    %21 = vector.broadcast %19 : vector<2x1x256xf32> to vector<2x2x256xf32>
    %22 = arith.mulf %20, %21 : vector<2x2x256xf32>
    %23 = arith.addf %15, %22 : vector<2x2x256xf32>
    %24 = vector.extract_strided_slice %4 {offsets = [1, 0, 0], sizes = [1, 2, 256], strides = [1, 1, 1]} : vector<4x2x1280xf32> to vector<1x2x256xf32>
    %25 = vector.shape_cast %24 : vector<1x2x256xf32> to vector<2x256xf32>
    %c128_i32_8 = arith.constant 128 : i32
    %26 = tpu.dynamic_rotate %25 by %c128_i32_8 dim 1 : vector<2x256xf32>, i32 -> vector<2x256xf32>
    %27 = vector.shape_cast %25 : vector<2x256xf32> to vector<1x2x256xf32>
    %28 = vector.extract_strided_slice %5 {offsets = [0, 1, 0, 0], sizes = [1, 1, 2, 256], strides = [1, 1, 1, 1]} : vector<2x4x2x256xf32> to vector<1x1x2x256xf32>
    %29 = vector.shape_cast %28 : vector<1x1x2x256xf32> to vector<2x256xf32>
    %30 = vector.shape_cast %29 : vector<2x256xf32> to vector<2x1x256xf32>
    %31 = vector.broadcast %27 : vector<1x2x256xf32> to vector<2x2x256xf32>
    %32 = vector.broadcast %30 : vector<2x1x256xf32> to vector<2x2x256xf32>
    %33 = arith.mulf %31, %32 : vector<2x2x256xf32>
    %34 = vector.shape_cast %26 : vector<2x256xf32> to vector<1x2x256xf32>
    %35 = vector.extract_strided_slice %5 {offsets = [1, 1, 0, 0], sizes = [1, 1, 2, 256], strides = [1, 1, 1, 1]} : vector<2x4x2x256xf32> to vector<1x1x2x256xf32>
    %36 = vector.shape_cast %35 : vector<1x1x2x256xf32> to vector<2x256xf32>
    %37 = vector.shape_cast %36 : vector<2x256xf32> to vector<2x1x256xf32>
    %38 = vector.broadcast %34 : vector<1x2x256xf32> to vector<2x2x256xf32>
    %39 = vector.broadcast %37 : vector<2x1x256xf32> to vector<2x2x256xf32>
    %40 = arith.mulf %38, %39 : vector<2x2x256xf32>
    %41 = arith.addf %33, %40 : vector<2x2x256xf32>
    %42 = arith.addf %23, %41 : vector<2x2x256xf32>
    %43 = vector.extract_strided_slice %4 {offsets = [2, 0, 0], sizes = [1, 2, 256], strides = [1, 1, 1]} : vector<4x2x1280xf32> to vector<1x2x256xf32>
    %44 = vector.shape_cast %43 : vector<1x2x256xf32> to vector<2x256xf32>
    %c128_i32_9 = arith.constant 128 : i32
    %45 = tpu.dynamic_rotate %44 by %c128_i32_9 dim 1 : vector<2x256xf32>, i32 -> vector<2x256xf32>
    %46 = vector.shape_cast %44 : vector<2x256xf32> to vector<1x2x256xf32>
    %47 = vector.extract_strided_slice %5 {offsets = [0, 2, 0, 0], sizes = [1, 1, 2, 256], strides = [1, 1, 1, 1]} : vector<2x4x2x256xf32> to vector<1x1x2x256xf32>
    %48 = vector.shape_cast %47 : vector<1x1x2x256xf32> to vector<2x256xf32>
    %49 = vector.shape_cast %48 : vector<2x256xf32> to vector<2x1x256xf32>
    %50 = vector.broadcast %46 : vector<1x2x256xf32> to vector<2x2x256xf32>
    %51 = vector.broadcast %49 : vector<2x1x256xf32> to vector<2x2x256xf32>
    %52 = arith.mulf %50, %51 : vector<2x2x256xf32>
    %53 = vector.shape_cast %45 : vector<2x256xf32> to vector<1x2x256xf32>
    %54 = vector.extract_strided_slice %5 {offsets = [1, 2, 0, 0], sizes = [1, 1, 2, 256], strides = [1, 1, 1, 1]} : vector<2x4x2x256xf32> to vector<1x1x2x256xf32>
    %55 = vector.shape_cast %54 : vector<1x1x2x256xf32> to vector<2x256xf32>
    %56 = vector.shape_cast %55 : vector<2x256xf32> to vector<2x1x256xf32>
    %57 = vector.broadcast %53 : vector<1x2x256xf32> to vector<2x2x256xf32>
    %58 = vector.broadcast %56 : vector<2x1x256xf32> to vector<2x2x256xf32>
    %59 = arith.mulf %57, %58 : vector<2x2x256xf32>
    %60 = arith.addf %52, %59 : vector<2x2x256xf32>
    %61 = arith.addf %42, %60 : vector<2x2x256xf32>
    %62 = vector.extract_strided_slice %4 {offsets = [3, 0, 0], sizes = [1, 2, 256], strides = [1, 1, 1]} : vector<4x2x1280xf32> to vector<1x2x256xf32>
    %63 = vector.shape_cast %62 : vector<1x2x256xf32> to vector<2x256xf32>
    %c128_i32_10 = arith.constant 128 : i32
    %64 = tpu.dynamic_rotate %63 by %c128_i32_10 dim 1 : vector<2x256xf32>, i32 -> vector<2x256xf32>
    %65 = vector.shape_cast %63 : vector<2x256xf32> to vector<1x2x256xf32>
    %66 = vector.extract_strided_slice %5 {offsets = [0, 3, 0, 0], sizes = [1, 1, 2, 256], strides = [1, 1, 1, 1]} : vector<2x4x2x256xf32> to vector<1x1x2x256xf32>
    %67 = vector.shape_cast %66 : vector<1x1x2x256xf32> to vector<2x256xf32>
    %68 = vector.shape_cast %67 : vector<2x256xf32> to vector<2x1x256xf32>
    %69 = vector.broadcast %65 : vector<1x2x256xf32> to vector<2x2x256xf32>
    %70 = vector.broadcast %68 : vector<2x1x256xf32> to vector<2x2x256xf32>
    %71 = arith.mulf %69, %70 : vector<2x2x256xf32>
    %72 = vector.shape_cast %64 : vector<2x256xf32> to vector<1x2x256xf32>
    %73 = vector.extract_strided_slice %5 {offsets = [1, 3, 0, 0], sizes = [1, 1, 2, 256], strides = [1, 1, 1, 1]} : vector<2x4x2x256xf32> to vector<1x1x2x256xf32>
    %74 = vector.shape_cast %73 : vector<1x1x2x256xf32> to vector<2x256xf32>
    %75 = vector.shape_cast %74 : vector<2x256xf32> to vector<2x1x256xf32>
    %76 = vector.broadcast %72 : vector<1x2x256xf32> to vector<2x2x256xf32>
    %77 = vector.broadcast %75 : vector<2x1x256xf32> to vector<2x2x256xf32>
    %78 = arith.mulf %76, %77 : vector<2x2x256xf32>
    %79 = arith.addf %71, %78 : vector<2x2x256xf32>
    %80 = arith.addf %61, %79 : vector<2x2x256xf32>
    %81 = vector.shape_cast %80 : vector<2x2x256xf32> to vector<4x256xf32>
    %82 = arith.truncf %81 : vector<4x256xf32> to vector<4x256xbf16>
    %c0_11 = arith.constant 0 : index
    %c0_12 = arith.constant 0 : index
    %83 = vector.load %arg4[%c0_11, %c0_12] : memref<256x128xbf16, #tpu.memory_space<vmem>>, vector<256x128xbf16>
    %cst_13 = arith.constant dense<0.000000e+00> : vector<4x128xf32>
    %84 = tpu.matmul %82, %83, %cst_13 {dimension_numbers = #tpu.dot_dimension_numbers<[1], [0], [0], [1], [0, 0, 1, 1], [], []>} : vector<4x256xbf16>, vector<256x128xbf16>, vector<4x128xf32> -> vector<4x128xf32>
    %85 = vector.shape_cast %84 : vector<4x128xf32> to vector<2x2x128xf32>
    %c0_14 = arith.constant 0 : index
    %c0_15 = arith.constant 0 : index
    %c0_16 = arith.constant 0 : index
    %86 = vector.load %arg13[%c0_14, %c0_15, %c0_16] : memref<10x2x128xf32, #tpu.memory_space<vmem>>, vector<2x2x128xf32>
    tpu.vector_store %arg13[%c0_14, %c0_15, %c0_16], %85 {strides = array<i32>} : memref<10x2x128xf32, #tpu.memory_space<vmem>>, vector<2x2x128xf32>,
    %c0_17 = arith.constant 0 : index
    %c0_18 = arith.constant 0 : index
    %c0_19 = arith.constant 0 : index
    %c0_20 = arith.constant 0 : index
    %87 = vector.load %arg5[%c0_17, %c0_18, %c0_19, %c0_20] : memref<2x4x2x256xf32, #tpu.memory_space<vmem>>, vector<2x4x2x256xf32>
    %88 = vector.extract_strided_slice %4 {offsets = [0, 0, 256], sizes = [1, 2, 256], strides = [1, 1, 1]} : vector<4x2x1280xf32> to vector<1x2x256xf32>
    %89 = vector.shape_cast %88 : vector<1x2x256xf32> to vector<2x256xf32>
    %c128_i32_21 = arith.constant 128 : i32
    %90 = tpu.dynamic_rotate %89 by %c128_i32_21 dim 1 : vector<2x256xf32>, i32 -> vector<2x256xf32>
    %91 = vector.shape_cast %89 : vector<2x256xf32> to vector<1x2x256xf32>
    %92 = vector.extract_strided_slice %87 {offsets = [0, 0, 0, 0], sizes = [1, 1, 2, 256], strides = [1, 1, 1, 1]} : vector<2x4x2x256xf32> to vector<1x1x2x256xf32>
    %93 = vector.shape_cast %92 : vector<1x1x2x256xf32> to vector<2x256xf32>
    %94 = vector.shape_cast %93 : vector<2x256xf32> to vector<2x1x256xf32>
    %95 = vector.broadcast %91 : vector<1x2x256xf32> to vector<2x2x256xf32>
    %96 = vector.broadcast %94 : vector<2x1x256xf32> to vector<2x2x256xf32>
    %97 = arith.mulf %95, %96 : vector<2x2x256xf32>
    %98 = vector.shape_cast %90 : vector<2x256xf32> to vector<1x2x256xf32>
    %99 = vector.extract_strided_slice %87 {offsets = [1, 0, 0, 0], sizes = [1, 1, 2, 256], strides = [1, 1, 1, 1]} : vector<2x4x2x256xf32> to vector<1x1x2x256xf32>
    %100 = vector.shape_cast %99 : vector<1x1x2x256xf32> to vector<2x256xf32>
    %101 = vector.shape_cast %100 : vector<2x256xf32> to vector<2x1x256xf32>
    %102 = vector.broadcast %98 : vector<1x2x256xf32> to vector<2x2x256xf32>
    %103 = vector.broadcast %101 : vector<2x1x256xf32> to vector<2x2x256xf32>
    %104 = arith.mulf %102, %103 : vector<2x2x256xf32>
    %105 = arith.addf %97, %104 : vector<2x2x256xf32>
    %106 = vector.extract_strided_slice %4 {offsets = [1, 0, 256], sizes = [1, 2, 256], strides = [1, 1, 1]} : vector<4x2x1280xf32> to vector<1x2x256xf32>
    %107 = vector.shape_cast %106 : vector<1x2x256xf32> to vector<2x256xf32>
    %c128_i32_22 = arith.constant 128 : i32
    %108 = tpu.dynamic_rotate %107 by %c128_i32_22 dim 1 : vector<2x256xf32>, i32 -> vector<2x256xf32>
    %109 = vector.shape_cast %107 : vector<2x256xf32> to vector<1x2x256xf32>
    %110 = vector.extract_strided_slice %87 {offsets = [0, 1, 0, 0], sizes = [1, 1, 2, 256], strides = [1, 1, 1, 1]} : vector<2x4x2x256xf32> to vector<1x1x2x256xf32>
    %111 = vector.shape_cast %110 : vector<1x1x2x256xf32> to vector<2x256xf32>
    %112 = vector.shape_cast %111 : vector<2x256xf32> to vector<2x1x256xf32>
    %113 = vector.broadcast %109 : vector<1x2x256xf32> to vector<2x2x256xf32>
    %114 = vector.broadcast %112 : vector<2x1x256xf32> to vector<2x2x256xf32>
    %115 = arith.mulf %113, %114 : vector<2x2x256xf32>
    %116 = vector.shape_cast %108 : vector<2x256xf32> to vector<1x2x256xf32>
    %117 = vector.extract_strided_slice %87 {offsets = [1, 1, 0, 0], sizes = [1, 1, 2, 256], strides = [1, 1, 1, 1]} : vector<2x4x2x256xf32> to vector<1x1x2x256xf32>
    %118 = vector.shape_cast %117 : vector<1x1x2x256xf32> to vector<2x256xf32>
    %119 = vector.shape_cast %118 : vector<2x256xf32> to vector<2x1x256xf32>
    %120 = vector.broadcast %116 : vector<1x2x256xf32> to vector<2x2x256xf32>
    %121 = vector.broadcast %119 : vector<2x1x256xf32> to vector<2x2x256xf32>
    %122 = arith.mulf %120, %121 : vector<2x2x256xf32>
    %123 = arith.addf %115, %122 : vector<2x2x256xf32>
    %124 = arith.addf %105, %123 : vector<2x2x256xf32>
    %125 = vector.extract_strided_slice %4 {offsets = [2, 0, 256], sizes = [1, 2, 256], strides = [1, 1, 1]} : vector<4x2x1280xf32> to vector<1x2x256xf32>
    %126 = vector.shape_cast %125 : vector<1x2x256xf32> to vector<2x256xf32>
    %c128_i32_23 = arith.constant 128 : i32
    %127 = tpu.dynamic_rotate %126 by %c128_i32_23 dim 1 : vector<2x256xf32>, i32 -> vector<2x256xf32>
    %128 = vector.shape_cast %126 : vector<2x256xf32> to vector<1x2x256xf32>
    %129 = vector.extract_strided_slice %87 {offsets = [0, 2, 0, 0], sizes = [1, 1, 2, 256], strides = [1, 1, 1, 1]} : vector<2x4x2x256xf32> to vector<1x1x2x256xf32>
    %130 = vector.shape_cast %129 : vector<1x1x2x256xf32> to vector<2x256xf32>
    %131 = vector.shape_cast %130 : vector<2x256xf32> to vector<2x1x256xf32>
    %132 = vector.broadcast %128 : vector<1x2x256xf32> to vector<2x2x256xf32>
    %133 = vector.broadcast %131 : vector<2x1x256xf32> to vector<2x2x256xf32>
    %134 = arith.mulf %132, %133 : vector<2x2x256xf32>
    %135 = vector.shape_cast %127 : vector<2x256xf32> to vector<1x2x256xf32>
    %136 = vector.extract_strided_slice %87 {offsets = [1, 2, 0, 0], sizes = [1, 1, 2, 256], strides = [1, 1, 1, 1]} : vector<2x4x2x256xf32> to vector<1x1x2x256xf32>
    %137 = vector.shape_cast %136 : vector<1x1x2x256xf32> to vector<2x256xf32>
    %138 = vector.shape_cast %137 : vector<2x256xf32> to vector<2x1x256xf32>
    %139 = vector.broadcast %135 : vector<1x2x256xf32> to vector<2x2x256xf32>
    %140 = vector.broadcast %138 : vector<2x1x256xf32> to vector<2x2x256xf32>
    %141 = arith.mulf %139, %140 : vector<2x2x256xf32>
    %142 = arith.addf %134, %141 : vector<2x2x256xf32>
    %143 = arith.addf %124, %142 : vector<2x2x256xf32>
    %144 = vector.extract_strided_slice %4 {offsets = [3, 0, 256], sizes = [1, 2, 256], strides = [1, 1, 1]} : vector<4x2x1280xf32> to vector<1x2x256xf32>
    %145 = vector.shape_cast %144 : vector<1x2x256xf32> to vector<2x256xf32>
    %c128_i32_24 = arith.constant 128 : i32
    %146 = tpu.dynamic_rotate %145 by %c128_i32_24 dim 1 : vector<2x256xf32>, i32 -> vector<2x256xf32>
    %147 = vector.shape_cast %145 : vector<2x256xf32> to vector<1x2x256xf32>
    %148 = vector.extract_strided_slice %87 {offsets = [0, 3, 0, 0], sizes = [1, 1, 2, 256], strides = [1, 1, 1, 1]} : vector<2x4x2x256xf32> to vector<1x1x2x256xf32>
    %149 = vector.shape_cast %148 : vector<1x1x2x256xf32> to vector<2x256xf32>
    %150 = vector.shape_cast %149 : vector<2x256xf32> to vector<2x1x256xf32>
    %151 = vector.broadcast %147 : vector<1x2x256xf32> to vector<2x2x256xf32>
    %152 = vector.broadcast %150 : vector<2x1x256xf32> to vector<2x2x256xf32>
    %153 = arith.mulf %151, %152 : vector<2x2x256xf32>
    %154 = vector.shape_cast %146 : vector<2x256xf32> to vector<1x2x256xf32>
    %155 = vector.extract_strided_slice %87 {offsets = [1, 3, 0, 0], sizes = [1, 1, 2, 256], strides = [1, 1, 1, 1]} : vector<2x4x2x256xf32> to vector<1x1x2x256xf32>
    %156 = vector.shape_cast %155 : vector<1x1x2x256xf32> to vector<2x256xf32>
    %157 = vector.shape_cast %156 : vector<2x256xf32> to vector<2x1x256xf32>
    %158 = vector.broadcast %154 : vector<1x2x256xf32> to vector<2x2x256xf32>
    %159 = vector.broadcast %157 : vector<2x1x256xf32> to vector<2x2x256xf32>
    %160 = arith.mulf %158, %159 : vector<2x2x256xf32>
    %161 = arith.addf %153, %160 : vector<2x2x256xf32>
    %162 = arith.addf %143, %161 : vector<2x2x256xf32>
    %163 = vector.shape_cast %162 : vector<2x2x256xf32> to vector<4x256xf32>
    %164 = arith.truncf %163 : vector<4x256xf32> to vector<4x256xbf16>
    %c0_25 = arith.constant 0 : index
    %c0_26 = arith.constant 0 : index
    %165 = vector.load %arg6[%c0_25, %c0_26] : memref<256x128xbf16, #tpu.memory_space<vmem>>, vector<256x128xbf16>
    %cst_27 = arith.constant dense<0.000000e+00> : vector<4x128xf32>
    %166 = tpu.matmul %164, %165, %cst_27 {dimension_numbers = #tpu.dot_dimension_numbers<[1], [0], [0], [1], [0, 0, 1, 1], [], []>} : vector<4x256xbf16>, vector<256x128xbf16>, vector<4x128xf32> -> vector<4x128xf32>
    %167 = vector.shape_cast %166 : vector<4x128xf32> to vector<2x2x128xf32>
    %c2 = arith.constant 2 : index
    %c0_28 = arith.constant 0 : index
    %c0_29 = arith.constant 0 : index
    %168 = vector.load %arg13[%c2, %c0_28, %c0_29] : memref<10x2x128xf32, #tpu.memory_space<vmem>>, vector<2x2x128xf32>
    tpu.vector_store %arg13[%c2, %c0_28, %c0_29], %167 {strides = array<i32>} : memref<10x2x128xf32, #tpu.memory_space<vmem>>, vector<2x2x128xf32>,
    %c0_30 = arith.constant 0 : index
    %c0_31 = arith.constant 0 : index
    %c0_32 = arith.constant 0 : index
    %c0_33 = arith.constant 0 : index
    %169 = vector.load %arg7[%c0_30, %c0_31, %c0_32, %c0_33] : memref<2x4x2x256xf32, #tpu.memory_space<vmem>>, vector<2x4x2x256xf32>
    %170 = vector.extract_strided_slice %4 {offsets = [0, 0, 512], sizes = [1, 2, 256], strides = [1, 1, 1]} : vector<4x2x1280xf32> to vector<1x2x256xf32>
    %171 = vector.shape_cast %170 : vector<1x2x256xf32> to vector<2x256xf32>
    %c128_i32_34 = arith.constant 128 : i32
    %172 = tpu.dynamic_rotate %171 by %c128_i32_34 dim 1 : vector<2x256xf32>, i32 -> vector<2x256xf32>
    %173 = vector.shape_cast %171 : vector<2x256xf32> to vector<1x2x256xf32>
    %174 = vector.extract_strided_slice %169 {offsets = [0, 0, 0, 0], sizes = [1, 1, 2, 256], strides = [1, 1, 1, 1]} : vector<2x4x2x256xf32> to vector<1x1x2x256xf32>
    %175 = vector.shape_cast %174 : vector<1x1x2x256xf32> to vector<2x256xf32>
    %176 = vector.shape_cast %175 : vector<2x256xf32> to vector<2x1x256xf32>
    %177 = vector.broadcast %173 : vector<1x2x256xf32> to vector<2x2x256xf32>
    %178 = vector.broadcast %176 : vector<2x1x256xf32> to vector<2x2x256xf32>
    %179 = arith.mulf %177, %178 : vector<2x2x256xf32>
    %180 = vector.shape_cast %172 : vector<2x256xf32> to vector<1x2x256xf32>
    %181 = vector.extract_strided_slice %169 {offsets = [1, 0, 0, 0], sizes = [1, 1, 2, 256], strides = [1, 1, 1, 1]} : vector<2x4x2x256xf32> to vector<1x1x2x256xf32>
    %182 = vector.shape_cast %181 : vector<1x1x2x256xf32> to vector<2x256xf32>
    %183 = vector.shape_cast %182 : vector<2x256xf32> to vector<2x1x256xf32>
    %184 = vector.broadcast %180 : vector<1x2x256xf32> to vector<2x2x256xf32>
    %185 = vector.broadcast %183 : vector<2x1x256xf32> to vector<2x2x256xf32>
    %186 = arith.mulf %184, %185 : vector<2x2x256xf32>
    %187 = arith.addf %179, %186 : vector<2x2x256xf32>
    %188 = vector.extract_strided_slice %4 {offsets = [1, 0, 512], sizes = [1, 2, 256], strides = [1, 1, 1]} : vector<4x2x1280xf32> to vector<1x2x256xf32>
    %189 = vector.shape_cast %188 : vector<1x2x256xf32> to vector<2x256xf32>
    %c128_i32_35 = arith.constant 128 : i32
    %190 = tpu.dynamic_rotate %189 by %c128_i32_35 dim 1 : vector<2x256xf32>, i32 -> vector<2x256xf32>
    %191 = vector.shape_cast %189 : vector<2x256xf32> to vector<1x2x256xf32>
    %192 = vector.extract_strided_slice %169 {offsets = [0, 1, 0, 0], sizes = [1, 1, 2, 256], strides = [1, 1, 1, 1]} : vector<2x4x2x256xf32> to vector<1x1x2x256xf32>
    %193 = vector.shape_cast %192 : vector<1x1x2x256xf32> to vector<2x256xf32>
    %194 = vector.shape_cast %193 : vector<2x256xf32> to vector<2x1x256xf32>
    %195 = vector.broadcast %191 : vector<1x2x256xf32> to vector<2x2x256xf32>
    %196 = vector.broadcast %194 : vector<2x1x256xf32> to vector<2x2x256xf32>
    %197 = arith.mulf %195, %196 : vector<2x2x256xf32>
    %198 = vector.shape_cast %190 : vector<2x256xf32> to vector<1x2x256xf32>
    %199 = vector.extract_strided_slice %169 {offsets = [1, 1, 0, 0], sizes = [1, 1, 2, 256], strides = [1, 1, 1, 1]} : vector<2x4x2x256xf32> to vector<1x1x2x256xf32>
    %200 = vector.shape_cast %199 : vector<1x1x2x256xf32> to vector<2x256xf32>
    %201 = vector.shape_cast %200 : vector<2x256xf32> to vector<2x1x256xf32>
    %202 = vector.broadcast %198 : vector<1x2x256xf32> to vector<2x2x256xf32>
    %203 = vector.broadcast %201 : vector<2x1x256xf32> to vector<2x2x256xf32>
    %204 = arith.mulf %202, %203 : vector<2x2x256xf32>
    %205 = arith.addf %197, %204 : vector<2x2x256xf32>
    %206 = arith.addf %187, %205 : vector<2x2x256xf32>
    %207 = vector.extract_strided_slice %4 {offsets = [2, 0, 512], sizes = [1, 2, 256], strides = [1, 1, 1]} : vector<4x2x1280xf32> to vector<1x2x256xf32>
    %208 = vector.shape_cast %207 : vector<1x2x256xf32> to vector<2x256xf32>
    %c128_i32_36 = arith.constant 128 : i32
    %209 = tpu.dynamic_rotate %208 by %c128_i32_36 dim 1 : vector<2x256xf32>, i32 -> vector<2x256xf32>
    %210 = vector.shape_cast %208 : vector<2x256xf32> to vector<1x2x256xf32>
    %211 = vector.extract_strided_slice %169 {offsets = [0, 2, 0, 0], sizes = [1, 1, 2, 256], strides = [1, 1, 1, 1]} : vector<2x4x2x256xf32> to vector<1x1x2x256xf32>
    %212 = vector.shape_cast %211 : vector<1x1x2x256xf32> to vector<2x256xf32>
    %213 = vector.shape_cast %212 : vector<2x256xf32> to vector<2x1x256xf32>
    %214 = vector.broadcast %210 : vector<1x2x256xf32> to vector<2x2x256xf32>
    %215 = vector.broadcast %213 : vector<2x1x256xf32> to vector<2x2x256xf32>
    %216 = arith.mulf %214, %215 : vector<2x2x256xf32>
    %217 = vector.shape_cast %209 : vector<2x256xf32> to vector<1x2x256xf32>
    %218 = vector.extract_strided_slice %169 {offsets = [1, 2, 0, 0], sizes = [1, 1, 2, 256], strides = [1, 1, 1, 1]} : vector<2x4x2x256xf32> to vector<1x1x2x256xf32>
    %219 = vector.shape_cast %218 : vector<1x1x2x256xf32> to vector<2x256xf32>
    %220 = vector.shape_cast %219 : vector<2x256xf32> to vector<2x1x256xf32>
    %221 = vector.broadcast %217 : vector<1x2x256xf32> to vector<2x2x256xf32>
    %222 = vector.broadcast %220 : vector<2x1x256xf32> to vector<2x2x256xf32>
    %223 = arith.mulf %221, %222 : vector<2x2x256xf32>
    %224 = arith.addf %216, %223 : vector<2x2x256xf32>
    %225 = arith.addf %206, %224 : vector<2x2x256xf32>
    %226 = vector.extract_strided_slice %4 {offsets = [3, 0, 512], sizes = [1, 2, 256], strides = [1, 1, 1]} : vector<4x2x1280xf32> to vector<1x2x256xf32>
    %227 = vector.shape_cast %226 : vector<1x2x256xf32> to vector<2x256xf32>
    %c128_i32_37 = arith.constant 128 : i32
    %228 = tpu.dynamic_rotate %227 by %c128_i32_37 dim 1 : vector<2x256xf32>, i32 -> vector<2x256xf32>
    %229 = vector.shape_cast %227 : vector<2x256xf32> to vector<1x2x256xf32>
    %230 = vector.extract_strided_slice %169 {offsets = [0, 3, 0, 0], sizes = [1, 1, 2, 256], strides = [1, 1, 1, 1]} : vector<2x4x2x256xf32> to vector<1x1x2x256xf32>
    %231 = vector.shape_cast %230 : vector<1x1x2x256xf32> to vector<2x256xf32>
    %232 = vector.shape_cast %231 : vector<2x256xf32> to vector<2x1x256xf32>
    %233 = vector.broadcast %229 : vector<1x2x256xf32> to vector<2x2x256xf32>
    %234 = vector.broadcast %232 : vector<2x1x256xf32> to vector<2x2x256xf32>
    %235 = arith.mulf %233, %234 : vector<2x2x256xf32>
    %236 = vector.shape_cast %228 : vector<2x256xf32> to vector<1x2x256xf32>
    %237 = vector.extract_strided_slice %169 {offsets = [1, 3, 0, 0], sizes = [1, 1, 2, 256], strides = [1, 1, 1, 1]} : vector<2x4x2x256xf32> to vector<1x1x2x256xf32>
    %238 = vector.shape_cast %237 : vector<1x1x2x256xf32> to vector<2x256xf32>
    %239 = vector.shape_cast %238 : vector<2x256xf32> to vector<2x1x256xf32>
    %240 = vector.broadcast %236 : vector<1x2x256xf32> to vector<2x2x256xf32>
    %241 = vector.broadcast %239 : vector<2x1x256xf32> to vector<2x2x256xf32>
    %242 = arith.mulf %240, %241 : vector<2x2x256xf32>
    %243 = arith.addf %235, %242 : vector<2x2x256xf32>
    %244 = arith.addf %225, %243 : vector<2x2x256xf32>
    %245 = vector.shape_cast %244 : vector<2x2x256xf32> to vector<4x256xf32>
    %246 = arith.truncf %245 : vector<4x256xf32> to vector<4x256xbf16>
    %c0_38 = arith.constant 0 : index
    %c0_39 = arith.constant 0 : index
    %247 = vector.load %arg8[%c0_38, %c0_39] : memref<256x128xbf16, #tpu.memory_space<vmem>>, vector<256x128xbf16>
    %cst_40 = arith.constant dense<0.000000e+00> : vector<4x128xf32>
    %248 = tpu.matmul %246, %247, %cst_40 {dimension_numbers = #tpu.dot_dimension_numbers<[1], [0], [0], [1], [0, 0, 1, 1], [], []>} : vector<4x256xbf16>, vector<256x128xbf16>, vector<4x128xf32> -> vector<4x128xf32>
    %249 = vector.shape_cast %248 : vector<4x128xf32> to vector<2x2x128xf32>
    %c4 = arith.constant 4 : index
    %c0_41 = arith.constant 0 : index
    %c0_42 = arith.constant 0 : index
    %250 = vector.load %arg13[%c4, %c0_41, %c0_42] : memref<10x2x128xf32, #tpu.memory_space<vmem>>, vector<2x2x128xf32>
    tpu.vector_store %arg13[%c4, %c0_41, %c0_42], %249 {strides = array<i32>} : memref<10x2x128xf32, #tpu.memory_space<vmem>>, vector<2x2x128xf32>,
    %c0_43 = arith.constant 0 : index
    %c0_44 = arith.constant 0 : index
    %c0_45 = arith.constant 0 : index
    %c0_46 = arith.constant 0 : index
    %251 = vector.load %arg9[%c0_43, %c0_44, %c0_45, %c0_46] : memref<2x4x2x256xf32, #tpu.memory_space<vmem>>, vector<2x4x2x256xf32>
    %252 = vector.extract_strided_slice %4 {offsets = [0, 0, 768], sizes = [1, 2, 256], strides = [1, 1, 1]} : vector<4x2x1280xf32> to vector<1x2x256xf32>
    %253 = vector.shape_cast %252 : vector<1x2x256xf32> to vector<2x256xf32>
    %c128_i32_47 = arith.constant 128 : i32
    %254 = tpu.dynamic_rotate %253 by %c128_i32_47 dim 1 : vector<2x256xf32>, i32 -> vector<2x256xf32>
    %255 = vector.shape_cast %253 : vector<2x256xf32> to vector<1x2x256xf32>
    %256 = vector.extract_strided_slice %251 {offsets = [0, 0, 0, 0], sizes = [1, 1, 2, 256], strides = [1, 1, 1, 1]} : vector<2x4x2x256xf32> to vector<1x1x2x256xf32>
    %257 = vector.shape_cast %256 : vector<1x1x2x256xf32> to vector<2x256xf32>
    %258 = vector.shape_cast %257 : vector<2x256xf32> to vector<2x1x256xf32>
    %259 = vector.broadcast %255 : vector<1x2x256xf32> to vector<2x2x256xf32>
    %260 = vector.broadcast %258 : vector<2x1x256xf32> to vector<2x2x256xf32>
    %261 = arith.mulf %259, %260 : vector<2x2x256xf32>
    %262 = vector.shape_cast %254 : vector<2x256xf32> to vector<1x2x256xf32>
    %263 = vector.extract_strided_slice %251 {offsets = [1, 0, 0, 0], sizes = [1, 1, 2, 256], strides = [1, 1, 1, 1]} : vector<2x4x2x256xf32> to vector<1x1x2x256xf32>
    %264 = vector.shape_cast %263 : vector<1x1x2x256xf32> to vector<2x256xf32>
    %265 = vector.shape_cast %264 : vector<2x256xf32> to vector<2x1x256xf32>
    %266 = vector.broadcast %262 : vector<1x2x256xf32> to vector<2x2x256xf32>
    %267 = vector.broadcast %265 : vector<2x1x256xf32> to vector<2x2x256xf32>
    %268 = arith.mulf %266, %267 : vector<2x2x256xf32>
    %269 = arith.addf %261, %268 : vector<2x2x256xf32>
    %270 = vector.extract_strided_slice %4 {offsets = [1, 0, 768], sizes = [1, 2, 256], strides = [1, 1, 1]} : vector<4x2x1280xf32> to vector<1x2x256xf32>
    %271 = vector.shape_cast %270 : vector<1x2x256xf32> to vector<2x256xf32>
    %c128_i32_48 = arith.constant 128 : i32
    %272 = tpu.dynamic_rotate %271 by %c128_i32_48 dim 1 : vector<2x256xf32>, i32 -> vector<2x256xf32>
    %273 = vector.shape_cast %271 : vector<2x256xf32> to vector<1x2x256xf32>
    %274 = vector.extract_strided_slice %251 {offsets = [0, 1, 0, 0], sizes = [1, 1, 2, 256], strides = [1, 1, 1, 1]} : vector<2x4x2x256xf32> to vector<1x1x2x256xf32>
    %275 = vector.shape_cast %274 : vector<1x1x2x256xf32> to vector<2x256xf32>
    %276 = vector.shape_cast %275 : vector<2x256xf32> to vector<2x1x256xf32>
    %277 = vector.broadcast %273 : vector<1x2x256xf32> to vector<2x2x256xf32>
    %278 = vector.broadcast %276 : vector<2x1x256xf32> to vector<2x2x256xf32>
    %279 = arith.mulf %277, %278 : vector<2x2x256xf32>
    %280 = vector.shape_cast %272 : vector<2x256xf32> to vector<1x2x256xf32>
    %281 = vector.extract_strided_slice %251 {offsets = [1, 1, 0, 0], sizes = [1, 1, 2, 256], strides = [1, 1, 1, 1]} : vector<2x4x2x256xf32> to vector<1x1x2x256xf32>
    %282 = vector.shape_cast %281 : vector<1x1x2x256xf32> to vector<2x256xf32>
    %283 = vector.shape_cast %282 : vector<2x256xf32> to vector<2x1x256xf32>
    %284 = vector.broadcast %280 : vector<1x2x256xf32> to vector<2x2x256xf32>
    %285 = vector.broadcast %283 : vector<2x1x256xf32> to vector<2x2x256xf32>
    %286 = arith.mulf %284, %285 : vector<2x2x256xf32>
    %287 = arith.addf %279, %286 : vector<2x2x256xf32>
    %288 = arith.addf %269, %287 : vector<2x2x256xf32>
    %289 = vector.extract_strided_slice %4 {offsets = [2, 0, 768], sizes = [1, 2, 256], strides = [1, 1, 1]} : vector<4x2x1280xf32> to vector<1x2x256xf32>
    %290 = vector.shape_cast %289 : vector<1x2x256xf32> to vector<2x256xf32>
    %c128_i32_49 = arith.constant 128 : i32
    %291 = tpu.dynamic_rotate %290 by %c128_i32_49 dim 1 : vector<2x256xf32>, i32 -> vector<2x256xf32>
    %292 = vector.shape_cast %290 : vector<2x256xf32> to vector<1x2x256xf32>
    %293 = vector.extract_strided_slice %251 {offsets = [0, 2, 0, 0], sizes = [1, 1, 2, 256], strides = [1, 1, 1, 1]} : vector<2x4x2x256xf32> to vector<1x1x2x256xf32>
    %294 = vector.shape_cast %293 : vector<1x1x2x256xf32> to vector<2x256xf32>
    %295 = vector.shape_cast %294 : vector<2x256xf32> to vector<2x1x256xf32>
    %296 = vector.broadcast %292 : vector<1x2x256xf32> to vector<2x2x256xf32>
    %297 = vector.broadcast %295 : vector<2x1x256xf32> to vector<2x2x256xf32>
    %298 = arith.mulf %296, %297 : vector<2x2x256xf32>
    %299 = vector.shape_cast %291 : vector<2x256xf32> to vector<1x2x256xf32>
    %300 = vector.extract_strided_slice %251 {offsets = [1, 2, 0, 0], sizes = [1, 1, 2, 256], strides = [1, 1, 1, 1]} : vector<2x4x2x256xf32> to vector<1x1x2x256xf32>
    %301 = vector.shape_cast %300 : vector<1x1x2x256xf32> to vector<2x256xf32>
    %302 = vector.shape_cast %301 : vector<2x256xf32> to vector<2x1x256xf32>
    %303 = vector.broadcast %299 : vector<1x2x256xf32> to vector<2x2x256xf32>
    %304 = vector.broadcast %302 : vector<2x1x256xf32> to vector<2x2x256xf32>
    %305 = arith.mulf %303, %304 : vector<2x2x256xf32>
    %306 = arith.addf %298, %305 : vector<2x2x256xf32>
    %307 = arith.addf %288, %306 : vector<2x2x256xf32>
    %308 = vector.extract_strided_slice %4 {offsets = [3, 0, 768], sizes = [1, 2, 256], strides = [1, 1, 1]} : vector<4x2x1280xf32> to vector<1x2x256xf32>
    %309 = vector.shape_cast %308 : vector<1x2x256xf32> to vector<2x256xf32>
    %c128_i32_50 = arith.constant 128 : i32
    %310 = tpu.dynamic_rotate %309 by %c128_i32_50 dim 1 : vector<2x256xf32>, i32 -> vector<2x256xf32>
    %311 = vector.shape_cast %309 : vector<2x256xf32> to vector<1x2x256xf32>
    %312 = vector.extract_strided_slice %251 {offsets = [0, 3, 0, 0], sizes = [1, 1, 2, 256], strides = [1, 1, 1, 1]} : vector<2x4x2x256xf32> to vector<1x1x2x256xf32>
    %313 = vector.shape_cast %312 : vector<1x1x2x256xf32> to vector<2x256xf32>
    %314 = vector.shape_cast %313 : vector<2x256xf32> to vector<2x1x256xf32>
    %315 = vector.broadcast %311 : vector<1x2x256xf32> to vector<2x2x256xf32>
    %316 = vector.broadcast %314 : vector<2x1x256xf32> to vector<2x2x256xf32>
    %317 = arith.mulf %315, %316 : vector<2x2x256xf32>
    %318 = vector.shape_cast %310 : vector<2x256xf32> to vector<1x2x256xf32>
    %319 = vector.extract_strided_slice %251 {offsets = [1, 3, 0, 0], sizes = [1, 1, 2, 256], strides = [1, 1, 1, 1]} : vector<2x4x2x256xf32> to vector<1x1x2x256xf32>
    %320 = vector.shape_cast %319 : vector<1x1x2x256xf32> to vector<2x256xf32>
    %321 = vector.shape_cast %320 : vector<2x256xf32> to vector<2x1x256xf32>
    %322 = vector.broadcast %318 : vector<1x2x256xf32> to vector<2x2x256xf32>
    %323 = vector.broadcast %321 : vector<2x1x256xf32> to vector<2x2x256xf32>
    %324 = arith.mulf %322, %323 : vector<2x2x256xf32>
    %325 = arith.addf %317, %324 : vector<2x2x256xf32>
    %326 = arith.addf %307, %325 : vector<2x2x256xf32>
    %327 = vector.shape_cast %326 : vector<2x2x256xf32> to vector<4x256xf32>
    %328 = arith.truncf %327 : vector<4x256xf32> to vector<4x256xbf16>
    %c0_51 = arith.constant 0 : index
    %c0_52 = arith.constant 0 : index
    %329 = vector.load %arg10[%c0_51, %c0_52] : memref<256x128xbf16, #tpu.memory_space<vmem>>, vector<256x128xbf16>
    %cst_53 = arith.constant dense<0.000000e+00> : vector<4x128xf32>
    %330 = tpu.matmul %328, %329, %cst_53 {dimension_numbers = #tpu.dot_dimension_numbers<[1], [0], [0], [1], [0, 0, 1, 1], [], []>} : vector<4x256xbf16>, vector<256x128xbf16>, vector<4x128xf32> -> vector<4x128xf32>
    %331 = vector.shape_cast %330 : vector<4x128xf32> to vector<2x2x128xf32>
    %c6 = arith.constant 6 : index
    %c0_54 = arith.constant 0 : index
    %c0_55 = arith.constant 0 : index
    %332 = vector.load %arg13[%c6, %c0_54, %c0_55] : memref<10x2x128xf32, #tpu.memory_space<vmem>>, vector<2x2x128xf32>
    tpu.vector_store %arg13[%c6, %c0_54, %c0_55], %331 {strides = array<i32>} : memref<10x2x128xf32, #tpu.memory_space<vmem>>, vector<2x2x128xf32>,
    %c0_56 = arith.constant 0 : index
    %c0_57 = arith.constant 0 : index
    %c0_58 = arith.constant 0 : index
    %c0_59 = arith.constant 0 : index
    %333 = vector.load %arg11[%c0_56, %c0_57, %c0_58, %c0_59] : memref<2x4x2x256xf32, #tpu.memory_space<vmem>>, vector<2x4x2x256xf32>
    %334 = vector.extract_strided_slice %4 {offsets = [0, 0, 1024], sizes = [1, 2, 256], strides = [1, 1, 1]} : vector<4x2x1280xf32> to vector<1x2x256xf32>
    %335 = vector.shape_cast %334 : vector<1x2x256xf32> to vector<2x256xf32>
    %c128_i32_60 = arith.constant 128 : i32
    %336 = tpu.dynamic_rotate %335 by %c128_i32_60 dim 1 : vector<2x256xf32>, i32 -> vector<2x256xf32>
    %337 = vector.shape_cast %335 : vector<2x256xf32> to vector<1x2x256xf32>
    %338 = vector.extract_strided_slice %333 {offsets = [0, 0, 0, 0], sizes = [1, 1, 2, 256], strides = [1, 1, 1, 1]} : vector<2x4x2x256xf32> to vector<1x1x2x256xf32>
    %339 = vector.shape_cast %338 : vector<1x1x2x256xf32> to vector<2x256xf32>
    %340 = vector.shape_cast %339 : vector<2x256xf32> to vector<2x1x256xf32>
    %341 = vector.broadcast %337 : vector<1x2x256xf32> to vector<2x2x256xf32>
    %342 = vector.broadcast %340 : vector<2x1x256xf32> to vector<2x2x256xf32>
    %343 = arith.mulf %341, %342 : vector<2x2x256xf32>
    %344 = vector.shape_cast %336 : vector<2x256xf32> to vector<1x2x256xf32>
    %345 = vector.extract_strided_slice %333 {offsets = [1, 0, 0, 0], sizes = [1, 1, 2, 256], strides = [1, 1, 1, 1]} : vector<2x4x2x256xf32> to vector<1x1x2x256xf32>
    %346 = vector.shape_cast %345 : vector<1x1x2x256xf32> to vector<2x256xf32>
    %347 = vector.shape_cast %346 : vector<2x256xf32> to vector<2x1x256xf32>
    %348 = vector.broadcast %344 : vector<1x2x256xf32> to vector<2x2x256xf32>
    %349 = vector.broadcast %347 : vector<2x1x256xf32> to vector<2x2x256xf32>
    %350 = arith.mulf %348, %349 : vector<2x2x256xf32>
    %351 = arith.addf %343, %350 : vector<2x2x256xf32>
    %352 = vector.extract_strided_slice %4 {offsets = [1, 0, 1024], sizes = [1, 2, 256], strides = [1, 1, 1]} : vector<4x2x1280xf32> to vector<1x2x256xf32>
    %353 = vector.shape_cast %352 : vector<1x2x256xf32> to vector<2x256xf32>
    %c128_i32_61 = arith.constant 128 : i32
    %354 = tpu.dynamic_rotate %353 by %c128_i32_61 dim 1 : vector<2x256xf32>, i32 -> vector<2x256xf32>
    %355 = vector.shape_cast %353 : vector<2x256xf32> to vector<1x2x256xf32>
    %356 = vector.extract_strided_slice %333 {offsets = [0, 1, 0, 0], sizes = [1, 1, 2, 256], strides = [1, 1, 1, 1]} : vector<2x4x2x256xf32> to vector<1x1x2x256xf32>
    %357 = vector.shape_cast %356 : vector<1x1x2x256xf32> to vector<2x256xf32>
    %358 = vector.shape_cast %357 : vector<2x256xf32> to vector<2x1x256xf32>
    %359 = vector.broadcast %355 : vector<1x2x256xf32> to vector<2x2x256xf32>
    %360 = vector.broadcast %358 : vector<2x1x256xf32> to vector<2x2x256xf32>
    %361 = arith.mulf %359, %360 : vector<2x2x256xf32>
    %362 = vector.shape_cast %354 : vector<2x256xf32> to vector<1x2x256xf32>
    %363 = vector.extract_strided_slice %333 {offsets = [1, 1, 0, 0], sizes = [1, 1, 2, 256], strides = [1, 1, 1, 1]} : vector<2x4x2x256xf32> to vector<1x1x2x256xf32>
    %364 = vector.shape_cast %363 : vector<1x1x2x256xf32> to vector<2x256xf32>
    %365 = vector.shape_cast %364 : vector<2x256xf32> to vector<2x1x256xf32>
    %366 = vector.broadcast %362 : vector<1x2x256xf32> to vector<2x2x256xf32>
    %367 = vector.broadcast %365 : vector<2x1x256xf32> to vector<2x2x256xf32>
    %368 = arith.mulf %366, %367 : vector<2x2x256xf32>
    %369 = arith.addf %361, %368 : vector<2x2x256xf32>
    %370 = arith.addf %351, %369 : vector<2x2x256xf32>
    %371 = vector.extract_strided_slice %4 {offsets = [2, 0, 1024], sizes = [1, 2, 256], strides = [1, 1, 1]} : vector<4x2x1280xf32> to vector<1x2x256xf32>
    %372 = vector.shape_cast %371 : vector<1x2x256xf32> to vector<2x256xf32>
    %c128_i32_62 = arith.constant 128 : i32
    %373 = tpu.dynamic_rotate %372 by %c128_i32_62 dim 1 : vector<2x256xf32>, i32 -> vector<2x256xf32>
    %374 = vector.shape_cast %372 : vector<2x256xf32> to vector<1x2x256xf32>
    %375 = vector.extract_strided_slice %333 {offsets = [0, 2, 0, 0], sizes = [1, 1, 2, 256], strides = [1, 1, 1, 1]} : vector<2x4x2x256xf32> to vector<1x1x2x256xf32>
    %376 = vector.shape_cast %375 : vector<1x1x2x256xf32> to vector<2x256xf32>
    %377 = vector.shape_cast %376 : vector<2x256xf32> to vector<2x1x256xf32>
    %378 = vector.broadcast %374 : vector<1x2x256xf32> to vector<2x2x256xf32>
    %379 = vector.broadcast %377 : vector<2x1x256xf32> to vector<2x2x256xf32>
    %380 = arith.mulf %378, %379 : vector<2x2x256xf32>
    %381 = vector.shape_cast %373 : vector<2x256xf32> to vector<1x2x256xf32>
    %382 = vector.extract_strided_slice %333 {offsets = [1, 2, 0, 0], sizes = [1, 1, 2, 256], strides = [1, 1, 1, 1]} : vector<2x4x2x256xf32> to vector<1x1x2x256xf32>
    %383 = vector.shape_cast %382 : vector<1x1x2x256xf32> to vector<2x256xf32>
    %384 = vector.shape_cast %383 : vector<2x256xf32> to vector<2x1x256xf32>
    %385 = vector.broadcast %381 : vector<1x2x256xf32> to vector<2x2x256xf32>
    %386 = vector.broadcast %384 : vector<2x1x256xf32> to vector<2x2x256xf32>
    %387 = arith.mulf %385, %386 : vector<2x2x256xf32>
    %388 = arith.addf %380, %387 : vector<2x2x256xf32>
    %389 = arith.addf %370, %388 : vector<2x2x256xf32>
    %390 = vector.extract_strided_slice %4 {offsets = [3, 0, 1024], sizes = [1, 2, 256], strides = [1, 1, 1]} : vector<4x2x1280xf32> to vector<1x2x256xf32>
    %391 = vector.shape_cast %390 : vector<1x2x256xf32> to vector<2x256xf32>
    %c128_i32_63 = arith.constant 128 : i32
    %392 = tpu.dynamic_rotate %391 by %c128_i32_63 dim 1 : vector<2x256xf32>, i32 -> vector<2x256xf32>
    %393 = vector.shape_cast %391 : vector<2x256xf32> to vector<1x2x256xf32>
    %394 = vector.extract_strided_slice %333 {offsets = [0, 3, 0, 0], sizes = [1, 1, 2, 256], strides = [1, 1, 1, 1]} : vector<2x4x2x256xf32> to vector<1x1x2x256xf32>
    %395 = vector.shape_cast %394 : vector<1x1x2x256xf32> to vector<2x256xf32>
    %396 = vector.shape_cast %395 : vector<2x256xf32> to vector<2x1x256xf32>
    %397 = vector.broadcast %393 : vector<1x2x256xf32> to vector<2x2x256xf32>
    %398 = vector.broadcast %396 : vector<2x1x256xf32> to vector<2x2x256xf32>
    %399 = arith.mulf %397, %398 : vector<2x2x256xf32>
    %400 = vector.shape_cast %392 : vector<2x256xf32> to vector<1x2x256xf32>
    %401 = vector.extract_strided_slice %333 {offsets = [1, 3, 0, 0], sizes = [1, 1, 2, 256], strides = [1, 1, 1, 1]} : vector<2x4x2x256xf32> to vector<1x1x2x256xf32>
    %402 = vector.shape_cast %401 : vector<1x1x2x256xf32> to vector<2x256xf32>
    %403 = vector.shape_cast %402 : vector<2x256xf32> to vector<2x1x256xf32>
    %404 = vector.broadcast %400 : vector<1x2x256xf32> to vector<2x2x256xf32>
    %405 = vector.broadcast %403 : vector<2x1x256xf32> to vector<2x2x256xf32>
    %406 = arith.mulf %404, %405 : vector<2x2x256xf32>
    %407 = arith.addf %399, %406 : vector<2x2x256xf32>
    %408 = arith.addf %389, %407 : vector<2x2x256xf32>
    %409 = vector.shape_cast %408 : vector<2x2x256xf32> to vector<4x256xf32>
    %410 = arith.truncf %409 : vector<4x256xf32> to vector<4x256xbf16>
    %c0_64 = arith.constant 0 : index
    %c0_65 = arith.constant 0 : index
    %411 = vector.load %arg12[%c0_64, %c0_65] : memref<256x128xbf16, #tpu.memory_space<vmem>>, vector<256x128xbf16>
    %cst_66 = arith.constant dense<0.000000e+00> : vector<4x128xf32>
    %412 = tpu.matmul %410, %411, %cst_66 {dimension_numbers = #tpu.dot_dimension_numbers<[1], [0], [0], [1], [0, 0, 1, 1], [], []>} : vector<4x256xbf16>, vector<256x128xbf16>, vector<4x128xf32> -> vector<4x128xf32>
    %413 = vector.shape_cast %412 : vector<4x128xf32> to vector<2x2x128xf32>
    %c8 = arith.constant 8 : index
    %c0_67 = arith.constant 0 : index
    %c0_68 = arith.constant 0 : index
    %414 = vector.load %arg13[%c8, %c0_67, %c0_68] : memref<10x2x128xf32, #tpu.memory_space<vmem>>, vector<2x2x128xf32>
    tpu.vector_store %arg13[%c8, %c0_67, %c0_68], %413 {strides = array<i32>} : memref<10x2x128xf32, #tpu.memory_space<vmem>>, vector<2x2x128xf32>,
    return
  }
  func.func @transform_0(%arg0: i32) -> (i32, i32, i32) {
    %c0_i32 = arith.constant 0 : i32
    %c0_i32_0 = arith.constant 0 : i32
    %c0_i32_1 = arith.constant 0 : i32
    return %c0_i32, %arg0, %c0_i32_0 : i32, i32, i32
  }
  func.func @transform_1(%arg0: i32) -> (i32, i32) {
    %c0_i32 = arith.constant 0 : i32
    %c0_i32_0 = arith.constant 0 : i32
    %c0_i32_1 = arith.constant 0 : i32
    return %c0_i32, %c0_i32_0 : i32, i32
  }
  func.func @transform_2(%arg0: i32) -> (i32, i32, i32, i32) {
    %c0_i32 = arith.constant 0 : i32
    %c0_i32_0 = arith.constant 0 : i32
    %c0_i32_1 = arith.constant 0 : i32
    %c0_i32_2 = arith.constant 0 : i32
    %c0_i32_3 = arith.constant 0 : i32
    return %c0_i32, %c0_i32_0, %c0_i32_1, %c0_i32_2 : i32, i32, i32, i32
  }
  func.func @transform_3(%arg0: i32) -> (i32, i32) {
    %c0_i32 = arith.constant 0 : i32
    %c0_i32_0 = arith.constant 0 : i32
    %c0_i32_1 = arith.constant 0 : i32
    return %c0_i32, %c0_i32_0 : i32, i32
  }
  func.func @transform_4(%arg0: i32) -> (i32, i32, i32, i32) {
    %c0_i32 = arith.constant 0 : i32
    %c0_i32_0 = arith.constant 0 : i32
    %c0_i32_1 = arith.constant 0 : i32
    %c0_i32_2 = arith.constant 0 : i32
    %c0_i32_3 = arith.constant 0 : i32
    return %c0_i32, %c0_i32_0, %c0_i32_1, %c0_i32_2 : i32, i32, i32, i32
  }
  func.func @transform_5(%arg0: i32) -> (i32, i32) {
    %c0_i32 = arith.constant 0 : i32
    %c0_i32_0 = arith.constant 0 : i32
    %c0_i32_1 = arith.constant 0 : i32
    return %c0_i32, %c0_i32_0 : i32, i32
  }
  func.func @transform_6(%arg0: i32) -> (i32, i32, i32, i32) {
    %c0_i32 = arith.constant 0 : i32
    %c0_i32_0 = arith.constant 0 : i32
    %c0_i32_1 = arith.constant 0 : i32
    %c0_i32_2 = arith.constant 0 : i32
    %c0_i32_3 = arith.constant 0 : i32
    return %c0_i32, %c0_i32_0, %c0_i32_1, %c0_i32_2 : i32, i32, i32, i32
  }
  func.func @transform_7(%arg0: i32) -> (i32, i32) {
    %c0_i32 = arith.constant 0 : i32
    %c0_i32_0 = arith.constant 0 : i32
    %c0_i32_1 = arith.constant 0 : i32
    return %c0_i32, %c0_i32_0 : i32, i32
  }
  func.func @transform_8(%arg0: i32) -> (i32, i32, i32, i32) {
    %c0_i32 = arith.constant 0 : i32
    %c0_i32_0 = arith.constant 0 : i32
    %c0_i32_1 = arith.constant 0 : i32
    %c0_i32_2 = arith.constant 0 : i32
    %c0_i32_3 = arith.constant 0 : i32
    return %c0_i32, %c0_i32_0, %c0_i32_1, %c0_i32_2 : i32, i32, i32, i32
  }
  func.func @transform_9(%arg0: i32) -> (i32, i32) {
    %c0_i32 = arith.constant 0 : i32
    %c0_i32_0 = arith.constant 0 : i32
    %c0_i32_1 = arith.constant 0 : i32
    return %c0_i32, %c0_i32_0 : i32, i32
  }
  func.func @transform_10(%arg0: i32) -> (i32, i32, i32, i32) {
    %c0_i32 = arith.constant 0 : i32
    %c0_i32_0 = arith.constant 0 : i32
    %c0_i32_1 = arith.constant 0 : i32
    %c0_i32_2 = arith.constant 0 : i32
    %c0_i32_3 = arith.constant 0 : i32
    return %c0_i32, %c0_i32_0, %c0_i32_1, %c0_i32_2 : i32, i32, i32, i32
  }
  func.func @transform_11(%arg0: i32) -> (i32, i32) {
    %c0_i32 = arith.constant 0 : i32
    %c0_i32_0 = arith.constant 0 : i32
    %c0_i32_1 = arith.constant 0 : i32
    return %c0_i32, %c0_i32_0 : i32, i32
  }
  func.func @transform_12(%arg0: i32) -> (i32, i32, i32) {
    %c0_i32 = arith.constant 0 : i32
    %c0_i32_0 = arith.constant 0 : i32
    %c0_i32_1 = arith.constant 0 : i32
    return %c0_i32, %arg0, %c0_i32_0 : i32, i32, i32
  }
}

</mosaic_0001>

<llo_original>
// kernel: tpu_custom_call.1
$region0: #{tpu_custom_call.1}
  #allocation0 [shape = 'u32[]', space=smem, size = 0x4, offset = 0x4, fixed_abs, tag = 'smem constant byte address 0x4 - core index']
  #allocation1 [shape = 'u32[72,128]{1,0:T(1,128)}', space=vmem, size = 0x9000, scoped, tag = 'internal scratch']
  %s0 = inlined_call_operand.hbm [shape: bf16[4,2,64], index: 0, kind: input, shape index: {}]
  %s1 = inlined_call_operand.hbm [shape: bf16[64,1280], index: 1, kind: input, shape index: {}]
  %s2 = inlined_call_operand.hbm [shape: f32[2,4,2,256], index: 2, kind: input, shape index: {}]
  %s3 = inlined_call_operand.hbm [shape: bf16[256,128], index: 3, kind: input, shape index: {}]
  %s4 = inlined_call_operand.hbm [shape: f32[2,4,2,256], index: 4, kind: input, shape index: {}]
  %s5 = inlined_call_operand.hbm [shape: bf16[256,128], index: 5, kind: input, shape index: {}]
  %s6 = inlined_call_operand.hbm [shape: f32[2,4,2,256], index: 6, kind: input, shape index: {}]
  %s7 = inlined_call_operand.hbm [shape: bf16[256,128], index: 7, kind: input, shape index: {}]
  %s8 = inlined_call_operand.hbm [shape: f32[2,4,2,256], index: 8, kind: input, shape index: {}]
  %s9 = inlined_call_operand.hbm [shape: bf16[256,128], index: 9, kind: input, shape index: {}]
  %s10 = inlined_call_operand.hbm [shape: f32[2,4,2,256], index: 10, kind: input, shape index: {}]
  %s11 = inlined_call_operand.hbm [shape: bf16[256,128], index: 11, kind: input, shape index: {}]
  %s12 = inlined_call_operand.hbm [shape: f32[10,2,128], index: 12, kind: output, shape index: {}]
  %s13 = sld [smem:[#allocation0]]
  $region106: #{tpu_custom_call.1} parent=0
    _
  %s15 = ssub.s32 1, %s13
  %s16 = scalar_select 0, %s15, %s13
  $region1: #{tpu_custom_call.1} parent=0
    #allocation2 [shape = 'u8[2048]{0}', space=vmem, size = 0x800, scoped, tag = 'input window, operand 0, single buffered']
    #allocation3 [shape = 's32[1]{0}', space=sflag, size = 0x4, scoped, tag = 'scoped memory for tpu_custom_call.1']
    #allocation4 [shape = 's32[1]{0}', space=sflag, size = 0x4, scoped, tag = 'scoped memory for tpu_custom_call.1']
    #allocation5 [shape = 'u8[163840]{0}', space=vmem, size = 0x28000, scoped, tag = 'input window, operand 1, single buffered']
    #allocation6 [shape = 's32[1]{0}', space=sflag, size = 0x4, scoped, tag = 'scoped memory for tpu_custom_call.1']
    #allocation7 [shape = 'u8[16384]{0}', space=vmem, size = 0x4000, scoped, tag = 'input window, operand 2, single buffered']
    #allocation8 [shape = 'u8[65536]{0}', space=vmem, size = 0x10000, scoped, tag = 'input window, operand 3, single buffered']
    #allocation9 [shape = 's32[1]{0}', space=sflag, size = 0x4, scoped, tag = 'scoped memory for tpu_custom_call.1']
    #allocation10 [shape = 'u8[16384]{0}', space=vmem, size = 0x4000, scoped, tag = 'input window, operand 4, single buffered']
    #allocation11 [shape = 'u8[65536]{0}', space=vmem, size = 0x10000, scoped, tag = 'input window, operand 5, single buffered']
    #allocation12 [shape = 's32[1]{0}', space=sflag, size = 0x4, scoped, tag = 'scoped memory for tpu_custom_call.1']
    #allocation13 [shape = 'u8[16384]{0}', space=vmem, size = 0x4000, scoped, tag = 'input window, operand 6, single buffered']
    #allocation14 [shape = 'u8[65536]{0}', space=vmem, size = 0x10000, scoped, tag = 'input window, operand 7, single buffered']
    #allocation15 [shape = 's32[1]{0}', space=sflag, size = 0x4, scoped, tag = 'scoped memory for tpu_custom_call.1']
    #allocation16 [shape = 'u8[16384]{0}', space=vmem, size = 0x4000, scoped, tag = 'input window, operand 8, single buffered']
    #allocation17 [shape = 'u8[65536]{0}', space=vmem, size = 0x10000, scoped, tag = 'input window, operand 9, single buffered']
    #allocation18 [shape = 's32[1]{0}', space=sflag, size = 0x4, scoped, tag = 'scoped memory for tpu_custom_call.1']
    #allocation19 [shape = 'u8[16384]{0}', space=vmem, size = 0x4000, scoped, tag = 'input window, operand 10, single buffered']
    #allocation20 [shape = 'u8[65536]{0}', space=vmem, size = 0x10000, scoped, tag = 'input window, operand 11, single buffered']
    #allocation21 [shape = 's32[1]{0}', space=sflag, size = 0x4, scoped, tag = 'scoped memory for tpu_custom_call.1']
    #allocation22 [shape = 'u8[10240]{0}', space=vmem, size = 0x2800, scoped, tag = 'output window, operand 0, single buffered']
    %17 = vsyncpa [#allocation3], 0
    %18 = vsyncpa [#allocation6], 0
    %19 = vsyncpa [#allocation9], 0
    %20 = vsyncpa [#allocation12], 0
    %21 = vsyncpa [#allocation15], 0
    %22 = vsyncpa [#allocation18], 0
    %23 = vsyncpa [#allocation21], 0
    %24 = vsyncpa [#allocation4], 0
    // Predicated region
    $region2: #{tpu_custom_call.1} parent=1 // pred_check
      _
    $region3: #{tpu_custom_call.1} parent=1 // pred_check_branch
      %26 = sbr.rel (0) target = $region5
    $region4: #{tpu_custom_call.1} parent=1 // pred_region
      %28 = vsyncadd [#allocation3], 0
      %s29 = sshll.u32 %s0, 4
      %s30 = int_to_ptr.hbm [resolvable:$true] %s29
      %s31 = sshll.u32 [#allocation2], 4
      %s32 = int_to_ptr.vmem [resolvable:$true] %s31
      %37 = dma.hbm_to_vmem [thread:$0]  %s30, 64, %s32, [#allocation3], 16, 16, 1
    $region5: #{tpu_custom_call.1} parent=1 // pred_fallthru
      _
    // Predicated region
    $region6: #{tpu_custom_call.1} parent=1 // pred_check
      _
    $region7: #{tpu_custom_call.1} parent=1 // pred_check_branch
      %39 = sbr.rel (0) target = $region9
    $region8: #{tpu_custom_call.1} parent=1 // pred_region
      %41 = vsyncadd [#allocation6], 0
      %s42 = sshll.u32 %s1, 4
      %s43 = int_to_ptr.hbm [resolvable:$true] %s42
      %s44 = sshll.u32 [#allocation5], 4
      %s45 = int_to_ptr.vmem [resolvable:$true] %s44
      %50 = dma.hbm_to_vmem [thread:$0]  %s43, 5120, %s45, [#allocation6], 640, 640, 40
    $region9: #{tpu_custom_call.1} parent=1 // pred_fallthru
      _
    // Predicated region
    $region10: #{tpu_custom_call.1} parent=1 // pred_check
      _
    $region11: #{tpu_custom_call.1} parent=1 // pred_check_branch
      %52 = sbr.rel (0) target = $region13
    $region12: #{tpu_custom_call.1} parent=1 // pred_region
      %54 = vsyncadd [#allocation6], 0
      %s55 = sshll.u32 %s2, 4
      %s56 = int_to_ptr.hbm [resolvable:$true] %s55
      %s57 = sshll.u32 [#allocation7], 4
      %s58 = int_to_ptr.vmem [resolvable:$true] %s57
      %63 = dma.hbm_to_vmem [thread:$0]  %s56, 512, %s58, [#allocation6], 64, 64, 4
    $region13: #{tpu_custom_call.1} parent=1 // pred_fallthru
      _
    // Predicated region
    $region14: #{tpu_custom_call.1} parent=1 // pred_check
      _
    $region15: #{tpu_custom_call.1} parent=1 // pred_check_branch
      %65 = sbr.rel (0) target = $region17
    $region16: #{tpu_custom_call.1} parent=1 // pred_region
      %67 = vsyncadd [#allocation9], 0
      %s68 = sshll.u32 %s3, 4
      %s69 = int_to_ptr.hbm [resolvable:$true] %s68
      %s70 = sshll.u32 [#allocation8], 4
      %s71 = int_to_ptr.vmem [resolvable:$true] %s70
      %76 = dma.hbm_to_vmem [thread:$0]  %s69, 2048, %s71, [#allocation9], 64, 64, 4
    $region17: #{tpu_custom_call.1} parent=1 // pred_fallthru
      _
    // Predicated region
    $region18: #{tpu_custom_call.1} parent=1 // pred_check
      _
    $region19: #{tpu_custom_call.1} parent=1 // pred_check_branch
      %78 = sbr.rel (0) target = $region21
    $region20: #{tpu_custom_call.1} parent=1 // pred_region
      %80 = vsyncadd [#allocation9], 0
      %s81 = sshll.u32 %s4, 4
      %s82 = int_to_ptr.hbm [resolvable:$true] %s81
      %s83 = sshll.u32 [#allocation10], 4
      %s84 = int_to_ptr.vmem [resolvable:$true] %s83
      %89 = dma.hbm_to_vmem [thread:$0]  %s82, 512, %s84, [#allocation9], 64, 64, 4
    $region21: #{tpu_custom_call.1} parent=1 // pred_fallthru
      _
    // Predicated region
    $region22: #{tpu_custom_call.1} parent=1 // pred_check
      _
    $region23: #{tpu_custom_call.1} parent=1 // pred_check_branch
      %91 = sbr.rel (0) target = $region25
    $region24: #{tpu_custom_call.1} parent=1 // pred_region
      %93 = vsyncadd [#allocation12], 0
      %s94 = sshll.u32 %s5, 4
      %s95 = int_to_ptr.hbm [resolvable:$true] %s94
      %s96 = sshll.u32 [#allocation11], 4
      %s97 = int_to_ptr.vmem [resolvable:$true] %s96
      %102 = dma.hbm_to_vmem [thread:$0]  %s95, 2048, %s97, [#allocation12], 64, 64, 4
    $region25: #{tpu_custom_call.1} parent=1 // pred_fallthru
      _
    // Predicated region
    $region26: #{tpu_custom_call.1} parent=1 // pred_check
      _
    $region27: #{tpu_custom_call.1} parent=1 // pred_check_branch
      %104 = sbr.rel (0) target = $region29
    $region28: #{tpu_custom_call.1} parent=1 // pred_region
      %106 = vsyncadd [#allocation12], 0
      %s107 = sshll.u32 %s6, 4
      %s108 = int_to_ptr.hbm [resolvable:$true] %s107
      %s109 = sshll.u32 [#allocation13], 4
      %s110 = int_to_ptr.vmem [resolvable:$true] %s109
      %115 = dma.hbm_to_vmem [thread:$0]  %s108, 512, %s110, [#allocation12], 64, 64, 4
    $region29: #{tpu_custom_call.1} parent=1 // pred_fallthru
      _
    // Predicated region
    $region30: #{tpu_custom_call.1} parent=1 // pred_check
      _
    $region31: #{tpu_custom_call.1} parent=1 // pred_check_branch
      %117 = sbr.rel (0) target = $region33
    $region32: #{tpu_custom_call.1} parent=1 // pred_region
      %119 = vsyncadd [#allocation15], 0
      %s120 = sshll.u32 %s7, 4
      %s121 = int_to_ptr.hbm [resolvable:$true] %s120
      %s122 = sshll.u32 [#allocation14], 4
      %s123 = int_to_ptr.vmem [resolvable:$true] %s122
      %128 = dma.hbm_to_vmem [thread:$0]  %s121, 2048, %s123, [#allocation15], 64, 64, 4
    $region33: #{tpu_custom_call.1} parent=1 // pred_fallthru
      _
    // Predicated region
    $region34: #{tpu_custom_call.1} parent=1 // pred_check
      _
    $region35: #{tpu_custom_call.1} parent=1 // pred_check_branch
      %130 = sbr.rel (0) target = $region37
    $region36: #{tpu_custom_call.1} parent=1 // pred_region
      %132 = vsyncadd [#allocation15], 0
      %s133 = sshll.u32 %s8, 4
      %s134 = int_to_ptr.hbm [resolvable:$true] %s133
      %s135 = sshll.u32 [#allocation16], 4
      %s136 = int_to_ptr.vmem [resolvable:$true] %s135
      %141 = dma.hbm_to_vmem [thread:$0]  %s134, 512, %s136, [#allocation15], 64, 64, 4
    $region37: #{tpu_custom_call.1} parent=1 // pred_fallthru
      _
    // Predicated region
    $region38: #{tpu_custom_call.1} parent=1 // pred_check
      _
    $region39: #{tpu_custom_call.1} parent=1 // pred_check_branch
      %143 = sbr.rel (0) target = $region41
    $region40: #{tpu_custom_call.1} parent=1 // pred_region
      %145 = vsyncadd [#allocation18], 0
      %s146 = sshll.u32 %s9, 4
      %s147 = int_to_ptr.hbm [resolvable:$true] %s146
      %s148 = sshll.u32 [#allocation17], 4
      %s149 = int_to_ptr.vmem [resolvable:$true] %s148
      %154 = dma.hbm_to_vmem [thread:$0]  %s147, 2048, %s149, [#allocation18], 64, 64, 4
    $region41: #{tpu_custom_call.1} parent=1 // pred_fallthru
      _
    // Predicated region
    $region42: #{tpu_custom_call.1} parent=1 // pred_check
      _
    $region43: #{tpu_custom_call.1} parent=1 // pred_check_branch
      %156 = sbr.rel (0) target = $region45
    $region44: #{tpu_custom_call.1} parent=1 // pred_region
      %158 = vsyncadd [#allocation18], 0
      %s159 = sshll.u32 %s10, 4
      %s160 = int_to_ptr.hbm [resolvable:$true] %s159
      %s161 = sshll.u32 [#allocation19], 4
      %s162 = int_to_ptr.vmem [resolvable:$true] %s161
      %167 = dma.hbm_to_vmem [thread:$0]  %s160, 512, %s162, [#allocation18], 64, 64, 4
    $region45: #{tpu_custom_call.1} parent=1 // pred_fallthru
      _
    // Predicated region
    $region46: #{tpu_custom_call.1} parent=1 // pred_check
      _
    $region47: #{tpu_custom_call.1} parent=1 // pred_check_branch
      %169 = sbr.rel (0) target = $region49
    $region48: #{tpu_custom_call.1} parent=1 // pred_region
      %171 = vsyncadd [#allocation21], 0
      %s172 = sshll.u32 %s11, 4
      %s173 = int_to_ptr.hbm [resolvable:$true] %s172
      %s174 = sshll.u32 [#allocation20], 4
      %s175 = int_to_ptr.vmem [resolvable:$true] %s174
      %180 = dma.hbm_to_vmem [thread:$0]  %s173, 2048, %s175, [#allocation21], 64, 64, 4
    $region49: #{tpu_custom_call.1} parent=1 // pred_fallthru
      _
    // Predicated region
    $region50: #{tpu_custom_call.1} parent=1 // pred_check
      _
    $region51: #{tpu_custom_call.1} parent=1 // pred_check_branch
      %182 = sbr.rel (0) target = $region53
    $region52: #{tpu_custom_call.1} parent=1 // pred_region
      %184 = dma.done [#allocation3], 64
    $region53: #{tpu_custom_call.1} parent=1 // pred_fallthru
      _
    // Predicated region
    $region54: #{tpu_custom_call.1} parent=1 // pred_check
      _
    $region55: #{tpu_custom_call.1} parent=1 // pred_check_branch
      %186 = sbr.rel (0) target = $region57
    $region56: #{tpu_custom_call.1} parent=1 // pred_region
      %188 = dma.done [#allocation6], 5120
    $region57: #{tpu_custom_call.1} parent=1 // pred_fallthru
      _
    // Predicated region
    $region58: #{tpu_custom_call.1} parent=1 // pred_check
      _
    $region59: #{tpu_custom_call.1} parent=1 // pred_check_branch
      %190 = sbr.rel (0) target = $region61
    $region60: #{tpu_custom_call.1} parent=1 // pred_region
      %192 = dma.done [#allocation6], 512
    $region61: #{tpu_custom_call.1} parent=1 // pred_fallthru
      _
    // Predicated region
    $region62: #{tpu_custom_call.1} parent=1 // pred_check
      _
    $region63: #{tpu_custom_call.1} parent=1 // pred_check_branch
      %194 = sbr.rel (0) target = $region65
    $region64: #{tpu_custom_call.1} parent=1 // pred_region
      %196 = dma.done [#allocation9], 2048
    $region65: #{tpu_custom_call.1} parent=1 // pred_fallthru
      _
    // Predicated region
    $region66: #{tpu_custom_call.1} parent=1 // pred_check
      _
    $region67: #{tpu_custom_call.1} parent=1 // pred_check_branch
      %198 = sbr.rel (0) target = $region69
    $region68: #{tpu_custom_call.1} parent=1 // pred_region
      %200 = dma.done [#allocation9], 512
    $region69: #{tpu_custom_call.1} parent=1 // pred_fallthru
      _
    // Predicated region
    $region70: #{tpu_custom_call.1} parent=1 // pred_check
      _
    $region71: #{tpu_custom_call.1} parent=1 // pred_check_branch
      %202 = sbr.rel (0) target = $region73
    $region72: #{tpu_custom_call.1} parent=1 // pred_region
      %204 = dma.done [#allocation12], 2048
    $region73: #{tpu_custom_call.1} parent=1 // pred_fallthru
      _
    // Predicated region
    $region74: #{tpu_custom_call.1} parent=1 // pred_check
      _
    $region75: #{tpu_custom_call.1} parent=1 // pred_check_branch
      %206 = sbr.rel (0) target = $region77
    $region76: #{tpu_custom_call.1} parent=1 // pred_region
      %208 = dma.done [#allocation12], 512
    $region77: #{tpu_custom_call.1} parent=1 // pred_fallthru
      _
    // Predicated region
    $region78: #{tpu_custom_call.1} parent=1 // pred_check
      _
    $region79: #{tpu_custom_call.1} parent=1 // pred_check_branch
      %210 = sbr.rel (0) target = $region81
    $region80: #{tpu_custom_call.1} parent=1 // pred_region
      %212 = dma.done [#allocation15], 2048
    $region81: #{tpu_custom_call.1} parent=1 // pred_fallthru
      _
    // Predicated region
    $region82: #{tpu_custom_call.1} parent=1 // pred_check
      _
    $region83: #{tpu_custom_call.1} parent=1 // pred_check_branch
      %214 = sbr.rel (0) target = $region85
    $region84: #{tpu_custom_call.1} parent=1 // pred_region
      %216 = dma.done [#allocation15], 512
    $region85: #{tpu_custom_call.1} parent=1 // pred_fallthru
      _
    // Predicated region
    $region86: #{tpu_custom_call.1} parent=1 // pred_check
      _
    $region87: #{tpu_custom_call.1} parent=1 // pred_check_branch
      %218 = sbr.rel (0) target = $region89
    $region88: #{tpu_custom_call.1} parent=1 // pred_region
      %220 = dma.done [#allocation18], 2048
    $region89: #{tpu_custom_call.1} parent=1 // pred_fallthru
      _
    // Predicated region
    $region90: #{tpu_custom_call.1} parent=1 // pred_check
      _
    $region91: #{tpu_custom_call.1} parent=1 // pred_check_branch
      %222 = sbr.rel (0) target = $region93
    $region92: #{tpu_custom_call.1} parent=1 // pred_region
      %224 = dma.done [#allocation18], 512
    $region93: #{tpu_custom_call.1} parent=1 // pred_fallthru
      _
    // Predicated region
    $region94: #{tpu_custom_call.1} parent=1 // pred_check
      _
    $region95: #{tpu_custom_call.1} parent=1 // pred_check_branch
      %226 = sbr.rel (0) target = $region97
    $region96: #{tpu_custom_call.1} parent=1 // pred_region
      %228 = dma.done [#allocation21], 2048
    $region97: #{tpu_custom_call.1} parent=1 // pred_fallthru
      _
    %v230 = vld [vmem:[#allocation2] sm:$0x1]
    %v231 = vld [vmem:[#allocation2 + $0x1] sm:$0x1]
    %v232 = vld [vmem:[#allocation2 + $0x2] sm:$0x1]
    %v233 = vld [vmem:[#allocation2 + $0x3] sm:$0x1]
    %v234 = vld [vmem:[#allocation5] sm:$0xff]
    %v235 = vld [vmem:[#allocation5 + $0x8] sm:$0xff]
    %v236 = vld [vmem:[#allocation5 + $0x10] sm:$0xff]
    %v237 = vld [vmem:[#allocation5 + $0x18] sm:$0xff]
    %v238 = vld [vmem:[#allocation5 + $0x20] sm:$0xff]
    %v239 = vld [vmem:[#allocation5 + $0x28] sm:$0xff]
    %v240 = vld [vmem:[#allocation5 + $0x30] sm:$0xff]
    %v241 = vld [vmem:[#allocation5 + $0x38] sm:$0xff]
    %v242 = vld [vmem:[#allocation5 + $0x40] sm:$0xff]
    %v243 = vld [vmem:[#allocation5 + $0x48] sm:$0xff]
    %v244 = vld [vmem:[#allocation5 + $0x50] sm:$0xff]
    %v245 = vld [vmem:[#allocation5 + $0x58] sm:$0xff]
    %v246 = vld [vmem:[#allocation5 + $0x60] sm:$0xff]
    %v247 = vld [vmem:[#allocation5 + $0x68] sm:$0xff]
    %v248 = vld [vmem:[#allocation5 + $0x70] sm:$0xff]
    %v249 = vld [vmem:[#allocation5 + $0x78] sm:$0xff]
    %v250 = vld [vmem:[#allocation5 + $0x80] sm:$0xff]
    %v251 = vld [vmem:[#allocation5 + $0x88] sm:$0xff]
    %v252 = vld [vmem:[#allocation5 + $0x90] sm:$0xff]
    %v253 = vld [vmem:[#allocation5 + $0x98] sm:$0xff]
    %v254 = vld [vmem:[#allocation5 + $0xa0] sm:$0xff]
    %v255 = vld [vmem:[#allocation5 + $0xa8] sm:$0xff]
    %v256 = vld [vmem:[#allocation5 + $0xb0] sm:$0xff]
    %v257 = vld [vmem:[#allocation5 + $0xb8] sm:$0xff]
    %v258 = vld [vmem:[#allocation5 + $0xc0] sm:$0xff]
    %v259 = vld [vmem:[#allocation5 + $0xc8] sm:$0xff]
    %v260 = vld [vmem:[#allocation5 + $0xd0] sm:$0xff]
    %v261 = vld [vmem:[#allocation5 + $0xd8] sm:$0xff]
    %v262 = vld [vmem:[#allocation5 + $0xe0] sm:$0xff]
    %v263 = vld [vmem:[#allocation5 + $0xe8] sm:$0xff]
    %v264 = vld [vmem:[#allocation5 + $0xf0] sm:$0xff]
    %v265 = vld [vmem:[#allocation5 + $0xf8] sm:$0xff]
    %v266 = vld [vmem:[#allocation5 + $0x100] sm:$0xff]
    %v267 = vld [vmem:[#allocation5 + $0x108] sm:$0xff]
    %v268 = vld [vmem:[#allocation5 + $0x110] sm:$0xff]
    %v269 = vld [vmem:[#allocation5 + $0x118] sm:$0xff]
    %v270 = vld [vmem:[#allocation5 + $0x120] sm:$0xff]
    %v271 = vld [vmem:[#allocation5 + $0x128] sm:$0xff]
    %v272 = vld [vmem:[#allocation5 + $0x130] sm:$0xff]
    %v273 = vld [vmem:[#allocation5 + $0x138] sm:$0xff]
    %275 = vst [vmem:[#allocation1] ss:$9 sm:$0xff] %v230
    %s277 = scalar_lea.vmem [#allocation1], 1
    %278 = vst [vmem:[%s277] ss:$9 sm:$0xff] %v231
    %s280 = scalar_lea.vmem [#allocation1], 2
    %281 = vst [vmem:[%s280] ss:$9 sm:$0xff] %v232
    %s283 = scalar_lea.vmem [#allocation1], 3
    %284 = vst [vmem:[%s283] ss:$9 sm:$0xff] %v233
    %v285 = vld [vmem:[#allocation1] sm:$0xff]
    %v326 = vunpack.c.l.b16 %v234
    %v327 = vunpack.c.h.b16 %v234
    %v328 = vunpack.c.l.b16 %v235
    %v329 = vunpack.c.h.b16 %v235
    %v330 = vunpack.c.l.b16 %v236
    %v331 = vunpack.c.h.b16 %v236
    %v332 = vunpack.c.l.b16 %v237
    %v333 = vunpack.c.h.b16 %v237
    %v334 = vunpack.c.l.b16 %v238
    %v335 = vunpack.c.h.b16 %v238
    %v336 = vunpack.c.l.b16 %v239
    %v337 = vunpack.c.h.b16 %v239
    %v338 = vunpack.c.l.b16 %v240
    %v339 = vunpack.c.h.b16 %v240
    %v340 = vunpack.c.l.b16 %v241
    %v341 = vunpack.c.h.b16 %v241
    %v342 = vunpack.c.l.b16 %v242
    %v343 = vunpack.c.h.b16 %v242
    %v344 = vunpack.c.l.b16 %v243
    %v345 = vunpack.c.h.b16 %v243
    %v346 = vunpack.c.l.b16 %v244
    %v347 = vunpack.c.h.b16 %v244
    %v348 = vunpack.c.l.b16 %v245
    %v349 = vunpack.c.h.b16 %v245
    %v350 = vunpack.c.l.b16 %v246
    %v351 = vunpack.c.h.b16 %v246
    %v352 = vunpack.c.l.b16 %v247
    %v353 = vunpack.c.h.b16 %v247
    %v354 = vunpack.c.l.b16 %v248
    %v355 = vunpack.c.h.b16 %v248
    %v356 = vunpack.c.l.b16 %v249
    %v357 = vunpack.c.h.b16 %v249
    %v358 = vunpack.c.l.b16 %v250
    %v359 = vunpack.c.h.b16 %v250
    %v360 = vunpack.c.l.b16 %v251
    %v361 = vunpack.c.h.b16 %v251
    %v362 = vunpack.c.l.b16 %v252
    %v363 = vunpack.c.h.b16 %v252
    %v364 = vunpack.c.l.b16 %v253
    %v365 = vunpack.c.h.b16 %v253
    %v366 = vunpack.c.l.b16 %v254
    %v367 = vunpack.c.h.b16 %v254
    %v368 = vunpack.c.l.b16 %v255
    %v369 = vunpack.c.h.b16 %v255
    %v370 = vunpack.c.l.b16 %v256
    %v371 = vunpack.c.h.b16 %v256
    %v372 = vunpack.c.l.b16 %v257
    %v373 = vunpack.c.h.b16 %v257
    %v374 = vunpack.c.l.b16 %v258
    %v375 = vunpack.c.h.b16 %v258
    %v376 = vunpack.c.l.b16 %v259
    %v377 = vunpack.c.h.b16 %v259
    %v378 = vunpack.c.l.b16 %v260
    %v379 = vunpack.c.h.b16 %v260
    %v380 = vunpack.c.l.b16 %v261
    %v381 = vunpack.c.h.b16 %v261
    %v382 = vunpack.c.l.b16 %v262
    %v383 = vunpack.c.h.b16 %v262
    %v384 = vunpack.c.l.b16 %v263
    %v385 = vunpack.c.h.b16 %v263
    %v386 = vunpack.c.l.b16 %v264
    %v387 = vunpack.c.h.b16 %v264
    %v388 = vunpack.c.l.b16 %v265
    %v389 = vunpack.c.h.b16 %v265
    %v390 = vunpack.c.l.b16 %v266
    %v391 = vunpack.c.h.b16 %v266
    %v392 = vunpack.c.l.b16 %v267
    %v393 = vunpack.c.h.b16 %v267
    %v394 = vunpack.c.l.b16 %v268
    %v395 = vunpack.c.h.b16 %v268
    %v396 = vunpack.c.l.b16 %v269
    %v397 = vunpack.c.h.b16 %v269
    %v398 = vunpack.c.l.b16 %v270
    %v399 = vunpack.c.h.b16 %v270
    %v400 = vunpack.c.l.b16 %v271
    %v401 = vunpack.c.h.b16 %v271
    %v402 = vunpack.c.l.b16 %v272
    %v403 = vunpack.c.h.b16 %v272
    %v404 = vunpack.c.l.b16 %v273
    %v405 = vunpack.c.h.b16 %v273
    %v406 = vpack.c.b16 %v336, %v326
    %v407 = vpack.c.b16 %v337, %v327
    %v408 = vpack.c.b16 %v338, %v328
    %v409 = vpack.c.b16 %v339, %v329
    %v410 = vpack.c.b16 %v340, %v330
    %v411 = vpack.c.b16 %v341, %v331
    %v412 = vpack.c.b16 %v342, %v332
    %v413 = vpack.c.b16 %v343, %v333
    %v414 = vpack.c.b16 %v344, %v334
    %v415 = vpack.c.b16 %v345, %v335
    %v416 = vpack.c.b16 %v356, %v346
    %v417 = vpack.c.b16 %v357, %v347
    %v418 = vpack.c.b16 %v358, %v348
    %v419 = vpack.c.b16 %v359, %v349
    %v420 = vpack.c.b16 %v360, %v350
    %v421 = vpack.c.b16 %v361, %v351
    %v422 = vpack.c.b16 %v362, %v352
    %v423 = vpack.c.b16 %v363, %v353
    %v424 = vpack.c.b16 %v364, %v354
    %v425 = vpack.c.b16 %v365, %v355
    %v426 = vpack.c.b16 %v376, %v366
    %v427 = vpack.c.b16 %v377, %v367
    %v428 = vpack.c.b16 %v378, %v368
    %v429 = vpack.c.b16 %v379, %v369
    %v430 = vpack.c.b16 %v380, %v370
    %v431 = vpack.c.b16 %v381, %v371
    %v432 = vpack.c.b16 %v382, %v372
    %v433 = vpack.c.b16 %v383, %v373
    %v434 = vpack.c.b16 %v384, %v374
    %v435 = vpack.c.b16 %v385, %v375
    %v436 = vpack.c.b16 %v396, %v386
    %v437 = vpack.c.b16 %v397, %v387
    %v438 = vpack.c.b16 %v398, %v388
    %v439 = vpack.c.b16 %v399, %v389
    %v440 = vpack.c.b16 %v400, %v390
    %v441 = vpack.c.b16 %v401, %v391
    %v442 = vpack.c.b16 %v402, %v392
    %v443 = vpack.c.b16 %v403, %v393
    %v444 = vpack.c.b16 %v404, %v394
    %v445 = vpack.c.b16 %v405, %v395
    %vm486 = vcmask 523264
    %v487 = vsel %vm486, %v285, 0
    %489 = vmatpush.bf16.msra.mxu0 0
    %490 = vmatpush.bf16.msra.mxu0 0
    %491 = vmatpush.bf16.msra.mxu0 0
    %492 = vmatpush.bf16.msra.mxu0 0
    %493 = vmatpush.bf16.msra.mxu0 %v436
    %494 = vmatpush.bf16.msra.mxu0 %v426
    %495 = vmatpush.bf16.msra.mxu0 %v416
    %496 = vmatpush.bf16.msra.mxu0 %v406
    %497 = vmatmul.bf16.gmra.mxu0 %v487
    %v498 = vpop.f32.mrf.mxu0
    %v499 = vadd.f32 0.0, %v498
    %v500 = vpop.f32.mrf.mxu0
    %501 = vdwg.mxu0
    %502 = vmatpush.bf16.msra.mxu0 0
    %503 = vmatpush.bf16.msra.mxu0 0
    %504 = vmatpush.bf16.msra.mxu0 0
    %505 = vmatpush.bf16.msra.mxu0 0
    %506 = vmatpush.bf16.msra.mxu0 %v437
    %507 = vmatpush.bf16.msra.mxu0 %v427
    %508 = vmatpush.bf16.msra.mxu0 %v417
    %509 = vmatpush.bf16.msra.mxu0 %v407
    %510 = vmatmul.bf16.gmra.mxu0 %v487
    %v511 = vpop.f32.mrf.mxu0
    %v512 = vadd.f32 0.0, %v511
    %v513 = vpop.f32.mrf.mxu0
    %514 = vdwg.mxu0
    %515 = vmatpush.bf16.msra.mxu0 0
    %516 = vmatpush.bf16.msra.mxu0 0
    %517 = vmatpush.bf16.msra.mxu0 0
    %518 = vmatpush.bf16.msra.mxu0 0
    %519 = vmatpush.bf16.msra.mxu0 %v438
    %520 = vmatpush.bf16.msra.mxu0 %v428
    %521 = vmatpush.bf16.msra.mxu0 %v418
    %522 = vmatpush.bf16.msra.mxu0 %v408
    %523 = vmatmul.bf16.gmra.mxu0 %v487
    %v524 = vpop.f32.mrf.mxu0
    %v525 = vadd.f32 0.0, %v524
    %v526 = vpop.f32.mrf.mxu0
    %527 = vdwg.mxu0
    %528 = vmatpush.bf16.msra.mxu0 0
    %529 = vmatpush.bf16.msra.mxu0 0
    %530 = vmatpush.bf16.msra.mxu0 0
    %531 = vmatpush.bf16.msra.mxu0 0
    %532 = vmatpush.bf16.msra.mxu0 %v439
    %533 = vmatpush.bf16.msra.mxu0 %v429
    %534 = vmatpush.bf16.msra.mxu0 %v419
    %535 = vmatpush.bf16.msra.mxu0 %v409
    %536 = vmatmul.bf16.gmra.mxu0 %v487
    %v537 = vpop.f32.mrf.mxu0
    %v538 = vadd.f32 0.0, %v537
    %v539 = vpop.f32.mrf.mxu0
    %540 = vdwg.mxu0
    %541 = vmatpush.bf16.msra.mxu0 0
    %542 = vmatpush.bf16.msra.mxu0 0
    %543 = vmatpush.bf16.msra.mxu0 0
    %544 = vmatpush.bf16.msra.mxu0 0
    %545 = vmatpush.bf16.msra.mxu0 %v440
    %546 = vmatpush.bf16.msra.mxu0 %v430
    %547 = vmatpush.bf16.msra.mxu0 %v420
    %548 = vmatpush.bf16.msra.mxu0 %v410
    %549 = vmatmul.bf16.gmra.mxu0 %v487
    %v550 = vpop.f32.mrf.mxu0
    %v551 = vadd.f32 0.0, %v550
    %v552 = vpop.f32.mrf.mxu0
    %553 = vdwg.mxu0
    %554 = vmatpush.bf16.msra.mxu0 0
    %555 = vmatpush.bf16.msra.mxu0 0
    %556 = vmatpush.bf16.msra.mxu0 0
    %557 = vmatpush.bf16.msra.mxu0 0
    %558 = vmatpush.bf16.msra.mxu0 %v441
    %559 = vmatpush.bf16.msra.mxu0 %v431
    %560 = vmatpush.bf16.msra.mxu0 %v421
    %561 = vmatpush.bf16.msra.mxu0 %v411
    %562 = vmatmul.bf16.gmra.mxu0 %v487
    %v563 = vpop.f32.mrf.mxu0
    %v564 = vadd.f32 0.0, %v563
    %v565 = vpop.f32.mrf.mxu0
    %566 = vdwg.mxu0
    %567 = vmatpush.bf16.msra.mxu0 0
    %568 = vmatpush.bf16.msra.mxu0 0
    %569 = vmatpush.bf16.msra.mxu0 0
    %570 = vmatpush.bf16.msra.mxu0 0
    %571 = vmatpush.bf16.msra.mxu0 %v442
    %572 = vmatpush.bf16.msra.mxu0 %v432
    %573 = vmatpush.bf16.msra.mxu0 %v422
    %574 = vmatpush.bf16.msra.mxu0 %v412
    %575 = vmatmul.bf16.gmra.mxu0 %v487
    %v576 = vpop.f32.mrf.mxu0
    %v577 = vadd.f32 0.0, %v576
    %v578 = vpop.f32.mrf.mxu0
    %579 = vdwg.mxu0
    %580 = vmatpush.bf16.msra.mxu0 0
    %581 = vmatpush.bf16.msra.mxu0 0
    %582 = vmatpush.bf16.msra.mxu0 0
    %583 = vmatpush.bf16.msra.mxu0 0
    %584 = vmatpush.bf16.msra.mxu0 %v443
    %585 = vmatpush.bf16.msra.mxu0 %v433
    %586 = vmatpush.bf16.msra.mxu0 %v423
    %587 = vmatpush.bf16.msra.mxu0 %v413
    %588 = vmatmul.bf16.gmra.mxu0 %v487
    %v589 = vpop.f32.mrf.mxu0
    %v590 = vadd.f32 0.0, %v589
    %v591 = vpop.f32.mrf.mxu0
    %592 = vdwg.mxu0
    %593 = vmatpush.bf16.msra.mxu0 0
    %594 = vmatpush.bf16.msra.mxu0 0
    %595 = vmatpush.bf16.msra.mxu0 0
    %596 = vmatpush.bf16.msra.mxu0 0
    %597 = vmatpush.bf16.msra.mxu0 %v444
    %598 = vmatpush.bf16.msra.mxu0 %v434
    %599 = vmatpush.bf16.msra.mxu0 %v424
    %600 = vmatpush.bf16.msra.mxu0 %v414
    %601 = vmatmul.bf16.gmra.mxu0 %v487
    %v602 = vpop.f32.mrf.mxu0
    %v603 = vadd.f32 0.0, %v602
    %v604 = vpop.f32.mrf.mxu0
    %605 = vdwg.mxu0
    %606 = vmatpush.bf16.msra.mxu0 0
    %607 = vmatpush.bf16.msra.mxu0 0
    %608 = vmatpush.bf16.msra.mxu0 0
    %609 = vmatpush.bf16.msra.mxu0 0
    %610 = vmatpush.bf16.msra.mxu0 %v445
    %611 = vmatpush.bf16.msra.mxu0 %v435
    %612 = vmatpush.bf16.msra.mxu0 %v425
    %613 = vmatpush.bf16.msra.mxu0 %v415
    %614 = vmatmul.bf16.gmra.mxu0 %v487
    %v615 = vpop.f32.mrf.mxu0
    %v616 = vadd.f32 0.0, %v615
    %v617 = vpop.f32.mrf.mxu0
    %618 = vdwg.mxu0
    %v629 = vrot.slane %v512, 6
    %v630 = vrot.slane %v525, 4
    %v631 = vrot.slane %v538, 2
    %v632 = vrot.slane %v564, 6
    %v633 = vrot.slane %v577, 4
    %v634 = vrot.slane %v590, 2
    %v635 = vrot.slane %v616, 6
    %vm636 = vcmask 1041408
    %v637 = vsel %vm636, %v499, %v629
    %vm638 = vcmask 1045508
    %v639 = vsel %vm638, %v630, %v631
    %vm640 = vcmask 1043456
    %v641 = vsel %vm640, %v637, %v639
    %v642 = vsel %vm636, %v551, %v632
    %v643 = vsel %vm638, %v633, %v634
    %v644 = vsel %vm640, %v642, %v643
    %v645 = vsel %vm636, %v603, %v635
    %vm646 = vcmask 1043458
    %v647 = vsel %vm646, %v499, %v629
    %vm648 = vcmask 1045504
    %v649 = vsel %vm648, %v631, %v630
    %vm650 = vcmask 1045506
    %v651 = vsel %vm650, %v647, %v649
    %v652 = vrot.slane %v651, 2
    %v653 = vsel %vm646, %v551, %v632
    %v654 = vsel %vm648, %v634, %v633
    %v655 = vsel %vm650, %v653, %v654
    %v656 = vrot.slane %v655, 2
    %v657 = vsel %vm646, %v603, %v635
    %v658 = vrot.slane %v657, 2
    %v659 = vsel %vm638, %v499, %v629
    %v660 = vsel %vm636, %v630, %v631
    %v661 = vsel %vm640, %v660, %v659
    %v662 = vrot.slane %v661, 4
    %v663 = vsel %vm638, %v551, %v632
    %v664 = vsel %vm636, %v633, %v634
    %v665 = vsel %vm640, %v664, %v663
    %v666 = vrot.slane %v665, 4
    %v667 = vsel %vm638, %v603, %v635
    %v668 = vrot.slane %v667, 4
    %v669 = vsel %vm648, %v629, %v499
    %v670 = vsel %vm646, %v630, %v631
    %v671 = vsel %vm650, %v670, %v669
    %v672 = vrot.slane %v671, 6
    %v673 = vsel %vm648, %v632, %v551
    %v674 = vsel %vm646, %v633, %v634
    %v675 = vsel %vm650, %v674, %v673
    %v676 = vrot.slane %v675, 6
    %v677 = vsel %vm648, %v635, %v603
    %v678 = vrot.slane %v677, 6
    %v691 = vld [vmem:[#allocation7] sm:$0xf]
    %v692 = vld [vmem:[#allocation7 + $0x4] sm:$0xf]
    %v693 = vld [vmem:[#allocation7 + $0x8] sm:$0xf]
    %v694 = vld [vmem:[#allocation7 + $0xc] sm:$0xf]
    %v695 = vld [vmem:[#allocation7 + $0x10] sm:$0xf]
    %v696 = vld [vmem:[#allocation7 + $0x14] sm:$0xf]
    %v697 = vld [vmem:[#allocation7 + $0x18] sm:$0xf]
    %v698 = vld [vmem:[#allocation7 + $0x1c] sm:$0xf]
    %699 = vst [vmem:[#allocation1] ss:$4 sm:$0xff] %v641
    %v700 = vld.sshfl [vmem:[#allocation1] sm:$0xff pattern:$0x73625140]
    %v701 = vld.sshfl [vmem:[#allocation1 + $0x8] sm:$0xff pattern:$0x73625140]
    %v705 = vrot.slane %v691, 1
    %v706 = vrot.slane %v691, 2
    %v707 = vrot.slane %v691, 3
    %vm708 = vcmask 1040384
    %v709 = vsel %vm708, %v691, %v705
    %vm710 = vcmask 1042434
    %v711 = vsel %vm710, %v706, %v707
    %v712 = vsel %vm636, %v709, %v711
    %vm713 = vcmask 1041409
    %v714 = vsel %vm713, %v691, %v705
    %vm715 = vcmask 1043459
    %v716 = vsel %vm715, %v706, %v707
    %vm717 = vcmask 1042433
    %v718 = vsel %vm717, %v714, %v716
    %v719 = vrot.slane %v718, 1
    %v720 = vperm.slane %v712, 0
    %v721 = vperm.slane %v712, 1
    %v722 = vperm.slane %v719, 0
    %v723 = vperm.slane %v719, 1
    %v724 = vrot.slane %v721, 6
    %v725 = vrot.slane %v723, 6
    %v726 = vsel %vm636, %v720, %v724
    %v727 = vsel %vm636, %v722, %v725
    %v730 = vmul.f32 %v641, %v726
    %v731 = vmul.f32 %v641, %v727
    %v733 = vrot.slane %v695, 1
    %v734 = vrot.slane %v695, 2
    %v735 = vrot.slane %v695, 3
    %v736 = vsel %vm708, %v695, %v733
    %v737 = vsel %vm710, %v734, %v735
    %v738 = vsel %vm636, %v736, %v737
    %v739 = vsel %vm713, %v695, %v733
    %v740 = vsel %vm715, %v734, %v735
    %v741 = vsel %vm717, %v739, %v740
    %v742 = vrot.slane %v741, 1
    %v743 = vperm.slane %v738, 0
    %v744 = vperm.slane %v738, 1
    %v745 = vperm.slane %v742, 0
    %v746 = vperm.slane %v742, 1
    %v751 = vmul.f32 %v701, %v743
    %v752 = vmul.f32 %v700, %v744
    %v753 = vmul.f32 %v701, %v745
    %v754 = vmul.f32 %v700, %v746
    %v759 = vrot.slane %v752, 6
    %v760 = vrot.slane %v754, 6
    %v761 = vsel %vm636, %v751, %v759
    %v762 = vsel %vm636, %v753, %v760
    %v765 = vadd.f32 %v730, %v761
    %v766 = vadd.f32 %v731, %v762
    %767 = vst [vmem:[#allocation1] ss:$4 sm:$0xff] %v652
    %v768 = vld.sshfl [vmem:[#allocation1] sm:$0xff pattern:$0x73625140]
    %v769 = vld.sshfl [vmem:[#allocation1 + $0x8] sm:$0xff pattern:$0x73625140]
    %v773 = vrot.slane %v692, 1
    %v774 = vrot.slane %v692, 2
    %v775 = vrot.slane %v692, 3
    %v776 = vsel %vm708, %v692, %v773
    %v777 = vsel %vm710, %v774, %v775
    %v778 = vsel %vm636, %v776, %v777
    %v779 = vsel %vm713, %v692, %v773
    %v780 = vsel %vm715, %v774, %v775
    %v781 = vsel %vm717, %v779, %v780
    %v782 = vrot.slane %v781, 1
    %v783 = vperm.slane %v778, 0
    %v784 = vperm.slane %v778, 1
    %v785 = vperm.slane %v782, 0
    %v786 = vperm.slane %v782, 1
    %v787 = vrot.slane %v784, 6
    %v788 = vrot.slane %v786, 6
    %v789 = vsel %vm636, %v783, %v787
    %v790 = vsel %vm636, %v785, %v788
    %v793 = vmul.f32 %v652, %v789
    %v794 = vmul.f32 %v652, %v790
    %v796 = vrot.slane %v696, 1
    %v797 = vrot.slane %v696, 2
    %v798 = vrot.slane %v696, 3
    %v799 = vsel %vm708, %v696, %v796
    %v800 = vsel %vm710, %v797, %v798
    %v801 = vsel %vm636, %v799, %v800
    %v802 = vsel %vm713, %v696, %v796
    %v803 = vsel %vm715, %v797, %v798
    %v804 = vsel %vm717, %v802, %v803
    %v805 = vrot.slane %v804, 1
    %v806 = vperm.slane %v801, 0
    %v807 = vperm.slane %v801, 1
    %v808 = vperm.slane %v805, 0
    %v809 = vperm.slane %v805, 1
    %v814 = vmul.f32 %v769, %v806
    %v815 = vmul.f32 %v768, %v807
    %v816 = vmul.f32 %v769, %v808
    %v817 = vmul.f32 %v768, %v809
    %v822 = vrot.slane %v815, 6
    %v823 = vrot.slane %v817, 6
    %v824 = vsel %vm636, %v814, %v822
    %v825 = vsel %vm636, %v816, %v823
    %v828 = vadd.f32 %v793, %v824
    %v829 = vadd.f32 %v794, %v825
    %v830 = vadd.f32 %v765, %v828
    %v831 = vadd.f32 %v766, %v829
    %832 = vst [vmem:[#allocation1] ss:$4 sm:$0xff] %v662
    %v833 = vld.sshfl [vmem:[#allocation1] sm:$0xff pattern:$0x73625140]
    %v834 = vld.sshfl [vmem:[#allocation1 + $0x8] sm:$0xff pattern:$0x73625140]
    %v838 = vrot.slane %v693, 1
    %v839 = vrot.slane %v693, 2
    %v840 = vrot.slane %v693, 3
    %v841 = vsel %vm708, %v693, %v838
    %v842 = vsel %vm710, %v839, %v840
    %v843 = vsel %vm636, %v841, %v842
    %v844 = vsel %vm713, %v693, %v838
    %v845 = vsel %vm715, %v839, %v840
    %v846 = vsel %vm717, %v844, %v845
    %v847 = vrot.slane %v846, 1
    %v848 = vperm.slane %v843, 0
    %v849 = vperm.slane %v843, 1
    %v850 = vperm.slane %v847, 0
    %v851 = vperm.slane %v847, 1
    %v852 = vrot.slane %v849, 6
    %v853 = vrot.slane %v851, 6
    %v854 = vsel %vm636, %v848, %v852
    %v855 = vsel %vm636, %v850, %v853
    %v858 = vmul.f32 %v662, %v854
    %v859 = vmul.f32 %v662, %v855
    %v861 = vrot.slane %v697, 1
    %v862 = vrot.slane %v697, 2
    %v863 = vrot.slane %v697, 3
    %v864 = vsel %vm708, %v697, %v861
    %v865 = vsel %vm710, %v862, %v863
    %v866 = vsel %vm636, %v864, %v865
    %v867 = vsel %vm713, %v697, %v861
    %v868 = vsel %vm715, %v862, %v863
    %v869 = vsel %vm717, %v867, %v868
    %v870 = vrot.slane %v869, 1
    %v871 = vperm.slane %v866, 0
    %v872 = vperm.slane %v866, 1
    %v873 = vperm.slane %v870, 0
    %v874 = vperm.slane %v870, 1
    %v879 = vmul.f32 %v834, %v871
    %v880 = vmul.f32 %v833, %v872
    %v881 = vmul.f32 %v834, %v873
    %v882 = vmul.f32 %v833, %v874
    %v887 = vrot.slane %v880, 6
    %v888 = vrot.slane %v882, 6
    %v889 = vsel %vm636, %v879, %v887
    %v890 = vsel %vm636, %v881, %v888
    %v893 = vadd.f32 %v858, %v889
    %v894 = vadd.f32 %v859, %v890
    %v895 = vadd.f32 %v830, %v893
    %v896 = vadd.f32 %v831, %v894
    %897 = vst [vmem:[#allocation1] ss:$4 sm:$0xff] %v672
    %v898 = vld.sshfl [vmem:[#allocation1] sm:$0xff pattern:$0x73625140]
    %v899 = vld.sshfl [vmem:[#allocation1 + $0x8] sm:$0xff pattern:$0x73625140]
    %v903 = vrot.slane %v694, 1
    %v904 = vrot.slane %v694, 2
    %v905 = vrot.slane %v694, 3
    %v906 = vsel %vm708, %v694, %v903
    %v907 = vsel %vm710, %v904, %v905
    %v908 = vsel %vm636, %v906, %v907
    %v909 = vsel %vm713, %v694, %v903
    %v910 = vsel %vm715, %v904, %v905
    %v911 = vsel %vm717, %v909, %v910
    %v912 = vrot.slane %v911, 1
    %v913 = vperm.slane %v908, 0
    %v914 = vperm.slane %v908, 1
    %v915 = vperm.slane %v912, 0
    %v916 = vperm.slane %v912, 1
    %v917 = vrot.slane %v914, 6
    %v918 = vrot.slane %v916, 6
    %v919 = vsel %vm636, %v913, %v917
    %v920 = vsel %vm636, %v915, %v918
    %v923 = vmul.f32 %v672, %v919
    %v924 = vmul.f32 %v672, %v920
    %v926 = vrot.slane %v698, 1
    %v927 = vrot.slane %v698, 2
    %v928 = vrot.slane %v698, 3
    %v929 = vsel %vm708, %v698, %v926
    %v930 = vsel %vm710, %v927, %v928
    %v931 = vsel %vm636, %v929, %v930
    %v932 = vsel %vm713, %v698, %v926
    %v933 = vsel %vm715, %v927, %v928
    %v934 = vsel %vm717, %v932, %v933
    %v935 = vrot.slane %v934, 1
    %v936 = vperm.slane %v931, 0
    %v937 = vperm.slane %v931, 1
    %v938 = vperm.slane %v935, 0
    %v939 = vperm.slane %v935, 1
    %v944 = vmul.f32 %v899, %v936
    %v945 = vmul.f32 %v898, %v937
    %v946 = vmul.f32 %v899, %v938
    %v947 = vmul.f32 %v898, %v939
    %v952 = vrot.slane %v945, 6
    %v953 = vrot.slane %v947, 6
    %v954 = vsel %vm636, %v944, %v952
    %v955 = vsel %vm636, %v946, %v953
    %v958 = vadd.f32 %v923, %v954
    %v959 = vadd.f32 %v924, %v955
    %v960 = vadd.f32 %v895, %v958
    %v961 = vadd.f32 %v896, %v959
    %964 = vst [vmem:[#allocation1] ss:$4 sm:$0xff] %v960
    %s965 = scalar_lea.vmem [#allocation1], 1
    %966 = vst [vmem:[%s965] ss:$4 sm:$0xff] %v961
    %v967 = vld.sshfl [vmem:[#allocation1] sm:$0xff pattern:$0x73625140]
    %v968 = vld.sshfl [vmem:[#allocation1 + $0x8] sm:$0xff pattern:$0x73625140]
    %v971 = vpack.c.bf16 %v967, %v967
    %v972 = vpack.c.bf16 %v968, %v968
    %v973 = vld [vmem:[#allocation8] sm:$0xf]
    %v974 = vld [vmem:[#allocation8 + $0x4] sm:$0xf]
    %v975 = vld [vmem:[#allocation8 + $0x8] sm:$0xf]
    %v976 = vld [vmem:[#allocation8 + $0xc] sm:$0xf]
    %v977 = vld [vmem:[#allocation8 + $0x10] sm:$0xf]
    %v978 = vld [vmem:[#allocation8 + $0x14] sm:$0xf]
    %v979 = vld [vmem:[#allocation8 + $0x18] sm:$0xf]
    %v980 = vld [vmem:[#allocation8 + $0x1c] sm:$0xf]
    %v981 = vld [vmem:[#allocation8 + $0x20] sm:$0xf]
    %v982 = vld [vmem:[#allocation8 + $0x24] sm:$0xf]
    %v983 = vld [vmem:[#allocation8 + $0x28] sm:$0xf]
    %v984 = vld [vmem:[#allocation8 + $0x2c] sm:$0xf]
    %v985 = vld [vmem:[#allocation8 + $0x30] sm:$0xf]
    %v986 = vld [vmem:[#allocation8 + $0x34] sm:$0xf]
    %v987 = vld [vmem:[#allocation8 + $0x38] sm:$0xf]
    %v988 = vld [vmem:[#allocation8 + $0x3c] sm:$0xf]
    %v989 = vld [vmem:[#allocation8 + $0x40] sm:$0xf]
    %v990 = vld [vmem:[#allocation8 + $0x44] sm:$0xf]
    %v991 = vld [vmem:[#allocation8 + $0x48] sm:$0xf]
    %v992 = vld [vmem:[#allocation8 + $0x4c] sm:$0xf]
    %v993 = vld [vmem:[#allocation8 + $0x50] sm:$0xf]
    %v994 = vld [vmem:[#allocation8 + $0x54] sm:$0xf]
    %v995 = vld [vmem:[#allocation8 + $0x58] sm:$0xf]
    %v996 = vld [vmem:[#allocation8 + $0x5c] sm:$0xf]
    %v997 = vld [vmem:[#allocation8 + $0x60] sm:$0xf]
    %v998 = vld [vmem:[#allocation8 + $0x64] sm:$0xf]
    %v999 = vld [vmem:[#allocation8 + $0x68] sm:$0xf]
    %v1000 = vld [vmem:[#allocation8 + $0x6c] sm:$0xf]
    %v1001 = vld [vmem:[#allocation8 + $0x70] sm:$0xf]
    %v1002 = vld [vmem:[#allocation8 + $0x74] sm:$0xf]
    %v1003 = vld [vmem:[#allocation8 + $0x78] sm:$0xf]
    %v1004 = vld [vmem:[#allocation8 + $0x7c] sm:$0xf]
    %v1037 = vunpack.c.l.b16 %v973
    %v1038 = vunpack.c.l.b16 %v974
    %v1039 = vunpack.c.l.b16 %v975
    %v1040 = vunpack.c.l.b16 %v976
    %v1041 = vunpack.c.l.b16 %v977
    %v1042 = vunpack.c.l.b16 %v978
    %v1043 = vunpack.c.l.b16 %v979
    %v1044 = vunpack.c.l.b16 %v980
    %v1045 = vunpack.c.l.b16 %v981
    %v1046 = vunpack.c.l.b16 %v982
    %v1047 = vunpack.c.l.b16 %v983
    %v1048 = vunpack.c.l.b16 %v984
    %v1049 = vunpack.c.l.b16 %v985
    %v1050 = vunpack.c.l.b16 %v986
    %v1051 = vunpack.c.l.b16 %v987
    %v1052 = vunpack.c.l.b16 %v988
    %v1053 = vunpack.c.l.b16 %v989
    %v1054 = vunpack.c.l.b16 %v990
    %v1055 = vunpack.c.l.b16 %v991
    %v1056 = vunpack.c.l.b16 %v992
    %v1057 = vunpack.c.l.b16 %v993
    %v1058 = vunpack.c.l.b16 %v994
    %v1059 = vunpack.c.l.b16 %v995
    %v1060 = vunpack.c.l.b16 %v996
    %v1061 = vunpack.c.l.b16 %v997
    %v1062 = vunpack.c.l.b16 %v998
    %v1063 = vunpack.c.l.b16 %v999
    %v1064 = vunpack.c.l.b16 %v1000
    %v1065 = vunpack.c.l.b16 %v1001
    %v1066 = vunpack.c.l.b16 %v1002
    %v1067 = vunpack.c.l.b16 %v1003
    %v1068 = vunpack.c.l.b16 %v1004
    %v1069 = vpack.c.b16 %v1038, %v1037
    %v1070 = vpack.c.b16 %v1040, %v1039
    %v1071 = vpack.c.b16 %v1042, %v1041
    %v1072 = vpack.c.b16 %v1044, %v1043
    %v1073 = vpack.c.b16 %v1046, %v1045
    %v1074 = vpack.c.b16 %v1048, %v1047
    %v1075 = vpack.c.b16 %v1050, %v1049
    %v1076 = vpack.c.b16 %v1052, %v1051
    %v1077 = vpack.c.b16 %v1054, %v1053
    %v1078 = vpack.c.b16 %v1056, %v1055
    %v1079 = vpack.c.b16 %v1058, %v1057
    %v1080 = vpack.c.b16 %v1060, %v1059
    %v1081 = vpack.c.b16 %v1062, %v1061
    %v1082 = vpack.c.b16 %v1064, %v1063
    %v1083 = vpack.c.b16 %v1066, %v1065
    %v1084 = vpack.c.b16 %v1068, %v1067
    %1101 = vmatpush.bf16.msra.mxu0 %v1076
    %1102 = vmatpush.bf16.msra.mxu0 %v1075
    %1103 = vmatpush.bf16.msra.mxu0 %v1074
    %1104 = vmatpush.bf16.msra.mxu0 %v1073
    %1105 = vmatpush.bf16.msra.mxu0 %v1072
    %1106 = vmatpush.bf16.msra.mxu0 %v1071
    %1107 = vmatpush.bf16.msra.mxu0 %v1070
    %1108 = vmatpush.bf16.msra.mxu0 %v1069
    %1109 = vmatmul.bf16.gmra.mxu0 %v971
    %v1110 = vpop.f32.mrf.mxu0
    %v1111 = vadd.f32 0.0, %v1110
    %v1112 = vpop.f32.mrf.mxu0
    %1113 = vdwg.mxu0
    %1114 = vmatpush.bf16.msra.mxu0 %v1084
    %1115 = vmatpush.bf16.msra.mxu0 %v1083
    %1116 = vmatpush.bf16.msra.mxu0 %v1082
    %1117 = vmatpush.bf16.msra.mxu0 %v1081
    %1118 = vmatpush.bf16.msra.mxu0 %v1080
    %1119 = vmatpush.bf16.msra.mxu0 %v1079
    %1120 = vmatpush.bf16.msra.mxu0 %v1078
    %1121 = vmatpush.bf16.msra.mxu0 %v1077
    %1122 = vmatmul.bf16.gmra.mxu0 %v972
    %v1123 = vpop.f32.mrf.mxu0
    %v1124 = vadd.f32 %v1111, %v1123
    %v1125 = vpop.f32.mrf.mxu0
    %1126 = vdwg.mxu0
    %v1128 = vrot.slane %v1124, 2
    %1130 = vst [vmem:[#allocation22] sm:$0x3] %v1124
    %1131 = vst [vmem:[#allocation22 + $0x2] sm:$0x3] %v1128
    %v1132 = vld [vmem:[#allocation10] sm:$0xf]
    %v1133 = vld [vmem:[#allocation10 + $0x4] sm:$0xf]
    %v1134 = vld [vmem:[#allocation10 + $0x8] sm:$0xf]
    %v1135 = vld [vmem:[#allocation10 + $0xc] sm:$0xf]
    %v1136 = vld [vmem:[#allocation10 + $0x10] sm:$0xf]
    %v1137 = vld [vmem:[#allocation10 + $0x14] sm:$0xf]
    %v1138 = vld [vmem:[#allocation10 + $0x18] sm:$0xf]
    %v1139 = vld [vmem:[#allocation10 + $0x1c] sm:$0xf]
    %v1140 = vrot.slane %v641, 4
    %1141 = vst [vmem:[#allocation1] ss:$4 sm:$0xff] %v1140
    %v1142 = vld.sshfl [vmem:[#allocation1] sm:$0xff pattern:$0x73625140]
    %v1143 = vld.sshfl [vmem:[#allocation1 + $0x8] sm:$0xff pattern:$0x73625140]
    %v1147 = vrot.slane %v1132, 1
    %v1148 = vrot.slane %v1132, 2
    %v1149 = vrot.slane %v1132, 3
    %v1150 = vsel %vm708, %v1132, %v1147
    %v1151 = vsel %vm710, %v1148, %v1149
    %v1152 = vsel %vm636, %v1150, %v1151
    %v1153 = vsel %vm713, %v1132, %v1147
    %v1154 = vsel %vm715, %v1148, %v1149
    %v1155 = vsel %vm717, %v1153, %v1154
    %v1156 = vrot.slane %v1155, 1
    %v1157 = vperm.slane %v1152, 0
    %v1158 = vperm.slane %v1152, 1
    %v1159 = vperm.slane %v1156, 0
    %v1160 = vperm.slane %v1156, 1
    %v1162 = vrot.slane %v1158, 6
    %v1163 = vrot.slane %v1160, 6
    %v1164 = vsel %vm636, %v1157, %v1162
    %v1165 = vsel %vm636, %v1159, %v1163
    %v1168 = vmul.f32 %v1140, %v1164
    %v1169 = vmul.f32 %v1140, %v1165
    %v1171 = vrot.slane %v1136, 1
    %v1172 = vrot.slane %v1136, 2
    %v1173 = vrot.slane %v1136, 3
    %v1174 = vsel %vm708, %v1136, %v1171
    %v1175 = vsel %vm710, %v1172, %v1173
    %v1176 = vsel %vm636, %v1174, %v1175
    %v1177 = vsel %vm713, %v1136, %v1171
    %v1178 = vsel %vm715, %v1172, %v1173
    %v1179 = vsel %vm717, %v1177, %v1178
    %v1180 = vrot.slane %v1179, 1
    %v1181 = vperm.slane %v1176, 0
    %v1182 = vperm.slane %v1176, 1
    %v1183 = vperm.slane %v1180, 0
    %v1184 = vperm.slane %v1180, 1
    %v1189 = vmul.f32 %v1143, %v1181
    %v1190 = vmul.f32 %v1142, %v1182
    %v1191 = vmul.f32 %v1143, %v1183
    %v1192 = vmul.f32 %v1142, %v1184
    %v1197 = vrot.slane %v1190, 6
    %v1198 = vrot.slane %v1192, 6
    %v1199 = vsel %vm636, %v1189, %v1197
    %v1200 = vsel %vm636, %v1191, %v1198
    %v1203 = vadd.f32 %v1168, %v1199
    %v1204 = vadd.f32 %v1169, %v1200
    %v1205 = vrot.slane %v652, 4
    %1206 = vst [vmem:[#allocation1] ss:$4 sm:$0xff] %v1205
    %v1207 = vld.sshfl [vmem:[#allocation1] sm:$0xff pattern:$0x73625140]
    %v1208 = vld.sshfl [vmem:[#allocation1 + $0x8] sm:$0xff pattern:$0x73625140]
    %v1212 = vrot.slane %v1133, 1
    %v1213 = vrot.slane %v1133, 2
    %v1214 = vrot.slane %v1133, 3
    %v1215 = vsel %vm708, %v1133, %v1212
    %v1216 = vsel %vm710, %v1213, %v1214
    %v1217 = vsel %vm636, %v1215, %v1216
    %v1218 = vsel %vm713, %v1133, %v1212
    %v1219 = vsel %vm715, %v1213, %v1214
    %v1220 = vsel %vm717, %v1218, %v1219
    %v1221 = vrot.slane %v1220, 1
    %v1222 = vperm.slane %v1217, 0
    %v1223 = vperm.slane %v1217, 1
    %v1224 = vperm.slane %v1221, 0
    %v1225 = vperm.slane %v1221, 1
    %v1227 = vrot.slane %v1223, 6
    %v1228 = vrot.slane %v1225, 6
    %v1229 = vsel %vm636, %v1222, %v1227
    %v1230 = vsel %vm636, %v1224, %v1228
    %v1233 = vmul.f32 %v1205, %v1229
    %v1234 = vmul.f32 %v1205, %v1230
    %v1236 = vrot.slane %v1137, 1
    %v1237 = vrot.slane %v1137, 2
    %v1238 = vrot.slane %v1137, 3
    %v1239 = vsel %vm708, %v1137, %v1236
    %v1240 = vsel %vm710, %v1237, %v1238
    %v1241 = vsel %vm636, %v1239, %v1240
    %v1242 = vsel %vm713, %v1137, %v1236
    %v1243 = vsel %vm715, %v1237, %v1238
    %v1244 = vsel %vm717, %v1242, %v1243
    %v1245 = vrot.slane %v1244, 1
    %v1246 = vperm.slane %v1241, 0
    %v1247 = vperm.slane %v1241, 1
    %v1248 = vperm.slane %v1245, 0
    %v1249 = vperm.slane %v1245, 1
    %v1254 = vmul.f32 %v1208, %v1246
    %v1255 = vmul.f32 %v1207, %v1247
    %v1256 = vmul.f32 %v1208, %v1248
    %v1257 = vmul.f32 %v1207, %v1249
    %v1262 = vrot.slane %v1255, 6
    %v1263 = vrot.slane %v1257, 6
    %v1264 = vsel %vm636, %v1254, %v1262
    %v1265 = vsel %vm636, %v1256, %v1263
    %v1268 = vadd.f32 %v1233, %v1264
    %v1269 = vadd.f32 %v1234, %v1265
    %v1270 = vadd.f32 %v1203, %v1268
    %v1271 = vadd.f32 %v1204, %v1269
    %v1272 = vrot.slane %v662, 4
    %1273 = vst [vmem:[#allocation1] ss:$4 sm:$0xff] %v1272
    %v1274 = vld.sshfl [vmem:[#allocation1] sm:$0xff pattern:$0x73625140]
    %v1275 = vld.sshfl [vmem:[#allocation1 + $0x8] sm:$0xff pattern:$0x73625140]
    %v1279 = vrot.slane %v1134, 1
    %v1280 = vrot.slane %v1134, 2
    %v1281 = vrot.slane %v1134, 3
    %v1282 = vsel %vm708, %v1134, %v1279
    %v1283 = vsel %vm710, %v1280, %v1281
    %v1284 = vsel %vm636, %v1282, %v1283
    %v1285 = vsel %vm713, %v1134, %v1279
    %v1286 = vsel %vm715, %v1280, %v1281
    %v1287 = vsel %vm717, %v1285, %v1286
    %v1288 = vrot.slane %v1287, 1
    %v1289 = vperm.slane %v1284, 0
    %v1290 = vperm.slane %v1284, 1
    %v1291 = vperm.slane %v1288, 0
    %v1292 = vperm.slane %v1288, 1
    %v1294 = vrot.slane %v1290, 6
    %v1295 = vrot.slane %v1292, 6
    %v1296 = vsel %vm636, %v1289, %v1294
    %v1297 = vsel %vm636, %v1291, %v1295
    %v1300 = vmul.f32 %v1272, %v1296
    %v1301 = vmul.f32 %v1272, %v1297
    %v1303 = vrot.slane %v1138, 1
    %v1304 = vrot.slane %v1138, 2
    %v1305 = vrot.slane %v1138, 3
    %v1306 = vsel %vm708, %v1138, %v1303
    %v1307 = vsel %vm710, %v1304, %v1305
    %v1308 = vsel %vm636, %v1306, %v1307
    %v1309 = vsel %vm713, %v1138, %v1303
    %v1310 = vsel %vm715, %v1304, %v1305
    %v1311 = vsel %vm717, %v1309, %v1310
    %v1312 = vrot.slane %v1311, 1
    %v1313 = vperm.slane %v1308, 0
    %v1314 = vperm.slane %v1308, 1
    %v1315 = vperm.slane %v1312, 0
    %v1316 = vperm.slane %v1312, 1
    %v1321 = vmul.f32 %v1275, %v1313
    %v1322 = vmul.f32 %v1274, %v1314
    %v1323 = vmul.f32 %v1275, %v1315
    %v1324 = vmul.f32 %v1274, %v1316
    %v1329 = vrot.slane %v1322, 6
    %v1330 = vrot.slane %v1324, 6
    %v1331 = vsel %vm636, %v1321, %v1329
    %v1332 = vsel %vm636, %v1323, %v1330
    %v1335 = vadd.f32 %v1300, %v1331
    %v1336 = vadd.f32 %v1301, %v1332
    %v1337 = vadd.f32 %v1270, %v1335
    %v1338 = vadd.f32 %v1271, %v1336
    %v1339 = vrot.slane %v672, 4
    %1340 = vst [vmem:[#allocation1] ss:$4 sm:$0xff] %v1339
    %v1341 = vld.sshfl [vmem:[#allocation1] sm:$0xff pattern:$0x73625140]
    %v1342 = vld.sshfl [vmem:[#allocation1 + $0x8] sm:$0xff pattern:$0x73625140]
    %v1346 = vrot.slane %v1135, 1
    %v1347 = vrot.slane %v1135, 2
    %v1348 = vrot.slane %v1135, 3
    %v1349 = vsel %vm708, %v1135, %v1346
    %v1350 = vsel %vm710, %v1347, %v1348
    %v1351 = vsel %vm636, %v1349, %v1350
    %v1352 = vsel %vm713, %v1135, %v1346
    %v1353 = vsel %vm715, %v1347, %v1348
    %v1354 = vsel %vm717, %v1352, %v1353
    %v1355 = vrot.slane %v1354, 1
    %v1356 = vperm.slane %v1351, 0
    %v1357 = vperm.slane %v1351, 1
    %v1358 = vperm.slane %v1355, 0
    %v1359 = vperm.slane %v1355, 1
    %v1361 = vrot.slane %v1357, 6
    %v1362 = vrot.slane %v1359, 6
    %v1363 = vsel %vm636, %v1356, %v1361
    %v1364 = vsel %vm636, %v1358, %v1362
    %v1367 = vmul.f32 %v1339, %v1363
    %v1368 = vmul.f32 %v1339, %v1364
    %v1370 = vrot.slane %v1139, 1
    %v1371 = vrot.slane %v1139, 2
    %v1372 = vrot.slane %v1139, 3
    %v1373 = vsel %vm708, %v1139, %v1370
    %v1374 = vsel %vm710, %v1371, %v1372
    %v1375 = vsel %vm636, %v1373, %v1374
    %v1376 = vsel %vm713, %v1139, %v1370
    %v1377 = vsel %vm715, %v1371, %v1372
    %v1378 = vsel %vm717, %v1376, %v1377
    %v1379 = vrot.slane %v1378, 1
    %v1380 = vperm.slane %v1375, 0
    %v1381 = vperm.slane %v1375, 1
    %v1382 = vperm.slane %v1379, 0
    %v1383 = vperm.slane %v1379, 1
    %v1388 = vmul.f32 %v1342, %v1380
    %v1389 = vmul.f32 %v1341, %v1381
    %v1390 = vmul.f32 %v1342, %v1382
    %v1391 = vmul.f32 %v1341, %v1383
    %v1396 = vrot.slane %v1389, 6
    %v1397 = vrot.slane %v1391, 6
    %v1398 = vsel %vm636, %v1388, %v1396
    %v1399 = vsel %vm636, %v1390, %v1397
    %v1402 = vadd.f32 %v1367, %v1398
    %v1403 = vadd.f32 %v1368, %v1399
    %v1404 = vadd.f32 %v1337, %v1402
    %v1405 = vadd.f32 %v1338, %v1403
    %1408 = vst [vmem:[#allocation1] ss:$4 sm:$0xff] %v1404
    %s1409 = scalar_lea.vmem [#allocation1], 1
    %1410 = vst [vmem:[%s1409] ss:$4 sm:$0xff] %v1405
    %v1411 = vld.sshfl [vmem:[#allocation1] sm:$0xff pattern:$0x73625140]
    %v1412 = vld.sshfl [vmem:[#allocation1 + $0x8] sm:$0xff pattern:$0x73625140]
    %v1415 = vpack.c.bf16 %v1411, %v1411
    %v1416 = vpack.c.bf16 %v1412, %v1412
    %v1417 = vld [vmem:[#allocation11] sm:$0xf]
    %v1418 = vld [vmem:[#allocation11 + $0x4] sm:$0xf]
    %v1419 = vld [vmem:[#allocation11 + $0x8] sm:$0xf]
    %v1420 = vld [vmem:[#allocation11 + $0xc] sm:$0xf]
    %v1421 = vld [vmem:[#allocation11 + $0x10] sm:$0xf]
    %v1422 = vld [vmem:[#allocation11 + $0x14] sm:$0xf]
    %v1423 = vld [vmem:[#allocation11 + $0x18] sm:$0xf]
    %v1424 = vld [vmem:[#allocation11 + $0x1c] sm:$0xf]
    %v1425 = vld [vmem:[#allocation11 + $0x20] sm:$0xf]
    %v1426 = vld [vmem:[#allocation11 + $0x24] sm:$0xf]
    %v1427 = vld [vmem:[#allocation11 + $0x28] sm:$0xf]
    %v1428 = vld [vmem:[#allocation11 + $0x2c] sm:$0xf]
    %v1429 = vld [vmem:[#allocation11 + $0x30] sm:$0xf]
    %v1430 = vld [vmem:[#allocation11 + $0x34] sm:$0xf]
    %v1431 = vld [vmem:[#allocation11 + $0x38] sm:$0xf]
    %v1432 = vld [vmem:[#allocation11 + $0x3c] sm:$0xf]
    %v1433 = vld [vmem:[#allocation11 + $0x40] sm:$0xf]
    %v1434 = vld [vmem:[#allocation11 + $0x44] sm:$0xf]
    %v1435 = vld [vmem:[#allocation11 + $0x48] sm:$0xf]
    %v1436 = vld [vmem:[#allocation11 + $0x4c] sm:$0xf]
    %v1437 = vld [vmem:[#allocation11 + $0x50] sm:$0xf]
    %v1438 = vld [vmem:[#allocation11 + $0x54] sm:$0xf]
    %v1439 = vld [vmem:[#allocation11 + $0x58] sm:$0xf]
    %v1440 = vld [vmem:[#allocation11 + $0x5c] sm:$0xf]
    %v1441 = vld [vmem:[#allocation11 + $0x60] sm:$0xf]
    %v1442 = vld [vmem:[#allocation11 + $0x64] sm:$0xf]
    %v1443 = vld [vmem:[#allocation11 + $0x68] sm:$0xf]
    %v1444 = vld [vmem:[#allocation11 + $0x6c] sm:$0xf]
    %v1445 = vld [vmem:[#allocation11 + $0x70] sm:$0xf]
    %v1446 = vld [vmem:[#allocation11 + $0x74] sm:$0xf]
    %v1447 = vld [vmem:[#allocation11 + $0x78] sm:$0xf]
    %v1448 = vld [vmem:[#allocation11 + $0x7c] sm:$0xf]
    %v1481 = vunpack.c.l.b16 %v1417
    %v1482 = vunpack.c.l.b16 %v1418
    %v1483 = vunpack.c.l.b16 %v1419
    %v1484 = vunpack.c.l.b16 %v1420
    %v1485 = vunpack.c.l.b16 %v1421
    %v1486 = vunpack.c.l.b16 %v1422
    %v1487 = vunpack.c.l.b16 %v1423
    %v1488 = vunpack.c.l.b16 %v1424
    %v1489 = vunpack.c.l.b16 %v1425
    %v1490 = vunpack.c.l.b16 %v1426
    %v1491 = vunpack.c.l.b16 %v1427
    %v1492 = vunpack.c.l.b16 %v1428
    %v1493 = vunpack.c.l.b16 %v1429
    %v1494 = vunpack.c.l.b16 %v1430
    %v1495 = vunpack.c.l.b16 %v1431
    %v1496 = vunpack.c.l.b16 %v1432
    %v1497 = vunpack.c.l.b16 %v1433
    %v1498 = vunpack.c.l.b16 %v1434
    %v1499 = vunpack.c.l.b16 %v1435
    %v1500 = vunpack.c.l.b16 %v1436
    %v1501 = vunpack.c.l.b16 %v1437
    %v1502 = vunpack.c.l.b16 %v1438
    %v1503 = vunpack.c.l.b16 %v1439
    %v1504 = vunpack.c.l.b16 %v1440
    %v1505 = vunpack.c.l.b16 %v1441
    %v1506 = vunpack.c.l.b16 %v1442
    %v1507 = vunpack.c.l.b16 %v1443
    %v1508 = vunpack.c.l.b16 %v1444
    %v1509 = vunpack.c.l.b16 %v1445
    %v1510 = vunpack.c.l.b16 %v1446
    %v1511 = vunpack.c.l.b16 %v1447
    %v1512 = vunpack.c.l.b16 %v1448
    %v1513 = vpack.c.b16 %v1482, %v1481
    %v1514 = vpack.c.b16 %v1484, %v1483
    %v1515 = vpack.c.b16 %v1486, %v1485
    %v1516 = vpack.c.b16 %v1488, %v1487
    %v1517 = vpack.c.b16 %v1490, %v1489
    %v1518 = vpack.c.b16 %v1492, %v1491
    %v1519 = vpack.c.b16 %v1494, %v1493
    %v1520 = vpack.c.b16 %v1496, %v1495
    %v1521 = vpack.c.b16 %v1498, %v1497
    %v1522 = vpack.c.b16 %v1500, %v1499
    %v1523 = vpack.c.b16 %v1502, %v1501
    %v1524 = vpack.c.b16 %v1504, %v1503
    %v1525 = vpack.c.b16 %v1506, %v1505
    %v1526 = vpack.c.b16 %v1508, %v1507
    %v1527 = vpack.c.b16 %v1510, %v1509
    %v1528 = vpack.c.b16 %v1512, %v1511
    %1545 = vmatpush.bf16.msra.mxu0 %v1520
    %1546 = vmatpush.bf16.msra.mxu0 %v1519
    %1547 = vmatpush.bf16.msra.mxu0 %v1518
    %1548 = vmatpush.bf16.msra.mxu0 %v1517
    %1549 = vmatpush.bf16.msra.mxu0 %v1516
    %1550 = vmatpush.bf16.msra.mxu0 %v1515
    %1551 = vmatpush.bf16.msra.mxu0 %v1514
    %1552 = vmatpush.bf16.msra.mxu0 %v1513
    %1553 = vmatmul.bf16.gmra.mxu0 %v1415
    %v1554 = vpop.f32.mrf.mxu0
    %v1555 = vadd.f32 0.0, %v1554
    %v1556 = vpop.f32.mrf.mxu0
    %1557 = vdwg.mxu0
    %1558 = vmatpush.bf16.msra.mxu0 %v1528
    %1559 = vmatpush.bf16.msra.mxu0 %v1527
    %1560 = vmatpush.bf16.msra.mxu0 %v1526
    %1561 = vmatpush.bf16.msra.mxu0 %v1525
    %1562 = vmatpush.bf16.msra.mxu0 %v1524
    %1563 = vmatpush.bf16.msra.mxu0 %v1523
    %1564 = vmatpush.bf16.msra.mxu0 %v1522
    %1565 = vmatpush.bf16.msra.mxu0 %v1521
    %1566 = vmatmul.bf16.gmra.mxu0 %v1416
    %v1567 = vpop.f32.mrf.mxu0
    %v1568 = vadd.f32 %v1555, %v1567
    %v1569 = vpop.f32.mrf.mxu0
    %1570 = vdwg.mxu0
    %v1572 = vrot.slane %v1568, 2
    %s1574 = scalar_lea.vmem [#allocation22], 4
    %1575 = vst [vmem:[%s1574] sm:$0x3] %v1568
    %1576 = vst [vmem:[%s1574 + $0x2] sm:$0x3] %v1572
    %v1577 = vld [vmem:[#allocation13] sm:$0xf]
    %v1578 = vld [vmem:[#allocation13 + $0x4] sm:$0xf]
    %v1579 = vld [vmem:[#allocation13 + $0x8] sm:$0xf]
    %v1580 = vld [vmem:[#allocation13 + $0xc] sm:$0xf]
    %v1581 = vld [vmem:[#allocation13 + $0x10] sm:$0xf]
    %v1582 = vld [vmem:[#allocation13 + $0x14] sm:$0xf]
    %v1583 = vld [vmem:[#allocation13 + $0x18] sm:$0xf]
    %v1584 = vld [vmem:[#allocation13 + $0x1c] sm:$0xf]
    %1585 = vst [vmem:[#allocation1] ss:$4 sm:$0xff] %v644
    %v1586 = vld.sshfl [vmem:[#allocation1] sm:$0xff pattern:$0x73625140]
    %v1587 = vld.sshfl [vmem:[#allocation1 + $0x8] sm:$0xff pattern:$0x73625140]
    %v1591 = vrot.slane %v1577, 1
    %v1592 = vrot.slane %v1577, 2
    %v1593 = vrot.slane %v1577, 3
    %v1594 = vsel %vm708, %v1577, %v1591
    %v1595 = vsel %vm710, %v1592, %v1593
    %v1596 = vsel %vm636, %v1594, %v1595
    %v1597 = vsel %vm713, %v1577, %v1591
    %v1598 = vsel %vm715, %v1592, %v1593
    %v1599 = vsel %vm717, %v1597, %v1598
    %v1600 = vrot.slane %v1599, 1
    %v1601 = vperm.slane %v1596, 0
    %v1602 = vperm.slane %v1596, 1
    %v1603 = vperm.slane %v1600, 0
    %v1604 = vperm.slane %v1600, 1
    %v1605 = vrot.slane %v1602, 6
    %v1606 = vrot.slane %v1604, 6
    %v1607 = vsel %vm636, %v1601, %v1605
    %v1608 = vsel %vm636, %v1603, %v1606
    %v1611 = vmul.f32 %v644, %v1607
    %v1612 = vmul.f32 %v644, %v1608
    %v1614 = vrot.slane %v1581, 1
    %v1615 = vrot.slane %v1581, 2
    %v1616 = vrot.slane %v1581, 3
    %v1617 = vsel %vm708, %v1581, %v1614
    %v1618 = vsel %vm710, %v1615, %v1616
    %v1619 = vsel %vm636, %v1617, %v1618
    %v1620 = vsel %vm713, %v1581, %v1614
    %v1621 = vsel %vm715, %v1615, %v1616
    %v1622 = vsel %vm717, %v1620, %v1621
    %v1623 = vrot.slane %v1622, 1
    %v1624 = vperm.slane %v1619, 0
    %v1625 = vperm.slane %v1619, 1
    %v1626 = vperm.slane %v1623, 0
    %v1627 = vperm.slane %v1623, 1
    %v1632 = vmul.f32 %v1587, %v1624
    %v1633 = vmul.f32 %v1586, %v1625
    %v1634 = vmul.f32 %v1587, %v1626
    %v1635 = vmul.f32 %v1586, %v1627
    %v1640 = vrot.slane %v1633, 6
    %v1641 = vrot.slane %v1635, 6
    %v1642 = vsel %vm636, %v1632, %v1640
    %v1643 = vsel %vm636, %v1634, %v1641
    %v1646 = vadd.f32 %v1611, %v1642
    %v1647 = vadd.f32 %v1612, %v1643
    %1648 = vst [vmem:[#allocation1] ss:$4 sm:$0xff] %v656
    %v1649 = vld.sshfl [vmem:[#allocation1] sm:$0xff pattern:$0x73625140]
    %v1650 = vld.sshfl [vmem:[#allocation1 + $0x8] sm:$0xff pattern:$0x73625140]
    %v1654 = vrot.slane %v1578, 1
    %v1655 = vrot.slane %v1578, 2
    %v1656 = vrot.slane %v1578, 3
    %v1657 = vsel %vm708, %v1578, %v1654
    %v1658 = vsel %vm710, %v1655, %v1656
    %v1659 = vsel %vm636, %v1657, %v1658
    %v1660 = vsel %vm713, %v1578, %v1654
    %v1661 = vsel %vm715, %v1655, %v1656
    %v1662 = vsel %vm717, %v1660, %v1661
    %v1663 = vrot.slane %v1662, 1
    %v1664 = vperm.slane %v1659, 0
    %v1665 = vperm.slane %v1659, 1
    %v1666 = vperm.slane %v1663, 0
    %v1667 = vperm.slane %v1663, 1
    %v1668 = vrot.slane %v1665, 6
    %v1669 = vrot.slane %v1667, 6
    %v1670 = vsel %vm636, %v1664, %v1668
    %v1671 = vsel %vm636, %v1666, %v1669
    %v1674 = vmul.f32 %v656, %v1670
    %v1675 = vmul.f32 %v656, %v1671
    %v1677 = vrot.slane %v1582, 1
    %v1678 = vrot.slane %v1582, 2
    %v1679 = vrot.slane %v1582, 3
    %v1680 = vsel %vm708, %v1582, %v1677
    %v1681 = vsel %vm710, %v1678, %v1679
    %v1682 = vsel %vm636, %v1680, %v1681
    %v1683 = vsel %vm713, %v1582, %v1677
    %v1684 = vsel %vm715, %v1678, %v1679
    %v1685 = vsel %vm717, %v1683, %v1684
    %v1686 = vrot.slane %v1685, 1
    %v1687 = vperm.slane %v1682, 0
    %v1688 = vperm.slane %v1682, 1
    %v1689 = vperm.slane %v1686, 0
    %v1690 = vperm.slane %v1686, 1
    %v1695 = vmul.f32 %v1650, %v1687
    %v1696 = vmul.f32 %v1649, %v1688
    %v1697 = vmul.f32 %v1650, %v1689
    %v1698 = vmul.f32 %v1649, %v1690
    %v1703 = vrot.slane %v1696, 6
    %v1704 = vrot.slane %v1698, 6
    %v1705 = vsel %vm636, %v1695, %v1703
    %v1706 = vsel %vm636, %v1697, %v1704
    %v1709 = vadd.f32 %v1674, %v1705
    %v1710 = vadd.f32 %v1675, %v1706
    %v1711 = vadd.f32 %v1646, %v1709
    %v1712 = vadd.f32 %v1647, %v1710
    %1713 = vst [vmem:[#allocation1] ss:$4 sm:$0xff] %v666
    %v1714 = vld.sshfl [vmem:[#allocation1] sm:$0xff pattern:$0x73625140]
    %v1715 = vld.sshfl [vmem:[#allocation1 + $0x8] sm:$0xff pattern:$0x73625140]
    %v1719 = vrot.slane %v1579, 1
    %v1720 = vrot.slane %v1579, 2
    %v1721 = vrot.slane %v1579, 3
    %v1722 = vsel %vm708, %v1579, %v1719
    %v1723 = vsel %vm710, %v1720, %v1721
    %v1724 = vsel %vm636, %v1722, %v1723
    %v1725 = vsel %vm713, %v1579, %v1719
    %v1726 = vsel %vm715, %v1720, %v1721
    %v1727 = vsel %vm717, %v1725, %v1726
    %v1728 = vrot.slane %v1727, 1
    %v1729 = vperm.slane %v1724, 0
    %v1730 = vperm.slane %v1724, 1
    %v1731 = vperm.slane %v1728, 0
    %v1732 = vperm.slane %v1728, 1
    %v1733 = vrot.slane %v1730, 6
    %v1734 = vrot.slane %v1732, 6
    %v1735 = vsel %vm636, %v1729, %v1733
    %v1736 = vsel %vm636, %v1731, %v1734
    %v1739 = vmul.f32 %v666, %v1735
    %v1740 = vmul.f32 %v666, %v1736
    %v1742 = vrot.slane %v1583, 1
    %v1743 = vrot.slane %v1583, 2
    %v1744 = vrot.slane %v1583, 3
    %v1745 = vsel %vm708, %v1583, %v1742
    %v1746 = vsel %vm710, %v1743, %v1744
    %v1747 = vsel %vm636, %v1745, %v1746
    %v1748 = vsel %vm713, %v1583, %v1742
    %v1749 = vsel %vm715, %v1743, %v1744
    %v1750 = vsel %vm717, %v1748, %v1749
    %v1751 = vrot.slane %v1750, 1
    %v1752 = vperm.slane %v1747, 0
    %v1753 = vperm.slane %v1747, 1
    %v1754 = vperm.slane %v1751, 0
    %v1755 = vperm.slane %v1751, 1
    %v1760 = vmul.f32 %v1715, %v1752
    %v1761 = vmul.f32 %v1714, %v1753
    %v1762 = vmul.f32 %v1715, %v1754
    %v1763 = vmul.f32 %v1714, %v1755
    %v1768 = vrot.slane %v1761, 6
    %v1769 = vrot.slane %v1763, 6
    %v1770 = vsel %vm636, %v1760, %v1768
    %v1771 = vsel %vm636, %v1762, %v1769
    %v1774 = vadd.f32 %v1739, %v1770
    %v1775 = vadd.f32 %v1740, %v1771
    %v1776 = vadd.f32 %v1711, %v1774
    %v1777 = vadd.f32 %v1712, %v1775
    %1778 = vst [vmem:[#allocation1] ss:$4 sm:$0xff] %v676
    %v1779 = vld.sshfl [vmem:[#allocation1] sm:$0xff pattern:$0x73625140]
    %v1780 = vld.sshfl [vmem:[#allocation1 + $0x8] sm:$0xff pattern:$0x73625140]
    %v1784 = vrot.slane %v1580, 1
    %v1785 = vrot.slane %v1580, 2
    %v1786 = vrot.slane %v1580, 3
    %v1787 = vsel %vm708, %v1580, %v1784
    %v1788 = vsel %vm710, %v1785, %v1786
    %v1789 = vsel %vm636, %v1787, %v1788
    %v1790 = vsel %vm713, %v1580, %v1784
    %v1791 = vsel %vm715, %v1785, %v1786
    %v1792 = vsel %vm717, %v1790, %v1791
    %v1793 = vrot.slane %v1792, 1
    %v1794 = vperm.slane %v1789, 0
    %v1795 = vperm.slane %v1789, 1
    %v1796 = vperm.slane %v1793, 0
    %v1797 = vperm.slane %v1793, 1
    %v1798 = vrot.slane %v1795, 6
    %v1799 = vrot.slane %v1797, 6
    %v1800 = vsel %vm636, %v1794, %v1798
    %v1801 = vsel %vm636, %v1796, %v1799
    %v1804 = vmul.f32 %v676, %v1800
    %v1805 = vmul.f32 %v676, %v1801
    %v1807 = vrot.slane %v1584, 1
    %v1808 = vrot.slane %v1584, 2
    %v1809 = vrot.slane %v1584, 3
    %v1810 = vsel %vm708, %v1584, %v1807
    %v1811 = vsel %vm710, %v1808, %v1809
    %v1812 = vsel %vm636, %v1810, %v1811
    %v1813 = vsel %vm713, %v1584, %v1807
    %v1814 = vsel %vm715, %v1808, %v1809
    %v1815 = vsel %vm717, %v1813, %v1814
    %v1816 = vrot.slane %v1815, 1
    %v1817 = vperm.slane %v1812, 0
    %v1818 = vperm.slane %v1812, 1
    %v1819 = vperm.slane %v1816, 0
    %v1820 = vperm.slane %v1816, 1
    %v1825 = vmul.f32 %v1780, %v1817
    %v1826 = vmul.f32 %v1779, %v1818
    %v1827 = vmul.f32 %v1780, %v1819
    %v1828 = vmul.f32 %v1779, %v1820
    %v1833 = vrot.slane %v1826, 6
    %v1834 = vrot.slane %v1828, 6
    %v1835 = vsel %vm636, %v1825, %v1833
    %v1836 = vsel %vm636, %v1827, %v1834
    %v1839 = vadd.f32 %v1804, %v1835
    %v1840 = vadd.f32 %v1805, %v1836
    %v1841 = vadd.f32 %v1776, %v1839
    %v1842 = vadd.f32 %v1777, %v1840
    %1845 = vst [vmem:[#allocation1] ss:$4 sm:$0xff] %v1841
    %s1846 = scalar_lea.vmem [#allocation1], 1
    %1847 = vst [vmem:[%s1846] ss:$4 sm:$0xff] %v1842
    %v1848 = vld.sshfl [vmem:[#allocation1] sm:$0xff pattern:$0x73625140]
    %v1849 = vld.sshfl [vmem:[#allocation1 + $0x8] sm:$0xff pattern:$0x73625140]
    %v1852 = vpack.c.bf16 %v1848, %v1848
    %v1853 = vpack.c.bf16 %v1849, %v1849
    %v1854 = vld [vmem:[#allocation14] sm:$0xf]
    %v1855 = vld [vmem:[#allocation14 + $0x4] sm:$0xf]
    %v1856 = vld [vmem:[#allocation14 + $0x8] sm:$0xf]
    %v1857 = vld [vmem:[#allocation14 + $0xc] sm:$0xf]
    %v1858 = vld [vmem:[#allocation14 + $0x10] sm:$0xf]
    %v1859 = vld [vmem:[#allocation14 + $0x14] sm:$0xf]
    %v1860 = vld [vmem:[#allocation14 + $0x18] sm:$0xf]
    %v1861 = vld [vmem:[#allocation14 + $0x1c] sm:$0xf]
    %v1862 = vld [vmem:[#allocation14 + $0x20] sm:$0xf]
    %v1863 = vld [vmem:[#allocation14 + $0x24] sm:$0xf]
    %v1864 = vld [vmem:[#allocation14 + $0x28] sm:$0xf]
    %v1865 = vld [vmem:[#allocation14 + $0x2c] sm:$0xf]
    %v1866 = vld [vmem:[#allocation14 + $0x30] sm:$0xf]
    %v1867 = vld [vmem:[#allocation14 + $0x34] sm:$0xf]
    %v1868 = vld [vmem:[#allocation14 + $0x38] sm:$0xf]
    %v1869 = vld [vmem:[#allocation14 + $0x3c] sm:$0xf]
    %v1870 = vld [vmem:[#allocation14 + $0x40] sm:$0xf]
    %v1871 = vld [vmem:[#allocation14 + $0x44] sm:$0xf]
    %v1872 = vld [vmem:[#allocation14 + $0x48] sm:$0xf]
    %v1873 = vld [vmem:[#allocation14 + $0x4c] sm:$0xf]
    %v1874 = vld [vmem:[#allocation14 + $0x50] sm:$0xf]
    %v1875 = vld [vmem:[#allocation14 + $0x54] sm:$0xf]
    %v1876 = vld [vmem:[#allocation14 + $0x58] sm:$0xf]
    %v1877 = vld [vmem:[#allocation14 + $0x5c] sm:$0xf]
    %v1878 = vld [vmem:[#allocation14 + $0x60] sm:$0xf]
    %v1879 = vld [vmem:[#allocation14 + $0x64] sm:$0xf]
    %v1880 = vld [vmem:[#allocation14 + $0x68] sm:$0xf]
    %v1881 = vld [vmem:[#allocation14 + $0x6c] sm:$0xf]
    %v1882 = vld [vmem:[#allocation14 + $0x70] sm:$0xf]
    %v1883 = vld [vmem:[#allocation14 + $0x74] sm:$0xf]
    %v1884 = vld [vmem:[#allocation14 + $0x78] sm:$0xf]
    %v1885 = vld [vmem:[#allocation14 + $0x7c] sm:$0xf]
    %v1918 = vunpack.c.l.b16 %v1854
    %v1919 = vunpack.c.l.b16 %v1855
    %v1920 = vunpack.c.l.b16 %v1856
    %v1921 = vunpack.c.l.b16 %v1857
    %v1922 = vunpack.c.l.b16 %v1858
    %v1923 = vunpack.c.l.b16 %v1859
    %v1924 = vunpack.c.l.b16 %v1860
    %v1925 = vunpack.c.l.b16 %v1861
    %v1926 = vunpack.c.l.b16 %v1862
    %v1927 = vunpack.c.l.b16 %v1863
    %v1928 = vunpack.c.l.b16 %v1864
    %v1929 = vunpack.c.l.b16 %v1865
    %v1930 = vunpack.c.l.b16 %v1866
    %v1931 = vunpack.c.l.b16 %v1867
    %v1932 = vunpack.c.l.b16 %v1868
    %v1933 = vunpack.c.l.b16 %v1869
    %v1934 = vunpack.c.l.b16 %v1870
    %v1935 = vunpack.c.l.b16 %v1871
    %v1936 = vunpack.c.l.b16 %v1872
    %v1937 = vunpack.c.l.b16 %v1873
    %v1938 = vunpack.c.l.b16 %v1874
    %v1939 = vunpack.c.l.b16 %v1875
    %v1940 = vunpack.c.l.b16 %v1876
    %v1941 = vunpack.c.l.b16 %v1877
    %v1942 = vunpack.c.l.b16 %v1878
    %v1943 = vunpack.c.l.b16 %v1879
    %v1944 = vunpack.c.l.b16 %v1880
    %v1945 = vunpack.c.l.b16 %v1881
    %v1946 = vunpack.c.l.b16 %v1882
    %v1947 = vunpack.c.l.b16 %v1883
    %v1948 = vunpack.c.l.b16 %v1884
    %v1949 = vunpack.c.l.b16 %v1885
    %v1950 = vpack.c.b16 %v1919, %v1918
    %v1951 = vpack.c.b16 %v1921, %v1920
    %v1952 = vpack.c.b16 %v1923, %v1922
    %v1953 = vpack.c.b16 %v1925, %v1924
    %v1954 = vpack.c.b16 %v1927, %v1926
    %v1955 = vpack.c.b16 %v1929, %v1928
    %v1956 = vpack.c.b16 %v1931, %v1930
    %v1957 = vpack.c.b16 %v1933, %v1932
    %v1958 = vpack.c.b16 %v1935, %v1934
    %v1959 = vpack.c.b16 %v1937, %v1936
    %v1960 = vpack.c.b16 %v1939, %v1938
    %v1961 = vpack.c.b16 %v1941, %v1940
    %v1962 = vpack.c.b16 %v1943, %v1942
    %v1963 = vpack.c.b16 %v1945, %v1944
    %v1964 = vpack.c.b16 %v1947, %v1946
    %v1965 = vpack.c.b16 %v1949, %v1948
    %1982 = vmatpush.bf16.msra.mxu0 %v1957
    %1983 = vmatpush.bf16.msra.mxu0 %v1956
    %1984 = vmatpush.bf16.msra.mxu0 %v1955
    %1985 = vmatpush.bf16.msra.mxu0 %v1954
    %1986 = vmatpush.bf16.msra.mxu0 %v1953
    %1987 = vmatpush.bf16.msra.mxu0 %v1952
    %1988 = vmatpush.bf16.msra.mxu0 %v1951
    %1989 = vmatpush.bf16.msra.mxu0 %v1950
    %1990 = vmatmul.bf16.gmra.mxu0 %v1852
    %v1991 = vpop.f32.mrf.mxu0
    %v1992 = vadd.f32 0.0, %v1991
    %v1993 = vpop.f32.mrf.mxu0
    %1994 = vdwg.mxu0
    %1995 = vmatpush.bf16.msra.mxu0 %v1965
    %1996 = vmatpush.bf16.msra.mxu0 %v1964
    %1997 = vmatpush.bf16.msra.mxu0 %v1963
    %1998 = vmatpush.bf16.msra.mxu0 %v1962
    %1999 = vmatpush.bf16.msra.mxu0 %v1961
    %2000 = vmatpush.bf16.msra.mxu0 %v1960
    %2001 = vmatpush.bf16.msra.mxu0 %v1959
    %2002 = vmatpush.bf16.msra.mxu0 %v1958
    %2003 = vmatmul.bf16.gmra.mxu0 %v1853
    %v2004 = vpop.f32.mrf.mxu0
    %v2005 = vadd.f32 %v1992, %v2004
    %v2006 = vpop.f32.mrf.mxu0
    %2007 = vdwg.mxu0
    %v2009 = vrot.slane %v2005, 2
    %s2011 = scalar_lea.vmem [#allocation22], 8
    %2012 = vst [vmem:[%s2011] sm:$0x3] %v2005
    %2013 = vst [vmem:[%s2011 + $0x2] sm:$0x3] %v2009
    %v2014 = vld [vmem:[#allocation16] sm:$0xf]
    %v2015 = vld [vmem:[#allocation16 + $0x4] sm:$0xf]
    %v2016 = vld [vmem:[#allocation16 + $0x8] sm:$0xf]
    %v2017 = vld [vmem:[#allocation16 + $0xc] sm:$0xf]
    %v2018 = vld [vmem:[#allocation16 + $0x10] sm:$0xf]
    %v2019 = vld [vmem:[#allocation16 + $0x14] sm:$0xf]
    %v2020 = vld [vmem:[#allocation16 + $0x18] sm:$0xf]
    %v2021 = vld [vmem:[#allocation16 + $0x1c] sm:$0xf]
    %v2022 = vrot.slane %v644, 4
    %2023 = vst [vmem:[#allocation1] ss:$4 sm:$0xff] %v2022
    %v2024 = vld.sshfl [vmem:[#allocation1] sm:$0xff pattern:$0x73625140]
    %v2025 = vld.sshfl [vmem:[#allocation1 + $0x8] sm:$0xff pattern:$0x73625140]
    %v2029 = vrot.slane %v2014, 1
    %v2030 = vrot.slane %v2014, 2
    %v2031 = vrot.slane %v2014, 3
    %v2032 = vsel %vm708, %v2014, %v2029
    %v2033 = vsel %vm710, %v2030, %v2031
    %v2034 = vsel %vm636, %v2032, %v2033
    %v2035 = vsel %vm713, %v2014, %v2029
    %v2036 = vsel %vm715, %v2030, %v2031
    %v2037 = vsel %vm717, %v2035, %v2036
    %v2038 = vrot.slane %v2037, 1
    %v2039 = vperm.slane %v2034, 0
    %v2040 = vperm.slane %v2034, 1
    %v2041 = vperm.slane %v2038, 0
    %v2042 = vperm.slane %v2038, 1
    %v2044 = vrot.slane %v2040, 6
    %v2045 = vrot.slane %v2042, 6
    %v2046 = vsel %vm636, %v2039, %v2044
    %v2047 = vsel %vm636, %v2041, %v2045
    %v2050 = vmul.f32 %v2022, %v2046
    %v2051 = vmul.f32 %v2022, %v2047
    %v2053 = vrot.slane %v2018, 1
    %v2054 = vrot.slane %v2018, 2
    %v2055 = vrot.slane %v2018, 3
    %v2056 = vsel %vm708, %v2018, %v2053
    %v2057 = vsel %vm710, %v2054, %v2055
    %v2058 = vsel %vm636, %v2056, %v2057
    %v2059 = vsel %vm713, %v2018, %v2053
    %v2060 = vsel %vm715, %v2054, %v2055
    %v2061 = vsel %vm717, %v2059, %v2060
    %v2062 = vrot.slane %v2061, 1
    %v2063 = vperm.slane %v2058, 0
    %v2064 = vperm.slane %v2058, 1
    %v2065 = vperm.slane %v2062, 0
    %v2066 = vperm.slane %v2062, 1
    %v2071 = vmul.f32 %v2025, %v2063
    %v2072 = vmul.f32 %v2024, %v2064
    %v2073 = vmul.f32 %v2025, %v2065
    %v2074 = vmul.f32 %v2024, %v2066
    %v2079 = vrot.slane %v2072, 6
    %v2080 = vrot.slane %v2074, 6
    %v2081 = vsel %vm636, %v2071, %v2079
    %v2082 = vsel %vm636, %v2073, %v2080
    %v2085 = vadd.f32 %v2050, %v2081
    %v2086 = vadd.f32 %v2051, %v2082
    %v2087 = vrot.slane %v656, 4
    %2088 = vst [vmem:[#allocation1] ss:$4 sm:$0xff] %v2087
    %v2089 = vld.sshfl [vmem:[#allocation1] sm:$0xff pattern:$0x73625140]
    %v2090 = vld.sshfl [vmem:[#allocation1 + $0x8] sm:$0xff pattern:$0x73625140]
    %v2094 = vrot.slane %v2015, 1
    %v2095 = vrot.slane %v2015, 2
    %v2096 = vrot.slane %v2015, 3
    %v2097 = vsel %vm708, %v2015, %v2094
    %v2098 = vsel %vm710, %v2095, %v2096
    %v2099 = vsel %vm636, %v2097, %v2098
    %v2100 = vsel %vm713, %v2015, %v2094
    %v2101 = vsel %vm715, %v2095, %v2096
    %v2102 = vsel %vm717, %v2100, %v2101
    %v2103 = vrot.slane %v2102, 1
    %v2104 = vperm.slane %v2099, 0
    %v2105 = vperm.slane %v2099, 1
    %v2106 = vperm.slane %v2103, 0
    %v2107 = vperm.slane %v2103, 1
    %v2109 = vrot.slane %v2105, 6
    %v2110 = vrot.slane %v2107, 6
    %v2111 = vsel %vm636, %v2104, %v2109
    %v2112 = vsel %vm636, %v2106, %v2110
    %v2115 = vmul.f32 %v2087, %v2111
    %v2116 = vmul.f32 %v2087, %v2112
    %v2118 = vrot.slane %v2019, 1
    %v2119 = vrot.slane %v2019, 2
    %v2120 = vrot.slane %v2019, 3
    %v2121 = vsel %vm708, %v2019, %v2118
    %v2122 = vsel %vm710, %v2119, %v2120
    %v2123 = vsel %vm636, %v2121, %v2122
    %v2124 = vsel %vm713, %v2019, %v2118
    %v2125 = vsel %vm715, %v2119, %v2120
    %v2126 = vsel %vm717, %v2124, %v2125
    %v2127 = vrot.slane %v2126, 1
    %v2128 = vperm.slane %v2123, 0
    %v2129 = vperm.slane %v2123, 1
    %v2130 = vperm.slane %v2127, 0
    %v2131 = vperm.slane %v2127, 1
    %v2136 = vmul.f32 %v2090, %v2128
    %v2137 = vmul.f32 %v2089, %v2129
    %v2138 = vmul.f32 %v2090, %v2130
    %v2139 = vmul.f32 %v2089, %v2131
    %v2144 = vrot.slane %v2137, 6
    %v2145 = vrot.slane %v2139, 6
    %v2146 = vsel %vm636, %v2136, %v2144
    %v2147 = vsel %vm636, %v2138, %v2145
    %v2150 = vadd.f32 %v2115, %v2146
    %v2151 = vadd.f32 %v2116, %v2147
    %v2152 = vadd.f32 %v2085, %v2150
    %v2153 = vadd.f32 %v2086, %v2151
    %v2154 = vrot.slane %v666, 4
    %2155 = vst [vmem:[#allocation1] ss:$4 sm:$0xff] %v2154
    %v2156 = vld.sshfl [vmem:[#allocation1] sm:$0xff pattern:$0x73625140]
    %v2157 = vld.sshfl [vmem:[#allocation1 + $0x8] sm:$0xff pattern:$0x73625140]
    %v2161 = vrot.slane %v2016, 1
    %v2162 = vrot.slane %v2016, 2
    %v2163 = vrot.slane %v2016, 3
    %v2164 = vsel %vm708, %v2016, %v2161
    %v2165 = vsel %vm710, %v2162, %v2163
    %v2166 = vsel %vm636, %v2164, %v2165
    %v2167 = vsel %vm713, %v2016, %v2161
    %v2168 = vsel %vm715, %v2162, %v2163
    %v2169 = vsel %vm717, %v2167, %v2168
    %v2170 = vrot.slane %v2169, 1
    %v2171 = vperm.slane %v2166, 0
    %v2172 = vperm.slane %v2166, 1
    %v2173 = vperm.slane %v2170, 0
    %v2174 = vperm.slane %v2170, 1
    %v2176 = vrot.slane %v2172, 6
    %v2177 = vrot.slane %v2174, 6
    %v2178 = vsel %vm636, %v2171, %v2176
    %v2179 = vsel %vm636, %v2173, %v2177
    %v2182 = vmul.f32 %v2154, %v2178
    %v2183 = vmul.f32 %v2154, %v2179
    %v2185 = vrot.slane %v2020, 1
    %v2186 = vrot.slane %v2020, 2
    %v2187 = vrot.slane %v2020, 3
    %v2188 = vsel %vm708, %v2020, %v2185
    %v2189 = vsel %vm710, %v2186, %v2187
    %v2190 = vsel %vm636, %v2188, %v2189
    %v2191 = vsel %vm713, %v2020, %v2185
    %v2192 = vsel %vm715, %v2186, %v2187
    %v2193 = vsel %vm717, %v2191, %v2192
    %v2194 = vrot.slane %v2193, 1
    %v2195 = vperm.slane %v2190, 0
    %v2196 = vperm.slane %v2190, 1
    %v2197 = vperm.slane %v2194, 0
    %v2198 = vperm.slane %v2194, 1
    %v2203 = vmul.f32 %v2157, %v2195
    %v2204 = vmul.f32 %v2156, %v2196
    %v2205 = vmul.f32 %v2157, %v2197
    %v2206 = vmul.f32 %v2156, %v2198
    %v2211 = vrot.slane %v2204, 6
    %v2212 = vrot.slane %v2206, 6
    %v2213 = vsel %vm636, %v2203, %v2211
    %v2214 = vsel %vm636, %v2205, %v2212
    %v2217 = vadd.f32 %v2182, %v2213
    %v2218 = vadd.f32 %v2183, %v2214
    %v2219 = vadd.f32 %v2152, %v2217
    %v2220 = vadd.f32 %v2153, %v2218
    %v2221 = vrot.slane %v676, 4
    %2222 = vst [vmem:[#allocation1] ss:$4 sm:$0xff] %v2221
    %v2223 = vld.sshfl [vmem:[#allocation1] sm:$0xff pattern:$0x73625140]
    %v2224 = vld.sshfl [vmem:[#allocation1 + $0x8] sm:$0xff pattern:$0x73625140]
    %v2228 = vrot.slane %v2017, 1
    %v2229 = vrot.slane %v2017, 2
    %v2230 = vrot.slane %v2017, 3
    %v2231 = vsel %vm708, %v2017, %v2228
    %v2232 = vsel %vm710, %v2229, %v2230
    %v2233 = vsel %vm636, %v2231, %v2232
    %v2234 = vsel %vm713, %v2017, %v2228
    %v2235 = vsel %vm715, %v2229, %v2230
    %v2236 = vsel %vm717, %v2234, %v2235
    %v2237 = vrot.slane %v2236, 1
    %v2238 = vperm.slane %v2233, 0
    %v2239 = vperm.slane %v2233, 1
    %v2240 = vperm.slane %v2237, 0
    %v2241 = vperm.slane %v2237, 1
    %v2243 = vrot.slane %v2239, 6
    %v2244 = vrot.slane %v2241, 6
    %v2245 = vsel %vm636, %v2238, %v2243
    %v2246 = vsel %vm636, %v2240, %v2244
    %v2249 = vmul.f32 %v2221, %v2245
    %v2250 = vmul.f32 %v2221, %v2246
    %v2252 = vrot.slane %v2021, 1
    %v2253 = vrot.slane %v2021, 2
    %v2254 = vrot.slane %v2021, 3
    %v2255 = vsel %vm708, %v2021, %v2252
    %v2256 = vsel %vm710, %v2253, %v2254
    %v2257 = vsel %vm636, %v2255, %v2256
    %v2258 = vsel %vm713, %v2021, %v2252
    %v2259 = vsel %vm715, %v2253, %v2254
    %v2260 = vsel %vm717, %v2258, %v2259
    %v2261 = vrot.slane %v2260, 1
    %v2262 = vperm.slane %v2257, 0
    %v2263 = vperm.slane %v2257, 1
    %v2264 = vperm.slane %v2261, 0
    %v2265 = vperm.slane %v2261, 1
    %v2270 = vmul.f32 %v2224, %v2262
    %v2271 = vmul.f32 %v2223, %v2263
    %v2272 = vmul.f32 %v2224, %v2264
    %v2273 = vmul.f32 %v2223, %v2265
    %v2278 = vrot.slane %v2271, 6
    %v2279 = vrot.slane %v2273, 6
    %v2280 = vsel %vm636, %v2270, %v2278
    %v2281 = vsel %vm636, %v2272, %v2279
    %v2284 = vadd.f32 %v2249, %v2280
    %v2285 = vadd.f32 %v2250, %v2281
    %v2286 = vadd.f32 %v2219, %v2284
    %v2287 = vadd.f32 %v2220, %v2285
    %2290 = vst [vmem:[#allocation1] ss:$4 sm:$0xff] %v2286
    %s2291 = scalar_lea.vmem [#allocation1], 1
    %2292 = vst [vmem:[%s2291] ss:$4 sm:$0xff] %v2287
    %v2293 = vld.sshfl [vmem:[#allocation1] sm:$0xff pattern:$0x73625140]
    %v2294 = vld.sshfl [vmem:[#allocation1 + $0x8] sm:$0xff pattern:$0x73625140]
    %v2297 = vpack.c.bf16 %v2293, %v2293
    %v2298 = vpack.c.bf16 %v2294, %v2294
    %v2299 = vld [vmem:[#allocation17] sm:$0xf]
    %v2300 = vld [vmem:[#allocation17 + $0x4] sm:$0xf]
    %v2301 = vld [vmem:[#allocation17 + $0x8] sm:$0xf]
    %v2302 = vld [vmem:[#allocation17 + $0xc] sm:$0xf]
    %v2303 = vld [vmem:[#allocation17 + $0x10] sm:$0xf]
    %v2304 = vld [vmem:[#allocation17 + $0x14] sm:$0xf]
    %v2305 = vld [vmem:[#allocation17 + $0x18] sm:$0xf]
    %v2306 = vld [vmem:[#allocation17 + $0x1c] sm:$0xf]
    %v2307 = vld [vmem:[#allocation17 + $0x20] sm:$0xf]
    %v2308 = vld [vmem:[#allocation17 + $0x24] sm:$0xf]
    %v2309 = vld [vmem:[#allocation17 + $0x28] sm:$0xf]
    %v2310 = vld [vmem:[#allocation17 + $0x2c] sm:$0xf]
    %v2311 = vld [vmem:[#allocation17 + $0x30] sm:$0xf]
    %v2312 = vld [vmem:[#allocation17 + $0x34] sm:$0xf]
    %v2313 = vld [vmem:[#allocation17 + $0x38] sm:$0xf]
    %v2314 = vld [vmem:[#allocation17 + $0x3c] sm:$0xf]
    %v2315 = vld [vmem:[#allocation17 + $0x40] sm:$0xf]
    %v2316 = vld [vmem:[#allocation17 + $0x44] sm:$0xf]
    %v2317 = vld [vmem:[#allocation17 + $0x48] sm:$0xf]
    %v2318 = vld [vmem:[#allocation17 + $0x4c] sm:$0xf]
    %v2319 = vld [vmem:[#allocation17 + $0x50] sm:$0xf]
    %v2320 = vld [vmem:[#allocation17 + $0x54] sm:$0xf]
    %v2321 = vld [vmem:[#allocation17 + $0x58] sm:$0xf]
    %v2322 = vld [vmem:[#allocation17 + $0x5c] sm:$0xf]
    %v2323 = vld [vmem:[#allocation17 + $0x60] sm:$0xf]
    %v2324 = vld [vmem:[#allocation17 + $0x64] sm:$0xf]
    %v2325 = vld [vmem:[#allocation17 + $0x68] sm:$0xf]
    %v2326 = vld [vmem:[#allocation17 + $0x6c] sm:$0xf]
    %v2327 = vld [vmem:[#allocation17 + $0x70] sm:$0xf]
    %v2328 = vld [vmem:[#allocation17 + $0x74] sm:$0xf]
    %v2329 = vld [vmem:[#allocation17 + $0x78] sm:$0xf]
    %v2330 = vld [vmem:[#allocation17 + $0x7c] sm:$0xf]
    %v2363 = vunpack.c.l.b16 %v2299
    %v2364 = vunpack.c.l.b16 %v2300
    %v2365 = vunpack.c.l.b16 %v2301
    %v2366 = vunpack.c.l.b16 %v2302
    %v2367 = vunpack.c.l.b16 %v2303
    %v2368 = vunpack.c.l.b16 %v2304
    %v2369 = vunpack.c.l.b16 %v2305
    %v2370 = vunpack.c.l.b16 %v2306
    %v2371 = vunpack.c.l.b16 %v2307
    %v2372 = vunpack.c.l.b16 %v2308
    %v2373 = vunpack.c.l.b16 %v2309
    %v2374 = vunpack.c.l.b16 %v2310
    %v2375 = vunpack.c.l.b16 %v2311
    %v2376 = vunpack.c.l.b16 %v2312
    %v2377 = vunpack.c.l.b16 %v2313
    %v2378 = vunpack.c.l.b16 %v2314
    %v2379 = vunpack.c.l.b16 %v2315
    %v2380 = vunpack.c.l.b16 %v2316
    %v2381 = vunpack.c.l.b16 %v2317
    %v2382 = vunpack.c.l.b16 %v2318
    %v2383 = vunpack.c.l.b16 %v2319
    %v2384 = vunpack.c.l.b16 %v2320
    %v2385 = vunpack.c.l.b16 %v2321
    %v2386 = vunpack.c.l.b16 %v2322
    %v2387 = vunpack.c.l.b16 %v2323
    %v2388 = vunpack.c.l.b16 %v2324
    %v2389 = vunpack.c.l.b16 %v2325
    %v2390 = vunpack.c.l.b16 %v2326
    %v2391 = vunpack.c.l.b16 %v2327
    %v2392 = vunpack.c.l.b16 %v2328
    %v2393 = vunpack.c.l.b16 %v2329
    %v2394 = vunpack.c.l.b16 %v2330
    %v2395 = vpack.c.b16 %v2364, %v2363
    %v2396 = vpack.c.b16 %v2366, %v2365
    %v2397 = vpack.c.b16 %v2368, %v2367
    %v2398 = vpack.c.b16 %v2370, %v2369
    %v2399 = vpack.c.b16 %v2372, %v2371
    %v2400 = vpack.c.b16 %v2374, %v2373
    %v2401 = vpack.c.b16 %v2376, %v2375
    %v2402 = vpack.c.b16 %v2378, %v2377
    %v2403 = vpack.c.b16 %v2380, %v2379
    %v2404 = vpack.c.b16 %v2382, %v2381
    %v2405 = vpack.c.b16 %v2384, %v2383
    %v2406 = vpack.c.b16 %v2386, %v2385
    %v2407 = vpack.c.b16 %v2388, %v2387
    %v2408 = vpack.c.b16 %v2390, %v2389
    %v2409 = vpack.c.b16 %v2392, %v2391
    %v2410 = vpack.c.b16 %v2394, %v2393
    %2427 = vmatpush.bf16.msra.mxu0 %v2402
    %2428 = vmatpush.bf16.msra.mxu0 %v2401
    %2429 = vmatpush.bf16.msra.mxu0 %v2400
    %2430 = vmatpush.bf16.msra.mxu0 %v2399
    %2431 = vmatpush.bf16.msra.mxu0 %v2398
    %2432 = vmatpush.bf16.msra.mxu0 %v2397
    %2433 = vmatpush.bf16.msra.mxu0 %v2396
    %2434 = vmatpush.bf16.msra.mxu0 %v2395
    %2435 = vmatmul.bf16.gmra.mxu0 %v2297
    %v2436 = vpop.f32.mrf.mxu0
    %v2437 = vadd.f32 0.0, %v2436
    %v2438 = vpop.f32.mrf.mxu0
    %2439 = vdwg.mxu0
    %2440 = vmatpush.bf16.msra.mxu0 %v2410
    %2441 = vmatpush.bf16.msra.mxu0 %v2409
    %2442 = vmatpush.bf16.msra.mxu0 %v2408
    %2443 = vmatpush.bf16.msra.mxu0 %v2407
    %2444 = vmatpush.bf16.msra.mxu0 %v2406
    %2445 = vmatpush.bf16.msra.mxu0 %v2405
    %2446 = vmatpush.bf16.msra.mxu0 %v2404
    %2447 = vmatpush.bf16.msra.mxu0 %v2403
    %2448 = vmatmul.bf16.gmra.mxu0 %v2298
    %v2449 = vpop.f32.mrf.mxu0
    %v2450 = vadd.f32 %v2437, %v2449
    %v2451 = vpop.f32.mrf.mxu0
    %2452 = vdwg.mxu0
    %v2454 = vrot.slane %v2450, 2
    %s2456 = scalar_lea.vmem [#allocation22], 12
    %2457 = vst [vmem:[%s2456] sm:$0x3] %v2450
    %2458 = vst [vmem:[%s2456 + $0x2] sm:$0x3] %v2454
    %v2459 = vld [vmem:[#allocation19] sm:$0xf]
    %v2460 = vld [vmem:[#allocation19 + $0x4] sm:$0xf]
    %v2461 = vld [vmem:[#allocation19 + $0x8] sm:$0xf]
    %v2462 = vld [vmem:[#allocation19 + $0xc] sm:$0xf]
    %v2463 = vld [vmem:[#allocation19 + $0x10] sm:$0xf]
    %v2464 = vld [vmem:[#allocation19 + $0x14] sm:$0xf]
    %v2465 = vld [vmem:[#allocation19 + $0x18] sm:$0xf]
    %v2466 = vld [vmem:[#allocation19 + $0x1c] sm:$0xf]
    %2467 = vst [vmem:[#allocation1] ss:$4 sm:$0xff] %v645
    %v2468 = vld.sshfl [vmem:[#allocation1] sm:$0xff pattern:$0x73625140]
    %v2469 = vld.sshfl [vmem:[#allocation1 + $0x8] sm:$0xff pattern:$0x73625140]
    %v2473 = vrot.slane %v2459, 1
    %v2474 = vrot.slane %v2459, 2
    %v2475 = vrot.slane %v2459, 3
    %v2476 = vsel %vm708, %v2459, %v2473
    %v2477 = vsel %vm710, %v2474, %v2475
    %v2478 = vsel %vm636, %v2476, %v2477
    %v2479 = vsel %vm713, %v2459, %v2473
    %v2480 = vsel %vm715, %v2474, %v2475
    %v2481 = vsel %vm717, %v2479, %v2480
    %v2482 = vrot.slane %v2481, 1
    %v2483 = vperm.slane %v2478, 0
    %v2484 = vperm.slane %v2478, 1
    %v2485 = vperm.slane %v2482, 0
    %v2486 = vperm.slane %v2482, 1
    %v2487 = vrot.slane %v2484, 6
    %v2488 = vrot.slane %v2486, 6
    %v2489 = vsel %vm636, %v2483, %v2487
    %v2490 = vsel %vm636, %v2485, %v2488
    %v2493 = vmul.f32 %v645, %v2489
    %v2494 = vmul.f32 %v645, %v2490
    %v2496 = vrot.slane %v2463, 1
    %v2497 = vrot.slane %v2463, 2
    %v2498 = vrot.slane %v2463, 3
    %v2499 = vsel %vm708, %v2463, %v2496
    %v2500 = vsel %vm710, %v2497, %v2498
    %v2501 = vsel %vm636, %v2499, %v2500
    %v2502 = vsel %vm713, %v2463, %v2496
    %v2503 = vsel %vm715, %v2497, %v2498
    %v2504 = vsel %vm717, %v2502, %v2503
    %v2505 = vrot.slane %v2504, 1
    %v2506 = vperm.slane %v2501, 0
    %v2507 = vperm.slane %v2501, 1
    %v2508 = vperm.slane %v2505, 0
    %v2509 = vperm.slane %v2505, 1
    %v2514 = vmul.f32 %v2469, %v2506
    %v2515 = vmul.f32 %v2468, %v2507
    %v2516 = vmul.f32 %v2469, %v2508
    %v2517 = vmul.f32 %v2468, %v2509
    %v2522 = vrot.slane %v2515, 6
    %v2523 = vrot.slane %v2517, 6
    %v2524 = vsel %vm636, %v2514, %v2522
    %v2525 = vsel %vm636, %v2516, %v2523
    %v2528 = vadd.f32 %v2493, %v2524
    %v2529 = vadd.f32 %v2494, %v2525
    %2530 = vst [vmem:[#allocation1] ss:$4 sm:$0xff] %v658
    %v2531 = vld.sshfl [vmem:[#allocation1] sm:$0xff pattern:$0x73625140]
    %v2532 = vld.sshfl [vmem:[#allocation1 + $0x8] sm:$0xff pattern:$0x73625140]
    %v2536 = vrot.slane %v2460, 1
    %v2537 = vrot.slane %v2460, 2
    %v2538 = vrot.slane %v2460, 3
    %v2539 = vsel %vm708, %v2460, %v2536
    %v2540 = vsel %vm710, %v2537, %v2538
    %v2541 = vsel %vm636, %v2539, %v2540
    %v2542 = vsel %vm713, %v2460, %v2536
    %v2543 = vsel %vm715, %v2537, %v2538
    %v2544 = vsel %vm717, %v2542, %v2543
    %v2545 = vrot.slane %v2544, 1
    %v2546 = vperm.slane %v2541, 0
    %v2547 = vperm.slane %v2541, 1
    %v2548 = vperm.slane %v2545, 0
    %v2549 = vperm.slane %v2545, 1
    %v2550 = vrot.slane %v2547, 6
    %v2551 = vrot.slane %v2549, 6
    %v2552 = vsel %vm636, %v2546, %v2550
    %v2553 = vsel %vm636, %v2548, %v2551
    %v2556 = vmul.f32 %v658, %v2552
    %v2557 = vmul.f32 %v658, %v2553
    %v2559 = vrot.slane %v2464, 1
    %v2560 = vrot.slane %v2464, 2
    %v2561 = vrot.slane %v2464, 3
    %v2562 = vsel %vm708, %v2464, %v2559
    %v2563 = vsel %vm710, %v2560, %v2561
    %v2564 = vsel %vm636, %v2562, %v2563
    %v2565 = vsel %vm713, %v2464, %v2559
    %v2566 = vsel %vm715, %v2560, %v2561
    %v2567 = vsel %vm717, %v2565, %v2566
    %v2568 = vrot.slane %v2567, 1
    %v2569 = vperm.slane %v2564, 0
    %v2570 = vperm.slane %v2564, 1
    %v2571 = vperm.slane %v2568, 0
    %v2572 = vperm.slane %v2568, 1
    %v2577 = vmul.f32 %v2532, %v2569
    %v2578 = vmul.f32 %v2531, %v2570
    %v2579 = vmul.f32 %v2532, %v2571
    %v2580 = vmul.f32 %v2531, %v2572
    %v2585 = vrot.slane %v2578, 6
    %v2586 = vrot.slane %v2580, 6
    %v2587 = vsel %vm636, %v2577, %v2585
    %v2588 = vsel %vm636, %v2579, %v2586
    %v2591 = vadd.f32 %v2556, %v2587
    %v2592 = vadd.f32 %v2557, %v2588
    %v2593 = vadd.f32 %v2528, %v2591
    %v2594 = vadd.f32 %v2529, %v2592
    %2595 = vst [vmem:[#allocation1] ss:$4 sm:$0xff] %v668
    %v2596 = vld.sshfl [vmem:[#allocation1] sm:$0xff pattern:$0x73625140]
    %v2597 = vld.sshfl [vmem:[#allocation1 + $0x8] sm:$0xff pattern:$0x73625140]
    %v2601 = vrot.slane %v2461, 1
    %v2602 = vrot.slane %v2461, 2
    %v2603 = vrot.slane %v2461, 3
    %v2604 = vsel %vm708, %v2461, %v2601
    %v2605 = vsel %vm710, %v2602, %v2603
    %v2606 = vsel %vm636, %v2604, %v2605
    %v2607 = vsel %vm713, %v2461, %v2601
    %v2608 = vsel %vm715, %v2602, %v2603
    %v2609 = vsel %vm717, %v2607, %v2608
    %v2610 = vrot.slane %v2609, 1
    %v2611 = vperm.slane %v2606, 0
    %v2612 = vperm.slane %v2606, 1
    %v2613 = vperm.slane %v2610, 0
    %v2614 = vperm.slane %v2610, 1
    %v2615 = vrot.slane %v2612, 6
    %v2616 = vrot.slane %v2614, 6
    %v2617 = vsel %vm636, %v2611, %v2615
    %v2618 = vsel %vm636, %v2613, %v2616
    %v2621 = vmul.f32 %v668, %v2617
    %v2622 = vmul.f32 %v668, %v2618
    %v2624 = vrot.slane %v2465, 1
    %v2625 = vrot.slane %v2465, 2
    %v2626 = vrot.slane %v2465, 3
    %v2627 = vsel %vm708, %v2465, %v2624
    %v2628 = vsel %vm710, %v2625, %v2626
    %v2629 = vsel %vm636, %v2627, %v2628
    %v2630 = vsel %vm713, %v2465, %v2624
    %v2631 = vsel %vm715, %v2625, %v2626
    %v2632 = vsel %vm717, %v2630, %v2631
    %v2633 = vrot.slane %v2632, 1
    %v2634 = vperm.slane %v2629, 0
    %v2635 = vperm.slane %v2629, 1
    %v2636 = vperm.slane %v2633, 0
    %v2637 = vperm.slane %v2633, 1
    %v2642 = vmul.f32 %v2597, %v2634
    %v2643 = vmul.f32 %v2596, %v2635
    %v2644 = vmul.f32 %v2597, %v2636
    %v2645 = vmul.f32 %v2596, %v2637
    %v2650 = vrot.slane %v2643, 6
    %v2651 = vrot.slane %v2645, 6
    %v2652 = vsel %vm636, %v2642, %v2650
    %v2653 = vsel %vm636, %v2644, %v2651
    %v2656 = vadd.f32 %v2621, %v2652
    %v2657 = vadd.f32 %v2622, %v2653
    %v2658 = vadd.f32 %v2593, %v2656
    %v2659 = vadd.f32 %v2594, %v2657
    %2660 = vst [vmem:[#allocation1] ss:$4 sm:$0xff] %v678
    %v2661 = vld.sshfl [vmem:[#allocation1] sm:$0xff pattern:$0x73625140]
    %v2662 = vld.sshfl [vmem:[#allocation1 + $0x8] sm:$0xff pattern:$0x73625140]
    %v2666 = vrot.slane %v2462, 1
    %v2667 = vrot.slane %v2462, 2
    %v2668 = vrot.slane %v2462, 3
    %v2669 = vsel %vm708, %v2462, %v2666
    %v2670 = vsel %vm710, %v2667, %v2668
    %v2671 = vsel %vm636, %v2669, %v2670
    %v2672 = vsel %vm713, %v2462, %v2666
    %v2673 = vsel %vm715, %v2667, %v2668
    %v2674 = vsel %vm717, %v2672, %v2673
    %v2675 = vrot.slane %v2674, 1
    %v2676 = vperm.slane %v2671, 0
    %v2677 = vperm.slane %v2671, 1
    %v2678 = vperm.slane %v2675, 0
    %v2679 = vperm.slane %v2675, 1
    %v2680 = vrot.slane %v2677, 6
    %v2681 = vrot.slane %v2679, 6
    %v2682 = vsel %vm636, %v2676, %v2680
    %v2683 = vsel %vm636, %v2678, %v2681
    %v2686 = vmul.f32 %v678, %v2682
    %v2687 = vmul.f32 %v678, %v2683
    %v2689 = vrot.slane %v2466, 1
    %v2690 = vrot.slane %v2466, 2
    %v2691 = vrot.slane %v2466, 3
    %v2692 = vsel %vm708, %v2466, %v2689
    %v2693 = vsel %vm710, %v2690, %v2691
    %v2694 = vsel %vm636, %v2692, %v2693
    %v2695 = vsel %vm713, %v2466, %v2689
    %v2696 = vsel %vm715, %v2690, %v2691
    %v2697 = vsel %vm717, %v2695, %v2696
    %v2698 = vrot.slane %v2697, 1
    %v2699 = vperm.slane %v2694, 0
    %v2700 = vperm.slane %v2694, 1
    %v2701 = vperm.slane %v2698, 0
    %v2702 = vperm.slane %v2698, 1
    %v2707 = vmul.f32 %v2662, %v2699
    %v2708 = vmul.f32 %v2661, %v2700
    %v2709 = vmul.f32 %v2662, %v2701
    %v2710 = vmul.f32 %v2661, %v2702
    %v2715 = vrot.slane %v2708, 6
    %v2716 = vrot.slane %v2710, 6
    %v2717 = vsel %vm636, %v2707, %v2715
    %v2718 = vsel %vm636, %v2709, %v2716
    %v2721 = vadd.f32 %v2686, %v2717
    %v2722 = vadd.f32 %v2687, %v2718
    %v2723 = vadd.f32 %v2658, %v2721
    %v2724 = vadd.f32 %v2659, %v2722
    %2727 = vst [vmem:[#allocation1] ss:$4 sm:$0xff] %v2723
    %s2728 = scalar_lea.vmem [#allocation1], 1
    %2729 = vst [vmem:[%s2728] ss:$4 sm:$0xff] %v2724
    %v2730 = vld.sshfl [vmem:[#allocation1] sm:$0xff pattern:$0x73625140]
    %v2731 = vld.sshfl [vmem:[#allocation1 + $0x8] sm:$0xff pattern:$0x73625140]
    %v2734 = vpack.c.bf16 %v2730, %v2730
    %v2735 = vpack.c.bf16 %v2731, %v2731
    %v2736 = vld [vmem:[#allocation20] sm:$0xf]
    %v2737 = vld [vmem:[#allocation20 + $0x4] sm:$0xf]
    %v2738 = vld [vmem:[#allocation20 + $0x8] sm:$0xf]
    %v2739 = vld [vmem:[#allocation20 + $0xc] sm:$0xf]
    %v2740 = vld [vmem:[#allocation20 + $0x10] sm:$0xf]
    %v2741 = vld [vmem:[#allocation20 + $0x14] sm:$0xf]
    %v2742 = vld [vmem:[#allocation20 + $0x18] sm:$0xf]
    %v2743 = vld [vmem:[#allocation20 + $0x1c] sm:$0xf]
    %v2744 = vld [vmem:[#allocation20 + $0x20] sm:$0xf]
    %v2745 = vld [vmem:[#allocation20 + $0x24] sm:$0xf]
    %v2746 = vld [vmem:[#allocation20 + $0x28] sm:$0xf]
    %v2747 = vld [vmem:[#allocation20 + $0x2c] sm:$0xf]
    %v2748 = vld [vmem:[#allocation20 + $0x30] sm:$0xf]
    %v2749 = vld [vmem:[#allocation20 + $0x34] sm:$0xf]
    %v2750 = vld [vmem:[#allocation20 + $0x38] sm:$0xf]
    %v2751 = vld [vmem:[#allocation20 + $0x3c] sm:$0xf]
    %v2752 = vld [vmem:[#allocation20 + $0x40] sm:$0xf]
    %v2753 = vld [vmem:[#allocation20 + $0x44] sm:$0xf]
    %v2754 = vld [vmem:[#allocation20 + $0x48] sm:$0xf]
    %v2755 = vld [vmem:[#allocation20 + $0x4c] sm:$0xf]
    %v2756 = vld [vmem:[#allocation20 + $0x50] sm:$0xf]
    %v2757 = vld [vmem:[#allocation20 + $0x54] sm:$0xf]
    %v2758 = vld [vmem:[#allocation20 + $0x58] sm:$0xf]
    %v2759 = vld [vmem:[#allocation20 + $0x5c] sm:$0xf]
    %v2760 = vld [vmem:[#allocation20 + $0x60] sm:$0xf]
    %v2761 = vld [vmem:[#allocation20 + $0x64] sm:$0xf]
    %v2762 = vld [vmem:[#allocation20 + $0x68] sm:$0xf]
    %v2763 = vld [vmem:[#allocation20 + $0x6c] sm:$0xf]
    %v2764 = vld [vmem:[#allocation20 + $0x70] sm:$0xf]
    %v2765 = vld [vmem:[#allocation20 + $0x74] sm:$0xf]
    %v2766 = vld [vmem:[#allocation20 + $0x78] sm:$0xf]
    %v2767 = vld [vmem:[#allocation20 + $0x7c] sm:$0xf]
    %v2800 = vunpack.c.l.b16 %v2736
    %v2801 = vunpack.c.l.b16 %v2737
    %v2802 = vunpack.c.l.b16 %v2738
    %v2803 = vunpack.c.l.b16 %v2739
    %v2804 = vunpack.c.l.b16 %v2740
    %v2805 = vunpack.c.l.b16 %v2741
    %v2806 = vunpack.c.l.b16 %v2742
    %v2807 = vunpack.c.l.b16 %v2743
    %v2808 = vunpack.c.l.b16 %v2744
    %v2809 = vunpack.c.l.b16 %v2745
    %v2810 = vunpack.c.l.b16 %v2746
    %v2811 = vunpack.c.l.b16 %v2747
    %v2812 = vunpack.c.l.b16 %v2748
    %v2813 = vunpack.c.l.b16 %v2749
    %v2814 = vunpack.c.l.b16 %v2750
    %v2815 = vunpack.c.l.b16 %v2751
    %v2816 = vunpack.c.l.b16 %v2752
    %v2817 = vunpack.c.l.b16 %v2753
    %v2818 = vunpack.c.l.b16 %v2754
    %v2819 = vunpack.c.l.b16 %v2755
    %v2820 = vunpack.c.l.b16 %v2756
    %v2821 = vunpack.c.l.b16 %v2757
    %v2822 = vunpack.c.l.b16 %v2758
    %v2823 = vunpack.c.l.b16 %v2759
    %v2824 = vunpack.c.l.b16 %v2760
    %v2825 = vunpack.c.l.b16 %v2761
    %v2826 = vunpack.c.l.b16 %v2762
    %v2827 = vunpack.c.l.b16 %v2763
    %v2828 = vunpack.c.l.b16 %v2764
    %v2829 = vunpack.c.l.b16 %v2765
    %v2830 = vunpack.c.l.b16 %v2766
    %v2831 = vunpack.c.l.b16 %v2767
    %v2832 = vpack.c.b16 %v2801, %v2800
    %v2833 = vpack.c.b16 %v2803, %v2802
    %v2834 = vpack.c.b16 %v2805, %v2804
    %v2835 = vpack.c.b16 %v2807, %v2806
    %v2836 = vpack.c.b16 %v2809, %v2808
    %v2837 = vpack.c.b16 %v2811, %v2810
    %v2838 = vpack.c.b16 %v2813, %v2812
    %v2839 = vpack.c.b16 %v2815, %v2814
    %v2840 = vpack.c.b16 %v2817, %v2816
    %v2841 = vpack.c.b16 %v2819, %v2818
    %v2842 = vpack.c.b16 %v2821, %v2820
    %v2843 = vpack.c.b16 %v2823, %v2822
    %v2844 = vpack.c.b16 %v2825, %v2824
    %v2845 = vpack.c.b16 %v2827, %v2826
    %v2846 = vpack.c.b16 %v2829, %v2828
    %v2847 = vpack.c.b16 %v2831, %v2830
    %2864 = vmatpush.bf16.msra.mxu0 %v2839
    %2865 = vmatpush.bf16.msra.mxu0 %v2838
    %2866 = vmatpush.bf16.msra.mxu0 %v2837
    %2867 = vmatpush.bf16.msra.mxu0 %v2836
    %2868 = vmatpush.bf16.msra.mxu0 %v2835
    %2869 = vmatpush.bf16.msra.mxu0 %v2834
    %2870 = vmatpush.bf16.msra.mxu0 %v2833
    %2871 = vmatpush.bf16.msra.mxu0 %v2832
    %2872 = vmatmul.bf16.gmra.mxu0 %v2734
    %v2873 = vpop.f32.mrf.mxu0
    %v2874 = vadd.f32 0.0, %v2873
    %v2875 = vpop.f32.mrf.mxu0
    %2876 = vdwg.mxu0
    %2877 = vmatpush.bf16.msra.mxu0 %v2847
    %2878 = vmatpush.bf16.msra.mxu0 %v2846
    %2879 = vmatpush.bf16.msra.mxu0 %v2845
    %2880 = vmatpush.bf16.msra.mxu0 %v2844
    %2881 = vmatpush.bf16.msra.mxu0 %v2843
    %2882 = vmatpush.bf16.msra.mxu0 %v2842
    %2883 = vmatpush.bf16.msra.mxu0 %v2841
    %2884 = vmatpush.bf16.msra.mxu0 %v2840
    %2885 = vmatmul.bf16.gmra.mxu0 %v2735
    %v2886 = vpop.f32.mrf.mxu0
    %v2887 = vadd.f32 %v2874, %v2886
    %v2888 = vpop.f32.mrf.mxu0
    %2889 = vdwg.mxu0
    %v2891 = vrot.slane %v2887, 2
    %s2893 = scalar_lea.vmem [#allocation22], 16
    %2894 = vst [vmem:[%s2893] sm:$0x3] %v2887
    %2895 = vst [vmem:[%s2893 + $0x2] sm:$0x3] %v2891
    // Predicated region
    $region98: #{tpu_custom_call.1} parent=1 // pred_check
      _
    $region99: #{tpu_custom_call.1} parent=1 // pred_check_branch
      %2897 = sbr.rel (0) target = $region101
    $region100: #{tpu_custom_call.1} parent=1 // pred_region
      %2899 = vsyncadd [#allocation4], 0
      %s2900 = sshll.u32 [#allocation22], 4
      %s2901 = int_to_ptr.vmem [resolvable:$true] %s2900
      %s2902 = sshll.u32 %s12, 4
      %s2903 = int_to_ptr.hbm [resolvable:$true] %s2902
      %2908 = dma.vmem_to_hbm [thread:$0]  %s2901, 320, %s2903, [#allocation4], 32, 32, 2
    $region101: #{tpu_custom_call.1} parent=1 // pred_fallthru
      _
    // Predicated region
    $region102: #{tpu_custom_call.1} parent=1 // pred_check
      _
    $region103: #{tpu_custom_call.1} parent=1 // pred_check_branch
      %2910 = sbr.rel (0) target = $region105
    $region104: #{tpu_custom_call.1} parent=1 // pred_region
      %2912 = dma.done [#allocation4], 320
    $region105: #{tpu_custom_call.1} parent=1 // pred_fallthru
      _
    %2913 = vsyncpa [#allocation3], 1
    %2914 = vsyncpa [#allocation6], 1
    %2915 = vsyncpa [#allocation9], 1
    %2916 = vsyncpa [#allocation12], 1
    %2917 = vsyncpa [#allocation15], 1
    %2918 = vsyncpa [#allocation18], 1
    %2919 = vsyncpa [#allocation21], 1
    %2920 = vsyncpa [#allocation4], 1

// kernel: tpu_custom_call.1
$region0: #{tpu_custom_call.1}
  #allocation0 [shape = 'u32[]', space=smem, size = 0x4, offset = 0x4, fixed_abs, tag = 'smem constant byte address 0x4 - core index']
  #allocation1 [shape = 'u32[72,128]{1,0:T(1,128)}', space=vmem, size = 0x9000, scoped, tag = 'internal scratch']
  %s0 = inlined_call_operand.hbm [shape: bf16[4,2,64], index: 0, kind: input, shape index: {}]
  %s1 = inlined_call_operand.hbm [shape: bf16[64,1280], index: 1, kind: input, shape index: {}]
  %s2 = inlined_call_operand.hbm [shape: f32[2,4,2,256], index: 2, kind: input, shape index: {}]
  %s3 = inlined_call_operand.hbm [shape: bf16[256,128], index: 3, kind: input, shape index: {}]
  %s4 = inlined_call_operand.hbm [shape: f32[2,4,2,256], index: 4, kind: input, shape index: {}]
  %s5 = inlined_call_operand.hbm [shape: bf16[256,128], index: 5, kind: input, shape index: {}]
  %s6 = inlined_call_operand.hbm [shape: f32[2,4,2,256], index: 6, kind: input, shape index: {}]
  %s7 = inlined_call_operand.hbm [shape: bf16[256,128], index: 7, kind: input, shape index: {}]
  %s8 = inlined_call_operand.hbm [shape: f32[2,4,2,256], index: 8, kind: input, shape index: {}]
  %s9 = inlined_call_operand.hbm [shape: bf16[256,128], index: 9, kind: input, shape index: {}]
  %s10 = inlined_call_operand.hbm [shape: f32[2,4,2,256], index: 10, kind: input, shape index: {}]
  %s11 = inlined_call_operand.hbm [shape: bf16[256,128], index: 11, kind: input, shape index: {}]
  %s12 = inlined_call_operand.hbm [shape: f32[10,2,128], index: 12, kind: output, shape index: {}]
  %s13 = sld [smem:[#allocation0]]
  $region106: #{tpu_custom_call.1} parent=0
    _
  %s15 = ssub.s32 1, %s13
  %s16 = scalar_select 0, %s15, %s13
  $region1: #{tpu_custom_call.1} parent=0
    #allocation2 [shape = 'u8[2048]{0}', space=vmem, size = 0x800, scoped, tag = 'input window, operand 0, single buffered']
    #allocation3 [shape = 's32[1]{0}', space=sflag, size = 0x4, scoped, tag = 'scoped memory for tpu_custom_call.1']
    #allocation4 [shape = 's32[1]{0}', space=sflag, size = 0x4, scoped, tag = 'scoped memory for tpu_custom_call.1']
    #allocation5 [shape = 'u8[163840]{0}', space=vmem, size = 0x28000, scoped, tag = 'input window, operand 1, single buffered']
    #allocation6 [shape = 's32[1]{0}', space=sflag, size = 0x4, scoped, tag = 'scoped memory for tpu_custom_call.1']
    #allocation7 [shape = 'u8[16384]{0}', space=vmem, size = 0x4000, scoped, tag = 'input window, operand 2, single buffered']
    #allocation8 [shape = 'u8[65536]{0}', space=vmem, size = 0x10000, scoped, tag = 'input window, operand 3, single buffered']
    #allocation9 [shape = 's32[1]{0}', space=sflag, size = 0x4, scoped, tag = 'scoped memory for tpu_custom_call.1']
    #allocation10 [shape = 'u8[16384]{0}', space=vmem, size = 0x4000, scoped, tag = 'input window, operand 4, single buffered']
    #allocation11 [shape = 'u8[65536]{0}', space=vmem, size = 0x10000, scoped, tag = 'input window, operand 5, single buffered']
    #allocation12 [shape = 's32[1]{0}', space=sflag, size = 0x4, scoped, tag = 'scoped memory for tpu_custom_call.1']
    #allocation13 [shape = 'u8[16384]{0}', space=vmem, size = 0x4000, scoped, tag = 'input window, operand 6, single buffered']
    #allocation14 [shape = 'u8[65536]{0}', space=vmem, size = 0x10000, scoped, tag = 'input window, operand 7, single buffered']
    #allocation15 [shape = 's32[1]{0}', space=sflag, size = 0x4, scoped, tag = 'scoped memory for tpu_custom_call.1']
    #allocation16 [shape = 'u8[16384]{0}', space=vmem, size = 0x4000, scoped, tag = 'input window, operand 8, single buffered']
    #allocation17 [shape = 'u8[65536]{0}', space=vmem, size = 0x10000, scoped, tag = 'input window, operand 9, single buffered']
    #allocation18 [shape = 's32[1]{0}', space=sflag, size = 0x4, scoped, tag = 'scoped memory for tpu_custom_call.1']
    #allocation19 [shape = 'u8[16384]{0}', space=vmem, size = 0x4000, scoped, tag = 'input window, operand 10, single buffered']
    #allocation20 [shape = 'u8[65536]{0}', space=vmem, size = 0x10000, scoped, tag = 'input window, operand 11, single buffered']
    #allocation21 [shape = 's32[1]{0}', space=sflag, size = 0x4, scoped, tag = 'scoped memory for tpu_custom_call.1']
    #allocation22 [shape = 'u8[10240]{0}', space=vmem, size = 0x2800, scoped, tag = 'output window, operand 0, single buffered']
    %17 = vsyncpa [#allocation3], 0
    %18 = vsyncpa [#allocation6], 0
    %19 = vsyncpa [#allocation9], 0
    %20 = vsyncpa [#allocation12], 0
    %21 = vsyncpa [#allocation15], 0
    %22 = vsyncpa [#allocation18], 0
    %23 = vsyncpa [#allocation21], 0
    %24 = vsyncpa [#allocation4], 0
    // Predicated region
    $region2: #{tpu_custom_call.1} parent=1 // pred_check
      _
    $region3: #{tpu_custom_call.1} parent=1 // pred_check_branch
      %26 = sbr.rel (0) target = $region5
    $region4: #{tpu_custom_call.1} parent=1 // pred_region
      %28 = vsyncadd [#allocation3], 0
      %s29 = sshll.u32 %s0, 4
      %s30 = int_to_ptr.hbm [resolvable:$true] %s29
      %s31 = sshll.u32 [#allocation2], 4
      %s32 = int_to_ptr.vmem [resolvable:$true] %s31
      %37 = dma.hbm_to_vmem [thread:$0]  %s30, 64, %s32, [#allocation3], 16, 16, 1
    $region5: #{tpu_custom_call.1} parent=1 // pred_fallthru
      _
    // Predicated region
    $region6: #{tpu_custom_call.1} parent=1 // pred_check
      _
    $region7: #{tpu_custom_call.1} parent=1 // pred_check_branch
      %39 = sbr.rel (0) target = $region9
    $region8: #{tpu_custom_call.1} parent=1 // pred_region
      %41 = vsyncadd [#allocation6], 0
      %s42 = sshll.u32 %s1, 4
      %s43 = int_to_ptr.hbm [resolvable:$true] %s42
      %s44 = sshll.u32 [#allocation5], 4
      %s45 = int_to_ptr.vmem [resolvable:$true] %s44
      %50 = dma.hbm_to_vmem [thread:$0]  %s43, 5120, %s45, [#allocation6], 640, 640, 40
    $region9: #{tpu_custom_call.1} parent=1 // pred_fallthru
      _
    // Predicated region
    $region10: #{tpu_custom_call.1} parent=1 // pred_check
      _
    $region11: #{tpu_custom_call.1} parent=1 // pred_check_branch
      %52 = sbr.rel (0) target = $region13
    $region12: #{tpu_custom_call.1} parent=1 // pred_region
      %54 = vsyncadd [#allocation6], 0
      %s55 = sshll.u32 %s2, 4
      %s56 = int_to_ptr.hbm [resolvable:$true] %s55
      %s57 = sshll.u32 [#allocation7], 4
      %s58 = int_to_ptr.vmem [resolvable:$true] %s57
      %63 = dma.hbm_to_vmem [thread:$0]  %s56, 512, %s58, [#allocation6], 64, 64, 4
    $region13: #{tpu_custom_call.1} parent=1 // pred_fallthru
      _
    // Predicated region
    $region14: #{tpu_custom_call.1} parent=1 // pred_check
      _
    $region15: #{tpu_custom_call.1} parent=1 // pred_check_branch
      %65 = sbr.rel (0) target = $region17
    $region16: #{tpu_custom_call.1} parent=1 // pred_region
      %67 = vsyncadd [#allocation9], 0
      %s68 = sshll.u32 %s3, 4
      %s69 = int_to_ptr.hbm [resolvable:$true] %s68
      %s70 = sshll.u32 [#allocation8], 4
      %s71 = int_to_ptr.vmem [resolvable:$true] %s70
      %76 = dma.hbm_to_vmem [thread:$0]  %s69, 2048, %s71, [#allocation9], 64, 64, 4
    $region17: #{tpu_custom_call.1} parent=1 // pred_fallthru
      _
    // Predicated region
    $region18: #{tpu_custom_call.1} parent=1 // pred_check
      _
    $region19: #{tpu_custom_call.1} parent=1 // pred_check_branch
      %78 = sbr.rel (0) target = $region21
    $region20: #{tpu_custom_call.1} parent=1 // pred_region
      %80 = vsyncadd [#allocation9], 0
      %s81 = sshll.u32 %s4, 4
      %s82 = int_to_ptr.hbm [resolvable:$true] %s81
      %s83 = sshll.u32 [#allocation10], 4
      %s84 = int_to_ptr.vmem [resolvable:$true] %s83
      %89 = dma.hbm_to_vmem [thread:$0]  %s82, 512, %s84, [#allocation9], 64, 64, 4
    $region21: #{tpu_custom_call.1} parent=1 // pred_fallthru
      _
    // Predicated region
    $region22: #{tpu_custom_call.1} parent=1 // pred_check
      _
    $region23: #{tpu_custom_call.1} parent=1 // pred_check_branch
      %91 = sbr.rel (0) target = $region25
    $region24: #{tpu_custom_call.1} parent=1 // pred_region
      %93 = vsyncadd [#allocation12], 0
      %s94 = sshll.u32 %s5, 4
      %s95 = int_to_ptr.hbm [resolvable:$true] %s94
      %s96 = sshll.u32 [#allocation11], 4
      %s97 = int_to_ptr.vmem [resolvable:$true] %s96
      %102 = dma.hbm_to_vmem [thread:$0]  %s95, 2048, %s97, [#allocation12], 64, 64, 4
    $region25: #{tpu_custom_call.1} parent=1 // pred_fallthru
      _
    // Predicated region
    $region26: #{tpu_custom_call.1} parent=1 // pred_check
      _
    $region27: #{tpu_custom_call.1} parent=1 // pred_check_branch
      %104 = sbr.rel (0) target = $region29
    $region28: #{tpu_custom_call.1} parent=1 // pred_region
      %106 = vsyncadd [#allocation12], 0
      %s107 = sshll.u32 %s6, 4
      %s108 = int_to_ptr.hbm [resolvable:$true] %s107
      %s109 = sshll.u32 [#allocation13], 4
      %s110 = int_to_ptr.vmem [resolvable:$true] %s109
      %115 = dma.hbm_to_vmem [thread:$0]  %s108, 512, %s110, [#allocation12], 64, 64, 4
    $region29: #{tpu_custom_call.1} parent=1 // pred_fallthru
      _
    // Predicated region
    $region30: #{tpu_custom_call.1} parent=1 // pred_check
      _
    $region31: #{tpu_custom_call.1} parent=1 // pred_check_branch
      %117 = sbr.rel (0) target = $region33
    $region32: #{tpu_custom_call.1} parent=1 // pred_region
      %119 = vsyncadd [#allocation15], 0
      %s120 = sshll.u32 %s7, 4
      %s121 = int_to_ptr.hbm [resolvable:$true] %s120
      %s122 = sshll.u32 [#allocation14], 4
      %s123 = int_to_ptr.vmem [resolvable:$true] %s122
      %128 = dma.hbm_to_vmem [thread:$0]  %s121, 2048, %s123, [#allocation15], 64, 64, 4
    $region33: #{tpu_custom_call.1} parent=1 // pred_fallthru
      _
    // Predicated region
    $region34: #{tpu_custom_call.1} parent=1 // pred_check
      _
    $region35: #{tpu_custom_call.1} parent=1 // pred_check_branch
      %130 = sbr.rel (0) target = $region37
    $region36: #{tpu_custom_call.1} parent=1 // pred_region
      %132 = vsyncadd [#allocation15], 0
      %s133 = sshll.u32 %s8, 4
      %s134 = int_to_ptr.hbm [resolvable:$true] %s133
      %s135 = sshll.u32 [#allocation16], 4
      %s136 = int_to_ptr.vmem [resolvable:$true] %s135
      %141 = dma.hbm_to_vmem [thread:$0]  %s134, 512, %s136, [#allocation15], 64, 64, 4
    $region37: #{tpu_custom_call.1} parent=1 // pred_fallthru
      _
    // Predicated region
    $region38: #{tpu_custom_call.1} parent=1 // pred_check
      _
    $region39: #{tpu_custom_call.1} parent=1 // pred_check_branch
      %143 = sbr.rel (0) target = $region41
    $region40: #{tpu_custom_call.1} parent=1 // pred_region
      %145 = vsyncadd [#allocation18], 0
      %s146 = sshll.u32 %s9, 4
      %s147 = int_to_ptr.hbm [resolvable:$true] %s146
      %s148 = sshll.u32 [#allocation17], 4
      %s149 = int_to_ptr.vmem [resolvable:$true] %s148
      %154 = dma.hbm_to_vmem [thread:$0]  %s147, 2048, %s149, [#allocation18], 64, 64, 4
    $region41: #{tpu_custom_call.1} parent=1 // pred_fallthru
      _
    // Predicated region
    $region42: #{tpu_custom_call.1} parent=1 // pred_check
      _
    $region43: #{tpu_custom_call.1} parent=1 // pred_check_branch
      %156 = sbr.rel (0) target = $region45
    $region44: #{tpu_custom_call.1} parent=1 // pred_region
      %158 = vsyncadd [#allocation18], 0
      %s159 = sshll.u32 %s10, 4
      %s160 = int_to_ptr.hbm [resolvable:$true] %s159
      %s161 = sshll.u32 [#allocation19], 4
      %s162 = int_to_ptr.vmem [resolvable:$true] %s161
      %167 = dma.hbm_to_vmem [thread:$0]  %s160, 512, %s162, [#allocation18], 64, 64, 4
    $region45: #{tpu_custom_call.1} parent=1 // pred_fallthru
      _
    // Predicated region
    $region46: #{tpu_custom_call.1} parent=1 // pred_check
      _
    $region47: #{tpu_custom_call.1} parent=1 // pred_check_branch
      %169 = sbr.rel (0) target = $region49
    $region48: #{tpu_custom_call.1} parent=1 // pred_region
      %171 = vsyncadd [#allocation21], 0
      %s172 = sshll.u32 %s11, 4
      %s173 = int_to_ptr.hbm [resolvable:$true] %s172
      %s174 = sshll.u32 [#allocation20], 4
      %s175 = int_to_ptr.vmem [resolvable:$true] %s174
      %180 = dma.hbm_to_vmem [thread:$0]  %s173, 2048, %s175, [#allocation21], 64, 64, 4
    $region49: #{tpu_custom_call.1} parent=1 // pred_fallthru
      _
    // Predicated region
    $region50: #{tpu_custom_call.1} parent=1 // pred_check
      _
    $region51: #{tpu_custom_call.1} parent=1 // pred_check_branch
      %182 = sbr.rel (0) target = $region53
    $region52: #{tpu_custom_call.1} parent=1 // pred_region
      %184 = dma.done [#allocation3], 64
    $region53: #{tpu_custom_call.1} parent=1 // pred_fallthru
      _
    // Predicated region
    $region54: #{tpu_custom_call.1} parent=1 // pred_check
      _
    $region55: #{tpu_custom_call.1} parent=1 // pred_check_branch
      %186 = sbr.rel (0) target = $region57
    $region56: #{tpu_custom_call.1} parent=1 // pred_region
      %188 = dma.done [#allocation6], 5120
    $region57: #{tpu_custom_call.1} parent=1 // pred_fallthru
      _
    // Predicated region
    $region58: #{tpu_custom_call.1} parent=1 // pred_check
      _
    $region59: #{tpu_custom_call.1} parent=1 // pred_check_branch
      %190 = sbr.rel (0) target = $region61
    $region60: #{tpu_custom_call.1} parent=1 // pred_region
      %192 = dma.done [#allocation6], 512
    $region61: #{tpu_custom_call.1} parent=1 // pred_fallthru
      _
    // Predicated region
    $region62: #{tpu_custom_call.1} parent=1 // pred_check
      _
    $region63: #{tpu_custom_call.1} parent=1 // pred_check_branch
      %194 = sbr.rel (0) target = $region65
    $region64: #{tpu_custom_call.1} parent=1 // pred_region
      %196 = dma.done [#allocation9], 2048
    $region65: #{tpu_custom_call.1} parent=1 // pred_fallthru
      _
    // Predicated region
    $region66: #{tpu_custom_call.1} parent=1 // pred_check
      _
    $region67: #{tpu_custom_call.1} parent=1 // pred_check_branch
      %198 = sbr.rel (0) target = $region69
    $region68: #{tpu_custom_call.1} parent=1 // pred_region
      %200 = dma.done [#allocation9], 512
    $region69: #{tpu_custom_call.1} parent=1 // pred_fallthru
      _
    // Predicated region
    $region70: #{tpu_custom_call.1} parent=1 // pred_check
      _
    $region71: #{tpu_custom_call.1} parent=1 // pred_check_branch
      %202 = sbr.rel (0) target = $region73
    $region72: #{tpu_custom_call.1} parent=1 // pred_region
      %204 = dma.done [#allocation12], 2048
    $region73: #{tpu_custom_call.1} parent=1 // pred_fallthru
      _
    // Predicated region
    $region74: #{tpu_custom_call.1} parent=1 // pred_check
      _
    $region75: #{tpu_custom_call.1} parent=1 // pred_check_branch
      %206 = sbr.rel (0) target = $region77
    $region76: #{tpu_custom_call.1} parent=1 // pred_region
      %208 = dma.done [#allocation12], 512
    $region77: #{tpu_custom_call.1} parent=1 // pred_fallthru
      _
    // Predicated region
    $region78: #{tpu_custom_call.1} parent=1 // pred_check
      _
    $region79: #{tpu_custom_call.1} parent=1 // pred_check_branch
      %210 = sbr.rel (0) target = $region81
    $region80: #{tpu_custom_call.1} parent=1 // pred_region
      %212 = dma.done [#allocation15], 2048
    $region81: #{tpu_custom_call.1} parent=1 // pred_fallthru
      _
    // Predicated region
    $region82: #{tpu_custom_call.1} parent=1 // pred_check
      _
    $region83: #{tpu_custom_call.1} parent=1 // pred_check_branch
      %214 = sbr.rel (0) target = $region85
    $region84: #{tpu_custom_call.1} parent=1 // pred_region
      %216 = dma.done [#allocation15], 512
    $region85: #{tpu_custom_call.1} parent=1 // pred_fallthru
      _
    // Predicated region
    $region86: #{tpu_custom_call.1} parent=1 // pred_check
      _
    $region87: #{tpu_custom_call.1} parent=1 // pred_check_branch
      %218 = sbr.rel (0) target = $region89
    $region88: #{tpu_custom_call.1} parent=1 // pred_region
      %220 = dma.done [#allocation18], 2048
    $region89: #{tpu_custom_call.1} parent=1 // pred_fallthru
      _
    // Predicated region
    $region90: #{tpu_custom_call.1} parent=1 // pred_check
      _
    $region91: #{tpu_custom_call.1} parent=1 // pred_check_branch
      %222 = sbr.rel (0) target = $region93
    $region92: #{tpu_custom_call.1} parent=1 // pred_region
      %224 = dma.done [#allocation18], 512
    $region93: #{tpu_custom_call.1} parent=1 // pred_fallthru
      _
    // Predicated region
    $region94: #{tpu_custom_call.1} parent=1 // pred_check
      _
    $region95: #{tpu_custom_call.1} parent=1 // pred_check_branch
      %226 = sbr.rel (0) target = $region97
    $region96: #{tpu_custom_call.1} parent=1 // pred_region
      %228 = dma.done [#allocation21], 2048
    $region97: #{tpu_custom_call.1} parent=1 // pred_fallthru
      _
    %v230 = vld [vmem:[#allocation2] sm:$0x1]
    %v231 = vld [vmem:[#allocation2 + $0x1] sm:$0x1]
    %v232 = vld [vmem:[#allocation2 + $0x2] sm:$0x1]
    %v233 = vld [vmem:[#allocation2 + $0x3] sm:$0x1]
    %v234 = vld [vmem:[#allocation5] sm:$0xff]
    %v235 = vld [vmem:[#allocation5 + $0x8] sm:$0xff]
    %v236 = vld [vmem:[#allocation5 + $0x10] sm:$0xff]
    %v237 = vld [vmem:[#allocation5 + $0x18] sm:$0xff]
    %v238 = vld [vmem:[#allocation5 + $0x20] sm:$0xff]
    %v239 = vld [vmem:[#allocation5 + $0x28] sm:$0xff]
    %v240 = vld [vmem:[#allocation5 + $0x30] sm:$0xff]
    %v241 = vld [vmem:[#allocation5 + $0x38] sm:$0xff]
    %v242 = vld [vmem:[#allocation5 + $0x40] sm:$0xff]
    %v243 = vld [vmem:[#allocation5 + $0x48] sm:$0xff]
    %v244 = vld [vmem:[#allocation5 + $0x50] sm:$0xff]
    %v245 = vld [vmem:[#allocation5 + $0x58] sm:$0xff]
    %v246 = vld [vmem:[#allocation5 + $0x60] sm:$0xff]
    %v247 = vld [vmem:[#allocation5 + $0x68] sm:$0xff]
    %v248 = vld [vmem:[#allocation5 + $0x70] sm:$0xff]
    %v249 = vld [vmem:[#allocation5 + $0x78] sm:$0xff]
    %v250 = vld [vmem:[#allocation5 + $0x80] sm:$0xff]
    %v251 = vld [vmem:[#allocation5 + $0x88] sm:$0xff]
    %v252 = vld [vmem:[#allocation5 + $0x90] sm:$0xff]
    %v253 = vld [vmem:[#allocation5 + $0x98] sm:$0xff]
    %v254 = vld [vmem:[#allocation5 + $0xa0] sm:$0xff]
    %v255 = vld [vmem:[#allocation5 + $0xa8] sm:$0xff]
    %v256 = vld [vmem:[#allocation5 + $0xb0] sm:$0xff]
    %v257 = vld [vmem:[#allocation5 + $0xb8] sm:$0xff]
    %v258 = vld [vmem:[#allocation5 + $0xc0] sm:$0xff]
    %v259 = vld [vmem:[#allocation5 + $0xc8] sm:$0xff]
    %v260 = vld [vmem:[#allocation5 + $0xd0] sm:$0xff]
    %v261 = vld [vmem:[#allocation5 + $0xd8] sm:$0xff]
    %v262 = vld [vmem:[#allocation5 + $0xe0] sm:$0xff]
    %v263 = vld [vmem:[#allocation5 + $0xe8] sm:$0xff]
    %v264 = vld [vmem:[#allocation5 + $0xf0] sm:$0xff]
    %v265 = vld [vmem:[#allocation5 + $0xf8] sm:$0xff]
    %v266 = vld [vmem:[#allocation5 + $0x100] sm:$0xff]
    %v267 = vld [vmem:[#allocation5 + $0x108] sm:$0xff]
    %v268 = vld [vmem:[#allocation5 + $0x110] sm:$0xff]
    %v269 = vld [vmem:[#allocation5 + $0x118] sm:$0xff]
    %v270 = vld [vmem:[#allocation5 + $0x120] sm:$0xff]
    %v271 = vld [vmem:[#allocation5 + $0x128] sm:$0xff]
    %v272 = vld [vmem:[#allocation5 + $0x130] sm:$0xff]
    %v273 = vld [vmem:[#allocation5 + $0x138] sm:$0xff]
    %275 = vst [vmem:[#allocation1] ss:$9 sm:$0xff] %v230
    %s277 = scalar_lea.vmem [#allocation1], 1
    %278 = vst [vmem:[%s277] ss:$9 sm:$0xff] %v231
    %s280 = scalar_lea.vmem [#allocation1], 2
    %281 = vst [vmem:[%s280] ss:$9 sm:$0xff] %v232
    %s283 = scalar_lea.vmem [#allocation1], 3
    %284 = vst [vmem:[%s283] ss:$9 sm:$0xff] %v233
    %v285 = vld [vmem:[#allocation1] sm:$0xff]
    %v326 = vunpack.c.l.b16 %v234
    %v327 = vunpack.c.h.b16 %v234
    %v328 = vunpack.c.l.b16 %v235
    %v329 = vunpack.c.h.b16 %v235
    %v330 = vunpack.c.l.b16 %v236
    %v331 = vunpack.c.h.b16 %v236
    %v332 = vunpack.c.l.b16 %v237
    %v333 = vunpack.c.h.b16 %v237
    %v334 = vunpack.c.l.b16 %v238
    %v335 = vunpack.c.h.b16 %v238
    %v336 = vunpack.c.l.b16 %v239
    %v337 = vunpack.c.h.b16 %v239
    %v338 = vunpack.c.l.b16 %v240
    %v339 = vunpack.c.h.b16 %v240
    %v340 = vunpack.c.l.b16 %v241
    %v341 = vunpack.c.h.b16 %v241
    %v342 = vunpack.c.l.b16 %v242
    %v343 = vunpack.c.h.b16 %v242
    %v344 = vunpack.c.l.b16 %v243
    %v345 = vunpack.c.h.b16 %v243
    %v346 = vunpack.c.l.b16 %v244
    %v347 = vunpack.c.h.b16 %v244
    %v348 = vunpack.c.l.b16 %v245
    %v349 = vunpack.c.h.b16 %v245
    %v350 = vunpack.c.l.b16 %v246
    %v351 = vunpack.c.h.b16 %v246
    %v352 = vunpack.c.l.b16 %v247
    %v353 = vunpack.c.h.b16 %v247
    %v354 = vunpack.c.l.b16 %v248
    %v355 = vunpack.c.h.b16 %v248
    %v356 = vunpack.c.l.b16 %v249
    %v357 = vunpack.c.h.b16 %v249
    %v358 = vunpack.c.l.b16 %v250
    %v359 = vunpack.c.h.b16 %v250
    %v360 = vunpack.c.l.b16 %v251
    %v361 = vunpack.c.h.b16 %v251
    %v362 = vunpack.c.l.b16 %v252
    %v363 = vunpack.c.h.b16 %v252
    %v364 = vunpack.c.l.b16 %v253
    %v365 = vunpack.c.h.b16 %v253
    %v366 = vunpack.c.l.b16 %v254
    %v367 = vunpack.c.h.b16 %v254
    %v368 = vunpack.c.l.b16 %v255
    %v369 = vunpack.c.h.b16 %v255
    %v370 = vunpack.c.l.b16 %v256
    %v371 = vunpack.c.h.b16 %v256
    %v372 = vunpack.c.l.b16 %v257
    %v373 = vunpack.c.h.b16 %v257
    %v374 = vunpack.c.l.b16 %v258
    %v375 = vunpack.c.h.b16 %v258
    %v376 = vunpack.c.l.b16 %v259
    %v377 = vunpack.c.h.b16 %v259
    %v378 = vunpack.c.l.b16 %v260
    %v379 = vunpack.c.h.b16 %v260
    %v380 = vunpack.c.l.b16 %v261
    %v381 = vunpack.c.h.b16 %v261
    %v382 = vunpack.c.l.b16 %v262
    %v383 = vunpack.c.h.b16 %v262
    %v384 = vunpack.c.l.b16 %v263
    %v385 = vunpack.c.h.b16 %v263
    %v386 = vunpack.c.l.b16 %v264
    %v387 = vunpack.c.h.b16 %v264
    %v388 = vunpack.c.l.b16 %v265
    %v389 = vunpack.c.h.b16 %v265
    %v390 = vunpack.c.l.b16 %v266
    %v391 = vunpack.c.h.b16 %v266
    %v392 = vunpack.c.l.b16 %v267
    %v393 = vunpack.c.h.b16 %v267
    %v394 = vunpack.c.l.b16 %v268
    %v395 = vunpack.c.h.b16 %v268
    %v396 = vunpack.c.l.b16 %v269
    %v397 = vunpack.c.h.b16 %v269
    %v398 = vunpack.c.l.b16 %v270
    %v399 = vunpack.c.h.b16 %v270
    %v400 = vunpack.c.l.b16 %v271
    %v401 = vunpack.c.h.b16 %v271
    %v402 = vunpack.c.l.b16 %v272
    %v403 = vunpack.c.h.b16 %v272
    %v404 = vunpack.c.l.b16 %v273
    %v405 = vunpack.c.h.b16 %v273
    %v406 = vpack.c.b16 %v336, %v326
    %v407 = vpack.c.b16 %v337, %v327
    %v408 = vpack.c.b16 %v338, %v328
    %v409 = vpack.c.b16 %v339, %v329
    %v410 = vpack.c.b16 %v340, %v330
    %v411 = vpack.c.b16 %v341, %v331
    %v412 = vpack.c.b16 %v342, %v332
    %v413 = vpack.c.b16 %v343, %v333
    %v414 = vpack.c.b16 %v344, %v334
    %v415 = vpack.c.b16 %v345, %v335
    %v416 = vpack.c.b16 %v356, %v346
    %v417 = vpack.c.b16 %v357, %v347
    %v418 = vpack.c.b16 %v358, %v348
    %v419 = vpack.c.b16 %v359, %v349
    %v420 = vpack.c.b16 %v360, %v350
    %v421 = vpack.c.b16 %v361, %v351
    %v422 = vpack.c.b16 %v362, %v352
    %v423 = vpack.c.b16 %v363, %v353
    %v424 = vpack.c.b16 %v364, %v354
    %v425 = vpack.c.b16 %v365, %v355
    %v426 = vpack.c.b16 %v376, %v366
    %v427 = vpack.c.b16 %v377, %v367
    %v428 = vpack.c.b16 %v378, %v368
    %v429 = vpack.c.b16 %v379, %v369
    %v430 = vpack.c.b16 %v380, %v370
    %v431 = vpack.c.b16 %v381, %v371
    %v432 = vpack.c.b16 %v382, %v372
    %v433 = vpack.c.b16 %v383, %v373
    %v434 = vpack.c.b16 %v384, %v374
    %v435 = vpack.c.b16 %v385, %v375
    %v436 = vpack.c.b16 %v396, %v386
    %v437 = vpack.c.b16 %v397, %v387
    %v438 = vpack.c.b16 %v398, %v388
    %v439 = vpack.c.b16 %v399, %v389
    %v440 = vpack.c.b16 %v400, %v390
    %v441 = vpack.c.b16 %v401, %v391
    %v442 = vpack.c.b16 %v402, %v392
    %v443 = vpack.c.b16 %v403, %v393
    %v444 = vpack.c.b16 %v404, %v394
    %v445 = vpack.c.b16 %v405, %v395
    %vm486 = vcmask 523264
    %v487 = vsel %vm486, %v285, 0
    %489 = vmatpush.bf16.msra.mxu0 0
    %490 = vmatpush.bf16.msra.mxu0 0
    %491 = vmatpush.bf16.msra.mxu0 0
    %492 = vmatpush.bf16.msra.mxu0 0
    %493 = vmatpush.bf16.msra.mxu0 %v436
    %494 = vmatpush.bf16.msra.mxu0 %v426
    %495 = vmatpush.bf16.msra.mxu0 %v416
    %496 = vmatpush.bf16.msra.mxu0 %v406
    %497 = vmatmul.bf16.gmra.mxu0 %v487
    %v498 = vpop.f32.mrf.mxu0
    %v499 = vadd.f32 0.0, %v498
    %v500 = vpop.f32.mrf.mxu0
    %501 = vdwg.mxu0
    %502 = vmatpush.bf16.msra.mxu0 0
    %503 = vmatpush.bf16.msra.mxu0 0
    %504 = vmatpush.bf16.msra.mxu0 0
    %505 = vmatpush.bf16.msra.mxu0 0
    %506 = vmatpush.bf16.msra.mxu0 %v437
    %507 = vmatpush.bf16.msra.mxu0 %v427
    %508 = vmatpush.bf16.msra.mxu0 %v417
    %509 = vmatpush.bf16.msra.mxu0 %v407
    %510 = vmatmul.bf16.gmra.mxu0 %v487
    %v511 = vpop.f32.mrf.mxu0
    %v512 = vadd.f32 0.0, %v511
    %v513 = vpop.f32.mrf.mxu0
    %514 = vdwg.mxu0
    %515 = vmatpush.bf16.msra.mxu0 0
    %516 = vmatpush.bf16.msra.mxu0 0
    %517 = vmatpush.bf16.msra.mxu0 0
    %518 = vmatpush.bf16.msra.mxu0 0
    %519 = vmatpush.bf16.msra.mxu0 %v438
    %520 = vmatpush.bf16.msra.mxu0 %v428
    %521 = vmatpush.bf16.msra.mxu0 %v418
    %522 = vmatpush.bf16.msra.mxu0 %v408
    %523 = vmatmul.bf16.gmra.mxu0 %v487
    %v524 = vpop.f32.mrf.mxu0
    %v525 = vadd.f32 0.0, %v524
    %v526 = vpop.f32.mrf.mxu0
    %527 = vdwg.mxu0
    %528 = vmatpush.bf16.msra.mxu0 0
    %529 = vmatpush.bf16.msra.mxu0 0
    %530 = vmatpush.bf16.msra.mxu0 0
    %531 = vmatpush.bf16.msra.mxu0 0
    %532 = vmatpush.bf16.msra.mxu0 %v439
    %533 = vmatpush.bf16.msra.mxu0 %v429
    %534 = vmatpush.bf16.msra.mxu0 %v419
    %535 = vmatpush.bf16.msra.mxu0 %v409
    %536 = vmatmul.bf16.gmra.mxu0 %v487
    %v537 = vpop.f32.mrf.mxu0
    %v538 = vadd.f32 0.0, %v537
    %v539 = vpop.f32.mrf.mxu0
    %540 = vdwg.mxu0
    %541 = vmatpush.bf16.msra.mxu0 0
    %542 = vmatpush.bf16.msra.mxu0 0
    %543 = vmatpush.bf16.msra.mxu0 0
    %544 = vmatpush.bf16.msra.mxu0 0
    %545 = vmatpush.bf16.msra.mxu0 %v440
    %546 = vmatpush.bf16.msra.mxu0 %v430
    %547 = vmatpush.bf16.msra.mxu0 %v420
    %548 = vmatpush.bf16.msra.mxu0 %v410
    %549 = vmatmul.bf16.gmra.mxu0 %v487
    %v550 = vpop.f32.mrf.mxu0
    %v551 = vadd.f32 0.0, %v550
    %v552 = vpop.f32.mrf.mxu0
    %553 = vdwg.mxu0
    %554 = vmatpush.bf16.msra.mxu0 0
    %555 = vmatpush.bf16.msra.mxu0 0
    %556 = vmatpush.bf16.msra.mxu0 0
    %557 = vmatpush.bf16.msra.mxu0 0
    %558 = vmatpush.bf16.msra.mxu0 %v441
    %559 = vmatpush.bf16.msra.mxu0 %v431
    %560 = vmatpush.bf16.msra.mxu0 %v421
    %561 = vmatpush.bf16.msra.mxu0 %v411
    %562 = vmatmul.bf16.gmra.mxu0 %v487
    %v563 = vpop.f32.mrf.mxu0
    %v564 = vadd.f32 0.0, %v563
    %v565 = vpop.f32.mrf.mxu0
    %566 = vdwg.mxu0
    %567 = vmatpush.bf16.msra.mxu0 0
    %568 = vmatpush.bf16.msra.mxu0 0
    %569 = vmatpush.bf16.msra.mxu0 0
    %570 = vmatpush.bf16.msra.mxu0 0
    %571 = vmatpush.bf16.msra.mxu0 %v442
    %572 = vmatpush.bf16.msra.mxu0 %v432
    %573 = vmatpush.bf16.msra.mxu0 %v422
    %574 = vmatpush.bf16.msra.mxu0 %v412
    %575 = vmatmul.bf16.gmra.mxu0 %v487
    %v576 = vpop.f32.mrf.mxu0
    %v577 = vadd.f32 0.0, %v576
    %v578 = vpop.f32.mrf.mxu0
    %579 = vdwg.mxu0
    %580 = vmatpush.bf16.msra.mxu0 0
    %581 = vmatpush.bf16.msra.mxu0 0
    %582 = vmatpush.bf16.msra.mxu0 0
    %583 = vmatpush.bf16.msra.mxu0 0
    %584 = vmatpush.bf16.msra.mxu0 %v443
    %585 = vmatpush.bf16.msra.mxu0 %v433
    %586 = vmatpush.bf16.msra.mxu0 %v423
    %587 = vmatpush.bf16.msra.mxu0 %v413
    %588 = vmatmul.bf16.gmra.mxu0 %v487
    %v589 = vpop.f32.mrf.mxu0
    %v590 = vadd.f32 0.0, %v589
    %v591 = vpop.f32.mrf.mxu0
    %592 = vdwg.mxu0
    %593 = vmatpush.bf16.msra.mxu0 0
    %594 = vmatpush.bf16.msra.mxu0 0
    %595 = vmatpush.bf16.msra.mxu0 0
    %596 = vmatpush.bf16.msra.mxu0 0
    %597 = vmatpush.bf16.msra.mxu0 %v444
    %598 = vmatpush.bf16.msra.mxu0 %v434
    %599 = vmatpush.bf16.msra.mxu0 %v424
    %600 = vmatpush.bf16.msra.mxu0 %v414
    %601 = vmatmul.bf16.gmra.mxu0 %v487
    %v602 = vpop.f32.mrf.mxu0
    %v603 = vadd.f32 0.0, %v602
    %v604 = vpop.f32.mrf.mxu0
    %605 = vdwg.mxu0
    %606 = vmatpush.bf16.msra.mxu0 0
    %607 = vmatpush.bf16.msra.mxu0 0
    %608 = vmatpush.bf16.msra.mxu0 0
    %609 = vmatpush.bf16.msra.mxu0 0
    %610 = vmatpush.bf16.msra.mxu0 %v445
    %611 = vmatpush.bf16.msra.mxu0 %v435
    %612 = vmatpush.bf16.msra.mxu0 %v425
    %613 = vmatpush.bf16.msra.mxu0 %v415
    %614 = vmatmul.bf16.gmra.mxu0 %v487
    %v615 = vpop.f32.mrf.mxu0
    %v616 = vadd.f32 0.0, %v615
    %v617 = vpop.f32.mrf.mxu0
    %618 = vdwg.mxu0
    %v629 = vrot.slane %v512, 6
    %v630 = vrot.slane %v525, 4
    %v631 = vrot.slane %v538, 2
    %v632 = vrot.slane %v564, 6
    %v633 = vrot.slane %v577, 4
    %v634 = vrot.slane %v590, 2
    %v635 = vrot.slane %v616, 6
    %vm636 = vcmask 1041408
    %v637 = vsel %vm636, %v499, %v629
    %vm638 = vcmask 1045508
    %v639 = vsel %vm638, %v630, %v631
    %vm640 = vcmask 1043456
    %v641 = vsel %vm640, %v637, %v639
    %v642 = vsel %vm636, %v551, %v632
    %v643 = vsel %vm638, %v633, %v634
    %v644 = vsel %vm640, %v642, %v643
    %v645 = vsel %vm636, %v603, %v635
    %vm646 = vcmask 1043458
    %v647 = vsel %vm646, %v499, %v629
    %vm648 = vcmask 1045504
    %v649 = vsel %vm648, %v631, %v630
    %vm650 = vcmask 1045506
    %v651 = vsel %vm650, %v647, %v649
    %v652 = vrot.slane %v651, 2
    %v653 = vsel %vm646, %v551, %v632
    %v654 = vsel %vm648, %v634, %v633
    %v655 = vsel %vm650, %v653, %v654
    %v656 = vrot.slane %v655, 2
    %v657 = vsel %vm646, %v603, %v635
    %v658 = vrot.slane %v657, 2
    %v659 = vsel %vm638, %v499, %v629
    %v660 = vsel %vm636, %v630, %v631
    %v661 = vsel %vm640, %v660, %v659
    %v662 = vrot.slane %v661, 4
    %v663 = vsel %vm638, %v551, %v632
    %v664 = vsel %vm636, %v633, %v634
    %v665 = vsel %vm640, %v664, %v663
    %v666 = vrot.slane %v665, 4
    %v667 = vsel %vm638, %v603, %v635
    %v668 = vrot.slane %v667, 4
    %v669 = vsel %vm648, %v629, %v499
    %v670 = vsel %vm646, %v630, %v631
    %v671 = vsel %vm650, %v670, %v669
    %v672 = vrot.slane %v671, 6
    %v673 = vsel %vm648, %v632, %v551
    %v674 = vsel %vm646, %v633, %v634
    %v675 = vsel %vm650, %v674, %v673
    %v676 = vrot.slane %v675, 6
    %v677 = vsel %vm648, %v635, %v603
    %v678 = vrot.slane %v677, 6
    %v691 = vld [vmem:[#allocation7] sm:$0xf]
    %v692 = vld [vmem:[#allocation7 + $0x4] sm:$0xf]
    %v693 = vld [vmem:[#allocation7 + $0x8] sm:$0xf]
    %v694 = vld [vmem:[#allocation7 + $0xc] sm:$0xf]
    %v695 = vld [vmem:[#allocation7 + $0x10] sm:$0xf]
    %v696 = vld [vmem:[#allocation7 + $0x14] sm:$0xf]
    %v697 = vld [vmem:[#allocation7 + $0x18] sm:$0xf]
    %v698 = vld [vmem:[#allocation7 + $0x1c] sm:$0xf]
    %699 = vst [vmem:[#allocation1] ss:$4 sm:$0xff] %v641
    %v700 = vld.sshfl [vmem:[#allocation1] sm:$0xff pattern:$0x73625140]
    %v701 = vld.sshfl [vmem:[#allocation1 + $0x8] sm:$0xff pattern:$0x73625140]
    %v705 = vrot.slane %v691, 1
    %v706 = vrot.slane %v691, 2
    %v707 = vrot.slane %v691, 3
    %vm708 = vcmask 1040384
    %v709 = vsel %vm708, %v691, %v705
    %vm710 = vcmask 1042434
    %v711 = vsel %vm710, %v706, %v707
    %v712 = vsel %vm636, %v709, %v711
    %vm713 = vcmask 1041409
    %v714 = vsel %vm713, %v691, %v705
    %vm715 = vcmask 1043459
    %v716 = vsel %vm715, %v706, %v707
    %vm717 = vcmask 1042433
    %v718 = vsel %vm717, %v714, %v716
    %v719 = vrot.slane %v718, 1
    %v720 = vperm.slane %v712, 0
    %v721 = vperm.slane %v712, 1
    %v722 = vperm.slane %v719, 0
    %v723 = vperm.slane %v719, 1
    %v724 = vrot.slane %v721, 6
    %v725 = vrot.slane %v723, 6
    %v726 = vsel %vm636, %v720, %v724
    %v727 = vsel %vm636, %v722, %v725
    %v730 = vmul.f32 %v641, %v726
    %v731 = vmul.f32 %v641, %v727
    %v733 = vrot.slane %v695, 1
    %v734 = vrot.slane %v695, 2
    %v735 = vrot.slane %v695, 3
    %v736 = vsel %vm708, %v695, %v733
    %v737 = vsel %vm710, %v734, %v735
    %v738 = vsel %vm636, %v736, %v737
    %v739 = vsel %vm713, %v695, %v733
    %v740 = vsel %vm715, %v734, %v735
    %v741 = vsel %vm717, %v739, %v740
    %v742 = vrot.slane %v741, 1
    %v743 = vperm.slane %v738, 0
    %v744 = vperm.slane %v738, 1
    %v745 = vperm.slane %v742, 0
    %v746 = vperm.slane %v742, 1
    %v751 = vmul.f32 %v701, %v743
    %v752 = vmul.f32 %v700, %v744
    %v753 = vmul.f32 %v701, %v745
    %v754 = vmul.f32 %v700, %v746
    %v759 = vrot.slane %v752, 6
    %v760 = vrot.slane %v754, 6
    %v761 = vsel %vm636, %v751, %v759
    %v762 = vsel %vm636, %v753, %v760
    %v765 = vadd.f32 %v730, %v761
    %v766 = vadd.f32 %v731, %v762
    %767 = vst [vmem:[#allocation1] ss:$4 sm:$0xff] %v652
    %v768 = vld.sshfl [vmem:[#allocation1] sm:$0xff pattern:$0x73625140]
    %v769 = vld.sshfl [vmem:[#allocation1 + $0x8] sm:$0xff pattern:$0x73625140]
    %v773 = vrot.slane %v692, 1
    %v774 = vrot.slane %v692, 2
    %v775 = vrot.slane %v692, 3
    %v776 = vsel %vm708, %v692, %v773
    %v777 = vsel %vm710, %v774, %v775
    %v778 = vsel %vm636, %v776, %v777
    %v779 = vsel %vm713, %v692, %v773
    %v780 = vsel %vm715, %v774, %v775
    %v781 = vsel %vm717, %v779, %v780
    %v782 = vrot.slane %v781, 1
    %v783 = vperm.slane %v778, 0
    %v784 = vperm.slane %v778, 1
    %v785 = vperm.slane %v782, 0
    %v786 = vperm.slane %v782, 1
    %v787 = vrot.slane %v784, 6
    %v788 = vrot.slane %v786, 6
    %v789 = vsel %vm636, %v783, %v787
    %v790 = vsel %vm636, %v785, %v788
    %v793 = vmul.f32 %v652, %v789
    %v794 = vmul.f32 %v652, %v790
    %v796 = vrot.slane %v696, 1
    %v797 = vrot.slane %v696, 2
    %v798 = vrot.slane %v696, 3
    %v799 = vsel %vm708, %v696, %v796
    %v800 = vsel %vm710, %v797, %v798
    %v801 = vsel %vm636, %v799, %v800
    %v802 = vsel %vm713, %v696, %v796
    %v803 = vsel %vm715, %v797, %v798
    %v804 = vsel %vm717, %v802, %v803
    %v805 = vrot.slane %v804, 1
    %v806 = vperm.slane %v801, 0
    %v807 = vperm.slane %v801, 1
    %v808 = vperm.slane %v805, 0
    %v809 = vperm.slane %v805, 1
    %v814 = vmul.f32 %v769, %v806
    %v815 = vmul.f32 %v768, %v807
    %v816 = vmul.f32 %v769, %v808
    %v817 = vmul.f32 %v768, %v809
    %v822 = vrot.slane %v815, 6
    %v823 = vrot.slane %v817, 6
    %v824 = vsel %vm636, %v814, %v822
    %v825 = vsel %vm636, %v816, %v823
    %v828 = vadd.f32 %v793, %v824
    %v829 = vadd.f32 %v794, %v825
    %v830 = vadd.f32 %v765, %v828
    %v831 = vadd.f32 %v766, %v829
    %832 = vst [vmem:[#allocation1] ss:$4 sm:$0xff] %v662
    %v833 = vld.sshfl [vmem:[#allocation1] sm:$0xff pattern:$0x73625140]
    %v834 = vld.sshfl [vmem:[#allocation1 + $0x8] sm:$0xff pattern:$0x73625140]
    %v838 = vrot.slane %v693, 1
    %v839 = vrot.slane %v693, 2
    %v840 = vrot.slane %v693, 3
    %v841 = vsel %vm708, %v693, %v838
    %v842 = vsel %vm710, %v839, %v840
    %v843 = vsel %vm636, %v841, %v842
    %v844 = vsel %vm713, %v693, %v838
    %v845 = vsel %vm715, %v839, %v840
    %v846 = vsel %vm717, %v844, %v845
    %v847 = vrot.slane %v846, 1
    %v848 = vperm.slane %v843, 0
    %v849 = vperm.slane %v843, 1
    %v850 = vperm.slane %v847, 0
    %v851 = vperm.slane %v847, 1
    %v852 = vrot.slane %v849, 6
    %v853 = vrot.slane %v851, 6
    %v854 = vsel %vm636, %v848, %v852
    %v855 = vsel %vm636, %v850, %v853
    %v858 = vmul.f32 %v662, %v854
    %v859 = vmul.f32 %v662, %v855
    %v861 = vrot.slane %v697, 1
    %v862 = vrot.slane %v697, 2
    %v863 = vrot.slane %v697, 3
    %v864 = vsel %vm708, %v697, %v861
    %v865 = vsel %vm710, %v862, %v863
    %v866 = vsel %vm636, %v864, %v865
    %v867 = vsel %vm713, %v697, %v861
    %v868 = vsel %vm715, %v862, %v863
    %v869 = vsel %vm717, %v867, %v868
    %v870 = vrot.slane %v869, 1
    %v871 = vperm.slane %v866, 0
    %v872 = vperm.slane %v866, 1
    %v873 = vperm.slane %v870, 0
    %v874 = vperm.slane %v870, 1
    %v879 = vmul.f32 %v834, %v871
    %v880 = vmul.f32 %v833, %v872
    %v881 = vmul.f32 %v834, %v873
    %v882 = vmul.f32 %v833, %v874
    %v887 = vrot.slane %v880, 6
    %v888 = vrot.slane %v882, 6
    %v889 = vsel %vm636, %v879, %v887
    %v890 = vsel %vm636, %v881, %v888
    %v893 = vadd.f32 %v858, %v889
    %v894 = vadd.f32 %v859, %v890
    %v895 = vadd.f32 %v830, %v893
    %v896 = vadd.f32 %v831, %v894
    %897 = vst [vmem:[#allocation1] ss:$4 sm:$0xff] %v672
    %v898 = vld.sshfl [vmem:[#allocation1] sm:$0xff pattern:$0x73625140]
    %v899 = vld.sshfl [vmem:[#allocation1 + $0x8] sm:$0xff pattern:$0x73625140]
    %v903 = vrot.slane %v694, 1
    %v904 = vrot.slane %v694, 2
    %v905 = vrot.slane %v694, 3
    %v906 = vsel %vm708, %v694, %v903
    %v907 = vsel %vm710, %v904, %v905
    %v908 = vsel %vm636, %v906, %v907
    %v909 = vsel %vm713, %v694, %v903
    %v910 = vsel %vm715, %v904, %v905
    %v911 = vsel %vm717, %v909, %v910
    %v912 = vrot.slane %v911, 1
    %v913 = vperm.slane %v908, 0
    %v914 = vperm.slane %v908, 1
    %v915 = vperm.slane %v912, 0
    %v916 = vperm.slane %v912, 1
    %v917 = vrot.slane %v914, 6
    %v918 = vrot.slane %v916, 6
    %v919 = vsel %vm636, %v913, %v917
    %v920 = vsel %vm636, %v915, %v918
    %v923 = vmul.f32 %v672, %v919
    %v924 = vmul.f32 %v672, %v920
    %v926 = vrot.slane %v698, 1
    %v927 = vrot.slane %v698, 2
    %v928 = vrot.slane %v698, 3
    %v929 = vsel %vm708, %v698, %v926
    %v930 = vsel %vm710, %v927, %v928
    %v931 = vsel %vm636, %v929, %v930
    %v932 = vsel %vm713, %v698, %v926
    %v933 = vsel %vm715, %v927, %v928
    %v934 = vsel %vm717, %v932, %v933
    %v935 = vrot.slane %v934, 1
    %v936 = vperm.slane %v931, 0
    %v937 = vperm.slane %v931, 1
    %v938 = vperm.slane %v935, 0
    %v939 = vperm.slane %v935, 1
    %v944 = vmul.f32 %v899, %v936
    %v945 = vmul.f32 %v898, %v937
    %v946 = vmul.f32 %v899, %v938
    %v947 = vmul.f32 %v898, %v939
    %v952 = vrot.slane %v945, 6
    %v953 = vrot.slane %v947, 6
    %v954 = vsel %vm636, %v944, %v952
    %v955 = vsel %vm636, %v946, %v953
    %v958 = vadd.f32 %v923, %v954
    %v959 = vadd.f32 %v924, %v955
    %v960 = vadd.f32 %v895, %v958
    %v961 = vadd.f32 %v896, %v959
    %964 = vst [vmem:[#allocation1] ss:$4 sm:$0xff] %v960
    %s965 = scalar_lea.vmem [#allocation1], 1
    %966 = vst [vmem:[%s965] ss:$4 sm:$0xff] %v961
    %v967 = vld.sshfl [vmem:[#allocation1] sm:$0xff pattern:$0x73625140]
    %v968 = vld.sshfl [vmem:[#allocation1 + $0x8] sm:$0xff pattern:$0x73625140]
    %v971 = vpack.c.bf16 %v967, %v967
    %v972 = vpack.c.bf16 %v968, %v968
    %v973 = vld [vmem:[#allocation8] sm:$0xf]
    %v974 = vld [vmem:[#allocation8 + $0x4] sm:$0xf]
    %v975 = vld [vmem:[#allocation8 + $0x8] sm:$0xf]
    %v976 = vld [vmem:[#allocation8 + $0xc] sm:$0xf]
    %v977 = vld [vmem:[#allocation8 + $0x10] sm:$0xf]
    %v978 = vld [vmem:[#allocation8 + $0x14] sm:$0xf]
    %v979 = vld [vmem:[#allocation8 + $0x18] sm:$0xf]
    %v980 = vld [vmem:[#allocation8 + $0x1c] sm:$0xf]
    %v981 = vld [vmem:[#allocation8 + $0x20] sm:$0xf]
    %v982 = vld [vmem:[#allocation8 + $0x24] sm:$0xf]
    %v983 = vld [vmem:[#allocation8 + $0x28] sm:$0xf]
    %v984 = vld [vmem:[#allocation8 + $0x2c] sm:$0xf]
    %v985 = vld [vmem:[#allocation8 + $0x30] sm:$0xf]
    %v986 = vld [vmem:[#allocation8 + $0x34] sm:$0xf]
    %v987 = vld [vmem:[#allocation8 + $0x38] sm:$0xf]
    %v988 = vld [vmem:[#allocation8 + $0x3c] sm:$0xf]
    %v989 = vld [vmem:[#allocation8 + $0x40] sm:$0xf]
    %v990 = vld [vmem:[#allocation8 + $0x44] sm:$0xf]
    %v991 = vld [vmem:[#allocation8 + $0x48] sm:$0xf]
    %v992 = vld [vmem:[#allocation8 + $0x4c] sm:$0xf]
    %v993 = vld [vmem:[#allocation8 + $0x50] sm:$0xf]
    %v994 = vld [vmem:[#allocation8 + $0x54] sm:$0xf]
    %v995 = vld [vmem:[#allocation8 + $0x58] sm:$0xf]
    %v996 = vld [vmem:[#allocation8 + $0x5c] sm:$0xf]
    %v997 = vld [vmem:[#allocation8 + $0x60] sm:$0xf]
    %v998 = vld [vmem:[#allocation8 + $0x64] sm:$0xf]
    %v999 = vld [vmem:[#allocation8 + $0x68] sm:$0xf]
    %v1000 = vld [vmem:[#allocation8 + $0x6c] sm:$0xf]
    %v1001 = vld [vmem:[#allocation8 + $0x70] sm:$0xf]
    %v1002 = vld [vmem:[#allocation8 + $0x74] sm:$0xf]
    %v1003 = vld [vmem:[#allocation8 + $0x78] sm:$0xf]
    %v1004 = vld [vmem:[#allocation8 + $0x7c] sm:$0xf]
    %v1037 = vunpack.c.l.b16 %v973
    %v1038 = vunpack.c.l.b16 %v974
    %v1039 = vunpack.c.l.b16 %v975
    %v1040 = vunpack.c.l.b16 %v976
    %v1041 = vunpack.c.l.b16 %v977
    %v1042 = vunpack.c.l.b16 %v978
    %v1043 = vunpack.c.l.b16 %v979
    %v1044 = vunpack.c.l.b16 %v980
    %v1045 = vunpack.c.l.b16 %v981
    %v1046 = vunpack.c.l.b16 %v982
    %v1047 = vunpack.c.l.b16 %v983
    %v1048 = vunpack.c.l.b16 %v984
    %v1049 = vunpack.c.l.b16 %v985
    %v1050 = vunpack.c.l.b16 %v986
    %v1051 = vunpack.c.l.b16 %v987
    %v1052 = vunpack.c.l.b16 %v988
    %v1053 = vunpack.c.l.b16 %v989
    %v1054 = vunpack.c.l.b16 %v990
    %v1055 = vunpack.c.l.b16 %v991
    %v1056 = vunpack.c.l.b16 %v992
    %v1057 = vunpack.c.l.b16 %v993
    %v1058 = vunpack.c.l.b16 %v994
    %v1059 = vunpack.c.l.b16 %v995
    %v1060 = vunpack.c.l.b16 %v996
    %v1061 = vunpack.c.l.b16 %v997
    %v1062 = vunpack.c.l.b16 %v998
    %v1063 = vunpack.c.l.b16 %v999
    %v1064 = vunpack.c.l.b16 %v1000
    %v1065 = vunpack.c.l.b16 %v1001
    %v1066 = vunpack.c.l.b16 %v1002
    %v1067 = vunpack.c.l.b16 %v1003
    %v1068 = vunpack.c.l.b16 %v1004
    %v1069 = vpack.c.b16 %v1038, %v1037
    %v1070 = vpack.c.b16 %v1040, %v1039
    %v1071 = vpack.c.b16 %v1042, %v1041
    %v1072 = vpack.c.b16 %v1044, %v1043
    %v1073 = vpack.c.b16 %v1046, %v1045
    %v1074 = vpack.c.b16 %v1048, %v1047
    %v1075 = vpack.c.b16 %v1050, %v1049
    %v1076 = vpack.c.b16 %v1052, %v1051
    %v1077 = vpack.c.b16 %v1054, %v1053
    %v1078 = vpack.c.b16 %v1056, %v1055
    %v1079 = vpack.c.b16 %v1058, %v1057
    %v1080 = vpack.c.b16 %v1060, %v1059
    %v1081 = vpack.c.b16 %v1062, %v1061
    %v1082 = vpack.c.b16 %v1064, %v1063
    %v1083 = vpack.c.b16 %v1066, %v1065
    %v1084 = vpack.c.b16 %v1068, %v1067
    %1101 = vmatpush.bf16.msra.mxu0 %v1076
    %1102 = vmatpush.bf16.msra.mxu0 %v1075
    %1103 = vmatpush.bf16.msra.mxu0 %v1074
    %1104 = vmatpush.bf16.msra.mxu0 %v1073
    %1105 = vmatpush.bf16.msra.mxu0 %v1072
    %1106 = vmatpush.bf16.msra.mxu0 %v1071
    %1107 = vmatpush.bf16.msra.mxu0 %v1070
    %1108 = vmatpush.bf16.msra.mxu0 %v1069
    %1109 = vmatmul.bf16.gmra.mxu0 %v971
    %v1110 = vpop.f32.mrf.mxu0
    %v1111 = vadd.f32 0.0, %v1110
    %v1112 = vpop.f32.mrf.mxu0
    %1113 = vdwg.mxu0
    %1114 = vmatpush.bf16.msra.mxu0 %v1084
    %1115 = vmatpush.bf16.msra.mxu0 %v1083
    %1116 = vmatpush.bf16.msra.mxu0 %v1082
    %1117 = vmatpush.bf16.msra.mxu0 %v1081
    %1118 = vmatpush.bf16.msra.mxu0 %v1080
    %1119 = vmatpush.bf16.msra.mxu0 %v1079
    %1120 = vmatpush.bf16.msra.mxu0 %v1078
    %1121 = vmatpush.bf16.msra.mxu0 %v1077
    %1122 = vmatmul.bf16.gmra.mxu0 %v972
    %v1123 = vpop.f32.mrf.mxu0
    %v1124 = vadd.f32 %v1111, %v1123
    %v1125 = vpop.f32.mrf.mxu0
    %1126 = vdwg.mxu0
    %v1128 = vrot.slane %v1124, 2
    %1130 = vst [vmem:[#allocation22] sm:$0x3] %v1124
    %1131 = vst [vmem:[#allocation22 + $0x2] sm:$0x3] %v1128
    %v1132 = vld [vmem:[#allocation10] sm:$0xf]
    %v1133 = vld [vmem:[#allocation10 + $0x4] sm:$0xf]
    %v1134 = vld [vmem:[#allocation10 + $0x8] sm:$0xf]
    %v1135 = vld [vmem:[#allocation10 + $0xc] sm:$0xf]
    %v1136 = vld [vmem:[#allocation10 + $0x10] sm:$0xf]
    %v1137 = vld [vmem:[#allocation10 + $0x14] sm:$0xf]
    %v1138 = vld [vmem:[#allocation10 + $0x18] sm:$0xf]
    %v1139 = vld [vmem:[#allocation10 + $0x1c] sm:$0xf]
    %v1140 = vrot.slane %v641, 4
    %1141 = vst [vmem:[#allocation1] ss:$4 sm:$0xff] %v1140
    %v1142 = vld.sshfl [vmem:[#allocation1] sm:$0xff pattern:$0x73625140]
    %v1143 = vld.sshfl [vmem:[#allocation1 + $0x8] sm:$0xff pattern:$0x73625140]
    %v1147 = vrot.slane %v1132, 1
    %v1148 = vrot.slane %v1132, 2
    %v1149 = vrot.slane %v1132, 3
    %v1150 = vsel %vm708, %v1132, %v1147
    %v1151 = vsel %vm710, %v1148, %v1149
    %v1152 = vsel %vm636, %v1150, %v1151
    %v1153 = vsel %vm713, %v1132, %v1147
    %v1154 = vsel %vm715, %v1148, %v1149
    %v1155 = vsel %vm717, %v1153, %v1154
    %v1156 = vrot.slane %v1155, 1
    %v1157 = vperm.slane %v1152, 0
    %v1158 = vperm.slane %v1152, 1
    %v1159 = vperm.slane %v1156, 0
    %v1160 = vperm.slane %v1156, 1
    %v1162 = vrot.slane %v1158, 6
    %v1163 = vrot.slane %v1160, 6
    %v1164 = vsel %vm636, %v1157, %v1162
    %v1165 = vsel %vm636, %v1159, %v1163
    %v1168 = vmul.f32 %v1140, %v1164
    %v1169 = vmul.f32 %v1140, %v1165
    %v1171 = vrot.slane %v1136, 1
    %v1172 = vrot.slane %v1136, 2
    %v1173 = vrot.slane %v1136, 3
    %v1174 = vsel %vm708, %v1136, %v1171
    %v1175 = vsel %vm710, %v1172, %v1173
    %v1176 = vsel %vm636, %v1174, %v1175
    %v1177 = vsel %vm713, %v1136, %v1171
    %v1178 = vsel %vm715, %v1172, %v1173
    %v1179 = vsel %vm717, %v1177, %v1178
    %v1180 = vrot.slane %v1179, 1
    %v1181 = vperm.slane %v1176, 0
    %v1182 = vperm.slane %v1176, 1
    %v1183 = vperm.slane %v1180, 0
    %v1184 = vperm.slane %v1180, 1
    %v1189 = vmul.f32 %v1143, %v1181
    %v1190 = vmul.f32 %v1142, %v1182
    %v1191 = vmul.f32 %v1143, %v1183
    %v1192 = vmul.f32 %v1142, %v1184
    %v1197 = vrot.slane %v1190, 6
    %v1198 = vrot.slane %v1192, 6
    %v1199 = vsel %vm636, %v1189, %v1197
    %v1200 = vsel %vm636, %v1191, %v1198
    %v1203 = vadd.f32 %v1168, %v1199
    %v1204 = vadd.f32 %v1169, %v1200
    %v1205 = vrot.slane %v652, 4
    %1206 = vst [vmem:[#allocation1] ss:$4 sm:$0xff] %v1205
    %v1207 = vld.sshfl [vmem:[#allocation1] sm:$0xff pattern:$0x73625140]
    %v1208 = vld.sshfl [vmem:[#allocation1 + $0x8] sm:$0xff pattern:$0x73625140]
    %v1212 = vrot.slane %v1133, 1
    %v1213 = vrot.slane %v1133, 2
    %v1214 = vrot.slane %v1133, 3
    %v1215 = vsel %vm708, %v1133, %v1212
    %v1216 = vsel %vm710, %v1213, %v1214
    %v1217 = vsel %vm636, %v1215, %v1216
    %v1218 = vsel %vm713, %v1133, %v1212
    %v1219 = vsel %vm715, %v1213, %v1214
    %v1220 = vsel %vm717, %v1218, %v1219
    %v1221 = vrot.slane %v1220, 1
    %v1222 = vperm.slane %v1217, 0
    %v1223 = vperm.slane %v1217, 1
    %v1224 = vperm.slane %v1221, 0
    %v1225 = vperm.slane %v1221, 1
    %v1227 = vrot.slane %v1223, 6
    %v1228 = vrot.slane %v1225, 6
    %v1229 = vsel %vm636, %v1222, %v1227
    %v1230 = vsel %vm636, %v1224, %v1228
    %v1233 = vmul.f32 %v1205, %v1229
    %v1234 = vmul.f32 %v1205, %v1230
    %v1236 = vrot.slane %v1137, 1
    %v1237 = vrot.slane %v1137, 2
    %v1238 = vrot.slane %v1137, 3
    %v1239 = vsel %vm708, %v1137, %v1236
    %v1240 = vsel %vm710, %v1237, %v1238
    %v1241 = vsel %vm636, %v1239, %v1240
    %v1242 = vsel %vm713, %v1137, %v1236
    %v1243 = vsel %vm715, %v1237, %v1238
    %v1244 = vsel %vm717, %v1242, %v1243
    %v1245 = vrot.slane %v1244, 1
    %v1246 = vperm.slane %v1241, 0
    %v1247 = vperm.slane %v1241, 1
    %v1248 = vperm.slane %v1245, 0
    %v1249 = vperm.slane %v1245, 1
    %v1254 = vmul.f32 %v1208, %v1246
    %v1255 = vmul.f32 %v1207, %v1247
    %v1256 = vmul.f32 %v1208, %v1248
    %v1257 = vmul.f32 %v1207, %v1249
    %v1262 = vrot.slane %v1255, 6
    %v1263 = vrot.slane %v1257, 6
    %v1264 = vsel %vm636, %v1254, %v1262
    %v1265 = vsel %vm636, %v1256, %v1263
    %v1268 = vadd.f32 %v1233, %v1264
    %v1269 = vadd.f32 %v1234, %v1265
    %v1270 = vadd.f32 %v1203, %v1268
    %v1271 = vadd.f32 %v1204, %v1269
    %v1272 = vrot.slane %v662, 4
    %1273 = vst [vmem:[#allocation1] ss:$4 sm:$0xff] %v1272
    %v1274 = vld.sshfl [vmem:[#allocation1] sm:$0xff pattern:$0x73625140]
    %v1275 = vld.sshfl [vmem:[#allocation1 + $0x8] sm:$0xff pattern:$0x73625140]
    %v1279 = vrot.slane %v1134, 1
    %v1280 = vrot.slane %v1134, 2
    %v1281 = vrot.slane %v1134, 3
    %v1282 = vsel %vm708, %v1134, %v1279
    %v1283 = vsel %vm710, %v1280, %v1281
    %v1284 = vsel %vm636, %v1282, %v1283
    %v1285 = vsel %vm713, %v1134, %v1279
    %v1286 = vsel %vm715, %v1280, %v1281
    %v1287 = vsel %vm717, %v1285, %v1286
    %v1288 = vrot.slane %v1287, 1
    %v1289 = vperm.slane %v1284, 0
    %v1290 = vperm.slane %v1284, 1
    %v1291 = vperm.slane %v1288, 0
    %v1292 = vperm.slane %v1288, 1
    %v1294 = vrot.slane %v1290, 6
    %v1295 = vrot.slane %v1292, 6
    %v1296 = vsel %vm636, %v1289, %v1294
    %v1297 = vsel %vm636, %v1291, %v1295
    %v1300 = vmul.f32 %v1272, %v1296
    %v1301 = vmul.f32 %v1272, %v1297
    %v1303 = vrot.slane %v1138, 1
    %v1304 = vrot.slane %v1138, 2
    %v1305 = vrot.slane %v1138, 3
    %v1306 = vsel %vm708, %v1138, %v1303
    %v1307 = vsel %vm710, %v1304, %v1305
    %v1308 = vsel %vm636, %v1306, %v1307
    %v1309 = vsel %vm713, %v1138, %v1303
    %v1310 = vsel %vm715, %v1304, %v1305
    %v1311 = vsel %vm717, %v1309, %v1310
    %v1312 = vrot.slane %v1311, 1
    %v1313 = vperm.slane %v1308, 0
    %v1314 = vperm.slane %v1308, 1
    %v1315 = vperm.slane %v1312, 0
    %v1316 = vperm.slane %v1312, 1
    %v1321 = vmul.f32 %v1275, %v1313
    %v1322 = vmul.f32 %v1274, %v1314
    %v1323 = vmul.f32 %v1275, %v1315
    %v1324 = vmul.f32 %v1274, %v1316
    %v1329 = vrot.slane %v1322, 6
    %v1330 = vrot.slane %v1324, 6
    %v1331 = vsel %vm636, %v1321, %v1329
    %v1332 = vsel %vm636, %v1323, %v1330
    %v1335 = vadd.f32 %v1300, %v1331
    %v1336 = vadd.f32 %v1301, %v1332
    %v1337 = vadd.f32 %v1270, %v1335
    %v1338 = vadd.f32 %v1271, %v1336
    %v1339 = vrot.slane %v672, 4
    %1340 = vst [vmem:[#allocation1] ss:$4 sm:$0xff] %v1339
    %v1341 = vld.sshfl [vmem:[#allocation1] sm:$0xff pattern:$0x73625140]
    %v1342 = vld.sshfl [vmem:[#allocation1 + $0x8] sm:$0xff pattern:$0x73625140]
    %v1346 = vrot.slane %v1135, 1
    %v1347 = vrot.slane %v1135, 2
    %v1348 = vrot.slane %v1135, 3
    %v1349 = vsel %vm708, %v1135, %v1346
    %v1350 = vsel %vm710, %v1347, %v1348
    %v1351 = vsel %vm636, %v1349, %v1350
    %v1352 = vsel %vm713, %v1135, %v1346
    %v1353 = vsel %vm715, %v1347, %v1348
    %v1354 = vsel %vm717, %v1352, %v1353
    %v1355 = vrot.slane %v1354, 1
    %v1356 = vperm.slane %v1351, 0
    %v1357 = vperm.slane %v1351, 1
    %v1358 = vperm.slane %v1355, 0
    %v1359 = vperm.slane %v1355, 1
    %v1361 = vrot.slane %v1357, 6
    %v1362 = vrot.slane %v1359, 6
    %v1363 = vsel %vm636, %v1356, %v1361
    %v1364 = vsel %vm636, %v1358, %v1362
    %v1367 = vmul.f32 %v1339, %v1363
    %v1368 = vmul.f32 %v1339, %v1364
    %v1370 = vrot.slane %v1139, 1
    %v1371 = vrot.slane %v1139, 2
    %v1372 = vrot.slane %v1139, 3
    %v1373 = vsel %vm708, %v1139, %v1370
    %v1374 = vsel %vm710, %v1371, %v1372
    %v1375 = vsel %vm636, %v1373, %v1374
    %v1376 = vsel %vm713, %v1139, %v1370
    %v1377 = vsel %vm715, %v1371, %v1372
    %v1378 = vsel %vm717, %v1376, %v1377
    %v1379 = vrot.slane %v1378, 1
    %v1380 = vperm.slane %v1375, 0
    %v1381 = vperm.slane %v1375, 1
    %v1382 = vperm.slane %v1379, 0
    %v1383 = vperm.slane %v1379, 1
    %v1388 = vmul.f32 %v1342, %v1380
    %v1389 = vmul.f32 %v1341, %v1381
    %v1390 = vmul.f32 %v1342, %v1382
    %v1391 = vmul.f32 %v1341, %v1383
    %v1396 = vrot.slane %v1389, 6
    %v1397 = vrot.slane %v1391, 6
    %v1398 = vsel %vm636, %v1388, %v1396
    %v1399 = vsel %vm636, %v1390, %v1397
    %v1402 = vadd.f32 %v1367, %v1398
    %v1403 = vadd.f32 %v1368, %v1399
    %v1404 = vadd.f32 %v1337, %v1402
    %v1405 = vadd.f32 %v1338, %v1403
    %1408 = vst [vmem:[#allocation1] ss:$4 sm:$0xff] %v1404
    %s1409 = scalar_lea.vmem [#allocation1], 1
    %1410 = vst [vmem:[%s1409] ss:$4 sm:$0xff] %v1405
    %v1411 = vld.sshfl [vmem:[#allocation1] sm:$0xff pattern:$0x73625140]
    %v1412 = vld.sshfl [vmem:[#allocation1 + $0x8] sm:$0xff pattern:$0x73625140]
    %v1415 = vpack.c.bf16 %v1411, %v1411
    %v1416 = vpack.c.bf16 %v1412, %v1412
    %v1417 = vld [vmem:[#allocation11] sm:$0xf]
    %v1418 = vld [vmem:[#allocation11 + $0x4] sm:$0xf]
    %v1419 = vld [vmem:[#allocation11 + $0x8] sm:$0xf]
    %v1420 = vld [vmem:[#allocation11 + $0xc] sm:$0xf]
    %v1421 = vld [vmem:[#allocation11 + $0x10] sm:$0xf]
    %v1422 = vld [vmem:[#allocation11 + $0x14] sm:$0xf]
    %v1423 = vld [vmem:[#allocation11 + $0x18] sm:$0xf]
    %v1424 = vld [vmem:[#allocation11 + $0x1c] sm:$0xf]
    %v1425 = vld [vmem:[#allocation11 + $0x20] sm:$0xf]
    %v1426 = vld [vmem:[#allocation11 + $0x24] sm:$0xf]
    %v1427 = vld [vmem:[#allocation11 + $0x28] sm:$0xf]
    %v1428 = vld [vmem:[#allocation11 + $0x2c] sm:$0xf]
    %v1429 = vld [vmem:[#allocation11 + $0x30] sm:$0xf]
    %v1430 = vld [vmem:[#allocation11 + $0x34] sm:$0xf]
    %v1431 = vld [vmem:[#allocation11 + $0x38] sm:$0xf]
    %v1432 = vld [vmem:[#allocation11 + $0x3c] sm:$0xf]
    %v1433 = vld [vmem:[#allocation11 + $0x40] sm:$0xf]
    %v1434 = vld [vmem:[#allocation11 + $0x44] sm:$0xf]
    %v1435 = vld [vmem:[#allocation11 + $0x48] sm:$0xf]
    %v1436 = vld [vmem:[#allocation11 + $0x4c] sm:$0xf]
    %v1437 = vld [vmem:[#allocation11 + $0x50] sm:$0xf]
    %v1438 = vld [vmem:[#allocation11 + $0x54] sm:$0xf]
    %v1439 = vld [vmem:[#allocation11 + $0x58] sm:$0xf]
    %v1440 = vld [vmem:[#allocation11 + $0x5c] sm:$0xf]
    %v1441 = vld [vmem:[#allocation11 + $0x60] sm:$0xf]
    %v1442 = vld [vmem:[#allocation11 + $0x64] sm:$0xf]
    %v1443 = vld [vmem:[#allocation11 + $0x68] sm:$0xf]
    %v1444 = vld [vmem:[#allocation11 + $0x6c] sm:$0xf]
    %v1445 = vld [vmem:[#allocation11 + $0x70] sm:$0xf]
    %v1446 = vld [vmem:[#allocation11 + $0x74] sm:$0xf]
    %v1447 = vld [vmem:[#allocation11 + $0x78] sm:$0xf]
    %v1448 = vld [vmem:[#allocation11 + $0x7c] sm:$0xf]
    %v1481 = vunpack.c.l.b16 %v1417
    %v1482 = vunpack.c.l.b16 %v1418
    %v1483 = vunpack.c.l.b16 %v1419
    %v1484 = vunpack.c.l.b16 %v1420
    %v1485 = vunpack.c.l.b16 %v1421
    %v1486 = vunpack.c.l.b16 %v1422
    %v1487 = vunpack.c.l.b16 %v1423
    %v1488 = vunpack.c.l.b16 %v1424
    %v1489 = vunpack.c.l.b16 %v1425
    %v1490 = vunpack.c.l.b16 %v1426
    %v1491 = vunpack.c.l.b16 %v1427
    %v1492 = vunpack.c.l.b16 %v1428
    %v1493 = vunpack.c.l.b16 %v1429
    %v1494 = vunpack.c.l.b16 %v1430
    %v1495 = vunpack.c.l.b16 %v1431
    %v1496 = vunpack.c.l.b16 %v1432
    %v1497 = vunpack.c.l.b16 %v1433
    %v1498 = vunpack.c.l.b16 %v1434
    %v1499 = vunpack.c.l.b16 %v1435
    %v1500 = vunpack.c.l.b16 %v1436
    %v1501 = vunpack.c.l.b16 %v1437
    %v1502 = vunpack.c.l.b16 %v1438
    %v1503 = vunpack.c.l.b16 %v1439
    %v1504 = vunpack.c.l.b16 %v1440
    %v1505 = vunpack.c.l.b16 %v1441
    %v1506 = vunpack.c.l.b16 %v1442
    %v1507 = vunpack.c.l.b16 %v1443
    %v1508 = vunpack.c.l.b16 %v1444
    %v1509 = vunpack.c.l.b16 %v1445
    %v1510 = vunpack.c.l.b16 %v1446
    %v1511 = vunpack.c.l.b16 %v1447
    %v1512 = vunpack.c.l.b16 %v1448
    %v1513 = vpack.c.b16 %v1482, %v1481
    %v1514 = vpack.c.b16 %v1484, %v1483
    %v1515 = vpack.c.b16 %v1486, %v1485
    %v1516 = vpack.c.b16 %v1488, %v1487
    %v1517 = vpack.c.b16 %v1490, %v1489
    %v1518 = vpack.c.b16 %v1492, %v1491
    %v1519 = vpack.c.b16 %v1494, %v1493
    %v1520 = vpack.c.b16 %v1496, %v1495
    %v1521 = vpack.c.b16 %v1498, %v1497
    %v1522 = vpack.c.b16 %v1500, %v1499
    %v1523 = vpack.c.b16 %v1502, %v1501
    %v1524 = vpack.c.b16 %v1504, %v1503
    %v1525 = vpack.c.b16 %v1506, %v1505
    %v1526 = vpack.c.b16 %v1508, %v1507
    %v1527 = vpack.c.b16 %v1510, %v1509
    %v1528 = vpack.c.b16 %v1512, %v1511
    %1545 = vmatpush.bf16.msra.mxu0 %v1520
    %1546 = vmatpush.bf16.msra.mxu0 %v1519
    %1547 = vmatpush.bf16.msra.mxu0 %v1518
    %1548 = vmatpush.bf16.msra.mxu0 %v1517
    %1549 = vmatpush.bf16.msra.mxu0 %v1516
    %1550 = vmatpush.bf16.msra.mxu0 %v1515
    %1551 = vmatpush.bf16.msra.mxu0 %v1514
    %1552 = vmatpush.bf16.msra.mxu0 %v1513
    %1553 = vmatmul.bf16.gmra.mxu0 %v1415
    %v1554 = vpop.f32.mrf.mxu0
    %v1555 = vadd.f32 0.0, %v1554
    %v1556 = vpop.f32.mrf.mxu0
    %1557 = vdwg.mxu0
    %1558 = vmatpush.bf16.msra.mxu0 %v1528
    %1559 = vmatpush.bf16.msra.mxu0 %v1527
    %1560 = vmatpush.bf16.msra.mxu0 %v1526
    %1561 = vmatpush.bf16.msra.mxu0 %v1525
    %1562 = vmatpush.bf16.msra.mxu0 %v1524
    %1563 = vmatpush.bf16.msra.mxu0 %v1523
    %1564 = vmatpush.bf16.msra.mxu0 %v1522
    %1565 = vmatpush.bf16.msra.mxu0 %v1521
    %1566 = vmatmul.bf16.gmra.mxu0 %v1416
    %v1567 = vpop.f32.mrf.mxu0
    %v1568 = vadd.f32 %v1555, %v1567
    %v1569 = vpop.f32.mrf.mxu0
    %1570 = vdwg.mxu0
    %v1572 = vrot.slane %v1568, 2
    %s1574 = scalar_lea.vmem [#allocation22], 4
    %1575 = vst [vmem:[%s1574] sm:$0x3] %v1568
    %1576 = vst [vmem:[%s1574 + $0x2] sm:$0x3] %v1572
    %v1577 = vld [vmem:[#allocation13] sm:$0xf]
    %v1578 = vld [vmem:[#allocation13 + $0x4] sm:$0xf]
    %v1579 = vld [vmem:[#allocation13 + $0x8] sm:$0xf]
    %v1580 = vld [vmem:[#allocation13 + $0xc] sm:$0xf]
    %v1581 = vld [vmem:[#allocation13 + $0x10] sm:$0xf]
    %v1582 = vld [vmem:[#allocation13 + $0x14] sm:$0xf]
    %v1583 = vld [vmem:[#allocation13 + $0x18] sm:$0xf]
    %v1584 = vld [vmem:[#allocation13 + $0x1c] sm:$0xf]
    %1585 = vst [vmem:[#allocation1] ss:$4 sm:$0xff] %v644
    %v1586 = vld.sshfl [vmem:[#allocation1] sm:$0xff pattern:$0x73625140]
    %v1587 = vld.sshfl [vmem:[#allocation1 + $0x8] sm:$0xff pattern:$0x73625140]
    %v1591 = vrot.slane %v1577, 1
    %v1592 = vrot.slane %v1577, 2
    %v1593 = vrot.slane %v1577, 3
    %v1594 = vsel %vm708, %v1577, %v1591
    %v1595 = vsel %vm710, %v1592, %v1593
    %v1596 = vsel %vm636, %v1594, %v1595
    %v1597 = vsel %vm713, %v1577, %v1591
    %v1598 = vsel %vm715, %v1592, %v1593
    %v1599 = vsel %vm717, %v1597, %v1598
    %v1600 = vrot.slane %v1599, 1
    %v1601 = vperm.slane %v1596, 0
    %v1602 = vperm.slane %v1596, 1
    %v1603 = vperm.slane %v1600, 0
    %v1604 = vperm.slane %v1600, 1
    %v1605 = vrot.slane %v1602, 6
    %v1606 = vrot.slane %v1604, 6
    %v1607 = vsel %vm636, %v1601, %v1605
    %v1608 = vsel %vm636, %v1603, %v1606
    %v1611 = vmul.f32 %v644, %v1607
    %v1612 = vmul.f32 %v644, %v1608
    %v1614 = vrot.slane %v1581, 1
    %v1615 = vrot.slane %v1581, 2
    %v1616 = vrot.slane %v1581, 3
    %v1617 = vsel %vm708, %v1581, %v1614
    %v1618 = vsel %vm710, %v1615, %v1616
    %v1619 = vsel %vm636, %v1617, %v1618
    %v1620 = vsel %vm713, %v1581, %v1614
    %v1621 = vsel %vm715, %v1615, %v1616
    %v1622 = vsel %vm717, %v1620, %v1621
    %v1623 = vrot.slane %v1622, 1
    %v1624 = vperm.slane %v1619, 0
    %v1625 = vperm.slane %v1619, 1
    %v1626 = vperm.slane %v1623, 0
    %v1627 = vperm.slane %v1623, 1
    %v1632 = vmul.f32 %v1587, %v1624
    %v1633 = vmul.f32 %v1586, %v1625
    %v1634 = vmul.f32 %v1587, %v1626
    %v1635 = vmul.f32 %v1586, %v1627
    %v1640 = vrot.slane %v1633, 6
    %v1641 = vrot.slane %v1635, 6
    %v1642 = vsel %vm636, %v1632, %v1640
    %v1643 = vsel %vm636, %v1634, %v1641
    %v1646 = vadd.f32 %v1611, %v1642
    %v1647 = vadd.f32 %v1612, %v1643
    %1648 = vst [vmem:[#allocation1] ss:$4 sm:$0xff] %v656
    %v1649 = vld.sshfl [vmem:[#allocation1] sm:$0xff pattern:$0x73625140]
    %v1650 = vld.sshfl [vmem:[#allocation1 + $0x8] sm:$0xff pattern:$0x73625140]
    %v1654 = vrot.slane %v1578, 1
    %v1655 = vrot.slane %v1578, 2
    %v1656 = vrot.slane %v1578, 3
    %v1657 = vsel %vm708, %v1578, %v1654
    %v1658 = vsel %vm710, %v1655, %v1656
    %v1659 = vsel %vm636, %v1657, %v1658
    %v1660 = vsel %vm713, %v1578, %v1654
    %v1661 = vsel %vm715, %v1655, %v1656
    %v1662 = vsel %vm717, %v1660, %v1661
    %v1663 = vrot.slane %v1662, 1
    %v1664 = vperm.slane %v1659, 0
    %v1665 = vperm.slane %v1659, 1
    %v1666 = vperm.slane %v1663, 0
    %v1667 = vperm.slane %v1663, 1
    %v1668 = vrot.slane %v1665, 6
    %v1669 = vrot.slane %v1667, 6
    %v1670 = vsel %vm636, %v1664, %v1668
    %v1671 = vsel %vm636, %v1666, %v1669
    %v1674 = vmul.f32 %v656, %v1670
    %v1675 = vmul.f32 %v656, %v1671
    %v1677 = vrot.slane %v1582, 1
    %v1678 = vrot.slane %v1582, 2
    %v1679 = vrot.slane %v1582, 3
    %v1680 = vsel %vm708, %v1582, %v1677
    %v1681 = vsel %vm710, %v1678, %v1679
    %v1682 = vsel %vm636, %v1680, %v1681
    %v1683 = vsel %vm713, %v1582, %v1677
    %v1684 = vsel %vm715, %v1678, %v1679
    %v1685 = vsel %vm717, %v1683, %v1684
    %v1686 = vrot.slane %v1685, 1
    %v1687 = vperm.slane %v1682, 0
    %v1688 = vperm.slane %v1682, 1
    %v1689 = vperm.slane %v1686, 0
    %v1690 = vperm.slane %v1686, 1
    %v1695 = vmul.f32 %v1650, %v1687
    %v1696 = vmul.f32 %v1649, %v1688
    %v1697 = vmul.f32 %v1650, %v1689
    %v1698 = vmul.f32 %v1649, %v1690
    %v1703 = vrot.slane %v1696, 6
    %v1704 = vrot.slane %v1698, 6
    %v1705 = vsel %vm636, %v1695, %v1703
    %v1706 = vsel %vm636, %v1697, %v1704
    %v1709 = vadd.f32 %v1674, %v1705
    %v1710 = vadd.f32 %v1675, %v1706
    %v1711 = vadd.f32 %v1646, %v1709
    %v1712 = vadd.f32 %v1647, %v1710
    %1713 = vst [vmem:[#allocation1] ss:$4 sm:$0xff] %v666
    %v1714 = vld.sshfl [vmem:[#allocation1] sm:$0xff pattern:$0x73625140]
    %v1715 = vld.sshfl [vmem:[#allocation1 + $0x8] sm:$0xff pattern:$0x73625140]
    %v1719 = vrot.slane %v1579, 1
    %v1720 = vrot.slane %v1579, 2
    %v1721 = vrot.slane %v1579, 3
    %v1722 = vsel %vm708, %v1579, %v1719
    %v1723 = vsel %vm710, %v1720, %v1721
    %v1724 = vsel %vm636, %v1722, %v1723
    %v1725 = vsel %vm713, %v1579, %v1719
    %v1726 = vsel %vm715, %v1720, %v1721
    %v1727 = vsel %vm717, %v1725, %v1726
    %v1728 = vrot.slane %v1727, 1
    %v1729 = vperm.slane %v1724, 0
    %v1730 = vperm.slane %v1724, 1
    %v1731 = vperm.slane %v1728, 0
    %v1732 = vperm.slane %v1728, 1
    %v1733 = vrot.slane %v1730, 6
    %v1734 = vrot.slane %v1732, 6
    %v1735 = vsel %vm636, %v1729, %v1733
    %v1736 = vsel %vm636, %v1731, %v1734
    %v1739 = vmul.f32 %v666, %v1735
    %v1740 = vmul.f32 %v666, %v1736
    %v1742 = vrot.slane %v1583, 1
    %v1743 = vrot.slane %v1583, 2
    %v1744 = vrot.slane %v1583, 3
    %v1745 = vsel %vm708, %v1583, %v1742
    %v1746 = vsel %vm710, %v1743, %v1744
    %v1747 = vsel %vm636, %v1745, %v1746
    %v1748 = vsel %vm713, %v1583, %v1742
    %v1749 = vsel %vm715, %v1743, %v1744
    %v1750 = vsel %vm717, %v1748, %v1749
    %v1751 = vrot.slane %v1750, 1
    %v1752 = vperm.slane %v1747, 0
    %v1753 = vperm.slane %v1747, 1
    %v1754 = vperm.slane %v1751, 0
    %v1755 = vperm.slane %v1751, 1
    %v1760 = vmul.f32 %v1715, %v1752
    %v1761 = vmul.f32 %v1714, %v1753
    %v1762 = vmul.f32 %v1715, %v1754
    %v1763 = vmul.f32 %v1714, %v1755
    %v1768 = vrot.slane %v1761, 6
    %v1769 = vrot.slane %v1763, 6
    %v1770 = vsel %vm636, %v1760, %v1768
    %v1771 = vsel %vm636, %v1762, %v1769
    %v1774 = vadd.f32 %v1739, %v1770
    %v1775 = vadd.f32 %v1740, %v1771
    %v1776 = vadd.f32 %v1711, %v1774
    %v1777 = vadd.f32 %v1712, %v1775
    %1778 = vst [vmem:[#allocation1] ss:$4 sm:$0xff] %v676
    %v1779 = vld.sshfl [vmem:[#allocation1] sm:$0xff pattern:$0x73625140]
    %v1780 = vld.sshfl [vmem:[#allocation1 + $0x8] sm:$0xff pattern:$0x73625140]
    %v1784 = vrot.slane %v1580, 1
    %v1785 = vrot.slane %v1580, 2
    %v1786 = vrot.slane %v1580, 3
    %v1787 = vsel %vm708, %v1580, %v1784
    %v1788 = vsel %vm710, %v1785, %v1786
    %v1789 = vsel %vm636, %v1787, %v1788
    %v1790 = vsel %vm713, %v1580, %v1784
    %v1791 = vsel %vm715, %v1785, %v1786
    %v1792 = vsel %vm717, %v1790, %v1791
    %v1793 = vrot.slane %v1792, 1
    %v1794 = vperm.slane %v1789, 0
    %v1795 = vperm.slane %v1789, 1
    %v1796 = vperm.slane %v1793, 0
    %v1797 = vperm.slane %v1793, 1
    %v1798 = vrot.slane %v1795, 6
    %v1799 = vrot.slane %v1797, 6
    %v1800 = vsel %vm636, %v1794, %v1798
    %v1801 = vsel %vm636, %v1796, %v1799
    %v1804 = vmul.f32 %v676, %v1800
    %v1805 = vmul.f32 %v676, %v1801
    %v1807 = vrot.slane %v1584, 1
    %v1808 = vrot.slane %v1584, 2
    %v1809 = vrot.slane %v1584, 3
    %v1810 = vsel %vm708, %v1584, %v1807
    %v1811 = vsel %vm710, %v1808, %v1809
    %v1812 = vsel %vm636, %v1810, %v1811
    %v1813 = vsel %vm713, %v1584, %v1807
    %v1814 = vsel %vm715, %v1808, %v1809
    %v1815 = vsel %vm717, %v1813, %v1814
    %v1816 = vrot.slane %v1815, 1
    %v1817 = vperm.slane %v1812, 0
    %v1818 = vperm.slane %v1812, 1
    %v1819 = vperm.slane %v1816, 0
    %v1820 = vperm.slane %v1816, 1
    %v1825 = vmul.f32 %v1780, %v1817
    %v1826 = vmul.f32 %v1779, %v1818
    %v1827 = vmul.f32 %v1780, %v1819
    %v1828 = vmul.f32 %v1779, %v1820
    %v1833 = vrot.slane %v1826, 6
    %v1834 = vrot.slane %v1828, 6
    %v1835 = vsel %vm636, %v1825, %v1833
    %v1836 = vsel %vm636, %v1827, %v1834
    %v1839 = vadd.f32 %v1804, %v1835
    %v1840 = vadd.f32 %v1805, %v1836
    %v1841 = vadd.f32 %v1776, %v1839
    %v1842 = vadd.f32 %v1777, %v1840
    %1845 = vst [vmem:[#allocation1] ss:$4 sm:$0xff] %v1841
    %s1846 = scalar_lea.vmem [#allocation1], 1
    %1847 = vst [vmem:[%s1846] ss:$4 sm:$0xff] %v1842
    %v1848 = vld.sshfl [vmem:[#allocation1] sm:$0xff pattern:$0x73625140]
    %v1849 = vld.sshfl [vmem:[#allocation1 + $0x8] sm:$0xff pattern:$0x73625140]
    %v1852 = vpack.c.bf16 %v1848, %v1848
    %v1853 = vpack.c.bf16 %v1849, %v1849
    %v1854 = vld [vmem:[#allocation14] sm:$0xf]
    %v1855 = vld [vmem:[#allocation14 + $0x4] sm:$0xf]
    %v1856 = vld [vmem:[#allocation14 + $0x8] sm:$0xf]
    %v1857 = vld [vmem:[#allocation14 + $0xc] sm:$0xf]
    %v1858 = vld [vmem:[#allocation14 + $0x10] sm:$0xf]
    %v1859 = vld [vmem:[#allocation14 + $0x14] sm:$0xf]
    %v1860 = vld [vmem:[#allocation14 + $0x18] sm:$0xf]
    %v1861 = vld [vmem:[#allocation14 + $0x1c] sm:$0xf]
    %v1862 = vld [vmem:[#allocation14 + $0x20] sm:$0xf]
    %v1863 = vld [vmem:[#allocation14 + $0x24] sm:$0xf]
    %v1864 = vld [vmem:[#allocation14 + $0x28] sm:$0xf]
    %v1865 = vld [vmem:[#allocation14 + $0x2c] sm:$0xf]
    %v1866 = vld [vmem:[#allocation14 + $0x30] sm:$0xf]
    %v1867 = vld [vmem:[#allocation14 + $0x34] sm:$0xf]
    %v1868 = vld [vmem:[#allocation14 + $0x38] sm:$0xf]
    %v1869 = vld [vmem:[#allocation14 + $0x3c] sm:$0xf]
    %v1870 = vld [vmem:[#allocation14 + $0x40] sm:$0xf]
    %v1871 = vld [vmem:[#allocation14 + $0x44] sm:$0xf]
    %v1872 = vld [vmem:[#allocation14 + $0x48] sm:$0xf]
    %v1873 = vld [vmem:[#allocation14 + $0x4c] sm:$0xf]
    %v1874 = vld [vmem:[#allocation14 + $0x50] sm:$0xf]
    %v1875 = vld [vmem:[#allocation14 + $0x54] sm:$0xf]
    %v1876 = vld [vmem:[#allocation14 + $0x58] sm:$0xf]
    %v1877 = vld [vmem:[#allocation14 + $0x5c] sm:$0xf]
    %v1878 = vld [vmem:[#allocation14 + $0x60] sm:$0xf]
    %v1879 = vld [vmem:[#allocation14 + $0x64] sm:$0xf]
    %v1880 = vld [vmem:[#allocation14 + $0x68] sm:$0xf]
    %v1881 = vld [vmem:[#allocation14 + $0x6c] sm:$0xf]
    %v1882 = vld [vmem:[#allocation14 + $0x70] sm:$0xf]
    %v1883 = vld [vmem:[#allocation14 + $0x74] sm:$0xf]
    %v1884 = vld [vmem:[#allocation14 + $0x78] sm:$0xf]
    %v1885 = vld [vmem:[#allocation14 + $0x7c] sm:$0xf]
    %v1918 = vunpack.c.l.b16 %v1854
    %v1919 = vunpack.c.l.b16 %v1855
    %v1920 = vunpack.c.l.b16 %v1856
    %v1921 = vunpack.c.l.b16 %v1857
    %v1922 = vunpack.c.l.b16 %v1858
    %v1923 = vunpack.c.l.b16 %v1859
    %v1924 = vunpack.c.l.b16 %v1860
    %v1925 = vunpack.c.l.b16 %v1861
    %v1926 = vunpack.c.l.b16 %v1862
    %v1927 = vunpack.c.l.b16 %v1863
    %v1928 = vunpack.c.l.b16 %v1864
    %v1929 = vunpack.c.l.b16 %v1865
    %v1930 = vunpack.c.l.b16 %v1866
    %v1931 = vunpack.c.l.b16 %v1867
    %v1932 = vunpack.c.l.b16 %v1868
    %v1933 = vunpack.c.l.b16 %v1869
    %v1934 = vunpack.c.l.b16 %v1870
    %v1935 = vunpack.c.l.b16 %v1871
    %v1936 = vunpack.c.l.b16 %v1872
    %v1937 = vunpack.c.l.b16 %v1873
    %v1938 = vunpack.c.l.b16 %v1874
    %v1939 = vunpack.c.l.b16 %v1875
    %v1940 = vunpack.c.l.b16 %v1876
    %v1941 = vunpack.c.l.b16 %v1877
    %v1942 = vunpack.c.l.b16 %v1878
    %v1943 = vunpack.c.l.b16 %v1879
    %v1944 = vunpack.c.l.b16 %v1880
    %v1945 = vunpack.c.l.b16 %v1881
    %v1946 = vunpack.c.l.b16 %v1882
    %v1947 = vunpack.c.l.b16 %v1883
    %v1948 = vunpack.c.l.b16 %v1884
    %v1949 = vunpack.c.l.b16 %v1885
    %v1950 = vpack.c.b16 %v1919, %v1918
    %v1951 = vpack.c.b16 %v1921, %v1920
    %v1952 = vpack.c.b16 %v1923, %v1922
    %v1953 = vpack.c.b16 %v1925, %v1924
    %v1954 = vpack.c.b16 %v1927, %v1926
    %v1955 = vpack.c.b16 %v1929, %v1928
    %v1956 = vpack.c.b16 %v1931, %v1930
    %v1957 = vpack.c.b16 %v1933, %v1932
    %v1958 = vpack.c.b16 %v1935, %v1934
    %v1959 = vpack.c.b16 %v1937, %v1936
    %v1960 = vpack.c.b16 %v1939, %v1938
    %v1961 = vpack.c.b16 %v1941, %v1940
    %v1962 = vpack.c.b16 %v1943, %v1942
    %v1963 = vpack.c.b16 %v1945, %v1944
    %v1964 = vpack.c.b16 %v1947, %v1946
    %v1965 = vpack.c.b16 %v1949, %v1948
    %1982 = vmatpush.bf16.msra.mxu0 %v1957
    %1983 = vmatpush.bf16.msra.mxu0 %v1956
    %1984 = vmatpush.bf16.msra.mxu0 %v1955
    %1985 = vmatpush.bf16.msra.mxu0 %v1954
    %1986 = vmatpush.bf16.msra.mxu0 %v1953
    %1987 = vmatpush.bf16.msra.mxu0 %v1952
    %1988 = vmatpush.bf16.msra.mxu0 %v1951
    %1989 = vmatpush.bf16.msra.mxu0 %v1950
    %1990 = vmatmul.bf16.gmra.mxu0 %v1852
    %v1991 = vpop.f32.mrf.mxu0
    %v1992 = vadd.f32 0.0, %v1991
    %v1993 = vpop.f32.mrf.mxu0
    %1994 = vdwg.mxu0
    %1995 = vmatpush.bf16.msra.mxu0 %v1965
    %1996 = vmatpush.bf16.msra.mxu0 %v1964
    %1997 = vmatpush.bf16.msra.mxu0 %v1963
    %1998 = vmatpush.bf16.msra.mxu0 %v1962
    %1999 = vmatpush.bf16.msra.mxu0 %v1961
    %2000 = vmatpush.bf16.msra.mxu0 %v1960
    %2001 = vmatpush.bf16.msra.mxu0 %v1959
    %2002 = vmatpush.bf16.msra.mxu0 %v1958
    %2003 = vmatmul.bf16.gmra.mxu0 %v1853
    %v2004 = vpop.f32.mrf.mxu0
    %v2005 = vadd.f32 %v1992, %v2004
    %v2006 = vpop.f32.mrf.mxu0
    %2007 = vdwg.mxu0
    %v2009 = vrot.slane %v2005, 2
    %s2011 = scalar_lea.vmem [#allocation22], 8
    %2012 = vst [vmem:[%s2011] sm:$0x3] %v2005
    %2013 = vst [vmem:[%s2011 + $0x2] sm:$0x3] %v2009
    %v2014 = vld [vmem:[#allocation16] sm:$0xf]
    %v2015 = vld [vmem:[#allocation16 + $0x4] sm:$0xf]
    %v2016 = vld [vmem:[#allocation16 + $0x8] sm:$0xf]
    %v2017 = vld [vmem:[#allocation16 + $0xc] sm:$0xf]
    %v2018 = vld [vmem:[#allocation16 + $0x10] sm:$0xf]
    %v2019 = vld [vmem:[#allocation16 + $0x14] sm:$0xf]
    %v2020 = vld [vmem:[#allocation16 + $0x18] sm:$0xf]
    %v2021 = vld [vmem:[#allocation16 + $0x1c] sm:$0xf]
    %v2022 = vrot.slane %v644, 4
    %2023 = vst [vmem:[#allocation1] ss:$4 sm:$0xff] %v2022
    %v2024 = vld.sshfl [vmem:[#allocation1] sm:$0xff pattern:$0x73625140]
    %v2025 = vld.sshfl [vmem:[#allocation1 + $0x8] sm:$0xff pattern:$0x73625140]
    %v2029 = vrot.slane %v2014, 1
    %v2030 = vrot.slane %v2014, 2
    %v2031 = vrot.slane %v2014, 3
    %v2032 = vsel %vm708, %v2014, %v2029
    %v2033 = vsel %vm710, %v2030, %v2031
    %v2034 = vsel %vm636, %v2032, %v2033
    %v2035 = vsel %vm713, %v2014, %v2029
    %v2036 = vsel %vm715, %v2030, %v2031
    %v2037 = vsel %vm717, %v2035, %v2036
    %v2038 = vrot.slane %v2037, 1
    %v2039 = vperm.slane %v2034, 0
    %v2040 = vperm.slane %v2034, 1
    %v2041 = vperm.slane %v2038, 0
    %v2042 = vperm.slane %v2038, 1
    %v2044 = vrot.slane %v2040, 6
    %v2045 = vrot.slane %v2042, 6
    %v2046 = vsel %vm636, %v2039, %v2044
    %v2047 = vsel %vm636, %v2041, %v2045
    %v2050 = vmul.f32 %v2022, %v2046
    %v2051 = vmul.f32 %v2022, %v2047
    %v2053 = vrot.slane %v2018, 1
    %v2054 = vrot.slane %v2018, 2
    %v2055 = vrot.slane %v2018, 3
    %v2056 = vsel %vm708, %v2018, %v2053
    %v2057 = vsel %vm710, %v2054, %v2055
    %v2058 = vsel %vm636, %v2056, %v2057
    %v2059 = vsel %vm713, %v2018, %v2053
    %v2060 = vsel %vm715, %v2054, %v2055
    %v2061 = vsel %vm717, %v2059, %v2060
    %v2062 = vrot.slane %v2061, 1
    %v2063 = vperm.slane %v2058, 0
    %v2064 = vperm.slane %v2058, 1
    %v2065 = vperm.slane %v2062, 0
    %v2066 = vperm.slane %v2062, 1
    %v2071 = vmul.f32 %v2025, %v2063
    %v2072 = vmul.f32 %v2024, %v2064
    %v2073 = vmul.f32 %v2025, %v2065
    %v2074 = vmul.f32 %v2024, %v2066
    %v2079 = vrot.slane %v2072, 6
    %v2080 = vrot.slane %v2074, 6
    %v2081 = vsel %vm636, %v2071, %v2079
    %v2082 = vsel %vm636, %v2073, %v2080
    %v2085 = vadd.f32 %v2050, %v2081
    %v2086 = vadd.f32 %v2051, %v2082
    %v2087 = vrot.slane %v656, 4
    %2088 = vst [vmem:[#allocation1] ss:$4 sm:$0xff] %v2087
    %v2089 = vld.sshfl [vmem:[#allocation1] sm:$0xff pattern:$0x73625140]
    %v2090 = vld.sshfl [vmem:[#allocation1 + $0x8] sm:$0xff pattern:$0x73625140]
    %v2094 = vrot.slane %v2015, 1
    %v2095 = vrot.slane %v2015, 2
    %v2096 = vrot.slane %v2015, 3
    %v2097 = vsel %vm708, %v2015, %v2094
    %v2098 = vsel %vm710, %v2095, %v2096
    %v2099 = vsel %vm636, %v2097, %v2098
    %v2100 = vsel %vm713, %v2015, %v2094
    %v2101 = vsel %vm715, %v2095, %v2096
    %v2102 = vsel %vm717, %v2100, %v2101
    %v2103 = vrot.slane %v2102, 1
    %v2104 = vperm.slane %v2099, 0
    %v2105 = vperm.slane %v2099, 1
    %v2106 = vperm.slane %v2103, 0
    %v2107 = vperm.slane %v2103, 1
    %v2109 = vrot.slane %v2105, 6
    %v2110 = vrot.slane %v2107, 6
    %v2111 = vsel %vm636, %v2104, %v2109
    %v2112 = vsel %vm636, %v2106, %v2110
    %v2115 = vmul.f32 %v2087, %v2111
    %v2116 = vmul.f32 %v2087, %v2112
    %v2118 = vrot.slane %v2019, 1
    %v2119 = vrot.slane %v2019, 2
    %v2120 = vrot.slane %v2019, 3
    %v2121 = vsel %vm708, %v2019, %v2118
    %v2122 = vsel %vm710, %v2119, %v2120
    %v2123 = vsel %vm636, %v2121, %v2122
    %v2124 = vsel %vm713, %v2019, %v2118
    %v2125 = vsel %vm715, %v2119, %v2120
    %v2126 = vsel %vm717, %v2124, %v2125
    %v2127 = vrot.slane %v2126, 1
    %v2128 = vperm.slane %v2123, 0
    %v2129 = vperm.slane %v2123, 1
    %v2130 = vperm.slane %v2127, 0
    %v2131 = vperm.slane %v2127, 1
    %v2136 = vmul.f32 %v2090, %v2128
    %v2137 = vmul.f32 %v2089, %v2129
    %v2138 = vmul.f32 %v2090, %v2130
    %v2139 = vmul.f32 %v2089, %v2131
    %v2144 = vrot.slane %v2137, 6
    %v2145 = vrot.slane %v2139, 6
    %v2146 = vsel %vm636, %v2136, %v2144
    %v2147 = vsel %vm636, %v2138, %v2145
    %v2150 = vadd.f32 %v2115, %v2146
    %v2151 = vadd.f32 %v2116, %v2147
    %v2152 = vadd.f32 %v2085, %v2150
    %v2153 = vadd.f32 %v2086, %v2151
    %v2154 = vrot.slane %v666, 4
    %2155 = vst [vmem:[#allocation1] ss:$4 sm:$0xff] %v2154
    %v2156 = vld.sshfl [vmem:[#allocation1] sm:$0xff pattern:$0x73625140]
    %v2157 = vld.sshfl [vmem:[#allocation1 + $0x8] sm:$0xff pattern:$0x73625140]
    %v2161 = vrot.slane %v2016, 1
    %v2162 = vrot.slane %v2016, 2
    %v2163 = vrot.slane %v2016, 3
    %v2164 = vsel %vm708, %v2016, %v2161
    %v2165 = vsel %vm710, %v2162, %v2163
    %v2166 = vsel %vm636, %v2164, %v2165
    %v2167 = vsel %vm713, %v2016, %v2161
    %v2168 = vsel %vm715, %v2162, %v2163
    %v2169 = vsel %vm717, %v2167, %v2168
    %v2170 = vrot.slane %v2169, 1
    %v2171 = vperm.slane %v2166, 0
    %v2172 = vperm.slane %v2166, 1
    %v2173 = vperm.slane %v2170, 0
    %v2174 = vperm.slane %v2170, 1
    %v2176 = vrot.slane %v2172, 6
    %v2177 = vrot.slane %v2174, 6
    %v2178 = vsel %vm636, %v2171, %v2176
    %v2179 = vsel %vm636, %v2173, %v2177
    %v2182 = vmul.f32 %v2154, %v2178
    %v2183 = vmul.f32 %v2154, %v2179
    %v2185 = vrot.slane %v2020, 1
    %v2186 = vrot.slane %v2020, 2
    %v2187 = vrot.slane %v2020, 3
    %v2188 = vsel %vm708, %v2020, %v2185
    %v2189 = vsel %vm710, %v2186, %v2187
    %v2190 = vsel %vm636, %v2188, %v2189
    %v2191 = vsel %vm713, %v2020, %v2185
    %v2192 = vsel %vm715, %v2186, %v2187
    %v2193 = vsel %vm717, %v2191, %v2192
    %v2194 = vrot.slane %v2193, 1
    %v2195 = vperm.slane %v2190, 0
    %v2196 = vperm.slane %v2190, 1
    %v2197 = vperm.slane %v2194, 0
    %v2198 = vperm.slane %v2194, 1
    %v2203 = vmul.f32 %v2157, %v2195
    %v2204 = vmul.f32 %v2156, %v2196
    %v2205 = vmul.f32 %v2157, %v2197
    %v2206 = vmul.f32 %v2156, %v2198
    %v2211 = vrot.slane %v2204, 6
    %v2212 = vrot.slane %v2206, 6
    %v2213 = vsel %vm636, %v2203, %v2211
    %v2214 = vsel %vm636, %v2205, %v2212
    %v2217 = vadd.f32 %v2182, %v2213
    %v2218 = vadd.f32 %v2183, %v2214
    %v2219 = vadd.f32 %v2152, %v2217
    %v2220 = vadd.f32 %v2153, %v2218
    %v2221 = vrot.slane %v676, 4
    %2222 = vst [vmem:[#allocation1] ss:$4 sm:$0xff] %v2221
    %v2223 = vld.sshfl [vmem:[#allocation1] sm:$0xff pattern:$0x73625140]
    %v2224 = vld.sshfl [vmem:[#allocation1 + $0x8] sm:$0xff pattern:$0x73625140]
    %v2228 = vrot.slane %v2017, 1
    %v2229 = vrot.slane %v2017, 2
    %v2230 = vrot.slane %v2017, 3
    %v2231 = vsel %vm708, %v2017, %v2228
    %v2232 = vsel %vm710, %v2229, %v2230
    %v2233 = vsel %vm636, %v2231, %v2232
    %v2234 = vsel %vm713, %v2017, %v2228
    %v2235 = vsel %vm715, %v2229, %v2230
    %v2236 = vsel %vm717, %v2234, %v2235
    %v2237 = vrot.slane %v2236, 1
    %v2238 = vperm.slane %v2233, 0
    %v2239 = vperm.slane %v2233, 1
    %v2240 = vperm.slane %v2237, 0
    %v2241 = vperm.slane %v2237, 1
    %v2243 = vrot.slane %v2239, 6
    %v2244 = vrot.slane %v2241, 6
    %v2245 = vsel %vm636, %v2238, %v2243
    %v2246 = vsel %vm636, %v2240, %v2244
    %v2249 = vmul.f32 %v2221, %v2245
    %v2250 = vmul.f32 %v2221, %v2246
    %v2252 = vrot.slane %v2021, 1
    %v2253 = vrot.slane %v2021, 2
    %v2254 = vrot.slane %v2021, 3
    %v2255 = vsel %vm708, %v2021, %v2252
    %v2256 = vsel %vm710, %v2253, %v2254
    %v2257 = vsel %vm636, %v2255, %v2256
    %v2258 = vsel %vm713, %v2021, %v2252
    %v2259 = vsel %vm715, %v2253, %v2254
    %v2260 = vsel %vm717, %v2258, %v2259
    %v2261 = vrot.slane %v2260, 1
    %v2262 = vperm.slane %v2257, 0
    %v2263 = vperm.slane %v2257, 1
    %v2264 = vperm.slane %v2261, 0
    %v2265 = vperm.slane %v2261, 1
    %v2270 = vmul.f32 %v2224, %v2262
    %v2271 = vmul.f32 %v2223, %v2263
    %v2272 = vmul.f32 %v2224, %v2264
    %v2273 = vmul.f32 %v2223, %v2265
    %v2278 = vrot.slane %v2271, 6
    %v2279 = vrot.slane %v2273, 6
    %v2280 = vsel %vm636, %v2270, %v2278
    %v2281 = vsel %vm636, %v2272, %v2279
    %v2284 = vadd.f32 %v2249, %v2280
    %v2285 = vadd.f32 %v2250, %v2281
    %v2286 = vadd.f32 %v2219, %v2284
    %v2287 = vadd.f32 %v2220, %v2285
    %2290 = vst [vmem:[#allocation1] ss:$4 sm:$0xff] %v2286
    %s2291 = scalar_lea.vmem [#allocation1], 1
    %2292 = vst [vmem:[%s2291] ss:$4 sm:$0xff] %v2287
    %v2293 = vld.sshfl [vmem:[#allocation1] sm:$0xff pattern:$0x73625140]
    %v2294 = vld.sshfl [vmem:[#allocation1 + $0x8] sm:$0xff pattern:$0x73625140]
    %v2297 = vpack.c.bf16 %v2293, %v2293
    %v2298 = vpack.c.bf16 %v2294, %v2294
    %v2299 = vld [vmem:[#allocation17] sm:$0xf]
    %v2300 = vld [vmem:[#allocation17 + $0x4] sm:$0xf]
    %v2301 = vld [vmem:[#allocation17 + $0x8] sm:$0xf]
    %v2302 = vld [vmem:[#allocation17 + $0xc] sm:$0xf]
    %v2303 = vld [vmem:[#allocation17 + $0x10] sm:$0xf]
    %v2304 = vld [vmem:[#allocation17 + $0x14] sm:$0xf]
    %v2305 = vld [vmem:[#allocation17 + $0x18] sm:$0xf]
    %v2306 = vld [vmem:[#allocation17 + $0x1c] sm:$0xf]
    %v2307 = vld [vmem:[#allocation17 + $0x20] sm:$0xf]
    %v2308 = vld [vmem:[#allocation17 + $0x24] sm:$0xf]
    %v2309 = vld [vmem:[#allocation17 + $0x28] sm:$0xf]
    %v2310 = vld [vmem:[#allocation17 + $0x2c] sm:$0xf]
    %v2311 = vld [vmem:[#allocation17 + $0x30] sm:$0xf]
    %v2312 = vld [vmem:[#allocation17 + $0x34] sm:$0xf]
    %v2313 = vld [vmem:[#allocation17 + $0x38] sm:$0xf]
    %v2314 = vld [vmem:[#allocation17 + $0x3c] sm:$0xf]
    %v2315 = vld [vmem:[#allocation17 + $0x40] sm:$0xf]
    %v2316 = vld [vmem:[#allocation17 + $0x44] sm:$0xf]
    %v2317 = vld [vmem:[#allocation17 + $0x48] sm:$0xf]
    %v2318 = vld [vmem:[#allocation17 + $0x4c] sm:$0xf]
    %v2319 = vld [vmem:[#allocation17 + $0x50] sm:$0xf]
    %v2320 = vld [vmem:[#allocation17 + $0x54] sm:$0xf]
    %v2321 = vld [vmem:[#allocation17 + $0x58] sm:$0xf]
    %v2322 = vld [vmem:[#allocation17 + $0x5c] sm:$0xf]
    %v2323 = vld [vmem:[#allocation17 + $0x60] sm:$0xf]
    %v2324 = vld [vmem:[#allocation17 + $0x64] sm:$0xf]
    %v2325 = vld [vmem:[#allocation17 + $0x68] sm:$0xf]
    %v2326 = vld [vmem:[#allocation17 + $0x6c] sm:$0xf]
    %v2327 = vld [vmem:[#allocation17 + $0x70] sm:$0xf]
    %v2328 = vld [vmem:[#allocation17 + $0x74] sm:$0xf]
    %v2329 = vld [vmem:[#allocation17 + $0x78] sm:$0xf]
    %v2330 = vld [vmem:[#allocation17 + $0x7c] sm:$0xf]
    %v2363 = vunpack.c.l.b16 %v2299
    %v2364 = vunpack.c.l.b16 %v2300
    %v2365 = vunpack.c.l.b16 %v2301
    %v2366 = vunpack.c.l.b16 %v2302
    %v2367 = vunpack.c.l.b16 %v2303
    %v2368 = vunpack.c.l.b16 %v2304
    %v2369 = vunpack.c.l.b16 %v2305
    %v2370 = vunpack.c.l.b16 %v2306
    %v2371 = vunpack.c.l.b16 %v2307
    %v2372 = vunpack.c.l.b16 %v2308
    %v2373 = vunpack.c.l.b16 %v2309
    %v2374 = vunpack.c.l.b16 %v2310
    %v2375 = vunpack.c.l.b16 %v2311
    %v2376 = vunpack.c.l.b16 %v2312
    %v2377 = vunpack.c.l.b16 %v2313
    %v2378 = vunpack.c.l.b16 %v2314
    %v2379 = vunpack.c.l.b16 %v2315
    %v2380 = vunpack.c.l.b16 %v2316
    %v2381 = vunpack.c.l.b16 %v2317
    %v2382 = vunpack.c.l.b16 %v2318
    %v2383 = vunpack.c.l.b16 %v2319
    %v2384 = vunpack.c.l.b16 %v2320
    %v2385 = vunpack.c.l.b16 %v2321
    %v2386 = vunpack.c.l.b16 %v2322
    %v2387 = vunpack.c.l.b16 %v2323
    %v2388 = vunpack.c.l.b16 %v2324
    %v2389 = vunpack.c.l.b16 %v2325
    %v2390 = vunpack.c.l.b16 %v2326
    %v2391 = vunpack.c.l.b16 %v2327
    %v2392 = vunpack.c.l.b16 %v2328
    %v2393 = vunpack.c.l.b16 %v2329
    %v2394 = vunpack.c.l.b16 %v2330
    %v2395 = vpack.c.b16 %v2364, %v2363
    %v2396 = vpack.c.b16 %v2366, %v2365
    %v2397 = vpack.c.b16 %v2368, %v2367
    %v2398 = vpack.c.b16 %v2370, %v2369
    %v2399 = vpack.c.b16 %v2372, %v2371
    %v2400 = vpack.c.b16 %v2374, %v2373
    %v2401 = vpack.c.b16 %v2376, %v2375
    %v2402 = vpack.c.b16 %v2378, %v2377
    %v2403 = vpack.c.b16 %v2380, %v2379
    %v2404 = vpack.c.b16 %v2382, %v2381
    %v2405 = vpack.c.b16 %v2384, %v2383
    %v2406 = vpack.c.b16 %v2386, %v2385
    %v2407 = vpack.c.b16 %v2388, %v2387
    %v2408 = vpack.c.b16 %v2390, %v2389
    %v2409 = vpack.c.b16 %v2392, %v2391
    %v2410 = vpack.c.b16 %v2394, %v2393
    %2427 = vmatpush.bf16.msra.mxu0 %v2402
    %2428 = vmatpush.bf16.msra.mxu0 %v2401
    %2429 = vmatpush.bf16.msra.mxu0 %v2400
    %2430 = vmatpush.bf16.msra.mxu0 %v2399
    %2431 = vmatpush.bf16.msra.mxu0 %v2398
    %2432 = vmatpush.bf16.msra.mxu0 %v2397
    %2433 = vmatpush.bf16.msra.mxu0 %v2396
    %2434 = vmatpush.bf16.msra.mxu0 %v2395
    %2435 = vmatmul.bf16.gmra.mxu0 %v2297
    %v2436 = vpop.f32.mrf.mxu0
    %v2437 = vadd.f32 0.0, %v2436
    %v2438 = vpop.f32.mrf.mxu0
    %2439 = vdwg.mxu0
    %2440 = vmatpush.bf16.msra.mxu0 %v2410
    %2441 = vmatpush.bf16.msra.mxu0 %v2409
    %2442 = vmatpush.bf16.msra.mxu0 %v2408
    %2443 = vmatpush.bf16.msra.mxu0 %v2407
    %2444 = vmatpush.bf16.msra.mxu0 %v2406
    %2445 = vmatpush.bf16.msra.mxu0 %v2405
    %2446 = vmatpush.bf16.msra.mxu0 %v2404
    %2447 = vmatpush.bf16.msra.mxu0 %v2403
    %2448 = vmatmul.bf16.gmra.mxu0 %v2298
    %v2449 = vpop.f32.mrf.mxu0
    %v2450 = vadd.f32 %v2437, %v2449
    %v2451 = vpop.f32.mrf.mxu0
    %2452 = vdwg.mxu0
    %v2454 = vrot.slane %v2450, 2
    %s2456 = scalar_lea.vmem [#allocation22], 12
    %2457 = vst [vmem:[%s2456] sm:$0x3] %v2450
    %2458 = vst [vmem:[%s2456 + $0x2] sm:$0x3] %v2454
    %v2459 = vld [vmem:[#allocation19] sm:$0xf]
    %v2460 = vld [vmem:[#allocation19 + $0x4] sm:$0xf]
    %v2461 = vld [vmem:[#allocation19 + $0x8] sm:$0xf]
    %v2462 = vld [vmem:[#allocation19 + $0xc] sm:$0xf]
    %v2463 = vld [vmem:[#allocation19 + $0x10] sm:$0xf]
    %v2464 = vld [vmem:[#allocation19 + $0x14] sm:$0xf]
    %v2465 = vld [vmem:[#allocation19 + $0x18] sm:$0xf]
    %v2466 = vld [vmem:[#allocation19 + $0x1c] sm:$0xf]
    %2467 = vst [vmem:[#allocation1] ss:$4 sm:$0xff] %v645
    %v2468 = vld.sshfl [vmem:[#allocation1] sm:$0xff pattern:$0x73625140]
    %v2469 = vld.sshfl [vmem:[#allocation1 + $0x8] sm:$0xff pattern:$0x73625140]
    %v2473 = vrot.slane %v2459, 1
    %v2474 = vrot.slane %v2459, 2
    %v2475 = vrot.slane %v2459, 3
    %v2476 = vsel %vm708, %v2459, %v2473
    %v2477 = vsel %vm710, %v2474, %v2475
    %v2478 = vsel %vm636, %v2476, %v2477
    %v2479 = vsel %vm713, %v2459, %v2473
    %v2480 = vsel %vm715, %v2474, %v2475
    %v2481 = vsel %vm717, %v2479, %v2480
    %v2482 = vrot.slane %v2481, 1
    %v2483 = vperm.slane %v2478, 0
    %v2484 = vperm.slane %v2478, 1
    %v2485 = vperm.slane %v2482, 0
    %v2486 = vperm.slane %v2482, 1
    %v2487 = vrot.slane %v2484, 6
    %v2488 = vrot.slane %v2486, 6
    %v2489 = vsel %vm636, %v2483, %v2487
    %v2490 = vsel %vm636, %v2485, %v2488
    %v2493 = vmul.f32 %v645, %v2489
    %v2494 = vmul.f32 %v645, %v2490
    %v2496 = vrot.slane %v2463, 1
    %v2497 = vrot.slane %v2463, 2
    %v2498 = vrot.slane %v2463, 3
    %v2499 = vsel %vm708, %v2463, %v2496
    %v2500 = vsel %vm710, %v2497, %v2498
    %v2501 = vsel %vm636, %v2499, %v2500
    %v2502 = vsel %vm713, %v2463, %v2496
    %v2503 = vsel %vm715, %v2497, %v2498
    %v2504 = vsel %vm717, %v2502, %v2503
    %v2505 = vrot.slane %v2504, 1
    %v2506 = vperm.slane %v2501, 0
    %v2507 = vperm.slane %v2501, 1
    %v2508 = vperm.slane %v2505, 0
    %v2509 = vperm.slane %v2505, 1
    %v2514 = vmul.f32 %v2469, %v2506
    %v2515 = vmul.f32 %v2468, %v2507
    %v2516 = vmul.f32 %v2469, %v2508
    %v2517 = vmul.f32 %v2468, %v2509
    %v2522 = vrot.slane %v2515, 6
    %v2523 = vrot.slane %v2517, 6
    %v2524 = vsel %vm636, %v2514, %v2522
    %v2525 = vsel %vm636, %v2516, %v2523
    %v2528 = vadd.f32 %v2493, %v2524
    %v2529 = vadd.f32 %v2494, %v2525
    %2530 = vst [vmem:[#allocation1] ss:$4 sm:$0xff] %v658
    %v2531 = vld.sshfl [vmem:[#allocation1] sm:$0xff pattern:$0x73625140]
    %v2532 = vld.sshfl [vmem:[#allocation1 + $0x8] sm:$0xff pattern:$0x73625140]
    %v2536 = vrot.slane %v2460, 1
    %v2537 = vrot.slane %v2460, 2
    %v2538 = vrot.slane %v2460, 3
    %v2539 = vsel %vm708, %v2460, %v2536
    %v2540 = vsel %vm710, %v2537, %v2538
    %v2541 = vsel %vm636, %v2539, %v2540
    %v2542 = vsel %vm713, %v2460, %v2536
    %v2543 = vsel %vm715, %v2537, %v2538
    %v2544 = vsel %vm717, %v2542, %v2543
    %v2545 = vrot.slane %v2544, 1
    %v2546 = vperm.slane %v2541, 0
    %v2547 = vperm.slane %v2541, 1
    %v2548 = vperm.slane %v2545, 0
    %v2549 = vperm.slane %v2545, 1
    %v2550 = vrot.slane %v2547, 6
    %v2551 = vrot.slane %v2549, 6
    %v2552 = vsel %vm636, %v2546, %v2550
    %v2553 = vsel %vm636, %v2548, %v2551
    %v2556 = vmul.f32 %v658, %v2552
    %v2557 = vmul.f32 %v658, %v2553
    %v2559 = vrot.slane %v2464, 1
    %v2560 = vrot.slane %v2464, 2
    %v2561 = vrot.slane %v2464, 3
    %v2562 = vsel %vm708, %v2464, %v2559
    %v2563 = vsel %vm710, %v2560, %v2561
    %v2564 = vsel %vm636, %v2562, %v2563
    %v2565 = vsel %vm713, %v2464, %v2559
    %v2566 = vsel %vm715, %v2560, %v2561
    %v2567 = vsel %vm717, %v2565, %v2566
    %v2568 = vrot.slane %v2567, 1
    %v2569 = vperm.slane %v2564, 0
    %v2570 = vperm.slane %v2564, 1
    %v2571 = vperm.slane %v2568, 0
    %v2572 = vperm.slane %v2568, 1
    %v2577 = vmul.f32 %v2532, %v2569
    %v2578 = vmul.f32 %v2531, %v2570
    %v2579 = vmul.f32 %v2532, %v2571
    %v2580 = vmul.f32 %v2531, %v2572
    %v2585 = vrot.slane %v2578, 6
    %v2586 = vrot.slane %v2580, 6
    %v2587 = vsel %vm636, %v2577, %v2585
    %v2588 = vsel %vm636, %v2579, %v2586
    %v2591 = vadd.f32 %v2556, %v2587
    %v2592 = vadd.f32 %v2557, %v2588
    %v2593 = vadd.f32 %v2528, %v2591
    %v2594 = vadd.f32 %v2529, %v2592
    %2595 = vst [vmem:[#allocation1] ss:$4 sm:$0xff] %v668
    %v2596 = vld.sshfl [vmem:[#allocation1] sm:$0xff pattern:$0x73625140]
    %v2597 = vld.sshfl [vmem:[#allocation1 + $0x8] sm:$0xff pattern:$0x73625140]
    %v2601 = vrot.slane %v2461, 1
    %v2602 = vrot.slane %v2461, 2
    %v2603 = vrot.slane %v2461, 3
    %v2604 = vsel %vm708, %v2461, %v2601
    %v2605 = vsel %vm710, %v2602, %v2603
    %v2606 = vsel %vm636, %v2604, %v2605
    %v2607 = vsel %vm713, %v2461, %v2601
    %v2608 = vsel %vm715, %v2602, %v2603
    %v2609 = vsel %vm717, %v2607, %v2608
    %v2610 = vrot.slane %v2609, 1
    %v2611 = vperm.slane %v2606, 0
    %v2612 = vperm.slane %v2606, 1
    %v2613 = vperm.slane %v2610, 0
    %v2614 = vperm.slane %v2610, 1
    %v2615 = vrot.slane %v2612, 6
    %v2616 = vrot.slane %v2614, 6
    %v2617 = vsel %vm636, %v2611, %v2615
    %v2618 = vsel %vm636, %v2613, %v2616
    %v2621 = vmul.f32 %v668, %v2617
    %v2622 = vmul.f32 %v668, %v2618
    %v2624 = vrot.slane %v2465, 1
    %v2625 = vrot.slane %v2465, 2
    %v2626 = vrot.slane %v2465, 3
    %v2627 = vsel %vm708, %v2465, %v2624
    %v2628 = vsel %vm710, %v2625, %v2626
    %v2629 = vsel %vm636, %v2627, %v2628
    %v2630 = vsel %vm713, %v2465, %v2624
    %v2631 = vsel %vm715, %v2625, %v2626
    %v2632 = vsel %vm717, %v2630, %v2631
    %v2633 = vrot.slane %v2632, 1
    %v2634 = vperm.slane %v2629, 0
    %v2635 = vperm.slane %v2629, 1
    %v2636 = vperm.slane %v2633, 0
    %v2637 = vperm.slane %v2633, 1
    %v2642 = vmul.f32 %v2597, %v2634
    %v2643 = vmul.f32 %v2596, %v2635
    %v2644 = vmul.f32 %v2597, %v2636
    %v2645 = vmul.f32 %v2596, %v2637
    %v2650 = vrot.slane %v2643, 6
    %v2651 = vrot.slane %v2645, 6
    %v2652 = vsel %vm636, %v2642, %v2650
    %v2653 = vsel %vm636, %v2644, %v2651
    %v2656 = vadd.f32 %v2621, %v2652
    %v2657 = vadd.f32 %v2622, %v2653
    %v2658 = vadd.f32 %v2593, %v2656
    %v2659 = vadd.f32 %v2594, %v2657
    %2660 = vst [vmem:[#allocation1] ss:$4 sm:$0xff] %v678
    %v2661 = vld.sshfl [vmem:[#allocation1] sm:$0xff pattern:$0x73625140]
    %v2662 = vld.sshfl [vmem:[#allocation1 + $0x8] sm:$0xff pattern:$0x73625140]
    %v2666 = vrot.slane %v2462, 1
    %v2667 = vrot.slane %v2462, 2
    %v2668 = vrot.slane %v2462, 3
    %v2669 = vsel %vm708, %v2462, %v2666
    %v2670 = vsel %vm710, %v2667, %v2668
    %v2671 = vsel %vm636, %v2669, %v2670
    %v2672 = vsel %vm713, %v2462, %v2666
    %v2673 = vsel %vm715, %v2667, %v2668
    %v2674 = vsel %vm717, %v2672, %v2673
    %v2675 = vrot.slane %v2674, 1
    %v2676 = vperm.slane %v2671, 0
    %v2677 = vperm.slane %v2671, 1
    %v2678 = vperm.slane %v2675, 0
    %v2679 = vperm.slane %v2675, 1
    %v2680 = vrot.slane %v2677, 6
    %v2681 = vrot.slane %v2679, 6
    %v2682 = vsel %vm636, %v2676, %v2680
    %v2683 = vsel %vm636, %v2678, %v2681
    %v2686 = vmul.f32 %v678, %v2682
    %v2687 = vmul.f32 %v678, %v2683
    %v2689 = vrot.slane %v2466, 1
    %v2690 = vrot.slane %v2466, 2
    %v2691 = vrot.slane %v2466, 3
    %v2692 = vsel %vm708, %v2466, %v2689
    %v2693 = vsel %vm710, %v2690, %v2691
    %v2694 = vsel %vm636, %v2692, %v2693
    %v2695 = vsel %vm713, %v2466, %v2689
    %v2696 = vsel %vm715, %v2690, %v2691
    %v2697 = vsel %vm717, %v2695, %v2696
    %v2698 = vrot.slane %v2697, 1
    %v2699 = vperm.slane %v2694, 0
    %v2700 = vperm.slane %v2694, 1
    %v2701 = vperm.slane %v2698, 0
    %v2702 = vperm.slane %v2698, 1
    %v2707 = vmul.f32 %v2662, %v2699
    %v2708 = vmul.f32 %v2661, %v2700
    %v2709 = vmul.f32 %v2662, %v2701
    %v2710 = vmul.f32 %v2661, %v2702
    %v2715 = vrot.slane %v2708, 6
    %v2716 = vrot.slane %v2710, 6
    %v2717 = vsel %vm636, %v2707, %v2715
    %v2718 = vsel %vm636, %v2709, %v2716
    %v2721 = vadd.f32 %v2686, %v2717
    %v2722 = vadd.f32 %v2687, %v2718
    %v2723 = vadd.f32 %v2658, %v2721
    %v2724 = vadd.f32 %v2659, %v2722
    %2727 = vst [vmem:[#allocation1] ss:$4 sm:$0xff] %v2723
    %s2728 = scalar_lea.vmem [#allocation1], 1
    %2729 = vst [vmem:[%s2728] ss:$4 sm:$0xff] %v2724
    %v2730 = vld.sshfl [vmem:[#allocation1] sm:$0xff pattern:$0x73625140]
    %v2731 = vld.sshfl [vmem:[#allocation1 + $0x8] sm:$0xff pattern:$0x73625140]
    %v2734 = vpack.c.bf16 %v2730, %v2730
    %v2735 = vpack.c.bf16 %v2731, %v2731
    %v2736 = vld [vmem:[#allocation20] sm:$0xf]
    %v2737 = vld [vmem:[#allocation20 + $0x4] sm:$0xf]
    %v2738 = vld [vmem:[#allocation20 + $0x8] sm:$0xf]
    %v2739 = vld [vmem:[#allocation20 + $0xc] sm:$0xf]
    %v2740 = vld [vmem:[#allocation20 + $0x10] sm:$0xf]
    %v2741 = vld [vmem:[#allocation20 + $0x14] sm:$0xf]
    %v2742 = vld [vmem:[#allocation20 + $0x18] sm:$0xf]
    %v2743 = vld [vmem:[#allocation20 + $0x1c] sm:$0xf]
    %v2744 = vld [vmem:[#allocation20 + $0x20] sm:$0xf]
    %v2745 = vld [vmem:[#allocation20 + $0x24] sm:$0xf]
    %v2746 = vld [vmem:[#allocation20 + $0x28] sm:$0xf]
    %v2747 = vld [vmem:[#allocation20 + $0x2c] sm:$0xf]
    %v2748 = vld [vmem:[#allocation20 + $0x30] sm:$0xf]
    %v2749 = vld [vmem:[#allocation20 + $0x34] sm:$0xf]
    %v2750 = vld [vmem:[#allocation20 + $0x38] sm:$0xf]
    %v2751 = vld [vmem:[#allocation20 + $0x3c] sm:$0xf]
    %v2752 = vld [vmem:[#allocation20 + $0x40] sm:$0xf]
    %v2753 = vld [vmem:[#allocation20 + $0x44] sm:$0xf]
    %v2754 = vld [vmem:[#allocation20 + $0x48] sm:$0xf]
    %v2755 = vld [vmem:[#allocation20 + $0x4c] sm:$0xf]
    %v2756 = vld [vmem:[#allocation20 + $0x50] sm:$0xf]
    %v2757 = vld [vmem:[#allocation20 + $0x54] sm:$0xf]
    %v2758 = vld [vmem:[#allocation20 + $0x58] sm:$0xf]
    %v2759 = vld [vmem:[#allocation20 + $0x5c] sm:$0xf]
    %v2760 = vld [vmem:[#allocation20 + $0x60] sm:$0xf]
    %v2761 = vld [vmem:[#allocation20 + $0x64] sm:$0xf]
    %v2762 = vld [vmem:[#allocation20 + $0x68] sm:$0xf]
    %v2763 = vld [vmem:[#allocation20 + $0x6c] sm:$0xf]
    %v2764 = vld [vmem:[#allocation20 + $0x70] sm:$0xf]
    %v2765 = vld [vmem:[#allocation20 + $0x74] sm:$0xf]
    %v2766 = vld [vmem:[#allocation20 + $0x78] sm:$0xf]
    %v2767 = vld [vmem:[#allocation20 + $0x7c] sm:$0xf]
    %v2800 = vunpack.c.l.b16 %v2736
    %v2801 = vunpack.c.l.b16 %v2737
    %v2802 = vunpack.c.l.b16 %v2738
    %v2803 = vunpack.c.l.b16 %v2739
    %v2804 = vunpack.c.l.b16 %v2740
    %v2805 = vunpack.c.l.b16 %v2741
    %v2806 = vunpack.c.l.b16 %v2742
    %v2807 = vunpack.c.l.b16 %v2743
    %v2808 = vunpack.c.l.b16 %v2744
    %v2809 = vunpack.c.l.b16 %v2745
    %v2810 = vunpack.c.l.b16 %v2746
    %v2811 = vunpack.c.l.b16 %v2747
    %v2812 = vunpack.c.l.b16 %v2748
    %v2813 = vunpack.c.l.b16 %v2749
    %v2814 = vunpack.c.l.b16 %v2750
    %v2815 = vunpack.c.l.b16 %v2751
    %v2816 = vunpack.c.l.b16 %v2752
    %v2817 = vunpack.c.l.b16 %v2753
    %v2818 = vunpack.c.l.b16 %v2754
    %v2819 = vunpack.c.l.b16 %v2755
    %v2820 = vunpack.c.l.b16 %v2756
    %v2821 = vunpack.c.l.b16 %v2757
    %v2822 = vunpack.c.l.b16 %v2758
    %v2823 = vunpack.c.l.b16 %v2759
    %v2824 = vunpack.c.l.b16 %v2760
    %v2825 = vunpack.c.l.b16 %v2761
    %v2826 = vunpack.c.l.b16 %v2762
    %v2827 = vunpack.c.l.b16 %v2763
    %v2828 = vunpack.c.l.b16 %v2764
    %v2829 = vunpack.c.l.b16 %v2765
    %v2830 = vunpack.c.l.b16 %v2766
    %v2831 = vunpack.c.l.b16 %v2767
    %v2832 = vpack.c.b16 %v2801, %v2800
    %v2833 = vpack.c.b16 %v2803, %v2802
    %v2834 = vpack.c.b16 %v2805, %v2804
    %v2835 = vpack.c.b16 %v2807, %v2806
    %v2836 = vpack.c.b16 %v2809, %v2808
    %v2837 = vpack.c.b16 %v2811, %v2810
    %v2838 = vpack.c.b16 %v2813, %v2812
    %v2839 = vpack.c.b16 %v2815, %v2814
    %v2840 = vpack.c.b16 %v2817, %v2816
    %v2841 = vpack.c.b16 %v2819, %v2818
    %v2842 = vpack.c.b16 %v2821, %v2820
    %v2843 = vpack.c.b16 %v2823, %v2822
    %v2844 = vpack.c.b16 %v2825, %v2824
    %v2845 = vpack.c.b16 %v2827, %v2826
    %v2846 = vpack.c.b16 %v2829, %v2828
    %v2847 = vpack.c.b16 %v2831, %v2830
    %2864 = vmatpush.bf16.msra.mxu0 %v2839
    %2865 = vmatpush.bf16.msra.mxu0 %v2838
    %2866 = vmatpush.bf16.msra.mxu0 %v2837
    %2867 = vmatpush.bf16.msra.mxu0 %v2836
    %2868 = vmatpush.bf16.msra.mxu0 %v2835
    %2869 = vmatpush.bf16.msra.mxu0 %v2834
    %2870 = vmatpush.bf16.msra.mxu0 %v2833
    %2871 = vmatpush.bf16.msra.mxu0 %v2832
    %2872 = vmatmul.bf16.gmra.mxu0 %v2734
    %v2873 = vpop.f32.mrf.mxu0
    %v2874 = vadd.f32 0.0, %v2873
    %v2875 = vpop.f32.mrf.mxu0
    %2876 = vdwg.mxu0
    %2877 = vmatpush.bf16.msra.mxu0 %v2847
    %2878 = vmatpush.bf16.msra.mxu0 %v2846
    %2879 = vmatpush.bf16.msra.mxu0 %v2845
    %2880 = vmatpush.bf16.msra.mxu0 %v2844
    %2881 = vmatpush.bf16.msra.mxu0 %v2843
    %2882 = vmatpush.bf16.msra.mxu0 %v2842
    %2883 = vmatpush.bf16.msra.mxu0 %v2841
    %2884 = vmatpush.bf16.msra.mxu0 %v2840
    %2885 = vmatmul.bf16.gmra.mxu0 %v2735
    %v2886 = vpop.f32.mrf.mxu0
    %v2887 = vadd.f32 %v2874, %v2886
    %v2888 = vpop.f32.mrf.mxu0
    %2889 = vdwg.mxu0
    %v2891 = vrot.slane %v2887, 2
    %s2893 = scalar_lea.vmem [#allocation22], 16
    %2894 = vst [vmem:[%s2893] sm:$0x3] %v2887
    %2895 = vst [vmem:[%s2893 + $0x2] sm:$0x3] %v2891
    // Predicated region
    $region98: #{tpu_custom_call.1} parent=1 // pred_check
      _
    $region99: #{tpu_custom_call.1} parent=1 // pred_check_branch
      %2897 = sbr.rel (0) target = $region101
    $region100: #{tpu_custom_call.1} parent=1 // pred_region
      %2899 = vsyncadd [#allocation4], 0
      %s2900 = sshll.u32 [#allocation22], 4
      %s2901 = int_to_ptr.vmem [resolvable:$true] %s2900
      %s2902 = sshll.u32 %s12, 4
      %s2903 = int_to_ptr.hbm [resolvable:$true] %s2902
      %2908 = dma.vmem_to_hbm [thread:$0]  %s2901, 320, %s2903, [#allocation4], 32, 32, 2
    $region101: #{tpu_custom_call.1} parent=1 // pred_fallthru
      _
    // Predicated region
    $region102: #{tpu_custom_call.1} parent=1 // pred_check
      _
    $region103: #{tpu_custom_call.1} parent=1 // pred_check_branch
      %2910 = sbr.rel (0) target = $region105
    $region104: #{tpu_custom_call.1} parent=1 // pred_region
      %2912 = dma.done [#allocation4], 320
    $region105: #{tpu_custom_call.1} parent=1 // pred_fallthru
      _
    %2913 = vsyncpa [#allocation3], 1
    %2914 = vsyncpa [#allocation6], 1
    %2915 = vsyncpa [#allocation9], 1
    %2916 = vsyncpa [#allocation12], 1
    %2917 = vsyncpa [#allocation15], 1
    %2918 = vsyncpa [#allocation18], 1
    %2919 = vsyncpa [#allocation21], 1
    %2920 = vsyncpa [#allocation4], 1

</llo_original>
